<compile_context>
chip_gen: v7x
topology: tpu7x:2x2x1
jax: 0.10.0
libtpu: 0.0.40
codegen_flags: <defaults>
</compile_context>

<pallas_src>
import functools

import jax
import jax.numpy as jnp
import numpy as np
from jax.experimental import pallas as pl
from jax.experimental.pallas import tpu as pltpu


_VMEM_BUDGET_BYTES = 48 * 1024 * 1024   # headroom under v7x's 64 MiB / core VMEM


def _vq_kernel(z_ref, e_hbm_ref, zq_ref, idx_ref, counts_ref, sqerr_ref,
               e_vmem, e_sq_half, copy_sem, *, bf16_scores):
    """One tile of rows: scores -> argmin -> quantized vectors + per-tile stats."""
    i = pl.program_id(1)   # per-core step along the row axis

    # Copy the codebook HBM -> VMEM once per core (single-buffered) and hoist
    # 0.5 * ||e_k||^2 out of the per-step loop.
    @pl.when(i == 0)
    def _():
        cp = pltpu.make_async_copy(e_hbm_ref, e_vmem, copy_sem)
        cp.start()
        cp.wait()
        e0 = e_vmem[...].astype(jnp.float32)
        e_sq_half[...] = 0.5 * jnp.sum(e0 * e0, axis=1)[None, :]

    z = z_ref[...].astype(jnp.float32)          # (TN, D)
    e = e_vmem[...].astype(jnp.float32)         # (K, D)
    tn, d = z.shape
    k = e.shape[0]

    # argmin_k ||z - e_k||^2 == argmin_k (0.5*||e_k||^2 - z . e_k)
    # (||z||^2 is constant per row and cannot change the argmin).
    if bf16_scores:
        ze = jax.lax.dot_general(z.astype(jnp.bfloat16), e.astype(jnp.bfloat16),
                                 (((1,), (1,)), ((), ())),
                                 preferred_element_type=jnp.float32)
    else:
        ze = jax.lax.dot_general(z, e, (((1,), (1,)), ((), ())),
                                 preferred_element_type=jnp.float32)   # (TN, K) MXU
    score = e_sq_half[...] - ze                                        # (TN, K) VPU

    # first-occurrence argmin (matches th.argmin tie-breaking)
    s_min = jnp.min(score, axis=1, keepdims=True)
    lane = jax.lax.broadcasted_iota(jnp.int32, (tn, k), 1)
    cand = jnp.where(score == s_min, lane, jnp.int32(k))
    idx = jnp.min(cand, axis=1)                                        # (TN,)

    # one-hot gather back through the codebook on the MXU (exact: 0/1 weights)
    one_hot = (lane == idx[:, None]).astype(jnp.float32)               # (TN, K)
    zq = jnp.dot(one_hot, e, preferred_element_type=jnp.float32)       # (TN, D)

    zq_ref[...] = zq.astype(zq_ref.dtype)
    idx_ref[...] = idx.reshape(1, 1, tn)                               # lane-dense store

    # per-tile partial statistics (reduced in f32 in the wrapper)
    diff = zq - z
    counts_ref[...] = jnp.sum(one_hot, axis=0).reshape(1, 1, k)
    sqerr_ref[...] = jnp.sum(diff * diff, axis=0).reshape(1, 1, d)


def _vmem_bytes_estimate(tile_n, d, k):
    f32 = 4
    io = 2 * 2 * tile_n * d * f32                 # z in + z_q out blocks, double-buffered
    small = 2 * (tile_n + k + d) * f32            # idx + per-tile stat blocks
    resident = (k * d + k) * f32                  # codebook copy + 0.5*||e||^2 scratch
    work = 4 * tile_n * max(k, 128) * f32         # (TN, K) score/cand/one-hot working set
    return io + small + resident + work


def _largest_divisor_at_most(n, t):
    t = max(1, min(t, n))
    fallback = 1
    for cand in range(t, 0, -1):
        if n % cand == 0:
            if cand % 8 == 0:
                return cand
            if fallback == 1:
                fallback = cand
    return fallback


def _choose_tiling(n_rows, d, k, requested_tile):
    tile = _largest_divisor_at_most(n_rows, requested_tile)
    while tile > 8 and _vmem_bytes_estimate(tile, d, k) > _VMEM_BUDGET_BYTES:
        tile = _largest_divisor_at_most(n_rows, tile // 2)
    if tile != n_rows and tile % 8 != 0:
        # keep 8-sublane block alignment; fall back to a single full tile
        tile = n_rows
    num_tiles = n_rows // tile
    # Dual-TensorCore (v7x) split of the row range; harmless on 1-TC chips
    # (outer "parallel" axis just becomes a 2-iteration sequential loop).
    num_cores = 2 if num_tiles % 2 == 0 else 1
    return tile, num_cores


def _vq_lookup(z_flat, embedding, tile_n, bf16_scores):
    n, d = z_flat.shape
    k, d2 = embedding.shape
    assert d == d2, "channel dim must equal codebook dim D"

    tile, num_cores = _choose_tiling(n, d, k, tile_n)
    num_tiles = n // tile
    steps = num_tiles // num_cores

    def row_map(c, i):
        return (c * steps + i, 0)

    def stat_map(c, i):
        return (c * steps + i, 0, 0)

    vmem_limit = int(max(32 * 1024 * 1024,
                         min(2 * _vmem_bytes_estimate(tile, d, k),
                             64 * 1024 * 1024)))

    kernel = functools.partial(_vq_kernel, bf16_scores=bf16_scores)

    zq, idx, counts, sqerr = pl.pallas_call(
        kernel,
        out_shape=(
            jax.ShapeDtypeStruct((n, d), z_flat.dtype),            # quantized rows
            jax.ShapeDtypeStruct((num_tiles, 1, tile), jnp.int32),  # argmin indices (lane-dense)
            jax.ShapeDtypeStruct((num_tiles, 1, k), jnp.float32),   # per-tile code counts
            jax.ShapeDtypeStruct((num_tiles, 1, d), jnp.float32),   # per-tile sq-error sums
        ),
        grid_spec=pltpu.PrefetchScalarGridSpec(
            num_scalar_prefetch=0,
            grid=(num_cores, steps),
            in_specs=[
                pl.BlockSpec((tile, d), row_map),
                pl.BlockSpec(memory_space=pl.ANY),   # codebook stays put; DMA'd once per core
            ],
            out_specs=[
                pl.BlockSpec((tile, d), row_map),
                pl.BlockSpec((1, 1, tile), stat_map),
                pl.BlockSpec((1, 1, k), stat_map),
                pl.BlockSpec((1, 1, d), stat_map),
            ],
            scratch_shapes=[
                pltpu.VMEM((k, d), embedding.dtype),   # resident codebook copy
                pltpu.VMEM((1, k), jnp.float32),       # 0.5 * ||e_k||^2
                pltpu.SemaphoreType.DMA,
            ],
        ),
        compiler_params=pltpu.CompilerParams(
            dimension_semantics=("parallel", "arbitrary"),
            vmem_limit_bytes=vmem_limit,
        ),
    )(z_flat, embedding)

    return (zq,
            idx.reshape(n),
            counts.reshape(num_tiles, k),
            sqerr.reshape(num_tiles, d))


def _forward_nhwc(z_nhwc, embedding, beta, tile_n, bf16_scores):
    b, h, w, d = z_nhwc.shape
    n = b * h * w
    z_flat = z_nhwc.reshape(n, d)
    zq_flat, idx_flat, counts, sqerr = _vq_lookup(z_flat, embedding, tile_n, bf16_scores)

    # loss = mean((zq.detach()-z)^2) + beta*mean((zq - z.detach())^2)
    # -> forward value (1 + beta) * MSE
    mse = jnp.sum(sqerr) / jnp.float32(n * d)
    loss = (1.0 + beta) * mse

    e_mean = jnp.sum(counts, axis=0) / jnp.float32(n)
    perplexity = jnp.exp(-jnp.sum(e_mean * jnp.log(e_mean + 1e-10)))

    # straight-through z + (z_q - z).detach() has forward value z_q
    # TODO(synk): .detach()/straight-through gradient routing is an autograd
    # concern; only the forward values are produced here.
    zq_nhwc = zq_flat.reshape(b, h, w, d)
    idx = idx_flat.reshape(b, h, w)
    return loss, zq_nhwc, perplexity, idx


@functools.partial(jax.jit, static_argnames=("tile_n", "bf16_scores"))
def vector_quantizer_forward(z_nchw, embedding, beta=0.25, *, tile_n=512,
                             bf16_scores=False):
    """PyTorch-layout entry point: z is (B, D, H, W); returns z_q as (B, D, H, W)."""
    b, c, h, w = z_nchw.shape
    k, d = embedding.shape
    assert c == d, "channel dim must equal codebook dim D"
    # permute(0,2,3,1).view(-1, D) glue. If the surrounding model is already
    # channels-last, call vector_quantizer_forward_nhwc to skip both
    # full-tensor HBM transposes.
    z_nhwc = jnp.transpose(z_nchw, (0, 2, 3, 1))
    loss, zq_nhwc, perplexity, idx = _forward_nhwc(z_nhwc, embedding, beta,
                                                   tile_n, bf16_scores)
    z_q = jnp.transpose(zq_nhwc, (0, 3, 1, 2))
    return loss, z_q, perplexity, idx


@functools.partial(jax.jit, static_argnames=("tile_n", "bf16_scores"))
def vector_quantizer_forward_nhwc(z_nhwc, embedding, beta=0.25, *, tile_n=512,
                                  bf16_scores=False):
    """Channels-last entry point (no NCHW<->NHWC round trips)."""
    return _forward_nhwc(z_nhwc, embedding, beta, tile_n, bf16_scores)


def _reference(z_nchw, embedding, beta):
    b, c, h, w = z_nchw.shape
    k, d = embedding.shape
    zf = jnp.transpose(z_nchw, (0, 2, 3, 1)).reshape(-1, d)
    dist = (jnp.sum(zf ** 2, 1, keepdims=True)
            + jnp.sum(embedding ** 2, 1)[None, :]
            - 2.0 * zf @ embedding.T)
    idx = jnp.argmin(dist, axis=1)
    one = jax.nn.one_hot(idx, k, dtype=jnp.float32)
    zq = one @ embedding
    loss = (1.0 + beta) * jnp.mean((zq - zf) ** 2)
    e_mean = jnp.mean(one, axis=0)
    perp = jnp.exp(-jnp.sum(e_mean * jnp.log(e_mean + 1e-10)))
    return (loss, jnp.transpose(zq.reshape(b, h, w, d), (0, 3, 1, 2)),
            perp, idx.reshape(b, h, w))


if __name__ == "__main__":
    K, D, beta = 32, 16, 0.25
    B, H, W = 2, 16, 16

    key = jax.random.PRNGKey(0)
    k_emb, k_z = jax.random.split(key)
    # nn.Embedding(K, D).weight.data.uniform_(-1/K, 1/K)
    embedding = jax.random.uniform(k_emb, (K, D), jnp.float32,
                                   minval=-1.0 / K, maxval=1.0 / K)
    z = jax.random.normal(k_z, (B, D, H, W), jnp.float32)

    r_loss, r_zq, r_perp, r_idx = _reference(z, embedding, beta)

    # default config (single 512-row tile), a small explicit tile that
    # exercises the multi-tile / dual-core index maps, and the channels-last
    # entry point (no NCHW round trips).
    out_default = vector_quantizer_forward(z, embedding, beta)
    out_tiled = vector_quantizer_forward(z, embedding, beta, tile_n=128)
    z_nhwc = jnp.transpose(z, (0, 2, 3, 1))
    n_loss, n_zq_nhwc, n_perp, n_idx = vector_quantizer_forward_nhwc(
        z_nhwc, embedding, beta)
    out_nhwc = (n_loss, jnp.transpose(n_zq_nhwc, (0, 3, 1, 2)), n_perp, n_idx)
    jax.block_until_ready((out_default, out_tiled, out_nhwc))

    for loss, z_q, perplexity, idx in (out_default, out_tiled, out_nhwc):
        np.testing.assert_allclose(np.asarray(loss), np.asarray(r_loss),
                                   rtol=1e-5, atol=1e-6)
        np.testing.assert_allclose(np.asarray(z_q), np.asarray(r_zq),
                                   rtol=1e-5, atol=1e-6)
        np.testing.assert_allclose(np.asarray(perplexity), np.asarray(r_perp),
                                   rtol=1e-5, atol=1e-6)
        np.testing.assert_array_equal(np.asarray(idx), np.asarray(r_idx))

    print("KERNEL_OK")
</pallas_src>

<mosaic_0001>
module attributes {stable_mosaic.version = 11 : i64} {
  func.func @_vq_kernel(%arg0: i32, %arg1: i32, %arg2: memref<512x16xf32, #tpu.memory_space<vmem>>, %arg3: memref<32x16xf32, #tpu.memory_space<any>>, %arg4: memref<512x16xf32, #tpu.memory_space<vmem>>, %arg5: memref<1x1x512xi32, #tpu.memory_space<vmem>>, %arg6: memref<1x1x32xf32, #tpu.memory_space<vmem>>, %arg7: memref<1x1x16xf32, #tpu.memory_space<vmem>>, %arg8: memref<32x16xf32, #tpu.memory_space<vmem>>, %arg9: memref<1x32xf32, #tpu.memory_space<vmem>>, %arg10: memref<!tpu.dma_semaphore, #tpu.memory_space<semaphore_mem>>) attributes {dimension_semantics = [#tpu.dimension_semantics<parallel>, #tpu.dimension_semantics<arbitrary>], iteration_bounds = array<i64: 1, 1>, scalar_prefetch = 0 : i64, scratch_operands = 3 : i64, tpu.core_type = #tpu.core_type<tc>, window_params = [{transform_indices = @transform_0, window_bounds = array<i64: 512, 16>}, {}, {transform_indices = @transform_2, window_bounds = array<i64: 512, 16>}, {transform_indices = @transform_3, window_bounds = array<i64: 1, 1, 512>}, {transform_indices = @transform_4, window_bounds = array<i64: 1, 1, 32>}, {transform_indices = @transform_5, window_bounds = array<i64: 1, 1, 16>}]} {
    %c0_i32 = arith.constant 0 : i32
    %0 = arith.cmpi eq, %arg1, %c0_i32 : i32
    %1 = arith.extui %0 : i1 to i32
    %c0_i32_0 = arith.constant 0 : i32
    %2 = arith.cmpi ne, %1, %c0_i32_0 : i32
    scf.if %2 {
      tpu.enqueue_dma source(%arg3 : memref<32x16xf32, #tpu.memory_space<any>>) target(%arg8 : memref<32x16xf32, #tpu.memory_space<vmem>>) target_semaphore(%arg10 : memref<!tpu.dma_semaphore, #tpu.memory_space<semaphore_mem>>)
      tpu.wait_dma2 semaphore(%arg10 : memref<!tpu.dma_semaphore, #tpu.memory_space<semaphore_mem>>) src(%arg3 : memref<32x16xf32, #tpu.memory_space<any>>) dst(%arg8 : memref<32x16xf32, #tpu.memory_space<vmem>>)
      %c0_22 = arith.constant 0 : index
      %c0_23 = arith.constant 0 : index
      %34 = vector.load %arg8[%c0_22, %c0_23] : memref<32x16xf32, #tpu.memory_space<vmem>>, vector<32x16xf32>
      %35 = arith.mulf %34, %34 : vector<32x16xf32>
      %cst_24 = arith.constant dense<0.000000e+00> : vector<32xf32>
      %36 = vector.multi_reduction <add>, %35, %cst_24 [1] : vector<32x16xf32> to vector<32xf32>
      %37 = vector.shape_cast %36 : vector<32xf32> to vector<1x32xf32>
      %cst_25 = arith.constant 5.000000e-01 : f32
      %38 = vector.broadcast %cst_25 : f32 to vector<1x32xf32>
      %39 = arith.mulf %38, %37 : vector<1x32xf32>
      %c0_26 = arith.constant 0 : index
      %c0_27 = arith.constant 0 : index
      %40 = vector.load %arg9[%c0_26, %c0_27] : memref<1x32xf32, #tpu.memory_space<vmem>>, vector<1x32xf32>
      tpu.vector_store %arg9[%c0_26, %c0_27], %39 {strides = array<i32>} : memref<1x32xf32, #tpu.memory_space<vmem>>, vector<1x32xf32>,
    } else {
    }
    %c0 = arith.constant 0 : index
    %c0_1 = arith.constant 0 : index
    %3 = vector.load %arg2[%c0, %c0_1] : memref<512x16xf32, #tpu.memory_space<vmem>>, vector<512x16xf32>
    %c0_2 = arith.constant 0 : index
    %c0_3 = arith.constant 0 : index
    %4 = vector.load %arg8[%c0_2, %c0_3] : memref<32x16xf32, #tpu.memory_space<vmem>>, vector<32x16xf32>
    %cst = arith.constant dense<0.000000e+00> : vector<512x32xf32>
    %5 = tpu.matmul %3, %4, %cst {dimension_numbers = #tpu.dot_dimension_numbers<[1], [1], [0], [0], [0, 0, 1, 0], [], []>} : vector<512x16xf32>, vector<32x16xf32>, vector<512x32xf32> -> vector<512x32xf32>
    %c0_4 = arith.constant 0 : index
    %c0_5 = arith.constant 0 : index
    %6 = vector.load %arg9[%c0_4, %c0_5] : memref<1x32xf32, #tpu.memory_space<vmem>>, vector<1x32xf32>
    %7 = vector.broadcast %6 : vector<1x32xf32> to vector<512x32xf32>
    %8 = arith.subf %7, %5 : vector<512x32xf32>
    %cst_6 = arith.constant dense<0x7F800000> : vector<512xf32>
    %9 = vector.multi_reduction <minimumf>, %8, %cst_6 [1] : vector<512x32xf32> to vector<512xf32>
    %10 = vector.shape_cast %9 : vector<512xf32> to vector<512x1xf32>
    %11 = tpu.iota {dimensions = array<i32: 1>} : vector<512x32xi32>
    %12 = vector.broadcast %10 : vector<512x1xf32> to vector<512x32xf32>
    %13 = arith.cmpf oeq, %8, %12 : vector<512x32xf32>
    %c32_i32 = arith.constant 32 : i32
    %14 = vector.broadcast %c32_i32 : i32 to vector<512x32xi32>
    %15 = arith.select %13, %11, %14 : vector<512x32xi1>, vector<512x32xi32>
    %cst_7 = arith.constant dense<2147483647> : vector<512xi32>
    %16 = vector.multi_reduction <minsi>, %15, %cst_7 [1] : vector<512x32xi32> to vector<512xi32>
    %17 = vector.shape_cast %16 : vector<512xi32> to vector<512x1xi32>
    %18 = vector.broadcast %17 : vector<512x1xi32> to vector<512x32xi32>
    %19 = arith.cmpi eq, %11, %18 : vector<512x32xi32>
    %20 = arith.extui %19 : vector<512x32xi1> to vector<512x32xi32>
    %21 = arith.sitofp %20 : vector<512x32xi32> to vector<512x32xf32>
    %cst_8 = arith.constant dense<0.000000e+00> : vector<512x16xf32>
    %22 = tpu.matmul %21, %4, %cst_8 {dimension_numbers = #tpu.dot_dimension_numbers<[1], [0], [0], [1], [0, 0, 1, 1], [], []>} : vector<512x32xf32>, vector<32x16xf32>, vector<512x16xf32> -> vector<512x16xf32>
    %c0_9 = arith.constant 0 : index
    %c0_10 = arith.constant 0 : index
    %23 = vector.load %arg4[%c0_9, %c0_10] : memref<512x16xf32, #tpu.memory_space<vmem>>, vector<512x16xf32>
    tpu.vector_store %arg4[%c0_9, %c0_10], %22 {strides = array<i32>} : memref<512x16xf32, #tpu.memory_space<vmem>>, vector<512x16xf32>,
    %24 = vector.shape_cast %16 : vector<512xi32> to vector<1x1x512xi32>
    %c0_11 = arith.constant 0 : index
    %c0_12 = arith.constant 0 : index
    %c0_13 = arith.constant 0 : index
    %25 = vector.load %arg5[%c0_11, %c0_12, %c0_13] : memref<1x1x512xi32, #tpu.memory_space<vmem>>, vector<1x1x512xi32>
    tpu.vector_store %arg5[%c0_11, %c0_12, %c0_13], %24 {strides = array<i32>} : memref<1x1x512xi32, #tpu.memory_space<vmem>>, vector<1x1x512xi32>,
    %26 = arith.subf %22, %3 : vector<512x16xf32>
    %cst_14 = arith.constant dense<0.000000e+00> : vector<32xf32>
    %27 = vector.multi_reduction <add>, %21, %cst_14 [0] : vector<512x32xf32> to vector<32xf32>
    %28 = vector.shape_cast %27 : vector<32xf32> to vector<1x1x32xf32>
    %c0_15 = arith.constant 0 : index
    %c0_16 = arith.constant 0 : index
    %c0_17 = arith.constant 0 : index
    %29 = vector.load %arg6[%c0_15, %c0_16, %c0_17] : memref<1x1x32xf32, #tpu.memory_space<vmem>>, vector<1x1x32xf32>
    tpu.vector_store %arg6[%c0_15, %c0_16, %c0_17], %28 {strides = array<i32>} : memref<1x1x32xf32, #tpu.memory_space<vmem>>, vector<1x1x32xf32>,
    %30 = arith.mulf %26, %26 : vector<512x16xf32>
    %cst_18 = arith.constant dense<0.000000e+00> : vector<16xf32>
    %31 = vector.multi_reduction <add>, %30, %cst_18 [0] : vector<512x16xf32> to vector<16xf32>
    %32 = vector.shape_cast %31 : vector<16xf32> to vector<1x1x16xf32>
    %c0_19 = arith.constant 0 : index
    %c0_20 = arith.constant 0 : index
    %c0_21 = arith.constant 0 : index
    %33 = vector.load %arg7[%c0_19, %c0_20, %c0_21] : memref<1x1x16xf32, #tpu.memory_space<vmem>>, vector<1x1x16xf32>
    tpu.vector_store %arg7[%c0_19, %c0_20, %c0_21], %32 {strides = array<i32>} : memref<1x1x16xf32, #tpu.memory_space<vmem>>, vector<1x1x16xf32>,
    return
  }
  func.func @transform_0(%arg0: i32, %arg1: i32) -> (i32, i32) {
    %c1_i32 = arith.constant 1 : i32
    %0 = arith.muli %arg0, %c1_i32 : i32
    %1 = arith.addi %0, %arg1 : i32
    %c0_i32 = arith.constant 0 : i32
    %c0_i32_0 = arith.constant 0 : i32
    return %1, %c0_i32 : i32, i32
  }
  func.func @transform_2(%arg0: i32, %arg1: i32) -> (i32, i32) {
    %c1_i32 = arith.constant 1 : i32
    %0 = arith.muli %arg0, %c1_i32 : i32
    %1 = arith.addi %0, %arg1 : i32
    %c0_i32 = arith.constant 0 : i32
    %c0_i32_0 = arith.constant 0 : i32
    return %1, %c0_i32 : i32, i32
  }
  func.func @transform_3(%arg0: i32, %arg1: i32) -> (i32, i32, i32) {
    %c1_i32 = arith.constant 1 : i32
    %0 = arith.muli %arg0, %c1_i32 : i32
    %1 = arith.addi %0, %arg1 : i32
    %c0_i32 = arith.constant 0 : i32
    %c0_i32_0 = arith.constant 0 : i32
    %c0_i32_1 = arith.constant 0 : i32
    return %1, %c0_i32, %c0_i32_0 : i32, i32, i32
  }
  func.func @transform_4(%arg0: i32, %arg1: i32) -> (i32, i32, i32) {
    %c1_i32 = arith.constant 1 : i32
    %0 = arith.muli %arg0, %c1_i32 : i32
    %1 = arith.addi %0, %arg1 : i32
    %c0_i32 = arith.constant 0 : i32
    %c0_i32_0 = arith.constant 0 : i32
    %c0_i32_1 = arith.constant 0 : i32
    return %1, %c0_i32, %c0_i32_0 : i32, i32, i32
  }
  func.func @transform_5(%arg0: i32, %arg1: i32) -> (i32, i32, i32) {
    %c1_i32 = arith.constant 1 : i32
    %0 = arith.muli %arg0, %c1_i32 : i32
    %1 = arith.addi %0, %arg1 : i32
    %c0_i32 = arith.constant 0 : i32
    %c0_i32_0 = arith.constant 0 : i32
    %c0_i32_1 = arith.constant 0 : i32
    return %1, %c0_i32, %c0_i32_0 : i32, i32, i32
  }
}

</mosaic_0001>

<llo_original>
// kernel: vector_quantizer_forward.1
$region0: #{vector_quantizer_forward.1}
  #allocation0 [shape = 'u32[]', space=smem, size = 0x4, offset = 0x4, fixed_abs, tag = 'smem constant byte address 0x4 - core index']
  #allocation1 [shape = 'u32[144,128]{1,0:T(1,128)}', space=vmem, size = 0x12000, scoped, tag = 'internal scratch']
  #allocation2 [shape = 'f32[32,16]{1,0:T(8,128)}', space=vmem, size = 0x4000, scoped, tag = 'scratch operand']
  #allocation3 [shape = 'f32[1,32]{1,0:T(1,128)}', space=vmem, size = 0x200, scoped, tag = 'scratch operand']
  #allocation4 [shape = 's32[1]{0}', space=sflag, size = 0x4, scoped, tag = 'scratch operand']
  #allocation5 [shape = 's32[]', space=sflag, size = 0x4, offset = 0, fixed_abs, tag = 'sflag constant byte address 0x0 - dummy sync flag']
  %s0 = inlined_call_operand.vmem [shape: f32[512,16], index: 0, kind: input, shape index: {}]
  %s1 = inlined_call_operand.vmem [shape: f32[32,16], index: 1, kind: input, shape index: {}]
  %s2 = inlined_call_operand.vmem [shape: f32[512,16], index: 2, kind: output, shape index: {0}]
  %s3 = inlined_call_operand.vmem [shape: s32[1,1,512], index: 3, kind: output, shape index: {1}]
  %s4 = inlined_call_operand.vmem [shape: f32[1,1,32], index: 4, kind: output, shape index: {2}]
  %s5 = inlined_call_operand.vmem [shape: f32[1,1,16], index: 5, kind: output, shape index: {3}]
  %6 = xla_tuple %s2, %s3, %s4, %s5
  %s7 = sld [smem:[#allocation0]]
  $region76: #{vector_quantizer_forward.1} parent=0
    _
  %s9 = ssub.s32 1, %s7
  %s10 = scalar_select 0, %s9, %s7
  // Predicated region
  $region2: #{vector_quantizer_forward.1} parent=0 // pred_check
    _
  $region3: #{vector_quantizer_forward.1} parent=0 // pred_check_branch
    %12 = sbr.rel (0) target = $region5
  $region4: #{vector_quantizer_forward.1} parent=0 // pred_region
    %s13 = sadd.s32 0, 0
    %s14 = smul.u32 64, %s13
    %p15 = scmp.lt.s32.totalorder %s14, 63
    %s16 = scalar_select %p15, %s14, 63
    %s17 = smul.addr %s16, 8
    %s18 = scalar_lea.vmem %s0, %s17
    %s19 = sadd.s32 0, 0
    %s20 = smul.u32 64, %s19
  $region5: #{vector_quantizer_forward.1} parent=0 // pred_fallthru
    _
  %s21 = sadd.s32 0, 0
  %s22 = smul.u32 64, %s21
  %p23 = scmp.lt.s32.totalorder %s22, 63
  %s24 = scalar_select %p23, %s22, 63
  %s25 = smul.addr %s24, 8
  %s26 = scalar_lea.vmem %s0, %s25
  %s27 = sadd.s32 0, 0
  %s28 = smul.u32 64, %s27
  %p29 = scmp.lt.s32.totalorder %s28, 63
  %s30 = scalar_select %p29, %s28, 63
  %s31 = smul.addr %s30, 8
  %s32 = scalar_lea.vmem %s2, %s31
  %s33 = sadd.s32 0, 0
  %p34 = scmp.lt.s32.totalorder %s33, 0
  %s35 = scalar_select %p34, %s33, 0
  %s36 = smul.addr %s35, 4
  %s37 = scalar_lea.vmem %s3, %s36
  %s38 = sadd.s32 0, 0
  %p39 = scmp.lt.s32.totalorder %s38, 0
  %s40 = scalar_select %p39, %s38, 0
  %s41 = scalar_lea.vmem %s4, %s40
  %s42 = sadd.s32 0, 0
  %p43 = scmp.lt.s32.totalorder %s42, 0
  %s44 = scalar_select %p43, %s42, 0
  %s45 = scalar_lea.vmem %s5, %s44
  %s46 = sadd.s32 0, 0
  %s47 = smul.u32 64, %s46
  %p48 = scmp.lt.s32.totalorder %s47, 63
  %s49 = scalar_select %p48, %s47, 63
  %s50 = smul.addr %s49, 8
  %s51 = scalar_lea.vmem %s0, %s50
  %s52 = sadd.s32 0, 0
  %s53 = smul.u32 64, %s52
  %s54 = sadd.s32 0, 0
  %s55 = smul.u32 64, %s54
  %p56 = scmp.lt.s32.totalorder %s55, 63
  %s57 = scalar_select %p56, %s55, 63
  %s58 = smul.addr %s57, 8
  %s59 = scalar_lea.vmem %s2, %s58
  %s60 = sadd.s32 0, 0
  %s61 = smul.u32 64, %s60
  %s62 = sadd.s32 0, 0
  %p63 = scmp.lt.s32.totalorder %s62, 0
  %s64 = scalar_select %p63, %s62, 0
  %s65 = smul.addr %s64, 4
  %s66 = scalar_lea.vmem %s3, %s65
  %s67 = sadd.s32 0, 0
  %s68 = sadd.s32 0, 0
  %p69 = scmp.lt.s32.totalorder %s68, 0
  %s70 = scalar_select %p69, %s68, 0
  %s71 = scalar_lea.vmem %s4, %s70
  %s72 = sadd.s32 0, 0
  %s73 = sadd.s32 0, 0
  %p74 = scmp.lt.s32.totalorder %s73, 0
  %s75 = scalar_select %p74, %s73, 0
  %s76 = scalar_lea.vmem %s5, %s75
  %s77 = sadd.s32 0, 0
  %p78 = scmp.eq.s32.totalorder 0, 0
  // Predicated region
  $region6: #{vector_quantizer_forward.1} parent=0 // pred_check
    %p79 = pneg %p78
  $region7: #{vector_quantizer_forward.1} parent=0 // pred_check_branch
    %81 = sbr.rel (%p79) target = $region9
  $region8: #{vector_quantizer_forward.1} parent=0 // pred_region
    %p83 = scmp.lt.u32.totalorder 32, 8
    %p84 = pneg %p83
    // Predicated region
    $region10: #{vector_quantizer_forward.1} parent=8 // pred_check
      _
    $region11: #{vector_quantizer_forward.1} parent=8 // pred_check_branch
      %86 = sbr.rel (%p83) target = $region13
    $region12: #{vector_quantizer_forward.1} parent=8 // pred_region
      %s101 = sand.u32 32, 7
      %p102 = scmp.eq.s32.totalorder %s101, 0
      // Predicated region
      $region25: #{vector_quantizer_forward.1} parent=12 // pred_check
        %p103 = pneg %p102
      $region26: #{vector_quantizer_forward.1} parent=12 // pred_check_branch
        %105 = sbr.rel (%p103) target = $region28
      $region27: #{vector_quantizer_forward.1} parent=12 // pred_region
        loop: start=0, step=1, limit=1
        $region29: #{vector_quantizer_forward.1} parent=27 // loop_pre_header
          _
        $region30: #{vector_quantizer_forward.1} parent=27 // loop_header
          %s107 = sphi 0, %s111
          %p108 = scmp.ge.s32.totalorder %s107, 1
          %s112 = sphi %s1, %s1
          %s113 = sphi [#allocation2], [#allocation2]
        $region31: #{vector_quantizer_forward.1} parent=27 // loop_header_branch
          %110 = sbr.rel (%p108) target = $region35
        $region32: #{vector_quantizer_forward.1} parent=27 // loop_body
          %v114 = vld [vmem:[%s112] sm:$0xff]
          %115 = vst [vmem:[%s113] sm:$0xff] %v114
          %v116 = vld [vmem:[%s112 + $0x8] sm:$0xff]
          %117 = vst [vmem:[%s113 + $0x8] sm:$0xff] %v116
          %v118 = vld [vmem:[%s112 + $0x10] sm:$0xff]
          %119 = vst [vmem:[%s113 + $0x10] sm:$0xff] %v118
          %v120 = vld [vmem:[%s112 + $0x18] sm:$0xff]
          %121 = vst [vmem:[%s113 + $0x18] sm:$0xff] %v120
        $region33: #{vector_quantizer_forward.1} parent=27 // loop_footer
          %s111 = sadd.s32 1, %s107
        $region34: #{vector_quantizer_forward.1} parent=27 // loop_footer_branch
          %106 = sbr.rel target = $region30
        $region35: #{vector_quantizer_forward.1} parent=27 // loop_exit
          _
      $region28: #{vector_quantizer_forward.1} parent=12 // pred_fallthru
        _
      %p122 = pneg %p102
      // Predicated region
      $region36: #{vector_quantizer_forward.1} parent=12 // pred_check
        _
      $region37: #{vector_quantizer_forward.1} parent=12 // pred_check_branch
        %124 = sbr.rel (%p102) target = $region39
      $region38: #{vector_quantizer_forward.1} parent=12 // pred_region
        %s125 = sand.u32 32, 7
      $region39: #{vector_quantizer_forward.1} parent=12 // pred_fallthru
        _
    $region13: #{vector_quantizer_forward.1} parent=8 // pred_fallthru
      _
    // Predicated region
    $region14: #{vector_quantizer_forward.1} parent=8 // pred_check
      %p87 = pneg %p83
    $region15: #{vector_quantizer_forward.1} parent=8 // pred_check_branch
      %89 = sbr.rel (%p87) target = $region17
    $region16: #{vector_quantizer_forward.1} parent=8 // pred_region
      %s90 = sshllo.u32 0, 32
      loop: start=0, step=1, limit=1
      $region18: #{vector_quantizer_forward.1} parent=16 // loop_pre_header
        _
      $region19: #{vector_quantizer_forward.1} parent=16 // loop_header
        %s92 = sphi 0, %s96
        %p93 = scmp.ge.s32.totalorder %s92, 1
        %s97 = sphi %s1, %s1
        %s98 = sphi [#allocation2], [#allocation2]
      $region20: #{vector_quantizer_forward.1} parent=16 // loop_header_branch
        %95 = sbr.rel (%p93) target = $region24
      $region21: #{vector_quantizer_forward.1} parent=16 // loop_body
        %v99 = vld [vmem:[%s97] sm:%s90]
        %100 = vst [vmem:[%s98] sm:%s90] %v99
      $region22: #{vector_quantizer_forward.1} parent=16 // loop_footer
        %s96 = sadd.s32 1, %s92
      $region23: #{vector_quantizer_forward.1} parent=16 // loop_footer_branch
        %91 = sbr.rel target = $region19
      $region24: #{vector_quantizer_forward.1} parent=16 // loop_exit
        _
    $region17: #{vector_quantizer_forward.1} parent=8 // pred_fallthru
      _
    // Predicated region
    $region40: #{vector_quantizer_forward.1} parent=8 // pred_check
      _
    $region41: #{vector_quantizer_forward.1} parent=8 // pred_check_branch
      %128 = sbr.rel (0) target = $region43
    $region42: #{vector_quantizer_forward.1} parent=8 // pred_region
      %129 = vsyncadd [#allocation4], 512
    $region43: #{vector_quantizer_forward.1} parent=8 // pred_fallthru
      _
    %s130 = smul.u32 32, 1
    %s131 = sshll.u32 %s130, 4
    %132 = dma.done [#allocation4], %s131
    %v133 = vld [vmem:[#allocation2] sm:$0xff]
    %v134 = vld [vmem:[#allocation2 + $0x8] sm:$0xff]
    %v135 = vld [vmem:[#allocation2 + $0x10] sm:$0xff]
    %v136 = vld [vmem:[#allocation2 + $0x18] sm:$0xff]
    %v137 = vmul.f32 %v133, %v133
    %v138 = vmul.f32 %v134, %v134
    %v139 = vmul.f32 %v135, %v135
    %v140 = vmul.f32 %v136, %v136
    %vm141 = vcmask 130048
    %v142 = vsel %vm141, %v137, 0.0
    %143 = vadd.xlane.f32.xlu0 %v142
    %v144 = vpop.xlane.xlu0 %143
    %v145 = vsel %vm141, %v138, 0.0
    %146 = vadd.xlane.f32.xlu0 %v145
    %v147 = vpop.xlane.xlu0 %146
    %v148 = vsel %vm141, %v139, 0.0
    %149 = vadd.xlane.f32.xlu0 %v148
    %v150 = vpop.xlane.xlu0 %149
    %v151 = vsel %vm141, %v140, 0.0
    %152 = vadd.xlane.f32.xlu0 %v151
    %v153 = vpop.xlane.xlu0 %152
    %v154 = vmul.f32 %v144, 0.5
    %v155 = vmul.f32 %v147, 0.5
    %v156 = vmul.f32 %v150, 0.5
    %v157 = vmul.f32 %v153, 0.5
    %v162 = vlaneseq
    %v163 = vand.u32 %v162, 127
    %v164 = vlaneseq
    %v165 = vshrl.u32 %v164, 7
    %v166 = vsub.s32 %v163, %v165
    %v167 = vrot.slane %v154, %v166
    %v168 = vadd.s32 %v163, 4294967288
    %v169 = vlaneseq
    %v170 = vshrl.u32 %v169, 7
    %v171 = vsub.s32 %v168, %v170
    %v172 = vrot.slane %v155, %v171
    %vm173 = vcmask 130112
    %v174 = vsel %vm173, %v172, %v167
    %v175 = vadd.s32 %v163, 4294967280
    %v176 = vlaneseq
    %v177 = vshrl.u32 %v176, 7
    %v178 = vsub.s32 %v175, %v177
    %v179 = vrot.slane %v156, %v178
    %vm180 = vcmask 195712
    %v181 = vsel %vm180, %v179, %v174
    %v182 = vadd.s32 %v163, 4294967272
    %v183 = vlaneseq
    %v184 = vshrl.u32 %v183, 7
    %v185 = vsub.s32 %v182, %v184
    %v186 = vrot.slane %v157, %v185
    %vm187 = vcmask 261312
    %v188 = vsel %vm187, %v186, %v181
    %vm190 = vcmask 253952
    %191 = vst.msk [vmem:[#allocation3] sm:$0x1] %vm190, %v188
  $region9: #{vector_quantizer_forward.1} parent=0 // pred_fallthru
    _
  %v192 = vld [vmem:[%s51] sm:$0xff]
  %v193 = vld [vmem:[%s51 + $0x8] sm:$0xff]
  %v194 = vld [vmem:[%s51 + $0x10] sm:$0xff]
  %v195 = vld [vmem:[%s51 + $0x18] sm:$0xff]
  %v196 = vld [vmem:[%s51 + $0x20] sm:$0xff]
  %v197 = vld [vmem:[%s51 + $0x28] sm:$0xff]
  %v198 = vld [vmem:[%s51 + $0x30] sm:$0xff]
  %v199 = vld [vmem:[%s51 + $0x38] sm:$0xff]
  %v200 = vld [vmem:[%s51 + $0x40] sm:$0xff]
  %v201 = vld [vmem:[%s51 + $0x48] sm:$0xff]
  %v202 = vld [vmem:[%s51 + $0x50] sm:$0xff]
  %v203 = vld [vmem:[%s51 + $0x58] sm:$0xff]
  %v204 = vld [vmem:[%s51 + $0x60] sm:$0xff]
  %v205 = vld [vmem:[%s51 + $0x68] sm:$0xff]
  %v206 = vld [vmem:[%s51 + $0x70] sm:$0xff]
  %v207 = vld [vmem:[%s51 + $0x78] sm:$0xff]
  %v208 = vld [vmem:[%s51 + $0x80] sm:$0xff]
  %v209 = vld [vmem:[%s51 + $0x88] sm:$0xff]
  %v210 = vld [vmem:[%s51 + $0x90] sm:$0xff]
  %v211 = vld [vmem:[%s51 + $0x98] sm:$0xff]
  %v212 = vld [vmem:[%s51 + $0xa0] sm:$0xff]
  %v213 = vld [vmem:[%s51 + $0xa8] sm:$0xff]
  %v214 = vld [vmem:[%s51 + $0xb0] sm:$0xff]
  %v215 = vld [vmem:[%s51 + $0xb8] sm:$0xff]
  %v216 = vld [vmem:[%s51 + $0xc0] sm:$0xff]
  %v217 = vld [vmem:[%s51 + $0xc8] sm:$0xff]
  %v218 = vld [vmem:[%s51 + $0xd0] sm:$0xff]
  %v219 = vld [vmem:[%s51 + $0xd8] sm:$0xff]
  %v220 = vld [vmem:[%s51 + $0xe0] sm:$0xff]
  %v221 = vld [vmem:[%s51 + $0xe8] sm:$0xff]
  %v222 = vld [vmem:[%s51 + $0xf0] sm:$0xff]
  %v223 = vld [vmem:[%s51 + $0xf8] sm:$0xff]
  %v224 = vld [vmem:[%s51 + $0x100] sm:$0xff]
  %v225 = vld [vmem:[%s51 + $0x108] sm:$0xff]
  %v226 = vld [vmem:[%s51 + $0x110] sm:$0xff]
  %v227 = vld [vmem:[%s51 + $0x118] sm:$0xff]
  %v228 = vld [vmem:[%s51 + $0x120] sm:$0xff]
  %v229 = vld [vmem:[%s51 + $0x128] sm:$0xff]
  %v230 = vld [vmem:[%s51 + $0x130] sm:$0xff]
  %v231 = vld [vmem:[%s51 + $0x138] sm:$0xff]
  %v232 = vld [vmem:[%s51 + $0x140] sm:$0xff]
  %v233 = vld [vmem:[%s51 + $0x148] sm:$0xff]
  %v234 = vld [vmem:[%s51 + $0x150] sm:$0xff]
  %v235 = vld [vmem:[%s51 + $0x158] sm:$0xff]
  %v236 = vld [vmem:[%s51 + $0x160] sm:$0xff]
  %v237 = vld [vmem:[%s51 + $0x168] sm:$0xff]
  %v238 = vld [vmem:[%s51 + $0x170] sm:$0xff]
  %v239 = vld [vmem:[%s51 + $0x178] sm:$0xff]
  %v240 = vld [vmem:[%s51 + $0x180] sm:$0xff]
  %v241 = vld [vmem:[%s51 + $0x188] sm:$0xff]
  %v242 = vld [vmem:[%s51 + $0x190] sm:$0xff]
  %v243 = vld [vmem:[%s51 + $0x198] sm:$0xff]
  %v244 = vld [vmem:[%s51 + $0x1a0] sm:$0xff]
  %v245 = vld [vmem:[%s51 + $0x1a8] sm:$0xff]
  %v246 = vld [vmem:[%s51 + $0x1b0] sm:$0xff]
  %v247 = vld [vmem:[%s51 + $0x1b8] sm:$0xff]
  %v248 = vld [vmem:[%s51 + $0x1c0] sm:$0xff]
  %v249 = vld [vmem:[%s51 + $0x1c8] sm:$0xff]
  %v250 = vld [vmem:[%s51 + $0x1d0] sm:$0xff]
  %v251 = vld [vmem:[%s51 + $0x1d8] sm:$0xff]
  %v252 = vld [vmem:[%s51 + $0x1e0] sm:$0xff]
  %v253 = vld [vmem:[%s51 + $0x1e8] sm:$0xff]
  %v254 = vld [vmem:[%s51 + $0x1f0] sm:$0xff]
  %v255 = vld [vmem:[%s51 + $0x1f8] sm:$0xff]
  %v256 = vld [vmem:[#allocation2] sm:$0xff]
  %v257 = vld [vmem:[#allocation2 + $0x8] sm:$0xff]
  %v258 = vld [vmem:[#allocation2 + $0x10] sm:$0xff]
  %v259 = vld [vmem:[#allocation2 + $0x18] sm:$0xff]
  %vm260 = vcmask 130048
  %v262 = vsel %vm260, %v192, 0
  %v265 = vsel %vm260, %v193, 0
  %v268 = vsel %vm260, %v194, 0
  %v271 = vsel %vm260, %v195, 0
  %v274 = vsel %vm260, %v196, 0
  %v277 = vsel %vm260, %v197, 0
  %v280 = vsel %vm260, %v198, 0
  %v283 = vsel %vm260, %v199, 0
  %v286 = vsel %vm260, %v200, 0
  %v289 = vsel %vm260, %v201, 0
  %v292 = vsel %vm260, %v202, 0
  %v295 = vsel %vm260, %v203, 0
  %v298 = vsel %vm260, %v204, 0
  %v301 = vsel %vm260, %v205, 0
  %v304 = vsel %vm260, %v206, 0
  %v307 = vsel %vm260, %v207, 0
  %v310 = vsel %vm260, %v208, 0
  %v313 = vsel %vm260, %v209, 0
  %v316 = vsel %vm260, %v210, 0
  %v319 = vsel %vm260, %v211, 0
  %v322 = vsel %vm260, %v212, 0
  %v325 = vsel %vm260, %v213, 0
  %v328 = vsel %vm260, %v214, 0
  %v331 = vsel %vm260, %v215, 0
  %v334 = vsel %vm260, %v216, 0
  %v337 = vsel %vm260, %v217, 0
  %v340 = vsel %vm260, %v218, 0
  %v343 = vsel %vm260, %v219, 0
  %v346 = vsel %vm260, %v220, 0
  %v349 = vsel %vm260, %v221, 0
  %v352 = vsel %vm260, %v222, 0
  %v355 = vsel %vm260, %v223, 0
  %v358 = vsel %vm260, %v224, 0
  %v361 = vsel %vm260, %v225, 0
  %v364 = vsel %vm260, %v226, 0
  %v367 = vsel %vm260, %v227, 0
  %v370 = vsel %vm260, %v228, 0
  %v373 = vsel %vm260, %v229, 0
  %v376 = vsel %vm260, %v230, 0
  %v379 = vsel %vm260, %v231, 0
  %v382 = vsel %vm260, %v232, 0
  %v385 = vsel %vm260, %v233, 0
  %v388 = vsel %vm260, %v234, 0
  %v391 = vsel %vm260, %v235, 0
  %v394 = vsel %vm260, %v236, 0
  %v397 = vsel %vm260, %v237, 0
  %v400 = vsel %vm260, %v238, 0
  %v403 = vsel %vm260, %v239, 0
  %v406 = vsel %vm260, %v240, 0
  %v409 = vsel %vm260, %v241, 0
  %v412 = vsel %vm260, %v242, 0
  %v415 = vsel %vm260, %v243, 0
  %v418 = vsel %vm260, %v244, 0
  %v421 = vsel %vm260, %v245, 0
  %v424 = vsel %vm260, %v246, 0
  %v427 = vsel %vm260, %v247, 0
  %v430 = vsel %vm260, %v248, 0
  %v433 = vsel %vm260, %v249, 0
  %v436 = vsel %vm260, %v250, 0
  %v439 = vsel %vm260, %v251, 0
  %v442 = vsel %vm260, %v252, 0
  %v445 = vsel %vm260, %v253, 0
  %v448 = vsel %vm260, %v254, 0
  %v451 = vsel %vm260, %v255, 0
  %v454 = vsel %vm260, %v256, 0
  %v457 = vsel %vm260, %v257, 0
  %v460 = vsel %vm260, %v258, 0
  %v463 = vsel %vm260, %v259, 0
  %465 = vmatprep.subr.mxu0 0.0
  %466 = vmatpush1.xpose.msra.mxu0 %v454
  %467 = vmatprep.subr.mxu0 0.0
  %468 = vmatpush1.xpose.msra.mxu0 %v457
  %469 = vmatprep.subr.mxu0 0.0
  %470 = vmatpush1.xpose.msra.mxu0 %v460
  %471 = vmatprep.subr.mxu0 0.0
  %472 = vmatpush1.xpose.msra.mxu0 %v463
  %473 = vmatprep.subr.mxu0 0.0
  %474 = vmatpush1.xpose.msra.mxu0 0.0
  %475 = vmatprep.subr.mxu0 0.0
  %476 = vmatpush1.xpose.msra.mxu0 0.0
  %477 = vmatprep.subr.mxu0 0.0
  %478 = vmatpush1.xpose.msra.mxu0 0.0
  %479 = vmatprep.subr.mxu0 0.0
  %480 = vmatpush1.xpose.msra.mxu0 0.0
  %481 = vmatprep.subr.mxu0 0.0
  %482 = vmatpush1.xpose.msra.mxu0 0.0
  %483 = vmatprep.subr.mxu0 0.0
  %484 = vmatpush1.xpose.msra.mxu0 0.0
  %485 = vmatprep.subr.mxu0 0.0
  %486 = vmatpush1.xpose.msra.mxu0 0.0
  %487 = vmatprep.subr.mxu0 0.0
  %488 = vmatpush1.xpose.msra.mxu0 0.0
  %489 = vmatprep.subr.mxu0 0.0
  %490 = vmatpush1.xpose.msra.mxu0 0.0
  %491 = vmatprep.subr.mxu0 0.0
  %492 = vmatpush1.xpose.msra.mxu0 0.0
  %493 = vmatprep.subr.mxu0 0.0
  %494 = vmatpush1.xpose.msra.mxu0 0.0
  %495 = vmatprep.subr.mxu0 0.0
  %496 = vmatpush1.xpose.msra.mxu0 0.0
  %497 = vmatprep.subr.mxu0 0.0
  %498 = vmatpush1.xpose.msra.mxu0 0.0
  %499 = vmatprep.subr.mxu0 0.0
  %500 = vmatpush1.xpose.msra.mxu0 0.0
  %501 = vmatprep.subr.mxu0 0.0
  %502 = vmatpush1.xpose.msra.mxu0 0.0
  %503 = vmatprep.subr.mxu0 0.0
  %504 = vmatpush1.xpose.msra.mxu0 0.0
  %505 = vmatprep.subr.mxu0 0.0
  %506 = vmatpush1.xpose.msra.mxu0 0.0
  %507 = vmatprep.subr.mxu0 0.0
  %508 = vmatpush1.xpose.msra.mxu0 0.0
  %509 = vmatprep.subr.mxu0 0.0
  %510 = vmatpush1.xpose.msra.mxu0 0.0
  %511 = vmatprep.subr.mxu0 0.0
  %512 = vmatpush1.xpose.msra.mxu0 0.0
  %513 = vmatprep.subr.mxu0 0.0
  %514 = vmatpush1.xpose.msra.mxu0 0.0
  %515 = vmatprep.subr.mxu0 0.0
  %516 = vmatpush1.xpose.msra.mxu0 0.0
  %517 = vmatprep.subr.mxu0 0.0
  %518 = vmatpush1.xpose.msra.mxu0 0.0
  %519 = vmatprep.subr.mxu0 0.0
  %520 = vmatpush1.xpose.msra.mxu0 0.0
  %521 = vmatprep.subr.mxu0 0.0
  %522 = vmatpush1.xpose.msra.mxu0 0.0
  %523 = vmatprep.subr.mxu0 0.0
  %524 = vmatpush1.xpose.msra.mxu0 0.0
  %525 = vmatprep.subr.mxu0 0.0
  %526 = vmatpush1.xpose.msra.mxu0 0.0
  %527 = vmatprep.subr.mxu0 0.0
  %528 = vmatpush1.xpose.msra.mxu0 0.0
  %529 = vmatprep.mubr.f32.mxu0 0.0
  %530 = vmatmul.mubr.f32.gmra.mrb[0].mxu0 %v262
  %v531 = vpop.f32.mrb[0].mxu0
  %v532 = vadd.f32 0.0, %v531
  %v533 = vpop.f32.mrb[0].mxu0
  %534 = vmatprep.mubr.f32.mxu0 0.0
  %535 = vmatmul.mubr.f32.gmra.mrb[0].mxu0 %v265
  %v536 = vpop.f32.mrb[0].mxu0
  %v537 = vadd.f32 0.0, %v536
  %v538 = vpop.f32.mrb[0].mxu0
  %539 = vmatprep.mubr.f32.mxu0 0.0
  %540 = vmatmul.mubr.f32.gmra.mrb[0].mxu0 %v268
  %v541 = vpop.f32.mrb[0].mxu0
  %v542 = vadd.f32 0.0, %v541
  %v543 = vpop.f32.mrb[0].mxu0
  %544 = vmatprep.mubr.f32.mxu0 0.0
  %545 = vmatmul.mubr.f32.gmra.mrb[0].mxu0 %v271
  %v546 = vpop.f32.mrb[0].mxu0
  %v547 = vadd.f32 0.0, %v546
  %v548 = vpop.f32.mrb[0].mxu0
  %549 = vmatprep.mubr.f32.mxu0 0.0
  %550 = vmatmul.mubr.f32.gmra.mrb[0].mxu0 %v274
  %v551 = vpop.f32.mrb[0].mxu0
  %v552 = vadd.f32 0.0, %v551
  %v553 = vpop.f32.mrb[0].mxu0
  %554 = vmatprep.mubr.f32.mxu0 0.0
  %555 = vmatmul.mubr.f32.gmra.mrb[0].mxu0 %v277
  %v556 = vpop.f32.mrb[0].mxu0
  %v557 = vadd.f32 0.0, %v556
  %v558 = vpop.f32.mrb[0].mxu0
  %559 = vmatprep.mubr.f32.mxu0 0.0
  %560 = vmatmul.mubr.f32.gmra.mrb[0].mxu0 %v280
  %v561 = vpop.f32.mrb[0].mxu0
  %v562 = vadd.f32 0.0, %v561
  %v563 = vpop.f32.mrb[0].mxu0
  %564 = vmatprep.mubr.f32.mxu0 0.0
  %565 = vmatmul.mubr.f32.gmra.mrb[0].mxu0 %v283
  %v566 = vpop.f32.mrb[0].mxu0
  %v567 = vadd.f32 0.0, %v566
  %v568 = vpop.f32.mrb[0].mxu0
  %569 = vmatprep.mubr.f32.mxu0 0.0
  %570 = vmatmul.mubr.f32.gmra.mrb[0].mxu0 %v286
  %v571 = vpop.f32.mrb[0].mxu0
  %v572 = vadd.f32 0.0, %v571
  %v573 = vpop.f32.mrb[0].mxu0
  %574 = vmatprep.mubr.f32.mxu0 0.0
  %575 = vmatmul.mubr.f32.gmra.mrb[0].mxu0 %v289
  %v576 = vpop.f32.mrb[0].mxu0
  %v577 = vadd.f32 0.0, %v576
  %v578 = vpop.f32.mrb[0].mxu0
  %579 = vmatprep.mubr.f32.mxu0 0.0
  %580 = vmatmul.mubr.f32.gmra.mrb[0].mxu0 %v292
  %v581 = vpop.f32.mrb[0].mxu0
  %v582 = vadd.f32 0.0, %v581
  %v583 = vpop.f32.mrb[0].mxu0
  %584 = vmatprep.mubr.f32.mxu0 0.0
  %585 = vmatmul.mubr.f32.gmra.mrb[0].mxu0 %v295
  %v586 = vpop.f32.mrb[0].mxu0
  %v587 = vadd.f32 0.0, %v586
  %v588 = vpop.f32.mrb[0].mxu0
  %589 = vmatprep.mubr.f32.mxu0 0.0
  %590 = vmatmul.mubr.f32.gmra.mrb[0].mxu0 %v298
  %v591 = vpop.f32.mrb[0].mxu0
  %v592 = vadd.f32 0.0, %v591
  %v593 = vpop.f32.mrb[0].mxu0
  %594 = vmatprep.mubr.f32.mxu0 0.0
  %595 = vmatmul.mubr.f32.gmra.mrb[0].mxu0 %v301
  %v596 = vpop.f32.mrb[0].mxu0
  %v597 = vadd.f32 0.0, %v596
  %v598 = vpop.f32.mrb[0].mxu0
  %599 = vmatprep.mubr.f32.mxu0 0.0
  %600 = vmatmul.mubr.f32.gmra.mrb[0].mxu0 %v304
  %v601 = vpop.f32.mrb[0].mxu0
  %v602 = vadd.f32 0.0, %v601
  %v603 = vpop.f32.mrb[0].mxu0
  %604 = vmatprep.mubr.f32.mxu0 0.0
  %605 = vmatmul.mubr.f32.gmra.mrb[0].mxu0 %v307
  %v606 = vpop.f32.mrb[0].mxu0
  %v607 = vadd.f32 0.0, %v606
  %v608 = vpop.f32.mrb[0].mxu0
  %609 = vmatprep.mubr.f32.mxu0 0.0
  %610 = vmatmul.mubr.f32.gmra.mrb[0].mxu0 %v310
  %v611 = vpop.f32.mrb[0].mxu0
  %v612 = vadd.f32 0.0, %v611
  %v613 = vpop.f32.mrb[0].mxu0
  %614 = vmatprep.mubr.f32.mxu0 0.0
  %615 = vmatmul.mubr.f32.gmra.mrb[0].mxu0 %v313
  %v616 = vpop.f32.mrb[0].mxu0
  %v617 = vadd.f32 0.0, %v616
  %v618 = vpop.f32.mrb[0].mxu0
  %619 = vmatprep.mubr.f32.mxu0 0.0
  %620 = vmatmul.mubr.f32.gmra.mrb[0].mxu0 %v316
  %v621 = vpop.f32.mrb[0].mxu0
  %v622 = vadd.f32 0.0, %v621
  %v623 = vpop.f32.mrb[0].mxu0
  %624 = vmatprep.mubr.f32.mxu0 0.0
  %625 = vmatmul.mubr.f32.gmra.mrb[0].mxu0 %v319
  %v626 = vpop.f32.mrb[0].mxu0
  %v627 = vadd.f32 0.0, %v626
  %v628 = vpop.f32.mrb[0].mxu0
  %629 = vmatprep.mubr.f32.mxu0 0.0
  %630 = vmatmul.mubr.f32.gmra.mrb[0].mxu0 %v322
  %v631 = vpop.f32.mrb[0].mxu0
  %v632 = vadd.f32 0.0, %v631
  %v633 = vpop.f32.mrb[0].mxu0
  %634 = vmatprep.mubr.f32.mxu0 0.0
  %635 = vmatmul.mubr.f32.gmra.mrb[0].mxu0 %v325
  %v636 = vpop.f32.mrb[0].mxu0
  %v637 = vadd.f32 0.0, %v636
  %v638 = vpop.f32.mrb[0].mxu0
  %639 = vmatprep.mubr.f32.mxu0 0.0
  %640 = vmatmul.mubr.f32.gmra.mrb[0].mxu0 %v328
  %v641 = vpop.f32.mrb[0].mxu0
  %v642 = vadd.f32 0.0, %v641
  %v643 = vpop.f32.mrb[0].mxu0
  %644 = vmatprep.mubr.f32.mxu0 0.0
  %645 = vmatmul.mubr.f32.gmra.mrb[0].mxu0 %v331
  %v646 = vpop.f32.mrb[0].mxu0
  %v647 = vadd.f32 0.0, %v646
  %v648 = vpop.f32.mrb[0].mxu0
  %649 = vmatprep.mubr.f32.mxu0 0.0
  %650 = vmatmul.mubr.f32.gmra.mrb[0].mxu0 %v334
  %v651 = vpop.f32.mrb[0].mxu0
  %v652 = vadd.f32 0.0, %v651
  %v653 = vpop.f32.mrb[0].mxu0
  %654 = vmatprep.mubr.f32.mxu0 0.0
  %655 = vmatmul.mubr.f32.gmra.mrb[0].mxu0 %v337
  %v656 = vpop.f32.mrb[0].mxu0
  %v657 = vadd.f32 0.0, %v656
  %v658 = vpop.f32.mrb[0].mxu0
  %659 = vmatprep.mubr.f32.mxu0 0.0
  %660 = vmatmul.mubr.f32.gmra.mrb[0].mxu0 %v340
  %v661 = vpop.f32.mrb[0].mxu0
  %v662 = vadd.f32 0.0, %v661
  %v663 = vpop.f32.mrb[0].mxu0
  %664 = vmatprep.mubr.f32.mxu0 0.0
  %665 = vmatmul.mubr.f32.gmra.mrb[0].mxu0 %v343
  %v666 = vpop.f32.mrb[0].mxu0
  %v667 = vadd.f32 0.0, %v666
  %v668 = vpop.f32.mrb[0].mxu0
  %669 = vmatprep.mubr.f32.mxu0 0.0
  %670 = vmatmul.mubr.f32.gmra.mrb[0].mxu0 %v346
  %v671 = vpop.f32.mrb[0].mxu0
  %v672 = vadd.f32 0.0, %v671
  %v673 = vpop.f32.mrb[0].mxu0
  %674 = vmatprep.mubr.f32.mxu0 0.0
  %675 = vmatmul.mubr.f32.gmra.mrb[0].mxu0 %v349
  %v676 = vpop.f32.mrb[0].mxu0
  %v677 = vadd.f32 0.0, %v676
  %v678 = vpop.f32.mrb[0].mxu0
  %679 = vmatprep.mubr.f32.mxu0 0.0
  %680 = vmatmul.mubr.f32.gmra.mrb[0].mxu0 %v352
  %v681 = vpop.f32.mrb[0].mxu0
  %v682 = vadd.f32 0.0, %v681
  %v683 = vpop.f32.mrb[0].mxu0
  %684 = vmatprep.mubr.f32.mxu0 0.0
  %685 = vmatmul.mubr.f32.gmra.mrb[0].mxu0 %v355
  %v686 = vpop.f32.mrb[0].mxu0
  %v687 = vadd.f32 0.0, %v686
  %v688 = vpop.f32.mrb[0].mxu0
  %689 = vmatprep.mubr.f32.mxu0 0.0
  %690 = vmatmul.mubr.f32.gmra.mrb[0].mxu0 %v358
  %v691 = vpop.f32.mrb[0].mxu0
  %v692 = vadd.f32 0.0, %v691
  %v693 = vpop.f32.mrb[0].mxu0
  %694 = vmatprep.mubr.f32.mxu0 0.0
  %695 = vmatmul.mubr.f32.gmra.mrb[0].mxu0 %v361
  %v696 = vpop.f32.mrb[0].mxu0
  %v697 = vadd.f32 0.0, %v696
  %v698 = vpop.f32.mrb[0].mxu0
  %699 = vmatprep.mubr.f32.mxu0 0.0
  %700 = vmatmul.mubr.f32.gmra.mrb[0].mxu0 %v364
  %v701 = vpop.f32.mrb[0].mxu0
  %v702 = vadd.f32 0.0, %v701
  %v703 = vpop.f32.mrb[0].mxu0
  %704 = vmatprep.mubr.f32.mxu0 0.0
  %705 = vmatmul.mubr.f32.gmra.mrb[0].mxu0 %v367
  %v706 = vpop.f32.mrb[0].mxu0
  %v707 = vadd.f32 0.0, %v706
  %v708 = vpop.f32.mrb[0].mxu0
  %709 = vmatprep.mubr.f32.mxu0 0.0
  %710 = vmatmul.mubr.f32.gmra.mrb[0].mxu0 %v370
  %v711 = vpop.f32.mrb[0].mxu0
  %v712 = vadd.f32 0.0, %v711
  %v713 = vpop.f32.mrb[0].mxu0
  %714 = vmatprep.mubr.f32.mxu0 0.0
  %715 = vmatmul.mubr.f32.gmra.mrb[0].mxu0 %v373
  %v716 = vpop.f32.mrb[0].mxu0
  %v717 = vadd.f32 0.0, %v716
  %v718 = vpop.f32.mrb[0].mxu0
  %719 = vmatprep.mubr.f32.mxu0 0.0
  %720 = vmatmul.mubr.f32.gmra.mrb[0].mxu0 %v376
  %v721 = vpop.f32.mrb[0].mxu0
  %v722 = vadd.f32 0.0, %v721
  %v723 = vpop.f32.mrb[0].mxu0
  %724 = vmatprep.mubr.f32.mxu0 0.0
  %725 = vmatmul.mubr.f32.gmra.mrb[0].mxu0 %v379
  %v726 = vpop.f32.mrb[0].mxu0
  %v727 = vadd.f32 0.0, %v726
  %v728 = vpop.f32.mrb[0].mxu0
  %729 = vmatprep.mubr.f32.mxu0 0.0
  %730 = vmatmul.mubr.f32.gmra.mrb[0].mxu0 %v382
  %v731 = vpop.f32.mrb[0].mxu0
  %v732 = vadd.f32 0.0, %v731
  %v733 = vpop.f32.mrb[0].mxu0
  %734 = vmatprep.mubr.f32.mxu0 0.0
  %735 = vmatmul.mubr.f32.gmra.mrb[0].mxu0 %v385
  %v736 = vpop.f32.mrb[0].mxu0
  %v737 = vadd.f32 0.0, %v736
  %v738 = vpop.f32.mrb[0].mxu0
  %739 = vmatprep.mubr.f32.mxu0 0.0
  %740 = vmatmul.mubr.f32.gmra.mrb[0].mxu0 %v388
  %v741 = vpop.f32.mrb[0].mxu0
  %v742 = vadd.f32 0.0, %v741
  %v743 = vpop.f32.mrb[0].mxu0
  %744 = vmatprep.mubr.f32.mxu0 0.0
  %745 = vmatmul.mubr.f32.gmra.mrb[0].mxu0 %v391
  %v746 = vpop.f32.mrb[0].mxu0
  %v747 = vadd.f32 0.0, %v746
  %v748 = vpop.f32.mrb[0].mxu0
  %749 = vmatprep.mubr.f32.mxu0 0.0
  %750 = vmatmul.mubr.f32.gmra.mrb[0].mxu0 %v394
  %v751 = vpop.f32.mrb[0].mxu0
  %v752 = vadd.f32 0.0, %v751
  %v753 = vpop.f32.mrb[0].mxu0
  %754 = vmatprep.mubr.f32.mxu0 0.0
  %755 = vmatmul.mubr.f32.gmra.mrb[0].mxu0 %v397
  %v756 = vpop.f32.mrb[0].mxu0
  %v757 = vadd.f32 0.0, %v756
  %v758 = vpop.f32.mrb[0].mxu0
  %759 = vmatprep.mubr.f32.mxu0 0.0
  %760 = vmatmul.mubr.f32.gmra.mrb[0].mxu0 %v400
  %v761 = vpop.f32.mrb[0].mxu0
  %v762 = vadd.f32 0.0, %v761
  %v763 = vpop.f32.mrb[0].mxu0
  %764 = vmatprep.mubr.f32.mxu0 0.0
  %765 = vmatmul.mubr.f32.gmra.mrb[0].mxu0 %v403
  %v766 = vpop.f32.mrb[0].mxu0
  %v767 = vadd.f32 0.0, %v766
  %v768 = vpop.f32.mrb[0].mxu0
  %769 = vmatprep.mubr.f32.mxu0 0.0
  %770 = vmatmul.mubr.f32.gmra.mrb[0].mxu0 %v406
  %v771 = vpop.f32.mrb[0].mxu0
  %v772 = vadd.f32 0.0, %v771
  %v773 = vpop.f32.mrb[0].mxu0
  %774 = vmatprep.mubr.f32.mxu0 0.0
  %775 = vmatmul.mubr.f32.gmra.mrb[0].mxu0 %v409
  %v776 = vpop.f32.mrb[0].mxu0
  %v777 = vadd.f32 0.0, %v776
  %v778 = vpop.f32.mrb[0].mxu0
  %779 = vmatprep.mubr.f32.mxu0 0.0
  %780 = vmatmul.mubr.f32.gmra.mrb[0].mxu0 %v412
  %v781 = vpop.f32.mrb[0].mxu0
  %v782 = vadd.f32 0.0, %v781
  %v783 = vpop.f32.mrb[0].mxu0
  %784 = vmatprep.mubr.f32.mxu0 0.0
  %785 = vmatmul.mubr.f32.gmra.mrb[0].mxu0 %v415
  %v786 = vpop.f32.mrb[0].mxu0
  %v787 = vadd.f32 0.0, %v786
  %v788 = vpop.f32.mrb[0].mxu0
  %789 = vmatprep.mubr.f32.mxu0 0.0
  %790 = vmatmul.mubr.f32.gmra.mrb[0].mxu0 %v418
  %v791 = vpop.f32.mrb[0].mxu0
  %v792 = vadd.f32 0.0, %v791
  %v793 = vpop.f32.mrb[0].mxu0
  %794 = vmatprep.mubr.f32.mxu0 0.0
  %795 = vmatmul.mubr.f32.gmra.mrb[0].mxu0 %v421
  %v796 = vpop.f32.mrb[0].mxu0
  %v797 = vadd.f32 0.0, %v796
  %v798 = vpop.f32.mrb[0].mxu0
  %799 = vmatprep.mubr.f32.mxu0 0.0
  %800 = vmatmul.mubr.f32.gmra.mrb[0].mxu0 %v424
  %v801 = vpop.f32.mrb[0].mxu0
  %v802 = vadd.f32 0.0, %v801
  %v803 = vpop.f32.mrb[0].mxu0
  %804 = vmatprep.mubr.f32.mxu0 0.0
  %805 = vmatmul.mubr.f32.gmra.mrb[0].mxu0 %v427
  %v806 = vpop.f32.mrb[0].mxu0
  %v807 = vadd.f32 0.0, %v806
  %v808 = vpop.f32.mrb[0].mxu0
  %809 = vmatprep.mubr.f32.mxu0 0.0
  %810 = vmatmul.mubr.f32.gmra.mrb[0].mxu0 %v430
  %v811 = vpop.f32.mrb[0].mxu0
  %v812 = vadd.f32 0.0, %v811
  %v813 = vpop.f32.mrb[0].mxu0
  %814 = vmatprep.mubr.f32.mxu0 0.0
  %815 = vmatmul.mubr.f32.gmra.mrb[0].mxu0 %v433
  %v816 = vpop.f32.mrb[0].mxu0
  %v817 = vadd.f32 0.0, %v816
  %v818 = vpop.f32.mrb[0].mxu0
  %819 = vmatprep.mubr.f32.mxu0 0.0
  %820 = vmatmul.mubr.f32.gmra.mrb[0].mxu0 %v436
  %v821 = vpop.f32.mrb[0].mxu0
  %v822 = vadd.f32 0.0, %v821
  %v823 = vpop.f32.mrb[0].mxu0
  %824 = vmatprep.mubr.f32.mxu0 0.0
  %825 = vmatmul.mubr.f32.gmra.mrb[0].mxu0 %v439
  %v826 = vpop.f32.mrb[0].mxu0
  %v827 = vadd.f32 0.0, %v826
  %v828 = vpop.f32.mrb[0].mxu0
  %829 = vmatprep.mubr.f32.mxu0 0.0
  %830 = vmatmul.mubr.f32.gmra.mrb[0].mxu0 %v442
  %v831 = vpop.f32.mrb[0].mxu0
  %v832 = vadd.f32 0.0, %v831
  %v833 = vpop.f32.mrb[0].mxu0
  %834 = vmatprep.mubr.f32.mxu0 0.0
  %835 = vmatmul.mubr.f32.gmra.mrb[0].mxu0 %v445
  %v836 = vpop.f32.mrb[0].mxu0
  %v837 = vadd.f32 0.0, %v836
  %v838 = vpop.f32.mrb[0].mxu0
  %839 = vmatprep.mubr.f32.mxu0 0.0
  %840 = vmatmul.mubr.f32.gmra.mrb[0].mxu0 %v448
  %v841 = vpop.f32.mrb[0].mxu0
  %v842 = vadd.f32 0.0, %v841
  %v843 = vpop.f32.mrb[0].mxu0
  %844 = vmatprep.mubr.f32.mxu0 0.0
  %845 = vmatmul.mubr.f32.gmra.mrb[0].mxu0 %v451
  %v846 = vpop.f32.mrb[0].mxu0
  %v847 = vadd.f32 0.0, %v846
  %v848 = vpop.f32.mrb[0].mxu0
  %849 = vdwg.mxu0
  %v850 = vld [vmem:[#allocation3] sm:$0x1]
  %v852 = vlaneseq
  %v853 = vshrl.u32 %v852, 7
  %v854 = vsub.s32 0, %v853
  %v855 = vrot.slane %v850, %v854
  %v857 = vsub.f32 %v855, %v532
  %v858 = vsub.f32 %v855, %v537
  %v859 = vsub.f32 %v855, %v542
  %v860 = vsub.f32 %v855, %v547
  %v861 = vsub.f32 %v855, %v552
  %v862 = vsub.f32 %v855, %v557
  %v863 = vsub.f32 %v855, %v562
  %v864 = vsub.f32 %v855, %v567
  %v865 = vsub.f32 %v855, %v572
  %v866 = vsub.f32 %v855, %v577
  %v867 = vsub.f32 %v855, %v582
  %v868 = vsub.f32 %v855, %v587
  %v869 = vsub.f32 %v855, %v592
  %v870 = vsub.f32 %v855, %v597
  %v871 = vsub.f32 %v855, %v602
  %v872 = vsub.f32 %v855, %v607
  %v873 = vsub.f32 %v855, %v612
  %v874 = vsub.f32 %v855, %v617
  %v875 = vsub.f32 %v855, %v622
  %v876 = vsub.f32 %v855, %v627
  %v877 = vsub.f32 %v855, %v632
  %v878 = vsub.f32 %v855, %v637
  %v879 = vsub.f32 %v855, %v642
  %v880 = vsub.f32 %v855, %v647
  %v881 = vsub.f32 %v855, %v652
  %v882 = vsub.f32 %v855, %v657
  %v883 = vsub.f32 %v855, %v662
  %v884 = vsub.f32 %v855, %v667
  %v885 = vsub.f32 %v855, %v672
  %v886 = vsub.f32 %v855, %v677
  %v887 = vsub.f32 %v855, %v682
  %v888 = vsub.f32 %v855, %v687
  %v889 = vsub.f32 %v855, %v692
  %v890 = vsub.f32 %v855, %v697
  %v891 = vsub.f32 %v855, %v702
  %v892 = vsub.f32 %v855, %v707
  %v893 = vsub.f32 %v855, %v712
  %v894 = vsub.f32 %v855, %v717
  %v895 = vsub.f32 %v855, %v722
  %v896 = vsub.f32 %v855, %v727
  %v897 = vsub.f32 %v855, %v732
  %v898 = vsub.f32 %v855, %v737
  %v899 = vsub.f32 %v855, %v742
  %v900 = vsub.f32 %v855, %v747
  %v901 = vsub.f32 %v855, %v752
  %v902 = vsub.f32 %v855, %v757
  %v903 = vsub.f32 %v855, %v762
  %v904 = vsub.f32 %v855, %v767
  %v905 = vsub.f32 %v855, %v772
  %v906 = vsub.f32 %v855, %v777
  %v907 = vsub.f32 %v855, %v782
  %v908 = vsub.f32 %v855, %v787
  %v909 = vsub.f32 %v855, %v792
  %v910 = vsub.f32 %v855, %v797
  %v911 = vsub.f32 %v855, %v802
  %v912 = vsub.f32 %v855, %v807
  %v913 = vsub.f32 %v855, %v812
  %v914 = vsub.f32 %v855, %v817
  %v915 = vsub.f32 %v855, %v822
  %v916 = vsub.f32 %v855, %v827
  %v917 = vsub.f32 %v855, %v832
  %v918 = vsub.f32 %v855, %v837
  %v919 = vsub.f32 %v855, %v842
  %v920 = vsub.f32 %v855, %v847
  %vm921 = vcmask 261120
  %v922 = vsel %vm921, %v857, inf
  %923 = vmin.xlane.f32.xlu0 %v922
  %v924 = vpop.xlane.xlu0 %923
  %v925 = vsel %vm921, %v858, inf
  %926 = vmin.xlane.f32.xlu0 %v925
  %v927 = vpop.xlane.xlu0 %926
  %v928 = vsel %vm921, %v859, inf
  %929 = vmin.xlane.f32.xlu0 %v928
  %v930 = vpop.xlane.xlu0 %929
  %v931 = vsel %vm921, %v860, inf
  %932 = vmin.xlane.f32.xlu0 %v931
  %v933 = vpop.xlane.xlu0 %932
  %v934 = vsel %vm921, %v861, inf
  %935 = vmin.xlane.f32.xlu0 %v934
  %v936 = vpop.xlane.xlu0 %935
  %v937 = vsel %vm921, %v862, inf
  %938 = vmin.xlane.f32.xlu0 %v937
  %v939 = vpop.xlane.xlu0 %938
  %v940 = vsel %vm921, %v863, inf
  %941 = vmin.xlane.f32.xlu0 %v940
  %v942 = vpop.xlane.xlu0 %941
  %v943 = vsel %vm921, %v864, inf
  %944 = vmin.xlane.f32.xlu0 %v943
  %v945 = vpop.xlane.xlu0 %944
  %v946 = vsel %vm921, %v865, inf
  %947 = vmin.xlane.f32.xlu0 %v946
  %v948 = vpop.xlane.xlu0 %947
  %v949 = vsel %vm921, %v866, inf
  %950 = vmin.xlane.f32.xlu0 %v949
  %v951 = vpop.xlane.xlu0 %950
  %v952 = vsel %vm921, %v867, inf
  %953 = vmin.xlane.f32.xlu0 %v952
  %v954 = vpop.xlane.xlu0 %953
  %v955 = vsel %vm921, %v868, inf
  %956 = vmin.xlane.f32.xlu0 %v955
  %v957 = vpop.xlane.xlu0 %956
  %v958 = vsel %vm921, %v869, inf
  %959 = vmin.xlane.f32.xlu0 %v958
  %v960 = vpop.xlane.xlu0 %959
  %v961 = vsel %vm921, %v870, inf
  %962 = vmin.xlane.f32.xlu0 %v961
  %v963 = vpop.xlane.xlu0 %962
  %v964 = vsel %vm921, %v871, inf
  %965 = vmin.xlane.f32.xlu0 %v964
  %v966 = vpop.xlane.xlu0 %965
  %v967 = vsel %vm921, %v872, inf
  %968 = vmin.xlane.f32.xlu0 %v967
  %v969 = vpop.xlane.xlu0 %968
  %v970 = vsel %vm921, %v873, inf
  %971 = vmin.xlane.f32.xlu0 %v970
  %v972 = vpop.xlane.xlu0 %971
  %v973 = vsel %vm921, %v874, inf
  %974 = vmin.xlane.f32.xlu0 %v973
  %v975 = vpop.xlane.xlu0 %974
  %v976 = vsel %vm921, %v875, inf
  %977 = vmin.xlane.f32.xlu0 %v976
  %v978 = vpop.xlane.xlu0 %977
  %v979 = vsel %vm921, %v876, inf
  %980 = vmin.xlane.f32.xlu0 %v979
  %v981 = vpop.xlane.xlu0 %980
  %v982 = vsel %vm921, %v877, inf
  %983 = vmin.xlane.f32.xlu0 %v982
  %v984 = vpop.xlane.xlu0 %983
  %v985 = vsel %vm921, %v878, inf
  %986 = vmin.xlane.f32.xlu0 %v985
  %v987 = vpop.xlane.xlu0 %986
  %v988 = vsel %vm921, %v879, inf
  %989 = vmin.xlane.f32.xlu0 %v988
  %v990 = vpop.xlane.xlu0 %989
  %v991 = vsel %vm921, %v880, inf
  %992 = vmin.xlane.f32.xlu0 %v991
  %v993 = vpop.xlane.xlu0 %992
  %v994 = vsel %vm921, %v881, inf
  %995 = vmin.xlane.f32.xlu0 %v994
  %v996 = vpop.xlane.xlu0 %995
  %v997 = vsel %vm921, %v882, inf
  %998 = vmin.xlane.f32.xlu0 %v997
  %v999 = vpop.xlane.xlu0 %998
  %v1000 = vsel %vm921, %v883, inf
  %1001 = vmin.xlane.f32.xlu0 %v1000
  %v1002 = vpop.xlane.xlu0 %1001
  %v1003 = vsel %vm921, %v884, inf
  %1004 = vmin.xlane.f32.xlu0 %v1003
  %v1005 = vpop.xlane.xlu0 %1004
  %v1006 = vsel %vm921, %v885, inf
  %1007 = vmin.xlane.f32.xlu0 %v1006
  %v1008 = vpop.xlane.xlu0 %1007
  %v1009 = vsel %vm921, %v886, inf
  %1010 = vmin.xlane.f32.xlu0 %v1009
  %v1011 = vpop.xlane.xlu0 %1010
  %v1012 = vsel %vm921, %v887, inf
  %1013 = vmin.xlane.f32.xlu0 %v1012
  %v1014 = vpop.xlane.xlu0 %1013
  %v1015 = vsel %vm921, %v888, inf
  %1016 = vmin.xlane.f32.xlu0 %v1015
  %v1017 = vpop.xlane.xlu0 %1016
  %v1018 = vsel %vm921, %v889, inf
  %1019 = vmin.xlane.f32.xlu0 %v1018
  %v1020 = vpop.xlane.xlu0 %1019
  %v1021 = vsel %vm921, %v890, inf
  %1022 = vmin.xlane.f32.xlu0 %v1021
  %v1023 = vpop.xlane.xlu0 %1022
  %v1024 = vsel %vm921, %v891, inf
  %1025 = vmin.xlane.f32.xlu0 %v1024
  %v1026 = vpop.xlane.xlu0 %1025
  %v1027 = vsel %vm921, %v892, inf
  %1028 = vmin.xlane.f32.xlu0 %v1027
  %v1029 = vpop.xlane.xlu0 %1028
  %v1030 = vsel %vm921, %v893, inf
  %1031 = vmin.xlane.f32.xlu0 %v1030
  %v1032 = vpop.xlane.xlu0 %1031
  %v1033 = vsel %vm921, %v894, inf
  %1034 = vmin.xlane.f32.xlu0 %v1033
  %v1035 = vpop.xlane.xlu0 %1034
  %v1036 = vsel %vm921, %v895, inf
  %1037 = vmin.xlane.f32.xlu0 %v1036
  %v1038 = vpop.xlane.xlu0 %1037
  %v1039 = vsel %vm921, %v896, inf
  %1040 = vmin.xlane.f32.xlu0 %v1039
  %v1041 = vpop.xlane.xlu0 %1040
  %v1042 = vsel %vm921, %v897, inf
  %1043 = vmin.xlane.f32.xlu0 %v1042
  %v1044 = vpop.xlane.xlu0 %1043
  %v1045 = vsel %vm921, %v898, inf
  %1046 = vmin.xlane.f32.xlu0 %v1045
  %v1047 = vpop.xlane.xlu0 %1046
  %v1048 = vsel %vm921, %v899, inf
  %1049 = vmin.xlane.f32.xlu0 %v1048
  %v1050 = vpop.xlane.xlu0 %1049
  %v1051 = vsel %vm921, %v900, inf
  %1052 = vmin.xlane.f32.xlu0 %v1051
  %v1053 = vpop.xlane.xlu0 %1052
  %v1054 = vsel %vm921, %v901, inf
  %1055 = vmin.xlane.f32.xlu0 %v1054
  %v1056 = vpop.xlane.xlu0 %1055
  %v1057 = vsel %vm921, %v902, inf
  %1058 = vmin.xlane.f32.xlu0 %v1057
  %v1059 = vpop.xlane.xlu0 %1058
  %v1060 = vsel %vm921, %v903, inf
  %1061 = vmin.xlane.f32.xlu0 %v1060
  %v1062 = vpop.xlane.xlu0 %1061
  %v1063 = vsel %vm921, %v904, inf
  %1064 = vmin.xlane.f32.xlu0 %v1063
  %v1065 = vpop.xlane.xlu0 %1064
  %v1066 = vsel %vm921, %v905, inf
  %1067 = vmin.xlane.f32.xlu0 %v1066
  %v1068 = vpop.xlane.xlu0 %1067
  %v1069 = vsel %vm921, %v906, inf
  %1070 = vmin.xlane.f32.xlu0 %v1069
  %v1071 = vpop.xlane.xlu0 %1070
  %v1072 = vsel %vm921, %v907, inf
  %1073 = vmin.xlane.f32.xlu0 %v1072
  %v1074 = vpop.xlane.xlu0 %1073
  %v1075 = vsel %vm921, %v908, inf
  %1076 = vmin.xlane.f32.xlu0 %v1075
  %v1077 = vpop.xlane.xlu0 %1076
  %v1078 = vsel %vm921, %v909, inf
  %1079 = vmin.xlane.f32.xlu0 %v1078
  %v1080 = vpop.xlane.xlu0 %1079
  %v1081 = vsel %vm921, %v910, inf
  %1082 = vmin.xlane.f32.xlu0 %v1081
  %v1083 = vpop.xlane.xlu0 %1082
  %v1084 = vsel %vm921, %v911, inf
  %1085 = vmin.xlane.f32.xlu0 %v1084
  %v1086 = vpop.xlane.xlu0 %1085
  %v1087 = vsel %vm921, %v912, inf
  %1088 = vmin.xlane.f32.xlu0 %v1087
  %v1089 = vpop.xlane.xlu0 %1088
  %v1090 = vsel %vm921, %v913, inf
  %1091 = vmin.xlane.f32.xlu0 %v1090
  %v1092 = vpop.xlane.xlu0 %1091
  %v1093 = vsel %vm921, %v914, inf
  %1094 = vmin.xlane.f32.xlu0 %v1093
  %v1095 = vpop.xlane.xlu0 %1094
  %v1096 = vsel %vm921, %v915, inf
  %1097 = vmin.xlane.f32.xlu0 %v1096
  %v1098 = vpop.xlane.xlu0 %1097
  %v1099 = vsel %vm921, %v916, inf
  %1100 = vmin.xlane.f32.xlu0 %v1099
  %v1101 = vpop.xlane.xlu0 %1100
  %v1102 = vsel %vm921, %v917, inf
  %1103 = vmin.xlane.f32.xlu0 %v1102
  %v1104 = vpop.xlane.xlu0 %1103
  %v1105 = vsel %vm921, %v918, inf
  %1106 = vmin.xlane.f32.xlu0 %v1105
  %v1107 = vpop.xlane.xlu0 %1106
  %v1108 = vsel %vm921, %v919, inf
  %1109 = vmin.xlane.f32.xlu0 %v1108
  %v1110 = vpop.xlane.xlu0 %1109
  %v1111 = vsel %vm921, %v920, inf
  %1112 = vmin.xlane.f32.xlu0 %v1111
  %v1113 = vpop.xlane.xlu0 %1112
  %v1114 = vlaneseq
  %v1115 = vand.u32 %v1114, 127
  %vm1116 = vcmp.eq.f32.partialorder %v857, %v924
  %vm1117 = vcmp.eq.f32.partialorder %v858, %v927
  %vm1118 = vcmp.eq.f32.partialorder %v859, %v930
  %vm1119 = vcmp.eq.f32.partialorder %v860, %v933
  %vm1120 = vcmp.eq.f32.partialorder %v861, %v936
  %vm1121 = vcmp.eq.f32.partialorder %v862, %v939
  %vm1122 = vcmp.eq.f32.partialorder %v863, %v942
  %vm1123 = vcmp.eq.f32.partialorder %v864, %v945
  %vm1124 = vcmp.eq.f32.partialorder %v865, %v948
  %vm1125 = vcmp.eq.f32.partialorder %v866, %v951
  %vm1126 = vcmp.eq.f32.partialorder %v867, %v954
  %vm1127 = vcmp.eq.f32.partialorder %v868, %v957
  %vm1128 = vcmp.eq.f32.partialorder %v869, %v960
  %vm1129 = vcmp.eq.f32.partialorder %v870, %v963
  %vm1130 = vcmp.eq.f32.partialorder %v871, %v966
  %vm1131 = vcmp.eq.f32.partialorder %v872, %v969
  %vm1132 = vcmp.eq.f32.partialorder %v873, %v972
  %vm1133 = vcmp.eq.f32.partialorder %v874, %v975
  %vm1134 = vcmp.eq.f32.partialorder %v875, %v978
  %vm1135 = vcmp.eq.f32.partialorder %v876, %v981
  %vm1136 = vcmp.eq.f32.partialorder %v877, %v984
  %vm1137 = vcmp.eq.f32.partialorder %v878, %v987
  %vm1138 = vcmp.eq.f32.partialorder %v879, %v990
  %vm1139 = vcmp.eq.f32.partialorder %v880, %v993
  %vm1140 = vcmp.eq.f32.partialorder %v881, %v996
  %vm1141 = vcmp.eq.f32.partialorder %v882, %v999
  %vm1142 = vcmp.eq.f32.partialorder %v883, %v1002
  %vm1143 = vcmp.eq.f32.partialorder %v884, %v1005
  %vm1144 = vcmp.eq.f32.partialorder %v885, %v1008
  %vm1145 = vcmp.eq.f32.partialorder %v886, %v1011
  %vm1146 = vcmp.eq.f32.partialorder %v887, %v1014
  %vm1147 = vcmp.eq.f32.partialorder %v888, %v1017
  %vm1148 = vcmp.eq.f32.partialorder %v889, %v1020
  %vm1149 = vcmp.eq.f32.partialorder %v890, %v1023
  %vm1150 = vcmp.eq.f32.partialorder %v891, %v1026
  %vm1151 = vcmp.eq.f32.partialorder %v892, %v1029
  %vm1152 = vcmp.eq.f32.partialorder %v893, %v1032
  %vm1153 = vcmp.eq.f32.partialorder %v894, %v1035
  %vm1154 = vcmp.eq.f32.partialorder %v895, %v1038
  %vm1155 = vcmp.eq.f32.partialorder %v896, %v1041
  %vm1156 = vcmp.eq.f32.partialorder %v897, %v1044
  %vm1157 = vcmp.eq.f32.partialorder %v898, %v1047
  %vm1158 = vcmp.eq.f32.partialorder %v899, %v1050
  %vm1159 = vcmp.eq.f32.partialorder %v900, %v1053
  %vm1160 = vcmp.eq.f32.partialorder %v901, %v1056
  %vm1161 = vcmp.eq.f32.partialorder %v902, %v1059
  %vm1162 = vcmp.eq.f32.partialorder %v903, %v1062
  %vm1163 = vcmp.eq.f32.partialorder %v904, %v1065
  %vm1164 = vcmp.eq.f32.partialorder %v905, %v1068
  %vm1165 = vcmp.eq.f32.partialorder %v906, %v1071
  %vm1166 = vcmp.eq.f32.partialorder %v907, %v1074
  %vm1167 = vcmp.eq.f32.partialorder %v908, %v1077
  %vm1168 = vcmp.eq.f32.partialorder %v909, %v1080
  %vm1169 = vcmp.eq.f32.partialorder %v910, %v1083
  %vm1170 = vcmp.eq.f32.partialorder %v911, %v1086
  %vm1171 = vcmp.eq.f32.partialorder %v912, %v1089
  %vm1172 = vcmp.eq.f32.partialorder %v913, %v1092
  %vm1173 = vcmp.eq.f32.partialorder %v914, %v1095
  %vm1174 = vcmp.eq.f32.partialorder %v915, %v1098
  %vm1175 = vcmp.eq.f32.partialorder %v916, %v1101
  %vm1176 = vcmp.eq.f32.partialorder %v917, %v1104
  %vm1177 = vcmp.eq.f32.partialorder %v918, %v1107
  %vm1178 = vcmp.eq.f32.partialorder %v919, %v1110
  %vm1179 = vcmp.eq.f32.partialorder %v920, %v1113
  %v1180 = vsel %vm1116, %v1115, 32
  %v1181 = vsel %vm1117, %v1115, 32
  %v1182 = vsel %vm1118, %v1115, 32
  %v1183 = vsel %vm1119, %v1115, 32
  %v1184 = vsel %vm1120, %v1115, 32
  %v1185 = vsel %vm1121, %v1115, 32
  %v1186 = vsel %vm1122, %v1115, 32
  %v1187 = vsel %vm1123, %v1115, 32
  %v1188 = vsel %vm1124, %v1115, 32
  %v1189 = vsel %vm1125, %v1115, 32
  %v1190 = vsel %vm1126, %v1115, 32
  %v1191 = vsel %vm1127, %v1115, 32
  %v1192 = vsel %vm1128, %v1115, 32
  %v1193 = vsel %vm1129, %v1115, 32
  %v1194 = vsel %vm1130, %v1115, 32
  %v1195 = vsel %vm1131, %v1115, 32
  %v1196 = vsel %vm1132, %v1115, 32
  %v1197 = vsel %vm1133, %v1115, 32
  %v1198 = vsel %vm1134, %v1115, 32
  %v1199 = vsel %vm1135, %v1115, 32
  %v1200 = vsel %vm1136, %v1115, 32
  %v1201 = vsel %vm1137, %v1115, 32
  %v1202 = vsel %vm1138, %v1115, 32
  %v1203 = vsel %vm1139, %v1115, 32
  %v1204 = vsel %vm1140, %v1115, 32
  %v1205 = vsel %vm1141, %v1115, 32
  %v1206 = vsel %vm1142, %v1115, 32
  %v1207 = vsel %vm1143, %v1115, 32
  %v1208 = vsel %vm1144, %v1115, 32
  %v1209 = vsel %vm1145, %v1115, 32
  %v1210 = vsel %vm1146, %v1115, 32
  %v1211 = vsel %vm1147, %v1115, 32
  %v1212 = vsel %vm1148, %v1115, 32
  %v1213 = vsel %vm1149, %v1115, 32
  %v1214 = vsel %vm1150, %v1115, 32
  %v1215 = vsel %vm1151, %v1115, 32
  %v1216 = vsel %vm1152, %v1115, 32
  %v1217 = vsel %vm1153, %v1115, 32
  %v1218 = vsel %vm1154, %v1115, 32
  %v1219 = vsel %vm1155, %v1115, 32
  %v1220 = vsel %vm1156, %v1115, 32
  %v1221 = vsel %vm1157, %v1115, 32
  %v1222 = vsel %vm1158, %v1115, 32
  %v1223 = vsel %vm1159, %v1115, 32
  %v1224 = vsel %vm1160, %v1115, 32
  %v1225 = vsel %vm1161, %v1115, 32
  %v1226 = vsel %vm1162, %v1115, 32
  %v1227 = vsel %vm1163, %v1115, 32
  %v1228 = vsel %vm1164, %v1115, 32
  %v1229 = vsel %vm1165, %v1115, 32
  %v1230 = vsel %vm1166, %v1115, 32
  %v1231 = vsel %vm1167, %v1115, 32
  %v1232 = vsel %vm1168, %v1115, 32
  %v1233 = vsel %vm1169, %v1115, 32
  %v1234 = vsel %vm1170, %v1115, 32
  %v1235 = vsel %vm1171, %v1115, 32
  %v1236 = vsel %vm1172, %v1115, 32
  %v1237 = vsel %vm1173, %v1115, 32
  %v1238 = vsel %vm1174, %v1115, 32
  %v1239 = vsel %vm1175, %v1115, 32
  %v1240 = vsel %vm1176, %v1115, 32
  %v1241 = vsel %vm1177, %v1115, 32
  %v1242 = vsel %vm1178, %v1115, 32
  %v1243 = vsel %vm1179, %v1115, 32
  %v1244 = vsel %vm921, %v1180, 2147483647
  %v1245 = vand.u32 %v1244, 65535
  %v1246 = vshra.s32 %v1244, 16
  %v1247 = vcvt.s32.f32 %v1245
  %v1248 = vcvt.s32.f32 %v1246
  %1249 = vmin.xlane.f32.xlu0 %v1248
  %v1250 = vpop.xlane.xlu0 %1249
  %vm1251 = vcmp.eq.f32.partialorder %v1248, %v1250
  %v1252 = vsel %vm1251, %v1247, inf
  %1253 = vmin.xlane.f32.xlu0 %v1252
  %v1254 = vpop.xlane.xlu0 %1253
  %v1255 = vcvt.f32.s32 %v1254
  %v1256 = vcvt.f32.s32 %v1250
  %v1257 = vshll.u32 %v1256, 16
  %v1258 = vadd.s32 %v1257, %v1255
  %v1259 = vsel %vm921, %v1181, 2147483647
  %v1260 = vand.u32 %v1259, 65535
  %v1261 = vshra.s32 %v1259, 16
  %v1262 = vcvt.s32.f32 %v1260
  %v1263 = vcvt.s32.f32 %v1261
  %1264 = vmin.xlane.f32.xlu0 %v1263
  %v1265 = vpop.xlane.xlu0 %1264
  %vm1266 = vcmp.eq.f32.partialorder %v1263, %v1265
  %v1267 = vsel %vm1266, %v1262, inf
  %1268 = vmin.xlane.f32.xlu0 %v1267
  %v1269 = vpop.xlane.xlu0 %1268
  %v1270 = vcvt.f32.s32 %v1269
  %v1271 = vcvt.f32.s32 %v1265
  %v1272 = vshll.u32 %v1271, 16
  %v1273 = vadd.s32 %v1272, %v1270
  %v1274 = vsel %vm921, %v1182, 2147483647
  %v1275 = vand.u32 %v1274, 65535
  %v1276 = vshra.s32 %v1274, 16
  %v1277 = vcvt.s32.f32 %v1275
  %v1278 = vcvt.s32.f32 %v1276
  %1279 = vmin.xlane.f32.xlu0 %v1278
  %v1280 = vpop.xlane.xlu0 %1279
  %vm1281 = vcmp.eq.f32.partialorder %v1278, %v1280
  %v1282 = vsel %vm1281, %v1277, inf
  %1283 = vmin.xlane.f32.xlu0 %v1282
  %v1284 = vpop.xlane.xlu0 %1283
  %v1285 = vcvt.f32.s32 %v1284
  %v1286 = vcvt.f32.s32 %v1280
  %v1287 = vshll.u32 %v1286, 16
  %v1288 = vadd.s32 %v1287, %v1285
  %v1289 = vsel %vm921, %v1183, 2147483647
  %v1290 = vand.u32 %v1289, 65535
  %v1291 = vshra.s32 %v1289, 16
  %v1292 = vcvt.s32.f32 %v1290
  %v1293 = vcvt.s32.f32 %v1291
  %1294 = vmin.xlane.f32.xlu0 %v1293
  %v1295 = vpop.xlane.xlu0 %1294
  %vm1296 = vcmp.eq.f32.partialorder %v1293, %v1295
  %v1297 = vsel %vm1296, %v1292, inf
  %1298 = vmin.xlane.f32.xlu0 %v1297
  %v1299 = vpop.xlane.xlu0 %1298
  %v1300 = vcvt.f32.s32 %v1299
  %v1301 = vcvt.f32.s32 %v1295
  %v1302 = vshll.u32 %v1301, 16
  %v1303 = vadd.s32 %v1302, %v1300
  %v1304 = vsel %vm921, %v1184, 2147483647
  %v1305 = vand.u32 %v1304, 65535
  %v1306 = vshra.s32 %v1304, 16
  %v1307 = vcvt.s32.f32 %v1305
  %v1308 = vcvt.s32.f32 %v1306
  %1309 = vmin.xlane.f32.xlu0 %v1308
  %v1310 = vpop.xlane.xlu0 %1309
  %vm1311 = vcmp.eq.f32.partialorder %v1308, %v1310
  %v1312 = vsel %vm1311, %v1307, inf
  %1313 = vmin.xlane.f32.xlu0 %v1312
  %v1314 = vpop.xlane.xlu0 %1313
  %v1315 = vcvt.f32.s32 %v1314
  %v1316 = vcvt.f32.s32 %v1310
  %v1317 = vshll.u32 %v1316, 16
  %v1318 = vadd.s32 %v1317, %v1315
  %v1319 = vsel %vm921, %v1185, 2147483647
  %v1320 = vand.u32 %v1319, 65535
  %v1321 = vshra.s32 %v1319, 16
  %v1322 = vcvt.s32.f32 %v1320
  %v1323 = vcvt.s32.f32 %v1321
  %1324 = vmin.xlane.f32.xlu0 %v1323
  %v1325 = vpop.xlane.xlu0 %1324
  %vm1326 = vcmp.eq.f32.partialorder %v1323, %v1325
  %v1327 = vsel %vm1326, %v1322, inf
  %1328 = vmin.xlane.f32.xlu0 %v1327
  %v1329 = vpop.xlane.xlu0 %1328
  %v1330 = vcvt.f32.s32 %v1329
  %v1331 = vcvt.f32.s32 %v1325
  %v1332 = vshll.u32 %v1331, 16
  %v1333 = vadd.s32 %v1332, %v1330
  %v1334 = vsel %vm921, %v1186, 2147483647
  %v1335 = vand.u32 %v1334, 65535
  %v1336 = vshra.s32 %v1334, 16
  %v1337 = vcvt.s32.f32 %v1335
  %v1338 = vcvt.s32.f32 %v1336
  %1339 = vmin.xlane.f32.xlu0 %v1338
  %v1340 = vpop.xlane.xlu0 %1339
  %vm1341 = vcmp.eq.f32.partialorder %v1338, %v1340
  %v1342 = vsel %vm1341, %v1337, inf
  %1343 = vmin.xlane.f32.xlu0 %v1342
  %v1344 = vpop.xlane.xlu0 %1343
  %v1345 = vcvt.f32.s32 %v1344
  %v1346 = vcvt.f32.s32 %v1340
  %v1347 = vshll.u32 %v1346, 16
  %v1348 = vadd.s32 %v1347, %v1345
  %v1349 = vsel %vm921, %v1187, 2147483647
  %v1350 = vand.u32 %v1349, 65535
  %v1351 = vshra.s32 %v1349, 16
  %v1352 = vcvt.s32.f32 %v1350
  %v1353 = vcvt.s32.f32 %v1351
  %1354 = vmin.xlane.f32.xlu0 %v1353
  %v1355 = vpop.xlane.xlu0 %1354
  %vm1356 = vcmp.eq.f32.partialorder %v1353, %v1355
  %v1357 = vsel %vm1356, %v1352, inf
  %1358 = vmin.xlane.f32.xlu0 %v1357
  %v1359 = vpop.xlane.xlu0 %1358
  %v1360 = vcvt.f32.s32 %v1359
  %v1361 = vcvt.f32.s32 %v1355
  %v1362 = vshll.u32 %v1361, 16
  %v1363 = vadd.s32 %v1362, %v1360
  %v1364 = vsel %vm921, %v1188, 2147483647
  %v1365 = vand.u32 %v1364, 65535
  %v1366 = vshra.s32 %v1364, 16
  %v1367 = vcvt.s32.f32 %v1365
  %v1368 = vcvt.s32.f32 %v1366
  %1369 = vmin.xlane.f32.xlu0 %v1368
  %v1370 = vpop.xlane.xlu0 %1369
  %vm1371 = vcmp.eq.f32.partialorder %v1368, %v1370
  %v1372 = vsel %vm1371, %v1367, inf
  %1373 = vmin.xlane.f32.xlu0 %v1372
  %v1374 = vpop.xlane.xlu0 %1373
  %v1375 = vcvt.f32.s32 %v1374
  %v1376 = vcvt.f32.s32 %v1370
  %v1377 = vshll.u32 %v1376, 16
  %v1378 = vadd.s32 %v1377, %v1375
  %v1379 = vsel %vm921, %v1189, 2147483647
  %v1380 = vand.u32 %v1379, 65535
  %v1381 = vshra.s32 %v1379, 16
  %v1382 = vcvt.s32.f32 %v1380
  %v1383 = vcvt.s32.f32 %v1381
  %1384 = vmin.xlane.f32.xlu0 %v1383
  %v1385 = vpop.xlane.xlu0 %1384
  %vm1386 = vcmp.eq.f32.partialorder %v1383, %v1385
  %v1387 = vsel %vm1386, %v1382, inf
  %1388 = vmin.xlane.f32.xlu0 %v1387
  %v1389 = vpop.xlane.xlu0 %1388
  %v1390 = vcvt.f32.s32 %v1389
  %v1391 = vcvt.f32.s32 %v1385
  %v1392 = vshll.u32 %v1391, 16
  %v1393 = vadd.s32 %v1392, %v1390
  %v1394 = vsel %vm921, %v1190, 2147483647
  %v1395 = vand.u32 %v1394, 65535
  %v1396 = vshra.s32 %v1394, 16
  %v1397 = vcvt.s32.f32 %v1395
  %v1398 = vcvt.s32.f32 %v1396
  %1399 = vmin.xlane.f32.xlu0 %v1398
  %v1400 = vpop.xlane.xlu0 %1399
  %vm1401 = vcmp.eq.f32.partialorder %v1398, %v1400
  %v1402 = vsel %vm1401, %v1397, inf
  %1403 = vmin.xlane.f32.xlu0 %v1402
  %v1404 = vpop.xlane.xlu0 %1403
  %v1405 = vcvt.f32.s32 %v1404
  %v1406 = vcvt.f32.s32 %v1400
  %v1407 = vshll.u32 %v1406, 16
  %v1408 = vadd.s32 %v1407, %v1405
  %v1409 = vsel %vm921, %v1191, 2147483647
  %v1410 = vand.u32 %v1409, 65535
  %v1411 = vshra.s32 %v1409, 16
  %v1412 = vcvt.s32.f32 %v1410
  %v1413 = vcvt.s32.f32 %v1411
  %1414 = vmin.xlane.f32.xlu0 %v1413
  %v1415 = vpop.xlane.xlu0 %1414
  %vm1416 = vcmp.eq.f32.partialorder %v1413, %v1415
  %v1417 = vsel %vm1416, %v1412, inf
  %1418 = vmin.xlane.f32.xlu0 %v1417
  %v1419 = vpop.xlane.xlu0 %1418
  %v1420 = vcvt.f32.s32 %v1419
  %v1421 = vcvt.f32.s32 %v1415
  %v1422 = vshll.u32 %v1421, 16
  %v1423 = vadd.s32 %v1422, %v1420
  %v1424 = vsel %vm921, %v1192, 2147483647
  %v1425 = vand.u32 %v1424, 65535
  %v1426 = vshra.s32 %v1424, 16
  %v1427 = vcvt.s32.f32 %v1425
  %v1428 = vcvt.s32.f32 %v1426
  %1429 = vmin.xlane.f32.xlu0 %v1428
  %v1430 = vpop.xlane.xlu0 %1429
  %vm1431 = vcmp.eq.f32.partialorder %v1428, %v1430
  %v1432 = vsel %vm1431, %v1427, inf
  %1433 = vmin.xlane.f32.xlu0 %v1432
  %v1434 = vpop.xlane.xlu0 %1433
  %v1435 = vcvt.f32.s32 %v1434
  %v1436 = vcvt.f32.s32 %v1430
  %v1437 = vshll.u32 %v1436, 16
  %v1438 = vadd.s32 %v1437, %v1435
  %v1439 = vsel %vm921, %v1193, 2147483647
  %v1440 = vand.u32 %v1439, 65535
  %v1441 = vshra.s32 %v1439, 16
  %v1442 = vcvt.s32.f32 %v1440
  %v1443 = vcvt.s32.f32 %v1441
  %1444 = vmin.xlane.f32.xlu0 %v1443
  %v1445 = vpop.xlane.xlu0 %1444
  %vm1446 = vcmp.eq.f32.partialorder %v1443, %v1445
  %v1447 = vsel %vm1446, %v1442, inf
  %1448 = vmin.xlane.f32.xlu0 %v1447
  %v1449 = vpop.xlane.xlu0 %1448
  %v1450 = vcvt.f32.s32 %v1449
  %v1451 = vcvt.f32.s32 %v1445
  %v1452 = vshll.u32 %v1451, 16
  %v1453 = vadd.s32 %v1452, %v1450
  %v1454 = vsel %vm921, %v1194, 2147483647
  %v1455 = vand.u32 %v1454, 65535
  %v1456 = vshra.s32 %v1454, 16
  %v1457 = vcvt.s32.f32 %v1455
  %v1458 = vcvt.s32.f32 %v1456
  %1459 = vmin.xlane.f32.xlu0 %v1458
  %v1460 = vpop.xlane.xlu0 %1459
  %vm1461 = vcmp.eq.f32.partialorder %v1458, %v1460
  %v1462 = vsel %vm1461, %v1457, inf
  %1463 = vmin.xlane.f32.xlu0 %v1462
  %v1464 = vpop.xlane.xlu0 %1463
  %v1465 = vcvt.f32.s32 %v1464
  %v1466 = vcvt.f32.s32 %v1460
  %v1467 = vshll.u32 %v1466, 16
  %v1468 = vadd.s32 %v1467, %v1465
  %v1469 = vsel %vm921, %v1195, 2147483647
  %v1470 = vand.u32 %v1469, 65535
  %v1471 = vshra.s32 %v1469, 16
  %v1472 = vcvt.s32.f32 %v1470
  %v1473 = vcvt.s32.f32 %v1471
  %1474 = vmin.xlane.f32.xlu0 %v1473
  %v1475 = vpop.xlane.xlu0 %1474
  %vm1476 = vcmp.eq.f32.partialorder %v1473, %v1475
  %v1477 = vsel %vm1476, %v1472, inf
  %1478 = vmin.xlane.f32.xlu0 %v1477
  %v1479 = vpop.xlane.xlu0 %1478
  %v1480 = vcvt.f32.s32 %v1479
  %v1481 = vcvt.f32.s32 %v1475
  %v1482 = vshll.u32 %v1481, 16
  %v1483 = vadd.s32 %v1482, %v1480
  %v1484 = vsel %vm921, %v1196, 2147483647
  %v1485 = vand.u32 %v1484, 65535
  %v1486 = vshra.s32 %v1484, 16
  %v1487 = vcvt.s32.f32 %v1485
  %v1488 = vcvt.s32.f32 %v1486
  %1489 = vmin.xlane.f32.xlu0 %v1488
  %v1490 = vpop.xlane.xlu0 %1489
  %vm1491 = vcmp.eq.f32.partialorder %v1488, %v1490
  %v1492 = vsel %vm1491, %v1487, inf
  %1493 = vmin.xlane.f32.xlu0 %v1492
  %v1494 = vpop.xlane.xlu0 %1493
  %v1495 = vcvt.f32.s32 %v1494
  %v1496 = vcvt.f32.s32 %v1490
  %v1497 = vshll.u32 %v1496, 16
  %v1498 = vadd.s32 %v1497, %v1495
  %v1499 = vsel %vm921, %v1197, 2147483647
  %v1500 = vand.u32 %v1499, 65535
  %v1501 = vshra.s32 %v1499, 16
  %v1502 = vcvt.s32.f32 %v1500
  %v1503 = vcvt.s32.f32 %v1501
  %1504 = vmin.xlane.f32.xlu0 %v1503
  %v1505 = vpop.xlane.xlu0 %1504
  %vm1506 = vcmp.eq.f32.partialorder %v1503, %v1505
  %v1507 = vsel %vm1506, %v1502, inf
  %1508 = vmin.xlane.f32.xlu0 %v1507
  %v1509 = vpop.xlane.xlu0 %1508
  %v1510 = vcvt.f32.s32 %v1509
  %v1511 = vcvt.f32.s32 %v1505
  %v1512 = vshll.u32 %v1511, 16
  %v1513 = vadd.s32 %v1512, %v1510
  %v1514 = vsel %vm921, %v1198, 2147483647
  %v1515 = vand.u32 %v1514, 65535
  %v1516 = vshra.s32 %v1514, 16
  %v1517 = vcvt.s32.f32 %v1515
  %v1518 = vcvt.s32.f32 %v1516
  %1519 = vmin.xlane.f32.xlu0 %v1518
  %v1520 = vpop.xlane.xlu0 %1519
  %vm1521 = vcmp.eq.f32.partialorder %v1518, %v1520
  %v1522 = vsel %vm1521, %v1517, inf
  %1523 = vmin.xlane.f32.xlu0 %v1522
  %v1524 = vpop.xlane.xlu0 %1523
  %v1525 = vcvt.f32.s32 %v1524
  %v1526 = vcvt.f32.s32 %v1520
  %v1527 = vshll.u32 %v1526, 16
  %v1528 = vadd.s32 %v1527, %v1525
  %v1529 = vsel %vm921, %v1199, 2147483647
  %v1530 = vand.u32 %v1529, 65535
  %v1531 = vshra.s32 %v1529, 16
  %v1532 = vcvt.s32.f32 %v1530
  %v1533 = vcvt.s32.f32 %v1531
  %1534 = vmin.xlane.f32.xlu0 %v1533
  %v1535 = vpop.xlane.xlu0 %1534
  %vm1536 = vcmp.eq.f32.partialorder %v1533, %v1535
  %v1537 = vsel %vm1536, %v1532, inf
  %1538 = vmin.xlane.f32.xlu0 %v1537
  %v1539 = vpop.xlane.xlu0 %1538
  %v1540 = vcvt.f32.s32 %v1539
  %v1541 = vcvt.f32.s32 %v1535
  %v1542 = vshll.u32 %v1541, 16
  %v1543 = vadd.s32 %v1542, %v1540
  %v1544 = vsel %vm921, %v1200, 2147483647
  %v1545 = vand.u32 %v1544, 65535
  %v1546 = vshra.s32 %v1544, 16
  %v1547 = vcvt.s32.f32 %v1545
  %v1548 = vcvt.s32.f32 %v1546
  %1549 = vmin.xlane.f32.xlu0 %v1548
  %v1550 = vpop.xlane.xlu0 %1549
  %vm1551 = vcmp.eq.f32.partialorder %v1548, %v1550
  %v1552 = vsel %vm1551, %v1547, inf
  %1553 = vmin.xlane.f32.xlu0 %v1552
  %v1554 = vpop.xlane.xlu0 %1553
  %v1555 = vcvt.f32.s32 %v1554
  %v1556 = vcvt.f32.s32 %v1550
  %v1557 = vshll.u32 %v1556, 16
  %v1558 = vadd.s32 %v1557, %v1555
  %v1559 = vsel %vm921, %v1201, 2147483647
  %v1560 = vand.u32 %v1559, 65535
  %v1561 = vshra.s32 %v1559, 16
  %v1562 = vcvt.s32.f32 %v1560
  %v1563 = vcvt.s32.f32 %v1561
  %1564 = vmin.xlane.f32.xlu0 %v1563
  %v1565 = vpop.xlane.xlu0 %1564
  %vm1566 = vcmp.eq.f32.partialorder %v1563, %v1565
  %v1567 = vsel %vm1566, %v1562, inf
  %1568 = vmin.xlane.f32.xlu0 %v1567
  %v1569 = vpop.xlane.xlu0 %1568
  %v1570 = vcvt.f32.s32 %v1569
  %v1571 = vcvt.f32.s32 %v1565
  %v1572 = vshll.u32 %v1571, 16
  %v1573 = vadd.s32 %v1572, %v1570
  %v1574 = vsel %vm921, %v1202, 2147483647
  %v1575 = vand.u32 %v1574, 65535
  %v1576 = vshra.s32 %v1574, 16
  %v1577 = vcvt.s32.f32 %v1575
  %v1578 = vcvt.s32.f32 %v1576
  %1579 = vmin.xlane.f32.xlu0 %v1578
  %v1580 = vpop.xlane.xlu0 %1579
  %vm1581 = vcmp.eq.f32.partialorder %v1578, %v1580
  %v1582 = vsel %vm1581, %v1577, inf
  %1583 = vmin.xlane.f32.xlu0 %v1582
  %v1584 = vpop.xlane.xlu0 %1583
  %v1585 = vcvt.f32.s32 %v1584
  %v1586 = vcvt.f32.s32 %v1580
  %v1587 = vshll.u32 %v1586, 16
  %v1588 = vadd.s32 %v1587, %v1585
  %v1589 = vsel %vm921, %v1203, 2147483647
  %v1590 = vand.u32 %v1589, 65535
  %v1591 = vshra.s32 %v1589, 16
  %v1592 = vcvt.s32.f32 %v1590
  %v1593 = vcvt.s32.f32 %v1591
  %1594 = vmin.xlane.f32.xlu0 %v1593
  %v1595 = vpop.xlane.xlu0 %1594
  %vm1596 = vcmp.eq.f32.partialorder %v1593, %v1595
  %v1597 = vsel %vm1596, %v1592, inf
  %1598 = vmin.xlane.f32.xlu0 %v1597
  %v1599 = vpop.xlane.xlu0 %1598
  %v1600 = vcvt.f32.s32 %v1599
  %v1601 = vcvt.f32.s32 %v1595
  %v1602 = vshll.u32 %v1601, 16
  %v1603 = vadd.s32 %v1602, %v1600
  %v1604 = vsel %vm921, %v1204, 2147483647
  %v1605 = vand.u32 %v1604, 65535
  %v1606 = vshra.s32 %v1604, 16
  %v1607 = vcvt.s32.f32 %v1605
  %v1608 = vcvt.s32.f32 %v1606
  %1609 = vmin.xlane.f32.xlu0 %v1608
  %v1610 = vpop.xlane.xlu0 %1609
  %vm1611 = vcmp.eq.f32.partialorder %v1608, %v1610
  %v1612 = vsel %vm1611, %v1607, inf
  %1613 = vmin.xlane.f32.xlu0 %v1612
  %v1614 = vpop.xlane.xlu0 %1613
  %v1615 = vcvt.f32.s32 %v1614
  %v1616 = vcvt.f32.s32 %v1610
  %v1617 = vshll.u32 %v1616, 16
  %v1618 = vadd.s32 %v1617, %v1615
  %v1619 = vsel %vm921, %v1205, 2147483647
  %v1620 = vand.u32 %v1619, 65535
  %v1621 = vshra.s32 %v1619, 16
  %v1622 = vcvt.s32.f32 %v1620
  %v1623 = vcvt.s32.f32 %v1621
  %1624 = vmin.xlane.f32.xlu0 %v1623
  %v1625 = vpop.xlane.xlu0 %1624
  %vm1626 = vcmp.eq.f32.partialorder %v1623, %v1625
  %v1627 = vsel %vm1626, %v1622, inf
  %1628 = vmin.xlane.f32.xlu0 %v1627
  %v1629 = vpop.xlane.xlu0 %1628
  %v1630 = vcvt.f32.s32 %v1629
  %v1631 = vcvt.f32.s32 %v1625
  %v1632 = vshll.u32 %v1631, 16
  %v1633 = vadd.s32 %v1632, %v1630
  %v1634 = vsel %vm921, %v1206, 2147483647
  %v1635 = vand.u32 %v1634, 65535
  %v1636 = vshra.s32 %v1634, 16
  %v1637 = vcvt.s32.f32 %v1635
  %v1638 = vcvt.s32.f32 %v1636
  %1639 = vmin.xlane.f32.xlu0 %v1638
  %v1640 = vpop.xlane.xlu0 %1639
  %vm1641 = vcmp.eq.f32.partialorder %v1638, %v1640
  %v1642 = vsel %vm1641, %v1637, inf
  %1643 = vmin.xlane.f32.xlu0 %v1642
  %v1644 = vpop.xlane.xlu0 %1643
  %v1645 = vcvt.f32.s32 %v1644
  %v1646 = vcvt.f32.s32 %v1640
  %v1647 = vshll.u32 %v1646, 16
  %v1648 = vadd.s32 %v1647, %v1645
  %v1649 = vsel %vm921, %v1207, 2147483647
  %v1650 = vand.u32 %v1649, 65535
  %v1651 = vshra.s32 %v1649, 16
  %v1652 = vcvt.s32.f32 %v1650
  %v1653 = vcvt.s32.f32 %v1651
  %1654 = vmin.xlane.f32.xlu0 %v1653
  %v1655 = vpop.xlane.xlu0 %1654
  %vm1656 = vcmp.eq.f32.partialorder %v1653, %v1655
  %v1657 = vsel %vm1656, %v1652, inf
  %1658 = vmin.xlane.f32.xlu0 %v1657
  %v1659 = vpop.xlane.xlu0 %1658
  %v1660 = vcvt.f32.s32 %v1659
  %v1661 = vcvt.f32.s32 %v1655
  %v1662 = vshll.u32 %v1661, 16
  %v1663 = vadd.s32 %v1662, %v1660
  %v1664 = vsel %vm921, %v1208, 2147483647
  %v1665 = vand.u32 %v1664, 65535
  %v1666 = vshra.s32 %v1664, 16
  %v1667 = vcvt.s32.f32 %v1665
  %v1668 = vcvt.s32.f32 %v1666
  %1669 = vmin.xlane.f32.xlu0 %v1668
  %v1670 = vpop.xlane.xlu0 %1669
  %vm1671 = vcmp.eq.f32.partialorder %v1668, %v1670
  %v1672 = vsel %vm1671, %v1667, inf
  %1673 = vmin.xlane.f32.xlu0 %v1672
  %v1674 = vpop.xlane.xlu0 %1673
  %v1675 = vcvt.f32.s32 %v1674
  %v1676 = vcvt.f32.s32 %v1670
  %v1677 = vshll.u32 %v1676, 16
  %v1678 = vadd.s32 %v1677, %v1675
  %v1679 = vsel %vm921, %v1209, 2147483647
  %v1680 = vand.u32 %v1679, 65535
  %v1681 = vshra.s32 %v1679, 16
  %v1682 = vcvt.s32.f32 %v1680
  %v1683 = vcvt.s32.f32 %v1681
  %1684 = vmin.xlane.f32.xlu0 %v1683
  %v1685 = vpop.xlane.xlu0 %1684
  %vm1686 = vcmp.eq.f32.partialorder %v1683, %v1685
  %v1687 = vsel %vm1686, %v1682, inf
  %1688 = vmin.xlane.f32.xlu0 %v1687
  %v1689 = vpop.xlane.xlu0 %1688
  %v1690 = vcvt.f32.s32 %v1689
  %v1691 = vcvt.f32.s32 %v1685
  %v1692 = vshll.u32 %v1691, 16
  %v1693 = vadd.s32 %v1692, %v1690
  %v1694 = vsel %vm921, %v1210, 2147483647
  %v1695 = vand.u32 %v1694, 65535
  %v1696 = vshra.s32 %v1694, 16
  %v1697 = vcvt.s32.f32 %v1695
  %v1698 = vcvt.s32.f32 %v1696
  %1699 = vmin.xlane.f32.xlu0 %v1698
  %v1700 = vpop.xlane.xlu0 %1699
  %vm1701 = vcmp.eq.f32.partialorder %v1698, %v1700
  %v1702 = vsel %vm1701, %v1697, inf
  %1703 = vmin.xlane.f32.xlu0 %v1702
  %v1704 = vpop.xlane.xlu0 %1703
  %v1705 = vcvt.f32.s32 %v1704
  %v1706 = vcvt.f32.s32 %v1700
  %v1707 = vshll.u32 %v1706, 16
  %v1708 = vadd.s32 %v1707, %v1705
  %v1709 = vsel %vm921, %v1211, 2147483647
  %v1710 = vand.u32 %v1709, 65535
  %v1711 = vshra.s32 %v1709, 16
  %v1712 = vcvt.s32.f32 %v1710
  %v1713 = vcvt.s32.f32 %v1711
  %1714 = vmin.xlane.f32.xlu0 %v1713
  %v1715 = vpop.xlane.xlu0 %1714
  %vm1716 = vcmp.eq.f32.partialorder %v1713, %v1715
  %v1717 = vsel %vm1716, %v1712, inf
  %1718 = vmin.xlane.f32.xlu0 %v1717
  %v1719 = vpop.xlane.xlu0 %1718
  %v1720 = vcvt.f32.s32 %v1719
  %v1721 = vcvt.f32.s32 %v1715
  %v1722 = vshll.u32 %v1721, 16
  %v1723 = vadd.s32 %v1722, %v1720
  %v1724 = vsel %vm921, %v1212, 2147483647
  %v1725 = vand.u32 %v1724, 65535
  %v1726 = vshra.s32 %v1724, 16
  %v1727 = vcvt.s32.f32 %v1725
  %v1728 = vcvt.s32.f32 %v1726
  %1729 = vmin.xlane.f32.xlu0 %v1728
  %v1730 = vpop.xlane.xlu0 %1729
  %vm1731 = vcmp.eq.f32.partialorder %v1728, %v1730
  %v1732 = vsel %vm1731, %v1727, inf
  %1733 = vmin.xlane.f32.xlu0 %v1732
  %v1734 = vpop.xlane.xlu0 %1733
  %v1735 = vcvt.f32.s32 %v1734
  %v1736 = vcvt.f32.s32 %v1730
  %v1737 = vshll.u32 %v1736, 16
  %v1738 = vadd.s32 %v1737, %v1735
  %v1739 = vsel %vm921, %v1213, 2147483647
  %v1740 = vand.u32 %v1739, 65535
  %v1741 = vshra.s32 %v1739, 16
  %v1742 = vcvt.s32.f32 %v1740
  %v1743 = vcvt.s32.f32 %v1741
  %1744 = vmin.xlane.f32.xlu0 %v1743
  %v1745 = vpop.xlane.xlu0 %1744
  %vm1746 = vcmp.eq.f32.partialorder %v1743, %v1745
  %v1747 = vsel %vm1746, %v1742, inf
  %1748 = vmin.xlane.f32.xlu0 %v1747
  %v1749 = vpop.xlane.xlu0 %1748
  %v1750 = vcvt.f32.s32 %v1749
  %v1751 = vcvt.f32.s32 %v1745
  %v1752 = vshll.u32 %v1751, 16
  %v1753 = vadd.s32 %v1752, %v1750
  %v1754 = vsel %vm921, %v1214, 2147483647
  %v1755 = vand.u32 %v1754, 65535
  %v1756 = vshra.s32 %v1754, 16
  %v1757 = vcvt.s32.f32 %v1755
  %v1758 = vcvt.s32.f32 %v1756
  %1759 = vmin.xlane.f32.xlu0 %v1758
  %v1760 = vpop.xlane.xlu0 %1759
  %vm1761 = vcmp.eq.f32.partialorder %v1758, %v1760
  %v1762 = vsel %vm1761, %v1757, inf
  %1763 = vmin.xlane.f32.xlu0 %v1762
  %v1764 = vpop.xlane.xlu0 %1763
  %v1765 = vcvt.f32.s32 %v1764
  %v1766 = vcvt.f32.s32 %v1760
  %v1767 = vshll.u32 %v1766, 16
  %v1768 = vadd.s32 %v1767, %v1765
  %v1769 = vsel %vm921, %v1215, 2147483647
  %v1770 = vand.u32 %v1769, 65535
  %v1771 = vshra.s32 %v1769, 16
  %v1772 = vcvt.s32.f32 %v1770
  %v1773 = vcvt.s32.f32 %v1771
  %1774 = vmin.xlane.f32.xlu0 %v1773
  %v1775 = vpop.xlane.xlu0 %1774
  %vm1776 = vcmp.eq.f32.partialorder %v1773, %v1775
  %v1777 = vsel %vm1776, %v1772, inf
  %1778 = vmin.xlane.f32.xlu0 %v1777
  %v1779 = vpop.xlane.xlu0 %1778
  %v1780 = vcvt.f32.s32 %v1779
  %v1781 = vcvt.f32.s32 %v1775
  %v1782 = vshll.u32 %v1781, 16
  %v1783 = vadd.s32 %v1782, %v1780
  %v1784 = vsel %vm921, %v1216, 2147483647
  %v1785 = vand.u32 %v1784, 65535
  %v1786 = vshra.s32 %v1784, 16
  %v1787 = vcvt.s32.f32 %v1785
  %v1788 = vcvt.s32.f32 %v1786
  %1789 = vmin.xlane.f32.xlu0 %v1788
  %v1790 = vpop.xlane.xlu0 %1789
  %vm1791 = vcmp.eq.f32.partialorder %v1788, %v1790
  %v1792 = vsel %vm1791, %v1787, inf
  %1793 = vmin.xlane.f32.xlu0 %v1792
  %v1794 = vpop.xlane.xlu0 %1793
  %v1795 = vcvt.f32.s32 %v1794
  %v1796 = vcvt.f32.s32 %v1790
  %v1797 = vshll.u32 %v1796, 16
  %v1798 = vadd.s32 %v1797, %v1795
  %v1799 = vsel %vm921, %v1217, 2147483647
  %v1800 = vand.u32 %v1799, 65535
  %v1801 = vshra.s32 %v1799, 16
  %v1802 = vcvt.s32.f32 %v1800
  %v1803 = vcvt.s32.f32 %v1801
  %1804 = vmin.xlane.f32.xlu0 %v1803
  %v1805 = vpop.xlane.xlu0 %1804
  %vm1806 = vcmp.eq.f32.partialorder %v1803, %v1805
  %v1807 = vsel %vm1806, %v1802, inf
  %1808 = vmin.xlane.f32.xlu0 %v1807
  %v1809 = vpop.xlane.xlu0 %1808
  %v1810 = vcvt.f32.s32 %v1809
  %v1811 = vcvt.f32.s32 %v1805
  %v1812 = vshll.u32 %v1811, 16
  %v1813 = vadd.s32 %v1812, %v1810
  %v1814 = vsel %vm921, %v1218, 2147483647
  %v1815 = vand.u32 %v1814, 65535
  %v1816 = vshra.s32 %v1814, 16
  %v1817 = vcvt.s32.f32 %v1815
  %v1818 = vcvt.s32.f32 %v1816
  %1819 = vmin.xlane.f32.xlu0 %v1818
  %v1820 = vpop.xlane.xlu0 %1819
  %vm1821 = vcmp.eq.f32.partialorder %v1818, %v1820
  %v1822 = vsel %vm1821, %v1817, inf
  %1823 = vmin.xlane.f32.xlu0 %v1822
  %v1824 = vpop.xlane.xlu0 %1823
  %v1825 = vcvt.f32.s32 %v1824
  %v1826 = vcvt.f32.s32 %v1820
  %v1827 = vshll.u32 %v1826, 16
  %v1828 = vadd.s32 %v1827, %v1825
  %v1829 = vsel %vm921, %v1219, 2147483647
  %v1830 = vand.u32 %v1829, 65535
  %v1831 = vshra.s32 %v1829, 16
  %v1832 = vcvt.s32.f32 %v1830
  %v1833 = vcvt.s32.f32 %v1831
  %1834 = vmin.xlane.f32.xlu0 %v1833
  %v1835 = vpop.xlane.xlu0 %1834
  %vm1836 = vcmp.eq.f32.partialorder %v1833, %v1835
  %v1837 = vsel %vm1836, %v1832, inf
  %1838 = vmin.xlane.f32.xlu0 %v1837
  %v1839 = vpop.xlane.xlu0 %1838
  %v1840 = vcvt.f32.s32 %v1839
  %v1841 = vcvt.f32.s32 %v1835
  %v1842 = vshll.u32 %v1841, 16
  %v1843 = vadd.s32 %v1842, %v1840
  %v1844 = vsel %vm921, %v1220, 2147483647
  %v1845 = vand.u32 %v1844, 65535
  %v1846 = vshra.s32 %v1844, 16
  %v1847 = vcvt.s32.f32 %v1845
  %v1848 = vcvt.s32.f32 %v1846
  %1849 = vmin.xlane.f32.xlu0 %v1848
  %v1850 = vpop.xlane.xlu0 %1849
  %vm1851 = vcmp.eq.f32.partialorder %v1848, %v1850
  %v1852 = vsel %vm1851, %v1847, inf
  %1853 = vmin.xlane.f32.xlu0 %v1852
  %v1854 = vpop.xlane.xlu0 %1853
  %v1855 = vcvt.f32.s32 %v1854
  %v1856 = vcvt.f32.s32 %v1850
  %v1857 = vshll.u32 %v1856, 16
  %v1858 = vadd.s32 %v1857, %v1855
  %v1859 = vsel %vm921, %v1221, 2147483647
  %v1860 = vand.u32 %v1859, 65535
  %v1861 = vshra.s32 %v1859, 16
  %v1862 = vcvt.s32.f32 %v1860
  %v1863 = vcvt.s32.f32 %v1861
  %1864 = vmin.xlane.f32.xlu0 %v1863
  %v1865 = vpop.xlane.xlu0 %1864
  %vm1866 = vcmp.eq.f32.partialorder %v1863, %v1865
  %v1867 = vsel %vm1866, %v1862, inf
  %1868 = vmin.xlane.f32.xlu0 %v1867
  %v1869 = vpop.xlane.xlu0 %1868
  %v1870 = vcvt.f32.s32 %v1869
  %v1871 = vcvt.f32.s32 %v1865
  %v1872 = vshll.u32 %v1871, 16
  %v1873 = vadd.s32 %v1872, %v1870
  %v1874 = vsel %vm921, %v1222, 2147483647
  %v1875 = vand.u32 %v1874, 65535
  %v1876 = vshra.s32 %v1874, 16
  %v1877 = vcvt.s32.f32 %v1875
  %v1878 = vcvt.s32.f32 %v1876
  %1879 = vmin.xlane.f32.xlu0 %v1878
  %v1880 = vpop.xlane.xlu0 %1879
  %vm1881 = vcmp.eq.f32.partialorder %v1878, %v1880
  %v1882 = vsel %vm1881, %v1877, inf
  %1883 = vmin.xlane.f32.xlu0 %v1882
  %v1884 = vpop.xlane.xlu0 %1883
  %v1885 = vcvt.f32.s32 %v1884
  %v1886 = vcvt.f32.s32 %v1880
  %v1887 = vshll.u32 %v1886, 16
  %v1888 = vadd.s32 %v1887, %v1885
  %v1889 = vsel %vm921, %v1223, 2147483647
  %v1890 = vand.u32 %v1889, 65535
  %v1891 = vshra.s32 %v1889, 16
  %v1892 = vcvt.s32.f32 %v1890
  %v1893 = vcvt.s32.f32 %v1891
  %1894 = vmin.xlane.f32.xlu0 %v1893
  %v1895 = vpop.xlane.xlu0 %1894
  %vm1896 = vcmp.eq.f32.partialorder %v1893, %v1895
  %v1897 = vsel %vm1896, %v1892, inf
  %1898 = vmin.xlane.f32.xlu0 %v1897
  %v1899 = vpop.xlane.xlu0 %1898
  %v1900 = vcvt.f32.s32 %v1899
  %v1901 = vcvt.f32.s32 %v1895
  %v1902 = vshll.u32 %v1901, 16
  %v1903 = vadd.s32 %v1902, %v1900
  %v1904 = vsel %vm921, %v1224, 2147483647
  %v1905 = vand.u32 %v1904, 65535
  %v1906 = vshra.s32 %v1904, 16
  %v1907 = vcvt.s32.f32 %v1905
  %v1908 = vcvt.s32.f32 %v1906
  %1909 = vmin.xlane.f32.xlu0 %v1908
  %v1910 = vpop.xlane.xlu0 %1909
  %vm1911 = vcmp.eq.f32.partialorder %v1908, %v1910
  %v1912 = vsel %vm1911, %v1907, inf
  %1913 = vmin.xlane.f32.xlu0 %v1912
  %v1914 = vpop.xlane.xlu0 %1913
  %v1915 = vcvt.f32.s32 %v1914
  %v1916 = vcvt.f32.s32 %v1910
  %v1917 = vshll.u32 %v1916, 16
  %v1918 = vadd.s32 %v1917, %v1915
  %v1919 = vsel %vm921, %v1225, 2147483647
  %v1920 = vand.u32 %v1919, 65535
  %v1921 = vshra.s32 %v1919, 16
  %v1922 = vcvt.s32.f32 %v1920
  %v1923 = vcvt.s32.f32 %v1921
  %1924 = vmin.xlane.f32.xlu0 %v1923
  %v1925 = vpop.xlane.xlu0 %1924
  %vm1926 = vcmp.eq.f32.partialorder %v1923, %v1925
  %v1927 = vsel %vm1926, %v1922, inf
  %1928 = vmin.xlane.f32.xlu0 %v1927
  %v1929 = vpop.xlane.xlu0 %1928
  %v1930 = vcvt.f32.s32 %v1929
  %v1931 = vcvt.f32.s32 %v1925
  %v1932 = vshll.u32 %v1931, 16
  %v1933 = vadd.s32 %v1932, %v1930
  %v1934 = vsel %vm921, %v1226, 2147483647
  %v1935 = vand.u32 %v1934, 65535
  %v1936 = vshra.s32 %v1934, 16
  %v1937 = vcvt.s32.f32 %v1935
  %v1938 = vcvt.s32.f32 %v1936
  %1939 = vmin.xlane.f32.xlu0 %v1938
  %v1940 = vpop.xlane.xlu0 %1939
  %vm1941 = vcmp.eq.f32.partialorder %v1938, %v1940
  %v1942 = vsel %vm1941, %v1937, inf
  %1943 = vmin.xlane.f32.xlu0 %v1942
  %v1944 = vpop.xlane.xlu0 %1943
  %v1945 = vcvt.f32.s32 %v1944
  %v1946 = vcvt.f32.s32 %v1940
  %v1947 = vshll.u32 %v1946, 16
  %v1948 = vadd.s32 %v1947, %v1945
  %v1949 = vsel %vm921, %v1227, 2147483647
  %v1950 = vand.u32 %v1949, 65535
  %v1951 = vshra.s32 %v1949, 16
  %v1952 = vcvt.s32.f32 %v1950
  %v1953 = vcvt.s32.f32 %v1951
  %1954 = vmin.xlane.f32.xlu0 %v1953
  %v1955 = vpop.xlane.xlu0 %1954
  %vm1956 = vcmp.eq.f32.partialorder %v1953, %v1955
  %v1957 = vsel %vm1956, %v1952, inf
  %1958 = vmin.xlane.f32.xlu0 %v1957
  %v1959 = vpop.xlane.xlu0 %1958
  %v1960 = vcvt.f32.s32 %v1959
  %v1961 = vcvt.f32.s32 %v1955
  %v1962 = vshll.u32 %v1961, 16
  %v1963 = vadd.s32 %v1962, %v1960
  %v1964 = vsel %vm921, %v1228, 2147483647
  %v1965 = vand.u32 %v1964, 65535
  %v1966 = vshra.s32 %v1964, 16
  %v1967 = vcvt.s32.f32 %v1965
  %v1968 = vcvt.s32.f32 %v1966
  %1969 = vmin.xlane.f32.xlu0 %v1968
  %v1970 = vpop.xlane.xlu0 %1969
  %vm1971 = vcmp.eq.f32.partialorder %v1968, %v1970
  %v1972 = vsel %vm1971, %v1967, inf
  %1973 = vmin.xlane.f32.xlu0 %v1972
  %v1974 = vpop.xlane.xlu0 %1973
  %v1975 = vcvt.f32.s32 %v1974
  %v1976 = vcvt.f32.s32 %v1970
  %v1977 = vshll.u32 %v1976, 16
  %v1978 = vadd.s32 %v1977, %v1975
  %v1979 = vsel %vm921, %v1229, 2147483647
  %v1980 = vand.u32 %v1979, 65535
  %v1981 = vshra.s32 %v1979, 16
  %v1982 = vcvt.s32.f32 %v1980
  %v1983 = vcvt.s32.f32 %v1981
  %1984 = vmin.xlane.f32.xlu0 %v1983
  %v1985 = vpop.xlane.xlu0 %1984
  %vm1986 = vcmp.eq.f32.partialorder %v1983, %v1985
  %v1987 = vsel %vm1986, %v1982, inf
  %1988 = vmin.xlane.f32.xlu0 %v1987
  %v1989 = vpop.xlane.xlu0 %1988
  %v1990 = vcvt.f32.s32 %v1989
  %v1991 = vcvt.f32.s32 %v1985
  %v1992 = vshll.u32 %v1991, 16
  %v1993 = vadd.s32 %v1992, %v1990
  %v1994 = vsel %vm921, %v1230, 2147483647
  %v1995 = vand.u32 %v1994, 65535
  %v1996 = vshra.s32 %v1994, 16
  %v1997 = vcvt.s32.f32 %v1995
  %v1998 = vcvt.s32.f32 %v1996
  %1999 = vmin.xlane.f32.xlu0 %v1998
  %v2000 = vpop.xlane.xlu0 %1999
  %vm2001 = vcmp.eq.f32.partialorder %v1998, %v2000
  %v2002 = vsel %vm2001, %v1997, inf
  %2003 = vmin.xlane.f32.xlu0 %v2002
  %v2004 = vpop.xlane.xlu0 %2003
  %v2005 = vcvt.f32.s32 %v2004
  %v2006 = vcvt.f32.s32 %v2000
  %v2007 = vshll.u32 %v2006, 16
  %v2008 = vadd.s32 %v2007, %v2005
  %v2009 = vsel %vm921, %v1231, 2147483647
  %v2010 = vand.u32 %v2009, 65535
  %v2011 = vshra.s32 %v2009, 16
  %v2012 = vcvt.s32.f32 %v2010
  %v2013 = vcvt.s32.f32 %v2011
  %2014 = vmin.xlane.f32.xlu0 %v2013
  %v2015 = vpop.xlane.xlu0 %2014
  %vm2016 = vcmp.eq.f32.partialorder %v2013, %v2015
  %v2017 = vsel %vm2016, %v2012, inf
  %2018 = vmin.xlane.f32.xlu0 %v2017
  %v2019 = vpop.xlane.xlu0 %2018
  %v2020 = vcvt.f32.s32 %v2019
  %v2021 = vcvt.f32.s32 %v2015
  %v2022 = vshll.u32 %v2021, 16
  %v2023 = vadd.s32 %v2022, %v2020
  %v2024 = vsel %vm921, %v1232, 2147483647
  %v2025 = vand.u32 %v2024, 65535
  %v2026 = vshra.s32 %v2024, 16
  %v2027 = vcvt.s32.f32 %v2025
  %v2028 = vcvt.s32.f32 %v2026
  %2029 = vmin.xlane.f32.xlu0 %v2028
  %v2030 = vpop.xlane.xlu0 %2029
  %vm2031 = vcmp.eq.f32.partialorder %v2028, %v2030
  %v2032 = vsel %vm2031, %v2027, inf
  %2033 = vmin.xlane.f32.xlu0 %v2032
  %v2034 = vpop.xlane.xlu0 %2033
  %v2035 = vcvt.f32.s32 %v2034
  %v2036 = vcvt.f32.s32 %v2030
  %v2037 = vshll.u32 %v2036, 16
  %v2038 = vadd.s32 %v2037, %v2035
  %v2039 = vsel %vm921, %v1233, 2147483647
  %v2040 = vand.u32 %v2039, 65535
  %v2041 = vshra.s32 %v2039, 16
  %v2042 = vcvt.s32.f32 %v2040
  %v2043 = vcvt.s32.f32 %v2041
  %2044 = vmin.xlane.f32.xlu0 %v2043
  %v2045 = vpop.xlane.xlu0 %2044
  %vm2046 = vcmp.eq.f32.partialorder %v2043, %v2045
  %v2047 = vsel %vm2046, %v2042, inf
  %2048 = vmin.xlane.f32.xlu0 %v2047
  %v2049 = vpop.xlane.xlu0 %2048
  %v2050 = vcvt.f32.s32 %v2049
  %v2051 = vcvt.f32.s32 %v2045
  %v2052 = vshll.u32 %v2051, 16
  %v2053 = vadd.s32 %v2052, %v2050
  %v2054 = vsel %vm921, %v1234, 2147483647
  %v2055 = vand.u32 %v2054, 65535
  %v2056 = vshra.s32 %v2054, 16
  %v2057 = vcvt.s32.f32 %v2055
  %v2058 = vcvt.s32.f32 %v2056
  %2059 = vmin.xlane.f32.xlu0 %v2058
  %v2060 = vpop.xlane.xlu0 %2059
  %vm2061 = vcmp.eq.f32.partialorder %v2058, %v2060
  %v2062 = vsel %vm2061, %v2057, inf
  %2063 = vmin.xlane.f32.xlu0 %v2062
  %v2064 = vpop.xlane.xlu0 %2063
  %v2065 = vcvt.f32.s32 %v2064
  %v2066 = vcvt.f32.s32 %v2060
  %v2067 = vshll.u32 %v2066, 16
  %v2068 = vadd.s32 %v2067, %v2065
  %v2069 = vsel %vm921, %v1235, 2147483647
  %v2070 = vand.u32 %v2069, 65535
  %v2071 = vshra.s32 %v2069, 16
  %v2072 = vcvt.s32.f32 %v2070
  %v2073 = vcvt.s32.f32 %v2071
  %2074 = vmin.xlane.f32.xlu0 %v2073
  %v2075 = vpop.xlane.xlu0 %2074
  %vm2076 = vcmp.eq.f32.partialorder %v2073, %v2075
  %v2077 = vsel %vm2076, %v2072, inf
  %2078 = vmin.xlane.f32.xlu0 %v2077
  %v2079 = vpop.xlane.xlu0 %2078
  %v2080 = vcvt.f32.s32 %v2079
  %v2081 = vcvt.f32.s32 %v2075
  %v2082 = vshll.u32 %v2081, 16
  %v2083 = vadd.s32 %v2082, %v2080
  %v2084 = vsel %vm921, %v1236, 2147483647
  %v2085 = vand.u32 %v2084, 65535
  %v2086 = vshra.s32 %v2084, 16
  %v2087 = vcvt.s32.f32 %v2085
  %v2088 = vcvt.s32.f32 %v2086
  %2089 = vmin.xlane.f32.xlu0 %v2088
  %v2090 = vpop.xlane.xlu0 %2089
  %vm2091 = vcmp.eq.f32.partialorder %v2088, %v2090
  %v2092 = vsel %vm2091, %v2087, inf
  %2093 = vmin.xlane.f32.xlu0 %v2092
  %v2094 = vpop.xlane.xlu0 %2093
  %v2095 = vcvt.f32.s32 %v2094
  %v2096 = vcvt.f32.s32 %v2090
  %v2097 = vshll.u32 %v2096, 16
  %v2098 = vadd.s32 %v2097, %v2095
  %v2099 = vsel %vm921, %v1237, 2147483647
  %v2100 = vand.u32 %v2099, 65535
  %v2101 = vshra.s32 %v2099, 16
  %v2102 = vcvt.s32.f32 %v2100
  %v2103 = vcvt.s32.f32 %v2101
  %2104 = vmin.xlane.f32.xlu0 %v2103
  %v2105 = vpop.xlane.xlu0 %2104
  %vm2106 = vcmp.eq.f32.partialorder %v2103, %v2105
  %v2107 = vsel %vm2106, %v2102, inf
  %2108 = vmin.xlane.f32.xlu0 %v2107
  %v2109 = vpop.xlane.xlu0 %2108
  %v2110 = vcvt.f32.s32 %v2109
  %v2111 = vcvt.f32.s32 %v2105
  %v2112 = vshll.u32 %v2111, 16
  %v2113 = vadd.s32 %v2112, %v2110
  %v2114 = vsel %vm921, %v1238, 2147483647
  %v2115 = vand.u32 %v2114, 65535
  %v2116 = vshra.s32 %v2114, 16
  %v2117 = vcvt.s32.f32 %v2115
  %v2118 = vcvt.s32.f32 %v2116
  %2119 = vmin.xlane.f32.xlu0 %v2118
  %v2120 = vpop.xlane.xlu0 %2119
  %vm2121 = vcmp.eq.f32.partialorder %v2118, %v2120
  %v2122 = vsel %vm2121, %v2117, inf
  %2123 = vmin.xlane.f32.xlu0 %v2122
  %v2124 = vpop.xlane.xlu0 %2123
  %v2125 = vcvt.f32.s32 %v2124
  %v2126 = vcvt.f32.s32 %v2120
  %v2127 = vshll.u32 %v2126, 16
  %v2128 = vadd.s32 %v2127, %v2125
  %v2129 = vsel %vm921, %v1239, 2147483647
  %v2130 = vand.u32 %v2129, 65535
  %v2131 = vshra.s32 %v2129, 16
  %v2132 = vcvt.s32.f32 %v2130
  %v2133 = vcvt.s32.f32 %v2131
  %2134 = vmin.xlane.f32.xlu0 %v2133
  %v2135 = vpop.xlane.xlu0 %2134
  %vm2136 = vcmp.eq.f32.partialorder %v2133, %v2135
  %v2137 = vsel %vm2136, %v2132, inf
  %2138 = vmin.xlane.f32.xlu0 %v2137
  %v2139 = vpop.xlane.xlu0 %2138
  %v2140 = vcvt.f32.s32 %v2139
  %v2141 = vcvt.f32.s32 %v2135
  %v2142 = vshll.u32 %v2141, 16
  %v2143 = vadd.s32 %v2142, %v2140
  %v2144 = vsel %vm921, %v1240, 2147483647
  %v2145 = vand.u32 %v2144, 65535
  %v2146 = vshra.s32 %v2144, 16
  %v2147 = vcvt.s32.f32 %v2145
  %v2148 = vcvt.s32.f32 %v2146
  %2149 = vmin.xlane.f32.xlu0 %v2148
  %v2150 = vpop.xlane.xlu0 %2149
  %vm2151 = vcmp.eq.f32.partialorder %v2148, %v2150
  %v2152 = vsel %vm2151, %v2147, inf
  %2153 = vmin.xlane.f32.xlu0 %v2152
  %v2154 = vpop.xlane.xlu0 %2153
  %v2155 = vcvt.f32.s32 %v2154
  %v2156 = vcvt.f32.s32 %v2150
  %v2157 = vshll.u32 %v2156, 16
  %v2158 = vadd.s32 %v2157, %v2155
  %v2159 = vsel %vm921, %v1241, 2147483647
  %v2160 = vand.u32 %v2159, 65535
  %v2161 = vshra.s32 %v2159, 16
  %v2162 = vcvt.s32.f32 %v2160
  %v2163 = vcvt.s32.f32 %v2161
  %2164 = vmin.xlane.f32.xlu0 %v2163
  %v2165 = vpop.xlane.xlu0 %2164
  %vm2166 = vcmp.eq.f32.partialorder %v2163, %v2165
  %v2167 = vsel %vm2166, %v2162, inf
  %2168 = vmin.xlane.f32.xlu0 %v2167
  %v2169 = vpop.xlane.xlu0 %2168
  %v2170 = vcvt.f32.s32 %v2169
  %v2171 = vcvt.f32.s32 %v2165
  %v2172 = vshll.u32 %v2171, 16
  %v2173 = vadd.s32 %v2172, %v2170
  %v2174 = vsel %vm921, %v1242, 2147483647
  %v2175 = vand.u32 %v2174, 65535
  %v2176 = vshra.s32 %v2174, 16
  %v2177 = vcvt.s32.f32 %v2175
  %v2178 = vcvt.s32.f32 %v2176
  %2179 = vmin.xlane.f32.xlu0 %v2178
  %v2180 = vpop.xlane.xlu0 %2179
  %vm2181 = vcmp.eq.f32.partialorder %v2178, %v2180
  %v2182 = vsel %vm2181, %v2177, inf
  %2183 = vmin.xlane.f32.xlu0 %v2182
  %v2184 = vpop.xlane.xlu0 %2183
  %v2185 = vcvt.f32.s32 %v2184
  %v2186 = vcvt.f32.s32 %v2180
  %v2187 = vshll.u32 %v2186, 16
  %v2188 = vadd.s32 %v2187, %v2185
  %v2189 = vsel %vm921, %v1243, 2147483647
  %v2190 = vand.u32 %v2189, 65535
  %v2191 = vshra.s32 %v2189, 16
  %v2192 = vcvt.s32.f32 %v2190
  %v2193 = vcvt.s32.f32 %v2191
  %2194 = vmin.xlane.f32.xlu0 %v2193
  %v2195 = vpop.xlane.xlu0 %2194
  %vm2196 = vcmp.eq.f32.partialorder %v2193, %v2195
  %v2197 = vsel %vm2196, %v2192, inf
  %2198 = vmin.xlane.f32.xlu0 %v2197
  %v2199 = vpop.xlane.xlu0 %2198
  %v2200 = vcvt.f32.s32 %v2199
  %v2201 = vcvt.f32.s32 %v2195
  %v2202 = vshll.u32 %v2201, 16
  %v2203 = vadd.s32 %v2202, %v2200
  %vm2204 = vcmp.eq.s32.totalorder %v1115, %v1258
  %vm2205 = vcmp.eq.s32.totalorder %v1115, %v1273
  %vm2206 = vcmp.eq.s32.totalorder %v1115, %v1288
  %vm2207 = vcmp.eq.s32.totalorder %v1115, %v1303
  %vm2208 = vcmp.eq.s32.totalorder %v1115, %v1318
  %vm2209 = vcmp.eq.s32.totalorder %v1115, %v1333
  %vm2210 = vcmp.eq.s32.totalorder %v1115, %v1348
  %vm2211 = vcmp.eq.s32.totalorder %v1115, %v1363
  %vm2212 = vcmp.eq.s32.totalorder %v1115, %v1378
  %vm2213 = vcmp.eq.s32.totalorder %v1115, %v1393
  %vm2214 = vcmp.eq.s32.totalorder %v1115, %v1408
  %vm2215 = vcmp.eq.s32.totalorder %v1115, %v1423
  %vm2216 = vcmp.eq.s32.totalorder %v1115, %v1438
  %vm2217 = vcmp.eq.s32.totalorder %v1115, %v1453
  %vm2218 = vcmp.eq.s32.totalorder %v1115, %v1468
  %vm2219 = vcmp.eq.s32.totalorder %v1115, %v1483
  %vm2220 = vcmp.eq.s32.totalorder %v1115, %v1498
  %vm2221 = vcmp.eq.s32.totalorder %v1115, %v1513
  %vm2222 = vcmp.eq.s32.totalorder %v1115, %v1528
  %vm2223 = vcmp.eq.s32.totalorder %v1115, %v1543
  %vm2224 = vcmp.eq.s32.totalorder %v1115, %v1558
  %vm2225 = vcmp.eq.s32.totalorder %v1115, %v1573
  %vm2226 = vcmp.eq.s32.totalorder %v1115, %v1588
  %vm2227 = vcmp.eq.s32.totalorder %v1115, %v1603
  %vm2228 = vcmp.eq.s32.totalorder %v1115, %v1618
  %vm2229 = vcmp.eq.s32.totalorder %v1115, %v1633
  %vm2230 = vcmp.eq.s32.totalorder %v1115, %v1648
  %vm2231 = vcmp.eq.s32.totalorder %v1115, %v1663
  %vm2232 = vcmp.eq.s32.totalorder %v1115, %v1678
  %vm2233 = vcmp.eq.s32.totalorder %v1115, %v1693
  %vm2234 = vcmp.eq.s32.totalorder %v1115, %v1708
  %vm2235 = vcmp.eq.s32.totalorder %v1115, %v1723
  %vm2236 = vcmp.eq.s32.totalorder %v1115, %v1738
  %vm2237 = vcmp.eq.s32.totalorder %v1115, %v1753
  %vm2238 = vcmp.eq.s32.totalorder %v1115, %v1768
  %vm2239 = vcmp.eq.s32.totalorder %v1115, %v1783
  %vm2240 = vcmp.eq.s32.totalorder %v1115, %v1798
  %vm2241 = vcmp.eq.s32.totalorder %v1115, %v1813
  %vm2242 = vcmp.eq.s32.totalorder %v1115, %v1828
  %vm2243 = vcmp.eq.s32.totalorder %v1115, %v1843
  %vm2244 = vcmp.eq.s32.totalorder %v1115, %v1858
  %vm2245 = vcmp.eq.s32.totalorder %v1115, %v1873
  %vm2246 = vcmp.eq.s32.totalorder %v1115, %v1888
  %vm2247 = vcmp.eq.s32.totalorder %v1115, %v1903
  %vm2248 = vcmp.eq.s32.totalorder %v1115, %v1918
  %vm2249 = vcmp.eq.s32.totalorder %v1115, %v1933
  %vm2250 = vcmp.eq.s32.totalorder %v1115, %v1948
  %vm2251 = vcmp.eq.s32.totalorder %v1115, %v1963
  %vm2252 = vcmp.eq.s32.totalorder %v1115, %v1978
  %vm2253 = vcmp.eq.s32.totalorder %v1115, %v1993
  %vm2254 = vcmp.eq.s32.totalorder %v1115, %v2008
  %vm2255 = vcmp.eq.s32.totalorder %v1115, %v2023
  %vm2256 = vcmp.eq.s32.totalorder %v1115, %v2038
  %vm2257 = vcmp.eq.s32.totalorder %v1115, %v2053
  %vm2258 = vcmp.eq.s32.totalorder %v1115, %v2068
  %vm2259 = vcmp.eq.s32.totalorder %v1115, %v2083
  %vm2260 = vcmp.eq.s32.totalorder %v1115, %v2098
  %vm2261 = vcmp.eq.s32.totalorder %v1115, %v2113
  %vm2262 = vcmp.eq.s32.totalorder %v1115, %v2128
  %vm2263 = vcmp.eq.s32.totalorder %v1115, %v2143
  %vm2264 = vcmp.eq.s32.totalorder %v1115, %v2158
  %vm2265 = vcmp.eq.s32.totalorder %v1115, %v2173
  %vm2266 = vcmp.eq.s32.totalorder %v1115, %v2188
  %vm2267 = vcmp.eq.s32.totalorder %v1115, %v2203
  %v2268 = vsel %vm2204, 1, 0
  %v2269 = vsel %vm2205, 1, 0
  %v2270 = vsel %vm2206, 1, 0
  %v2271 = vsel %vm2207, 1, 0
  %v2272 = vsel %vm2208, 1, 0
  %v2273 = vsel %vm2209, 1, 0
  %v2274 = vsel %vm2210, 1, 0
  %v2275 = vsel %vm2211, 1, 0
  %v2276 = vsel %vm2212, 1, 0
  %v2277 = vsel %vm2213, 1, 0
  %v2278 = vsel %vm2214, 1, 0
  %v2279 = vsel %vm2215, 1, 0
  %v2280 = vsel %vm2216, 1, 0
  %v2281 = vsel %vm2217, 1, 0
  %v2282 = vsel %vm2218, 1, 0
  %v2283 = vsel %vm2219, 1, 0
  %v2284 = vsel %vm2220, 1, 0
  %v2285 = vsel %vm2221, 1, 0
  %v2286 = vsel %vm2222, 1, 0
  %v2287 = vsel %vm2223, 1, 0
  %v2288 = vsel %vm2224, 1, 0
  %v2289 = vsel %vm2225, 1, 0
  %v2290 = vsel %vm2226, 1, 0
  %v2291 = vsel %vm2227, 1, 0
  %v2292 = vsel %vm2228, 1, 0
  %v2293 = vsel %vm2229, 1, 0
  %v2294 = vsel %vm2230, 1, 0
  %v2295 = vsel %vm2231, 1, 0
  %v2296 = vsel %vm2232, 1, 0
  %v2297 = vsel %vm2233, 1, 0
  %v2298 = vsel %vm2234, 1, 0
  %v2299 = vsel %vm2235, 1, 0
  %v2300 = vsel %vm2236, 1, 0
  %v2301 = vsel %vm2237, 1, 0
  %v2302 = vsel %vm2238, 1, 0
  %v2303 = vsel %vm2239, 1, 0
  %v2304 = vsel %vm2240, 1, 0
  %v2305 = vsel %vm2241, 1, 0
  %v2306 = vsel %vm2242, 1, 0
  %v2307 = vsel %vm2243, 1, 0
  %v2308 = vsel %vm2244, 1, 0
  %v2309 = vsel %vm2245, 1, 0
  %v2310 = vsel %vm2246, 1, 0
  %v2311 = vsel %vm2247, 1, 0
  %v2312 = vsel %vm2248, 1, 0
  %v2313 = vsel %vm2249, 1, 0
  %v2314 = vsel %vm2250, 1, 0
  %v2315 = vsel %vm2251, 1, 0
  %v2316 = vsel %vm2252, 1, 0
  %v2317 = vsel %vm2253, 1, 0
  %v2318 = vsel %vm2254, 1, 0
  %v2319 = vsel %vm2255, 1, 0
  %v2320 = vsel %vm2256, 1, 0
  %v2321 = vsel %vm2257, 1, 0
  %v2322 = vsel %vm2258, 1, 0
  %v2323 = vsel %vm2259, 1, 0
  %v2324 = vsel %vm2260, 1, 0
  %v2325 = vsel %vm2261, 1, 0
  %v2326 = vsel %vm2262, 1, 0
  %v2327 = vsel %vm2263, 1, 0
  %v2328 = vsel %vm2264, 1, 0
  %v2329 = vsel %vm2265, 1, 0
  %v2330 = vsel %vm2266, 1, 0
  %v2331 = vsel %vm2267, 1, 0
  %v2332 = vcvt.s32.f32 %v2268
  %v2333 = vcvt.s32.f32 %v2269
  %v2334 = vcvt.s32.f32 %v2270
  %v2335 = vcvt.s32.f32 %v2271
  %v2336 = vcvt.s32.f32 %v2272
  %v2337 = vcvt.s32.f32 %v2273
  %v2338 = vcvt.s32.f32 %v2274
  %v2339 = vcvt.s32.f32 %v2275
  %v2340 = vcvt.s32.f32 %v2276
  %v2341 = vcvt.s32.f32 %v2277
  %v2342 = vcvt.s32.f32 %v2278
  %v2343 = vcvt.s32.f32 %v2279
  %v2344 = vcvt.s32.f32 %v2280
  %v2345 = vcvt.s32.f32 %v2281
  %v2346 = vcvt.s32.f32 %v2282
  %v2347 = vcvt.s32.f32 %v2283
  %v2348 = vcvt.s32.f32 %v2284
  %v2349 = vcvt.s32.f32 %v2285
  %v2350 = vcvt.s32.f32 %v2286
  %v2351 = vcvt.s32.f32 %v2287
  %v2352 = vcvt.s32.f32 %v2288
  %v2353 = vcvt.s32.f32 %v2289
  %v2354 = vcvt.s32.f32 %v2290
  %v2355 = vcvt.s32.f32 %v2291
  %v2356 = vcvt.s32.f32 %v2292
  %v2357 = vcvt.s32.f32 %v2293
  %v2358 = vcvt.s32.f32 %v2294
  %v2359 = vcvt.s32.f32 %v2295
  %v2360 = vcvt.s32.f32 %v2296
  %v2361 = vcvt.s32.f32 %v2297
  %v2362 = vcvt.s32.f32 %v2298
  %v2363 = vcvt.s32.f32 %v2299
  %v2364 = vcvt.s32.f32 %v2300
  %v2365 = vcvt.s32.f32 %v2301
  %v2366 = vcvt.s32.f32 %v2302
  %v2367 = vcvt.s32.f32 %v2303
  %v2368 = vcvt.s32.f32 %v2304
  %v2369 = vcvt.s32.f32 %v2305
  %v2370 = vcvt.s32.f32 %v2306
  %v2371 = vcvt.s32.f32 %v2307
  %v2372 = vcvt.s32.f32 %v2308
  %v2373 = vcvt.s32.f32 %v2309
  %v2374 = vcvt.s32.f32 %v2310
  %v2375 = vcvt.s32.f32 %v2311
  %v2376 = vcvt.s32.f32 %v2312
  %v2377 = vcvt.s32.f32 %v2313
  %v2378 = vcvt.s32.f32 %v2314
  %v2379 = vcvt.s32.f32 %v2315
  %v2380 = vcvt.s32.f32 %v2316
  %v2381 = vcvt.s32.f32 %v2317
  %v2382 = vcvt.s32.f32 %v2318
  %v2383 = vcvt.s32.f32 %v2319
  %v2384 = vcvt.s32.f32 %v2320
  %v2385 = vcvt.s32.f32 %v2321
  %v2386 = vcvt.s32.f32 %v2322
  %v2387 = vcvt.s32.f32 %v2323
  %v2388 = vcvt.s32.f32 %v2324
  %v2389 = vcvt.s32.f32 %v2325
  %v2390 = vcvt.s32.f32 %v2326
  %v2391 = vcvt.s32.f32 %v2327
  %v2392 = vcvt.s32.f32 %v2328
  %v2393 = vcvt.s32.f32 %v2329
  %v2394 = vcvt.s32.f32 %v2330
  %v2395 = vcvt.s32.f32 %v2331
  %v2397 = vsel %vm921, %v2332, 0
  %v2400 = vsel %vm921, %v2333, 0
  %v2403 = vsel %vm921, %v2334, 0
  %v2406 = vsel %vm921, %v2335, 0
  %v2409 = vsel %vm921, %v2336, 0
  %v2412 = vsel %vm921, %v2337, 0
  %v2415 = vsel %vm921, %v2338, 0
  %v2418 = vsel %vm921, %v2339, 0
  %v2421 = vsel %vm921, %v2340, 0
  %v2424 = vsel %vm921, %v2341, 0
  %v2427 = vsel %vm921, %v2342, 0
  %v2430 = vsel %vm921, %v2343, 0
  %v2433 = vsel %vm921, %v2344, 0
  %v2436 = vsel %vm921, %v2345, 0
  %v2439 = vsel %vm921, %v2346, 0
  %v2442 = vsel %vm921, %v2347, 0
  %v2445 = vsel %vm921, %v2348, 0
  %v2448 = vsel %vm921, %v2349, 0
  %v2451 = vsel %vm921, %v2350, 0
  %v2454 = vsel %vm921, %v2351, 0
  %v2457 = vsel %vm921, %v2352, 0
  %v2460 = vsel %vm921, %v2353, 0
  %v2463 = vsel %vm921, %v2354, 0
  %v2466 = vsel %vm921, %v2355, 0
  %v2469 = vsel %vm921, %v2356, 0
  %v2472 = vsel %vm921, %v2357, 0
  %v2475 = vsel %vm921, %v2358, 0
  %v2478 = vsel %vm921, %v2359, 0
  %v2481 = vsel %vm921, %v2360, 0
  %v2484 = vsel %vm921, %v2361, 0
  %v2487 = vsel %vm921, %v2362, 0
  %v2490 = vsel %vm921, %v2363, 0
  %v2493 = vsel %vm921, %v2364, 0
  %v2496 = vsel %vm921, %v2365, 0
  %v2499 = vsel %vm921, %v2366, 0
  %v2502 = vsel %vm921, %v2367, 0
  %v2505 = vsel %vm921, %v2368, 0
  %v2508 = vsel %vm921, %v2369, 0
  %v2511 = vsel %vm921, %v2370, 0
  %v2514 = vsel %vm921, %v2371, 0
  %v2517 = vsel %vm921, %v2372, 0
  %v2520 = vsel %vm921, %v2373, 0
  %v2523 = vsel %vm921, %v2374, 0
  %v2526 = vsel %vm921, %v2375, 0
  %v2529 = vsel %vm921, %v2376, 0
  %v2532 = vsel %vm921, %v2377, 0
  %v2535 = vsel %vm921, %v2378, 0
  %v2538 = vsel %vm921, %v2379, 0
  %v2541 = vsel %vm921, %v2380, 0
  %v2544 = vsel %vm921, %v2381, 0
  %v2547 = vsel %vm921, %v2382, 0
  %v2550 = vsel %vm921, %v2383, 0
  %v2553 = vsel %vm921, %v2384, 0
  %v2556 = vsel %vm921, %v2385, 0
  %v2559 = vsel %vm921, %v2386, 0
  %v2562 = vsel %vm921, %v2387, 0
  %v2565 = vsel %vm921, %v2388, 0
  %v2568 = vsel %vm921, %v2389, 0
  %v2571 = vsel %vm921, %v2390, 0
  %v2574 = vsel %vm921, %v2391, 0
  %v2577 = vsel %vm921, %v2392, 0
  %v2580 = vsel %vm921, %v2393, 0
  %v2583 = vsel %vm921, %v2394, 0
  %v2586 = vsel %vm921, %v2395, 0
  %2588 = vmatprep.subr.mxu0 0.0
  %2589 = vmatpush1.msra.mxu0 %v256
  %2590 = vmatprep.subr.mxu0 0.0
  %2591 = vmatpush1.msra.mxu0 %v257
  %2592 = vmatprep.subr.mxu0 0.0
  %2593 = vmatpush1.msra.mxu0 %v258
  %2594 = vmatprep.subr.mxu0 0.0
  %2595 = vmatpush1.msra.mxu0 %v259
  %2596 = vmatprep.subr.mxu0 0.0
  %2597 = vmatpush1.msra.mxu0 0.0
  %2598 = vmatprep.subr.mxu0 0.0
  %2599 = vmatpush1.msra.mxu0 0.0
  %2600 = vmatprep.subr.mxu0 0.0
  %2601 = vmatpush1.msra.mxu0 0.0
  %2602 = vmatprep.subr.mxu0 0.0
  %2603 = vmatpush1.msra.mxu0 0.0
  %2604 = vmatprep.subr.mxu0 0.0
  %2605 = vmatpush1.msra.mxu0 0.0
  %2606 = vmatprep.subr.mxu0 0.0
  %2607 = vmatpush1.msra.mxu0 0.0
  %2608 = vmatprep.subr.mxu0 0.0
  %2609 = vmatpush1.msra.mxu0 0.0
  %2610 = vmatprep.subr.mxu0 0.0
  %2611 = vmatpush1.msra.mxu0 0.0
  %2612 = vmatprep.subr.mxu0 0.0
  %2613 = vmatpush1.msra.mxu0 0.0
  %2614 = vmatprep.subr.mxu0 0.0
  %2615 = vmatpush1.msra.mxu0 0.0
  %2616 = vmatprep.subr.mxu0 0.0
  %2617 = vmatpush1.msra.mxu0 0.0
  %2618 = vmatprep.subr.mxu0 0.0
  %2619 = vmatpush1.msra.mxu0 0.0
  %2620 = vmatprep.subr.mxu0 0.0
  %2621 = vmatpush1.msra.mxu0 0.0
  %2622 = vmatprep.subr.mxu0 0.0
  %2623 = vmatpush1.msra.mxu0 0.0
  %2624 = vmatprep.subr.mxu0 0.0
  %2625 = vmatpush1.msra.mxu0 0.0
  %2626 = vmatprep.subr.mxu0 0.0
  %2627 = vmatpush1.msra.mxu0 0.0
  %2628 = vmatprep.subr.mxu0 0.0
  %2629 = vmatpush1.msra.mxu0 0.0
  %2630 = vmatprep.subr.mxu0 0.0
  %2631 = vmatpush1.msra.mxu0 0.0
  %2632 = vmatprep.subr.mxu0 0.0
  %2633 = vmatpush1.msra.mxu0 0.0
  %2634 = vmatprep.subr.mxu0 0.0
  %2635 = vmatpush1.msra.mxu0 0.0
  %2636 = vmatprep.subr.mxu0 0.0
  %2637 = vmatpush1.msra.mxu0 0.0
  %2638 = vmatprep.subr.mxu0 0.0
  %2639 = vmatpush1.msra.mxu0 0.0
  %2640 = vmatprep.subr.mxu0 0.0
  %2641 = vmatpush1.msra.mxu0 0.0
  %2642 = vmatprep.subr.mxu0 0.0
  %2643 = vmatpush1.msra.mxu0 0.0
  %2644 = vmatprep.subr.mxu0 0.0
  %2645 = vmatpush1.msra.mxu0 0.0
  %2646 = vmatprep.subr.mxu0 0.0
  %2647 = vmatpush1.msra.mxu0 0.0
  %2648 = vmatprep.subr.mxu0 0.0
  %2649 = vmatpush1.msra.mxu0 0.0
  %2650 = vmatprep.subr.mxu0 0.0
  %2651 = vmatpush1.msra.mxu0 0.0
  %2652 = vmatprep.mubr.f32.mxu0 0.0
  %2653 = vmatmul.mubr.f32.gmra.mrb[0].mxu0 %v2397
  %v2654 = vpop.f32.mrb[0].mxu0
  %v2655 = vadd.f32 0.0, %v2654
  %v2656 = vpop.f32.mrb[0].mxu0
  %2657 = vmatprep.mubr.f32.mxu0 0.0
  %2658 = vmatmul.mubr.f32.gmra.mrb[0].mxu0 %v2400
  %v2659 = vpop.f32.mrb[0].mxu0
  %v2660 = vadd.f32 0.0, %v2659
  %v2661 = vpop.f32.mrb[0].mxu0
  %2662 = vmatprep.mubr.f32.mxu0 0.0
  %2663 = vmatmul.mubr.f32.gmra.mrb[0].mxu0 %v2403
  %v2664 = vpop.f32.mrb[0].mxu0
  %v2665 = vadd.f32 0.0, %v2664
  %v2666 = vpop.f32.mrb[0].mxu0
  %2667 = vmatprep.mubr.f32.mxu0 0.0
  %2668 = vmatmul.mubr.f32.gmra.mrb[0].mxu0 %v2406
  %v2669 = vpop.f32.mrb[0].mxu0
  %v2670 = vadd.f32 0.0, %v2669
  %v2671 = vpop.f32.mrb[0].mxu0
  %2672 = vmatprep.mubr.f32.mxu0 0.0
  %2673 = vmatmul.mubr.f32.gmra.mrb[0].mxu0 %v2409
  %v2674 = vpop.f32.mrb[0].mxu0
  %v2675 = vadd.f32 0.0, %v2674
  %v2676 = vpop.f32.mrb[0].mxu0
  %2677 = vmatprep.mubr.f32.mxu0 0.0
  %2678 = vmatmul.mubr.f32.gmra.mrb[0].mxu0 %v2412
  %v2679 = vpop.f32.mrb[0].mxu0
  %v2680 = vadd.f32 0.0, %v2679
  %v2681 = vpop.f32.mrb[0].mxu0
  %2682 = vmatprep.mubr.f32.mxu0 0.0
  %2683 = vmatmul.mubr.f32.gmra.mrb[0].mxu0 %v2415
  %v2684 = vpop.f32.mrb[0].mxu0
  %v2685 = vadd.f32 0.0, %v2684
  %v2686 = vpop.f32.mrb[0].mxu0
  %2687 = vmatprep.mubr.f32.mxu0 0.0
  %2688 = vmatmul.mubr.f32.gmra.mrb[0].mxu0 %v2418
  %v2689 = vpop.f32.mrb[0].mxu0
  %v2690 = vadd.f32 0.0, %v2689
  %v2691 = vpop.f32.mrb[0].mxu0
  %2692 = vmatprep.mubr.f32.mxu0 0.0
  %2693 = vmatmul.mubr.f32.gmra.mrb[0].mxu0 %v2421
  %v2694 = vpop.f32.mrb[0].mxu0
  %v2695 = vadd.f32 0.0, %v2694
  %v2696 = vpop.f32.mrb[0].mxu0
  %2697 = vmatprep.mubr.f32.mxu0 0.0
  %2698 = vmatmul.mubr.f32.gmra.mrb[0].mxu0 %v2424
  %v2699 = vpop.f32.mrb[0].mxu0
  %v2700 = vadd.f32 0.0, %v2699
  %v2701 = vpop.f32.mrb[0].mxu0
  %2702 = vmatprep.mubr.f32.mxu0 0.0
  %2703 = vmatmul.mubr.f32.gmra.mrb[0].mxu0 %v2427
  %v2704 = vpop.f32.mrb[0].mxu0
  %v2705 = vadd.f32 0.0, %v2704
  %v2706 = vpop.f32.mrb[0].mxu0
  %2707 = vmatprep.mubr.f32.mxu0 0.0
  %2708 = vmatmul.mubr.f32.gmra.mrb[0].mxu0 %v2430
  %v2709 = vpop.f32.mrb[0].mxu0
  %v2710 = vadd.f32 0.0, %v2709
  %v2711 = vpop.f32.mrb[0].mxu0
  %2712 = vmatprep.mubr.f32.mxu0 0.0
  %2713 = vmatmul.mubr.f32.gmra.mrb[0].mxu0 %v2433
  %v2714 = vpop.f32.mrb[0].mxu0
  %v2715 = vadd.f32 0.0, %v2714
  %v2716 = vpop.f32.mrb[0].mxu0
  %2717 = vmatprep.mubr.f32.mxu0 0.0
  %2718 = vmatmul.mubr.f32.gmra.mrb[0].mxu0 %v2436
  %v2719 = vpop.f32.mrb[0].mxu0
  %v2720 = vadd.f32 0.0, %v2719
  %v2721 = vpop.f32.mrb[0].mxu0
  %2722 = vmatprep.mubr.f32.mxu0 0.0
  %2723 = vmatmul.mubr.f32.gmra.mrb[0].mxu0 %v2439
  %v2724 = vpop.f32.mrb[0].mxu0
  %v2725 = vadd.f32 0.0, %v2724
  %v2726 = vpop.f32.mrb[0].mxu0
  %2727 = vmatprep.mubr.f32.mxu0 0.0
  %2728 = vmatmul.mubr.f32.gmra.mrb[0].mxu0 %v2442
  %v2729 = vpop.f32.mrb[0].mxu0
  %v2730 = vadd.f32 0.0, %v2729
  %v2731 = vpop.f32.mrb[0].mxu0
  %2732 = vmatprep.mubr.f32.mxu0 0.0
  %2733 = vmatmul.mubr.f32.gmra.mrb[0].mxu0 %v2445
  %v2734 = vpop.f32.mrb[0].mxu0
  %v2735 = vadd.f32 0.0, %v2734
  %v2736 = vpop.f32.mrb[0].mxu0
  %2737 = vmatprep.mubr.f32.mxu0 0.0
  %2738 = vmatmul.mubr.f32.gmra.mrb[0].mxu0 %v2448
  %v2739 = vpop.f32.mrb[0].mxu0
  %v2740 = vadd.f32 0.0, %v2739
  %v2741 = vpop.f32.mrb[0].mxu0
  %2742 = vmatprep.mubr.f32.mxu0 0.0
  %2743 = vmatmul.mubr.f32.gmra.mrb[0].mxu0 %v2451
  %v2744 = vpop.f32.mrb[0].mxu0
  %v2745 = vadd.f32 0.0, %v2744
  %v2746 = vpop.f32.mrb[0].mxu0
  %2747 = vmatprep.mubr.f32.mxu0 0.0
  %2748 = vmatmul.mubr.f32.gmra.mrb[0].mxu0 %v2454
  %v2749 = vpop.f32.mrb[0].mxu0
  %v2750 = vadd.f32 0.0, %v2749
  %v2751 = vpop.f32.mrb[0].mxu0
  %2752 = vmatprep.mubr.f32.mxu0 0.0
  %2753 = vmatmul.mubr.f32.gmra.mrb[0].mxu0 %v2457
  %v2754 = vpop.f32.mrb[0].mxu0
  %v2755 = vadd.f32 0.0, %v2754
  %v2756 = vpop.f32.mrb[0].mxu0
  %2757 = vmatprep.mubr.f32.mxu0 0.0
  %2758 = vmatmul.mubr.f32.gmra.mrb[0].mxu0 %v2460
  %v2759 = vpop.f32.mrb[0].mxu0
  %v2760 = vadd.f32 0.0, %v2759
  %v2761 = vpop.f32.mrb[0].mxu0
  %2762 = vmatprep.mubr.f32.mxu0 0.0
  %2763 = vmatmul.mubr.f32.gmra.mrb[0].mxu0 %v2463
  %v2764 = vpop.f32.mrb[0].mxu0
  %v2765 = vadd.f32 0.0, %v2764
  %v2766 = vpop.f32.mrb[0].mxu0
  %2767 = vmatprep.mubr.f32.mxu0 0.0
  %2768 = vmatmul.mubr.f32.gmra.mrb[0].mxu0 %v2466
  %v2769 = vpop.f32.mrb[0].mxu0
  %v2770 = vadd.f32 0.0, %v2769
  %v2771 = vpop.f32.mrb[0].mxu0
  %2772 = vmatprep.mubr.f32.mxu0 0.0
  %2773 = vmatmul.mubr.f32.gmra.mrb[0].mxu0 %v2469
  %v2774 = vpop.f32.mrb[0].mxu0
  %v2775 = vadd.f32 0.0, %v2774
  %v2776 = vpop.f32.mrb[0].mxu0
  %2777 = vmatprep.mubr.f32.mxu0 0.0
  %2778 = vmatmul.mubr.f32.gmra.mrb[0].mxu0 %v2472
  %v2779 = vpop.f32.mrb[0].mxu0
  %v2780 = vadd.f32 0.0, %v2779
  %v2781 = vpop.f32.mrb[0].mxu0
  %2782 = vmatprep.mubr.f32.mxu0 0.0
  %2783 = vmatmul.mubr.f32.gmra.mrb[0].mxu0 %v2475
  %v2784 = vpop.f32.mrb[0].mxu0
  %v2785 = vadd.f32 0.0, %v2784
  %v2786 = vpop.f32.mrb[0].mxu0
  %2787 = vmatprep.mubr.f32.mxu0 0.0
  %2788 = vmatmul.mubr.f32.gmra.mrb[0].mxu0 %v2478
  %v2789 = vpop.f32.mrb[0].mxu0
  %v2790 = vadd.f32 0.0, %v2789
  %v2791 = vpop.f32.mrb[0].mxu0
  %2792 = vmatprep.mubr.f32.mxu0 0.0
  %2793 = vmatmul.mubr.f32.gmra.mrb[0].mxu0 %v2481
  %v2794 = vpop.f32.mrb[0].mxu0
  %v2795 = vadd.f32 0.0, %v2794
  %v2796 = vpop.f32.mrb[0].mxu0
  %2797 = vmatprep.mubr.f32.mxu0 0.0
  %2798 = vmatmul.mubr.f32.gmra.mrb[0].mxu0 %v2484
  %v2799 = vpop.f32.mrb[0].mxu0
  %v2800 = vadd.f32 0.0, %v2799
  %v2801 = vpop.f32.mrb[0].mxu0
  %2802 = vmatprep.mubr.f32.mxu0 0.0
  %2803 = vmatmul.mubr.f32.gmra.mrb[0].mxu0 %v2487
  %v2804 = vpop.f32.mrb[0].mxu0
  %v2805 = vadd.f32 0.0, %v2804
  %v2806 = vpop.f32.mrb[0].mxu0
  %2807 = vmatprep.mubr.f32.mxu0 0.0
  %2808 = vmatmul.mubr.f32.gmra.mrb[0].mxu0 %v2490
  %v2809 = vpop.f32.mrb[0].mxu0
  %v2810 = vadd.f32 0.0, %v2809
  %v2811 = vpop.f32.mrb[0].mxu0
  %2812 = vmatprep.mubr.f32.mxu0 0.0
  %2813 = vmatmul.mubr.f32.gmra.mrb[0].mxu0 %v2493
  %v2814 = vpop.f32.mrb[0].mxu0
  %v2815 = vadd.f32 0.0, %v2814
  %v2816 = vpop.f32.mrb[0].mxu0
  %2817 = vmatprep.mubr.f32.mxu0 0.0
  %2818 = vmatmul.mubr.f32.gmra.mrb[0].mxu0 %v2496
  %v2819 = vpop.f32.mrb[0].mxu0
  %v2820 = vadd.f32 0.0, %v2819
  %v2821 = vpop.f32.mrb[0].mxu0
  %2822 = vmatprep.mubr.f32.mxu0 0.0
  %2823 = vmatmul.mubr.f32.gmra.mrb[0].mxu0 %v2499
  %v2824 = vpop.f32.mrb[0].mxu0
  %v2825 = vadd.f32 0.0, %v2824
  %v2826 = vpop.f32.mrb[0].mxu0
  %2827 = vmatprep.mubr.f32.mxu0 0.0
  %2828 = vmatmul.mubr.f32.gmra.mrb[0].mxu0 %v2502
  %v2829 = vpop.f32.mrb[0].mxu0
  %v2830 = vadd.f32 0.0, %v2829
  %v2831 = vpop.f32.mrb[0].mxu0
  %2832 = vmatprep.mubr.f32.mxu0 0.0
  %2833 = vmatmul.mubr.f32.gmra.mrb[0].mxu0 %v2505
  %v2834 = vpop.f32.mrb[0].mxu0
  %v2835 = vadd.f32 0.0, %v2834
  %v2836 = vpop.f32.mrb[0].mxu0
  %2837 = vmatprep.mubr.f32.mxu0 0.0
  %2838 = vmatmul.mubr.f32.gmra.mrb[0].mxu0 %v2508
  %v2839 = vpop.f32.mrb[0].mxu0
  %v2840 = vadd.f32 0.0, %v2839
  %v2841 = vpop.f32.mrb[0].mxu0
  %2842 = vmatprep.mubr.f32.mxu0 0.0
  %2843 = vmatmul.mubr.f32.gmra.mrb[0].mxu0 %v2511
  %v2844 = vpop.f32.mrb[0].mxu0
  %v2845 = vadd.f32 0.0, %v2844
  %v2846 = vpop.f32.mrb[0].mxu0
  %2847 = vmatprep.mubr.f32.mxu0 0.0
  %2848 = vmatmul.mubr.f32.gmra.mrb[0].mxu0 %v2514
  %v2849 = vpop.f32.mrb[0].mxu0
  %v2850 = vadd.f32 0.0, %v2849
  %v2851 = vpop.f32.mrb[0].mxu0
  %2852 = vmatprep.mubr.f32.mxu0 0.0
  %2853 = vmatmul.mubr.f32.gmra.mrb[0].mxu0 %v2517
  %v2854 = vpop.f32.mrb[0].mxu0
  %v2855 = vadd.f32 0.0, %v2854
  %v2856 = vpop.f32.mrb[0].mxu0
  %2857 = vmatprep.mubr.f32.mxu0 0.0
  %2858 = vmatmul.mubr.f32.gmra.mrb[0].mxu0 %v2520
  %v2859 = vpop.f32.mrb[0].mxu0
  %v2860 = vadd.f32 0.0, %v2859
  %v2861 = vpop.f32.mrb[0].mxu0
  %2862 = vmatprep.mubr.f32.mxu0 0.0
  %2863 = vmatmul.mubr.f32.gmra.mrb[0].mxu0 %v2523
  %v2864 = vpop.f32.mrb[0].mxu0
  %v2865 = vadd.f32 0.0, %v2864
  %v2866 = vpop.f32.mrb[0].mxu0
  %2867 = vmatprep.mubr.f32.mxu0 0.0
  %2868 = vmatmul.mubr.f32.gmra.mrb[0].mxu0 %v2526
  %v2869 = vpop.f32.mrb[0].mxu0
  %v2870 = vadd.f32 0.0, %v2869
  %v2871 = vpop.f32.mrb[0].mxu0
  %2872 = vmatprep.mubr.f32.mxu0 0.0
  %2873 = vmatmul.mubr.f32.gmra.mrb[0].mxu0 %v2529
  %v2874 = vpop.f32.mrb[0].mxu0
  %v2875 = vadd.f32 0.0, %v2874
  %v2876 = vpop.f32.mrb[0].mxu0
  %2877 = vmatprep.mubr.f32.mxu0 0.0
  %2878 = vmatmul.mubr.f32.gmra.mrb[0].mxu0 %v2532
  %v2879 = vpop.f32.mrb[0].mxu0
  %v2880 = vadd.f32 0.0, %v2879
  %v2881 = vpop.f32.mrb[0].mxu0
  %2882 = vmatprep.mubr.f32.mxu0 0.0
  %2883 = vmatmul.mubr.f32.gmra.mrb[0].mxu0 %v2535
  %v2884 = vpop.f32.mrb[0].mxu0
  %v2885 = vadd.f32 0.0, %v2884
  %v2886 = vpop.f32.mrb[0].mxu0
  %2887 = vmatprep.mubr.f32.mxu0 0.0
  %2888 = vmatmul.mubr.f32.gmra.mrb[0].mxu0 %v2538
  %v2889 = vpop.f32.mrb[0].mxu0
  %v2890 = vadd.f32 0.0, %v2889
  %v2891 = vpop.f32.mrb[0].mxu0
  %2892 = vmatprep.mubr.f32.mxu0 0.0
  %2893 = vmatmul.mubr.f32.gmra.mrb[0].mxu0 %v2541
  %v2894 = vpop.f32.mrb[0].mxu0
  %v2895 = vadd.f32 0.0, %v2894
  %v2896 = vpop.f32.mrb[0].mxu0
  %2897 = vmatprep.mubr.f32.mxu0 0.0
  %2898 = vmatmul.mubr.f32.gmra.mrb[0].mxu0 %v2544
  %v2899 = vpop.f32.mrb[0].mxu0
  %v2900 = vadd.f32 0.0, %v2899
  %v2901 = vpop.f32.mrb[0].mxu0
  %2902 = vmatprep.mubr.f32.mxu0 0.0
  %2903 = vmatmul.mubr.f32.gmra.mrb[0].mxu0 %v2547
  %v2904 = vpop.f32.mrb[0].mxu0
  %v2905 = vadd.f32 0.0, %v2904
  %v2906 = vpop.f32.mrb[0].mxu0
  %2907 = vmatprep.mubr.f32.mxu0 0.0
  %2908 = vmatmul.mubr.f32.gmra.mrb[0].mxu0 %v2550
  %v2909 = vpop.f32.mrb[0].mxu0
  %v2910 = vadd.f32 0.0, %v2909
  %v2911 = vpop.f32.mrb[0].mxu0
  %2912 = vmatprep.mubr.f32.mxu0 0.0
  %2913 = vmatmul.mubr.f32.gmra.mrb[0].mxu0 %v2553
  %v2914 = vpop.f32.mrb[0].mxu0
  %v2915 = vadd.f32 0.0, %v2914
  %v2916 = vpop.f32.mrb[0].mxu0
  %2917 = vmatprep.mubr.f32.mxu0 0.0
  %2918 = vmatmul.mubr.f32.gmra.mrb[0].mxu0 %v2556
  %v2919 = vpop.f32.mrb[0].mxu0
  %v2920 = vadd.f32 0.0, %v2919
  %v2921 = vpop.f32.mrb[0].mxu0
  %2922 = vmatprep.mubr.f32.mxu0 0.0
  %2923 = vmatmul.mubr.f32.gmra.mrb[0].mxu0 %v2559
  %v2924 = vpop.f32.mrb[0].mxu0
  %v2925 = vadd.f32 0.0, %v2924
  %v2926 = vpop.f32.mrb[0].mxu0
  %2927 = vmatprep.mubr.f32.mxu0 0.0
  %2928 = vmatmul.mubr.f32.gmra.mrb[0].mxu0 %v2562
  %v2929 = vpop.f32.mrb[0].mxu0
  %v2930 = vadd.f32 0.0, %v2929
  %v2931 = vpop.f32.mrb[0].mxu0
  %2932 = vmatprep.mubr.f32.mxu0 0.0
  %2933 = vmatmul.mubr.f32.gmra.mrb[0].mxu0 %v2565
  %v2934 = vpop.f32.mrb[0].mxu0
  %v2935 = vadd.f32 0.0, %v2934
  %v2936 = vpop.f32.mrb[0].mxu0
  %2937 = vmatprep.mubr.f32.mxu0 0.0
  %2938 = vmatmul.mubr.f32.gmra.mrb[0].mxu0 %v2568
  %v2939 = vpop.f32.mrb[0].mxu0
  %v2940 = vadd.f32 0.0, %v2939
  %v2941 = vpop.f32.mrb[0].mxu0
  %2942 = vmatprep.mubr.f32.mxu0 0.0
  %2943 = vmatmul.mubr.f32.gmra.mrb[0].mxu0 %v2571
  %v2944 = vpop.f32.mrb[0].mxu0
  %v2945 = vadd.f32 0.0, %v2944
  %v2946 = vpop.f32.mrb[0].mxu0
  %2947 = vmatprep.mubr.f32.mxu0 0.0
  %2948 = vmatmul.mubr.f32.gmra.mrb[0].mxu0 %v2574
  %v2949 = vpop.f32.mrb[0].mxu0
  %v2950 = vadd.f32 0.0, %v2949
  %v2951 = vpop.f32.mrb[0].mxu0
  %2952 = vmatprep.mubr.f32.mxu0 0.0
  %2953 = vmatmul.mubr.f32.gmra.mrb[0].mxu0 %v2577
  %v2954 = vpop.f32.mrb[0].mxu0
  %v2955 = vadd.f32 0.0, %v2954
  %v2956 = vpop.f32.mrb[0].mxu0
  %2957 = vmatprep.mubr.f32.mxu0 0.0
  %2958 = vmatmul.mubr.f32.gmra.mrb[0].mxu0 %v2580
  %v2959 = vpop.f32.mrb[0].mxu0
  %v2960 = vadd.f32 0.0, %v2959
  %v2961 = vpop.f32.mrb[0].mxu0
  %2962 = vmatprep.mubr.f32.mxu0 0.0
  %2963 = vmatmul.mubr.f32.gmra.mrb[0].mxu0 %v2583
  %v2964 = vpop.f32.mrb[0].mxu0
  %v2965 = vadd.f32 0.0, %v2964
  %v2966 = vpop.f32.mrb[0].mxu0
  %2967 = vmatprep.mubr.f32.mxu0 0.0
  %2968 = vmatmul.mubr.f32.gmra.mrb[0].mxu0 %v2586
  %v2969 = vpop.f32.mrb[0].mxu0
  %v2970 = vadd.f32 0.0, %v2969
  %v2971 = vpop.f32.mrb[0].mxu0
  %2972 = vdwg.mxu0
  %2973 = vst.msk [vmem:[%s59] sm:$0xff] %vm260, %v2655
  %2974 = vst.msk [vmem:[%s59 + $0x8] sm:$0xff] %vm260, %v2660
  %2975 = vst.msk [vmem:[%s59 + $0x10] sm:$0xff] %vm260, %v2665
  %2976 = vst.msk [vmem:[%s59 + $0x18] sm:$0xff] %vm260, %v2670
  %2977 = vst.msk [vmem:[%s59 + $0x20] sm:$0xff] %vm260, %v2675
  %2978 = vst.msk [vmem:[%s59 + $0x28] sm:$0xff] %vm260, %v2680
  %2979 = vst.msk [vmem:[%s59 + $0x30] sm:$0xff] %vm260, %v2685
  %2980 = vst.msk [vmem:[%s59 + $0x38] sm:$0xff] %vm260, %v2690
  %2981 = vst.msk [vmem:[%s59 + $0x40] sm:$0xff] %vm260, %v2695
  %2982 = vst.msk [vmem:[%s59 + $0x48] sm:$0xff] %vm260, %v2700
  %2983 = vst.msk [vmem:[%s59 + $0x50] sm:$0xff] %vm260, %v2705
  %2984 = vst.msk [vmem:[%s59 + $0x58] sm:$0xff] %vm260, %v2710
  %2985 = vst.msk [vmem:[%s59 + $0x60] sm:$0xff] %vm260, %v2715
  %2986 = vst.msk [vmem:[%s59 + $0x68] sm:$0xff] %vm260, %v2720
  %2987 = vst.msk [vmem:[%s59 + $0x70] sm:$0xff] %vm260, %v2725
  %2988 = vst.msk [vmem:[%s59 + $0x78] sm:$0xff] %vm260, %v2730
  %2989 = vst.msk [vmem:[%s59 + $0x80] sm:$0xff] %vm260, %v2735
  %2990 = vst.msk [vmem:[%s59 + $0x88] sm:$0xff] %vm260, %v2740
  %2991 = vst.msk [vmem:[%s59 + $0x90] sm:$0xff] %vm260, %v2745
  %2992 = vst.msk [vmem:[%s59 + $0x98] sm:$0xff] %vm260, %v2750
  %2993 = vst.msk [vmem:[%s59 + $0xa0] sm:$0xff] %vm260, %v2755
  %2994 = vst.msk [vmem:[%s59 + $0xa8] sm:$0xff] %vm260, %v2760
  %2995 = vst.msk [vmem:[%s59 + $0xb0] sm:$0xff] %vm260, %v2765
  %2996 = vst.msk [vmem:[%s59 + $0xb8] sm:$0xff] %vm260, %v2770
  %2997 = vst.msk [vmem:[%s59 + $0xc0] sm:$0xff] %vm260, %v2775
  %2998 = vst.msk [vmem:[%s59 + $0xc8] sm:$0xff] %vm260, %v2780
  %2999 = vst.msk [vmem:[%s59 + $0xd0] sm:$0xff] %vm260, %v2785
  %3000 = vst.msk [vmem:[%s59 + $0xd8] sm:$0xff] %vm260, %v2790
  %3001 = vst.msk [vmem:[%s59 + $0xe0] sm:$0xff] %vm260, %v2795
  %3002 = vst.msk [vmem:[%s59 + $0xe8] sm:$0xff] %vm260, %v2800
  %3003 = vst.msk [vmem:[%s59 + $0xf0] sm:$0xff] %vm260, %v2805
  %3004 = vst.msk [vmem:[%s59 + $0xf8] sm:$0xff] %vm260, %v2810
  %3005 = vst.msk [vmem:[%s59 + $0x100] sm:$0xff] %vm260, %v2815
  %3006 = vst.msk [vmem:[%s59 + $0x108] sm:$0xff] %vm260, %v2820
  %3007 = vst.msk [vmem:[%s59 + $0x110] sm:$0xff] %vm260, %v2825
  %3008 = vst.msk [vmem:[%s59 + $0x118] sm:$0xff] %vm260, %v2830
  %3009 = vst.msk [vmem:[%s59 + $0x120] sm:$0xff] %vm260, %v2835
  %3010 = vst.msk [vmem:[%s59 + $0x128] sm:$0xff] %vm260, %v2840
  %3011 = vst.msk [vmem:[%s59 + $0x130] sm:$0xff] %vm260, %v2845
  %3012 = vst.msk [vmem:[%s59 + $0x138] sm:$0xff] %vm260, %v2850
  %3013 = vst.msk [vmem:[%s59 + $0x140] sm:$0xff] %vm260, %v2855
  %3014 = vst.msk [vmem:[%s59 + $0x148] sm:$0xff] %vm260, %v2860
  %3015 = vst.msk [vmem:[%s59 + $0x150] sm:$0xff] %vm260, %v2865
  %3016 = vst.msk [vmem:[%s59 + $0x158] sm:$0xff] %vm260, %v2870
  %3017 = vst.msk [vmem:[%s59 + $0x160] sm:$0xff] %vm260, %v2875
  %3018 = vst.msk [vmem:[%s59 + $0x168] sm:$0xff] %vm260, %v2880
  %3019 = vst.msk [vmem:[%s59 + $0x170] sm:$0xff] %vm260, %v2885
  %3020 = vst.msk [vmem:[%s59 + $0x178] sm:$0xff] %vm260, %v2890
  %3021 = vst.msk [vmem:[%s59 + $0x180] sm:$0xff] %vm260, %v2895
  %3022 = vst.msk [vmem:[%s59 + $0x188] sm:$0xff] %vm260, %v2900
  %3023 = vst.msk [vmem:[%s59 + $0x190] sm:$0xff] %vm260, %v2905
  %3024 = vst.msk [vmem:[%s59 + $0x198] sm:$0xff] %vm260, %v2910
  %3025 = vst.msk [vmem:[%s59 + $0x1a0] sm:$0xff] %vm260, %v2915
  %3026 = vst.msk [vmem:[%s59 + $0x1a8] sm:$0xff] %vm260, %v2920
  %3027 = vst.msk [vmem:[%s59 + $0x1b0] sm:$0xff] %vm260, %v2925
  %3028 = vst.msk [vmem:[%s59 + $0x1b8] sm:$0xff] %vm260, %v2930
  %3029 = vst.msk [vmem:[%s59 + $0x1c0] sm:$0xff] %vm260, %v2935
  %3030 = vst.msk [vmem:[%s59 + $0x1c8] sm:$0xff] %vm260, %v2940
  %3031 = vst.msk [vmem:[%s59 + $0x1d0] sm:$0xff] %vm260, %v2945
  %3032 = vst.msk [vmem:[%s59 + $0x1d8] sm:$0xff] %vm260, %v2950
  %3033 = vst.msk [vmem:[%s59 + $0x1e0] sm:$0xff] %vm260, %v2955
  %3034 = vst.msk [vmem:[%s59 + $0x1e8] sm:$0xff] %vm260, %v2960
  %3035 = vst.msk [vmem:[%s59 + $0x1f0] sm:$0xff] %vm260, %v2965
  %3036 = vst.msk [vmem:[%s59 + $0x1f8] sm:$0xff] %vm260, %v2970
  %v3037 = vlaneseq
  %v3038 = vshrl.u32 %v3037, 7
  %v3039 = vsub.s32 0, %v3038
  %v3040 = vrot.slane %v1258, %v3039
  %v3041 = vlaneseq
  %v3042 = vshrl.u32 %v3041, 7
  %v3043 = vsub.s32 1, %v3042
  %v3044 = vrot.slane %v1258, %v3043
  %v3045 = vlaneseq
  %v3046 = vshrl.u32 %v3045, 7
  %v3047 = vsub.s32 2, %v3046
  %v3048 = vrot.slane %v1258, %v3047
  %v3049 = vlaneseq
  %v3050 = vshrl.u32 %v3049, 7
  %v3051 = vsub.s32 3, %v3050
  %v3052 = vrot.slane %v1258, %v3051
  %v3053 = vlaneseq
  %v3054 = vshrl.u32 %v3053, 7
  %v3055 = vsub.s32 4, %v3054
  %v3056 = vrot.slane %v1258, %v3055
  %v3057 = vlaneseq
  %v3058 = vshrl.u32 %v3057, 7
  %v3059 = vsub.s32 5, %v3058
  %v3060 = vrot.slane %v1258, %v3059
  %v3061 = vlaneseq
  %v3062 = vshrl.u32 %v3061, 7
  %v3063 = vsub.s32 6, %v3062
  %v3064 = vrot.slane %v1258, %v3063
  %v3065 = vlaneseq
  %v3066 = vshrl.u32 %v3065, 7
  %v3067 = vsub.s32 7, %v3066
  %v3068 = vrot.slane %v1258, %v3067
  %v3069 = vlaneseq
  %v3070 = vshrl.u32 %v3069, 7
  %v3071 = vsub.s32 0, %v3070
  %v3072 = vrot.slane %v1273, %v3071
  %v3073 = vlaneseq
  %v3074 = vshrl.u32 %v3073, 7
  %v3075 = vsub.s32 1, %v3074
  %v3076 = vrot.slane %v1273, %v3075
  %v3077 = vlaneseq
  %v3078 = vshrl.u32 %v3077, 7
  %v3079 = vsub.s32 2, %v3078
  %v3080 = vrot.slane %v1273, %v3079
  %v3081 = vlaneseq
  %v3082 = vshrl.u32 %v3081, 7
  %v3083 = vsub.s32 3, %v3082
  %v3084 = vrot.slane %v1273, %v3083
  %v3085 = vlaneseq
  %v3086 = vshrl.u32 %v3085, 7
  %v3087 = vsub.s32 4, %v3086
  %v3088 = vrot.slane %v1273, %v3087
  %v3089 = vlaneseq
  %v3090 = vshrl.u32 %v3089, 7
  %v3091 = vsub.s32 5, %v3090
  %v3092 = vrot.slane %v1273, %v3091
  %v3093 = vlaneseq
  %v3094 = vshrl.u32 %v3093, 7
  %v3095 = vsub.s32 6, %v3094
  %v3096 = vrot.slane %v1273, %v3095
  %v3097 = vlaneseq
  %v3098 = vshrl.u32 %v3097, 7
  %v3099 = vsub.s32 7, %v3098
  %v3100 = vrot.slane %v1273, %v3099
  %v3101 = vlaneseq
  %v3102 = vshrl.u32 %v3101, 7
  %v3103 = vsub.s32 0, %v3102
  %v3104 = vrot.slane %v1288, %v3103
  %v3105 = vlaneseq
  %v3106 = vshrl.u32 %v3105, 7
  %v3107 = vsub.s32 1, %v3106
  %v3108 = vrot.slane %v1288, %v3107
  %v3109 = vlaneseq
  %v3110 = vshrl.u32 %v3109, 7
  %v3111 = vsub.s32 2, %v3110
  %v3112 = vrot.slane %v1288, %v3111
  %v3113 = vlaneseq
  %v3114 = vshrl.u32 %v3113, 7
  %v3115 = vsub.s32 3, %v3114
  %v3116 = vrot.slane %v1288, %v3115
  %v3117 = vlaneseq
  %v3118 = vshrl.u32 %v3117, 7
  %v3119 = vsub.s32 4, %v3118
  %v3120 = vrot.slane %v1288, %v3119
  %v3121 = vlaneseq
  %v3122 = vshrl.u32 %v3121, 7
  %v3123 = vsub.s32 5, %v3122
  %v3124 = vrot.slane %v1288, %v3123
  %v3125 = vlaneseq
  %v3126 = vshrl.u32 %v3125, 7
  %v3127 = vsub.s32 6, %v3126
  %v3128 = vrot.slane %v1288, %v3127
  %v3129 = vlaneseq
  %v3130 = vshrl.u32 %v3129, 7
  %v3131 = vsub.s32 7, %v3130
  %v3132 = vrot.slane %v1288, %v3131
  %v3133 = vlaneseq
  %v3134 = vshrl.u32 %v3133, 7
  %v3135 = vsub.s32 0, %v3134
  %v3136 = vrot.slane %v1303, %v3135
  %v3137 = vlaneseq
  %v3138 = vshrl.u32 %v3137, 7
  %v3139 = vsub.s32 1, %v3138
  %v3140 = vrot.slane %v1303, %v3139
  %v3141 = vlaneseq
  %v3142 = vshrl.u32 %v3141, 7
  %v3143 = vsub.s32 2, %v3142
  %v3144 = vrot.slane %v1303, %v3143
  %v3145 = vlaneseq
  %v3146 = vshrl.u32 %v3145, 7
  %v3147 = vsub.s32 3, %v3146
  %v3148 = vrot.slane %v1303, %v3147
  %v3149 = vlaneseq
  %v3150 = vshrl.u32 %v3149, 7
  %v3151 = vsub.s32 4, %v3150
  %v3152 = vrot.slane %v1303, %v3151
  %v3153 = vlaneseq
  %v3154 = vshrl.u32 %v3153, 7
  %v3155 = vsub.s32 5, %v3154
  %v3156 = vrot.slane %v1303, %v3155
  %v3157 = vlaneseq
  %v3158 = vshrl.u32 %v3157, 7
  %v3159 = vsub.s32 6, %v3158
  %v3160 = vrot.slane %v1303, %v3159
  %v3161 = vlaneseq
  %v3162 = vshrl.u32 %v3161, 7
  %v3163 = vsub.s32 7, %v3162
  %v3164 = vrot.slane %v1303, %v3163
  %v3165 = vlaneseq
  %v3166 = vshrl.u32 %v3165, 7
  %v3167 = vsub.s32 0, %v3166
  %v3168 = vrot.slane %v1318, %v3167
  %v3169 = vlaneseq
  %v3170 = vshrl.u32 %v3169, 7
  %v3171 = vsub.s32 1, %v3170
  %v3172 = vrot.slane %v1318, %v3171
  %v3173 = vlaneseq
  %v3174 = vshrl.u32 %v3173, 7
  %v3175 = vsub.s32 2, %v3174
  %v3176 = vrot.slane %v1318, %v3175
  %v3177 = vlaneseq
  %v3178 = vshrl.u32 %v3177, 7
  %v3179 = vsub.s32 3, %v3178
  %v3180 = vrot.slane %v1318, %v3179
  %v3181 = vlaneseq
  %v3182 = vshrl.u32 %v3181, 7
  %v3183 = vsub.s32 4, %v3182
  %v3184 = vrot.slane %v1318, %v3183
  %v3185 = vlaneseq
  %v3186 = vshrl.u32 %v3185, 7
  %v3187 = vsub.s32 5, %v3186
  %v3188 = vrot.slane %v1318, %v3187
  %v3189 = vlaneseq
  %v3190 = vshrl.u32 %v3189, 7
  %v3191 = vsub.s32 6, %v3190
  %v3192 = vrot.slane %v1318, %v3191
  %v3193 = vlaneseq
  %v3194 = vshrl.u32 %v3193, 7
  %v3195 = vsub.s32 7, %v3194
  %v3196 = vrot.slane %v1318, %v3195
  %v3197 = vlaneseq
  %v3198 = vshrl.u32 %v3197, 7
  %v3199 = vsub.s32 0, %v3198
  %v3200 = vrot.slane %v1333, %v3199
  %v3201 = vlaneseq
  %v3202 = vshrl.u32 %v3201, 7
  %v3203 = vsub.s32 1, %v3202
  %v3204 = vrot.slane %v1333, %v3203
  %v3205 = vlaneseq
  %v3206 = vshrl.u32 %v3205, 7
  %v3207 = vsub.s32 2, %v3206
  %v3208 = vrot.slane %v1333, %v3207
  %v3209 = vlaneseq
  %v3210 = vshrl.u32 %v3209, 7
  %v3211 = vsub.s32 3, %v3210
  %v3212 = vrot.slane %v1333, %v3211
  %v3213 = vlaneseq
  %v3214 = vshrl.u32 %v3213, 7
  %v3215 = vsub.s32 4, %v3214
  %v3216 = vrot.slane %v1333, %v3215
  %v3217 = vlaneseq
  %v3218 = vshrl.u32 %v3217, 7
  %v3219 = vsub.s32 5, %v3218
  %v3220 = vrot.slane %v1333, %v3219
  %v3221 = vlaneseq
  %v3222 = vshrl.u32 %v3221, 7
  %v3223 = vsub.s32 6, %v3222
  %v3224 = vrot.slane %v1333, %v3223
  %v3225 = vlaneseq
  %v3226 = vshrl.u32 %v3225, 7
  %v3227 = vsub.s32 7, %v3226
  %v3228 = vrot.slane %v1333, %v3227
  %v3229 = vlaneseq
  %v3230 = vshrl.u32 %v3229, 7
  %v3231 = vsub.s32 0, %v3230
  %v3232 = vrot.slane %v1348, %v3231
  %v3233 = vlaneseq
  %v3234 = vshrl.u32 %v3233, 7
  %v3235 = vsub.s32 1, %v3234
  %v3236 = vrot.slane %v1348, %v3235
  %v3237 = vlaneseq
  %v3238 = vshrl.u32 %v3237, 7
  %v3239 = vsub.s32 2, %v3238
  %v3240 = vrot.slane %v1348, %v3239
  %v3241 = vlaneseq
  %v3242 = vshrl.u32 %v3241, 7
  %v3243 = vsub.s32 3, %v3242
  %v3244 = vrot.slane %v1348, %v3243
  %v3245 = vlaneseq
  %v3246 = vshrl.u32 %v3245, 7
  %v3247 = vsub.s32 4, %v3246
  %v3248 = vrot.slane %v1348, %v3247
  %v3249 = vlaneseq
  %v3250 = vshrl.u32 %v3249, 7
  %v3251 = vsub.s32 5, %v3250
  %v3252 = vrot.slane %v1348, %v3251
  %v3253 = vlaneseq
  %v3254 = vshrl.u32 %v3253, 7
  %v3255 = vsub.s32 6, %v3254
  %v3256 = vrot.slane %v1348, %v3255
  %v3257 = vlaneseq
  %v3258 = vshrl.u32 %v3257, 7
  %v3259 = vsub.s32 7, %v3258
  %v3260 = vrot.slane %v1348, %v3259
  %v3261 = vlaneseq
  %v3262 = vshrl.u32 %v3261, 7
  %v3263 = vsub.s32 0, %v3262
  %v3264 = vrot.slane %v1363, %v3263
  %v3265 = vlaneseq
  %v3266 = vshrl.u32 %v3265, 7
  %v3267 = vsub.s32 1, %v3266
  %v3268 = vrot.slane %v1363, %v3267
  %v3269 = vlaneseq
  %v3270 = vshrl.u32 %v3269, 7
  %v3271 = vsub.s32 2, %v3270
  %v3272 = vrot.slane %v1363, %v3271
  %v3273 = vlaneseq
  %v3274 = vshrl.u32 %v3273, 7
  %v3275 = vsub.s32 3, %v3274
  %v3276 = vrot.slane %v1363, %v3275
  %v3277 = vlaneseq
  %v3278 = vshrl.u32 %v3277, 7
  %v3279 = vsub.s32 4, %v3278
  %v3280 = vrot.slane %v1363, %v3279
  %v3281 = vlaneseq
  %v3282 = vshrl.u32 %v3281, 7
  %v3283 = vsub.s32 5, %v3282
  %v3284 = vrot.slane %v1363, %v3283
  %v3285 = vlaneseq
  %v3286 = vshrl.u32 %v3285, 7
  %v3287 = vsub.s32 6, %v3286
  %v3288 = vrot.slane %v1363, %v3287
  %v3289 = vlaneseq
  %v3290 = vshrl.u32 %v3289, 7
  %v3291 = vsub.s32 7, %v3290
  %v3292 = vrot.slane %v1363, %v3291
  %v3293 = vlaneseq
  %v3294 = vshrl.u32 %v3293, 7
  %v3295 = vsub.s32 0, %v3294
  %v3296 = vrot.slane %v1378, %v3295
  %v3297 = vlaneseq
  %v3298 = vshrl.u32 %v3297, 7
  %v3299 = vsub.s32 1, %v3298
  %v3300 = vrot.slane %v1378, %v3299
  %v3301 = vlaneseq
  %v3302 = vshrl.u32 %v3301, 7
  %v3303 = vsub.s32 2, %v3302
  %v3304 = vrot.slane %v1378, %v3303
  %v3305 = vlaneseq
  %v3306 = vshrl.u32 %v3305, 7
  %v3307 = vsub.s32 3, %v3306
  %v3308 = vrot.slane %v1378, %v3307
  %v3309 = vlaneseq
  %v3310 = vshrl.u32 %v3309, 7
  %v3311 = vsub.s32 4, %v3310
  %v3312 = vrot.slane %v1378, %v3311
  %v3313 = vlaneseq
  %v3314 = vshrl.u32 %v3313, 7
  %v3315 = vsub.s32 5, %v3314
  %v3316 = vrot.slane %v1378, %v3315
  %v3317 = vlaneseq
  %v3318 = vshrl.u32 %v3317, 7
  %v3319 = vsub.s32 6, %v3318
  %v3320 = vrot.slane %v1378, %v3319
  %v3321 = vlaneseq
  %v3322 = vshrl.u32 %v3321, 7
  %v3323 = vsub.s32 7, %v3322
  %v3324 = vrot.slane %v1378, %v3323
  %v3325 = vlaneseq
  %v3326 = vshrl.u32 %v3325, 7
  %v3327 = vsub.s32 0, %v3326
  %v3328 = vrot.slane %v1393, %v3327
  %v3329 = vlaneseq
  %v3330 = vshrl.u32 %v3329, 7
  %v3331 = vsub.s32 1, %v3330
  %v3332 = vrot.slane %v1393, %v3331
  %v3333 = vlaneseq
  %v3334 = vshrl.u32 %v3333, 7
  %v3335 = vsub.s32 2, %v3334
  %v3336 = vrot.slane %v1393, %v3335
  %v3337 = vlaneseq
  %v3338 = vshrl.u32 %v3337, 7
  %v3339 = vsub.s32 3, %v3338
  %v3340 = vrot.slane %v1393, %v3339
  %v3341 = vlaneseq
  %v3342 = vshrl.u32 %v3341, 7
  %v3343 = vsub.s32 4, %v3342
  %v3344 = vrot.slane %v1393, %v3343
  %v3345 = vlaneseq
  %v3346 = vshrl.u32 %v3345, 7
  %v3347 = vsub.s32 5, %v3346
  %v3348 = vrot.slane %v1393, %v3347
  %v3349 = vlaneseq
  %v3350 = vshrl.u32 %v3349, 7
  %v3351 = vsub.s32 6, %v3350
  %v3352 = vrot.slane %v1393, %v3351
  %v3353 = vlaneseq
  %v3354 = vshrl.u32 %v3353, 7
  %v3355 = vsub.s32 7, %v3354
  %v3356 = vrot.slane %v1393, %v3355
  %v3357 = vlaneseq
  %v3358 = vshrl.u32 %v3357, 7
  %v3359 = vsub.s32 0, %v3358
  %v3360 = vrot.slane %v1408, %v3359
  %v3361 = vlaneseq
  %v3362 = vshrl.u32 %v3361, 7
  %v3363 = vsub.s32 1, %v3362
  %v3364 = vrot.slane %v1408, %v3363
  %v3365 = vlaneseq
  %v3366 = vshrl.u32 %v3365, 7
  %v3367 = vsub.s32 2, %v3366
  %v3368 = vrot.slane %v1408, %v3367
  %v3369 = vlaneseq
  %v3370 = vshrl.u32 %v3369, 7
  %v3371 = vsub.s32 3, %v3370
  %v3372 = vrot.slane %v1408, %v3371
  %v3373 = vlaneseq
  %v3374 = vshrl.u32 %v3373, 7
  %v3375 = vsub.s32 4, %v3374
  %v3376 = vrot.slane %v1408, %v3375
  %v3377 = vlaneseq
  %v3378 = vshrl.u32 %v3377, 7
  %v3379 = vsub.s32 5, %v3378
  %v3380 = vrot.slane %v1408, %v3379
  %v3381 = vlaneseq
  %v3382 = vshrl.u32 %v3381, 7
  %v3383 = vsub.s32 6, %v3382
  %v3384 = vrot.slane %v1408, %v3383
  %v3385 = vlaneseq
  %v3386 = vshrl.u32 %v3385, 7
  %v3387 = vsub.s32 7, %v3386
  %v3388 = vrot.slane %v1408, %v3387
  %v3389 = vlaneseq
  %v3390 = vshrl.u32 %v3389, 7
  %v3391 = vsub.s32 0, %v3390
  %v3392 = vrot.slane %v1423, %v3391
  %v3393 = vlaneseq
  %v3394 = vshrl.u32 %v3393, 7
  %v3395 = vsub.s32 1, %v3394
  %v3396 = vrot.slane %v1423, %v3395
  %v3397 = vlaneseq
  %v3398 = vshrl.u32 %v3397, 7
  %v3399 = vsub.s32 2, %v3398
  %v3400 = vrot.slane %v1423, %v3399
  %v3401 = vlaneseq
  %v3402 = vshrl.u32 %v3401, 7
  %v3403 = vsub.s32 3, %v3402
  %v3404 = vrot.slane %v1423, %v3403
  %v3405 = vlaneseq
  %v3406 = vshrl.u32 %v3405, 7
  %v3407 = vsub.s32 4, %v3406
  %v3408 = vrot.slane %v1423, %v3407
  %v3409 = vlaneseq
  %v3410 = vshrl.u32 %v3409, 7
  %v3411 = vsub.s32 5, %v3410
  %v3412 = vrot.slane %v1423, %v3411
  %v3413 = vlaneseq
  %v3414 = vshrl.u32 %v3413, 7
  %v3415 = vsub.s32 6, %v3414
  %v3416 = vrot.slane %v1423, %v3415
  %v3417 = vlaneseq
  %v3418 = vshrl.u32 %v3417, 7
  %v3419 = vsub.s32 7, %v3418
  %v3420 = vrot.slane %v1423, %v3419
  %v3421 = vlaneseq
  %v3422 = vshrl.u32 %v3421, 7
  %v3423 = vsub.s32 0, %v3422
  %v3424 = vrot.slane %v1438, %v3423
  %v3425 = vlaneseq
  %v3426 = vshrl.u32 %v3425, 7
  %v3427 = vsub.s32 1, %v3426
  %v3428 = vrot.slane %v1438, %v3427
  %v3429 = vlaneseq
  %v3430 = vshrl.u32 %v3429, 7
  %v3431 = vsub.s32 2, %v3430
  %v3432 = vrot.slane %v1438, %v3431
  %v3433 = vlaneseq
  %v3434 = vshrl.u32 %v3433, 7
  %v3435 = vsub.s32 3, %v3434
  %v3436 = vrot.slane %v1438, %v3435
  %v3437 = vlaneseq
  %v3438 = vshrl.u32 %v3437, 7
  %v3439 = vsub.s32 4, %v3438
  %v3440 = vrot.slane %v1438, %v3439
  %v3441 = vlaneseq
  %v3442 = vshrl.u32 %v3441, 7
  %v3443 = vsub.s32 5, %v3442
  %v3444 = vrot.slane %v1438, %v3443
  %v3445 = vlaneseq
  %v3446 = vshrl.u32 %v3445, 7
  %v3447 = vsub.s32 6, %v3446
  %v3448 = vrot.slane %v1438, %v3447
  %v3449 = vlaneseq
  %v3450 = vshrl.u32 %v3449, 7
  %v3451 = vsub.s32 7, %v3450
  %v3452 = vrot.slane %v1438, %v3451
  %v3453 = vlaneseq
  %v3454 = vshrl.u32 %v3453, 7
  %v3455 = vsub.s32 0, %v3454
  %v3456 = vrot.slane %v1453, %v3455
  %v3457 = vlaneseq
  %v3458 = vshrl.u32 %v3457, 7
  %v3459 = vsub.s32 1, %v3458
  %v3460 = vrot.slane %v1453, %v3459
  %v3461 = vlaneseq
  %v3462 = vshrl.u32 %v3461, 7
  %v3463 = vsub.s32 2, %v3462
  %v3464 = vrot.slane %v1453, %v3463
  %v3465 = vlaneseq
  %v3466 = vshrl.u32 %v3465, 7
  %v3467 = vsub.s32 3, %v3466
  %v3468 = vrot.slane %v1453, %v3467
  %v3469 = vlaneseq
  %v3470 = vshrl.u32 %v3469, 7
  %v3471 = vsub.s32 4, %v3470
  %v3472 = vrot.slane %v1453, %v3471
  %v3473 = vlaneseq
  %v3474 = vshrl.u32 %v3473, 7
  %v3475 = vsub.s32 5, %v3474
  %v3476 = vrot.slane %v1453, %v3475
  %v3477 = vlaneseq
  %v3478 = vshrl.u32 %v3477, 7
  %v3479 = vsub.s32 6, %v3478
  %v3480 = vrot.slane %v1453, %v3479
  %v3481 = vlaneseq
  %v3482 = vshrl.u32 %v3481, 7
  %v3483 = vsub.s32 7, %v3482
  %v3484 = vrot.slane %v1453, %v3483
  %v3485 = vlaneseq
  %v3486 = vshrl.u32 %v3485, 7
  %v3487 = vsub.s32 0, %v3486
  %v3488 = vrot.slane %v1468, %v3487
  %v3489 = vlaneseq
  %v3490 = vshrl.u32 %v3489, 7
  %v3491 = vsub.s32 1, %v3490
  %v3492 = vrot.slane %v1468, %v3491
  %v3493 = vlaneseq
  %v3494 = vshrl.u32 %v3493, 7
  %v3495 = vsub.s32 2, %v3494
  %v3496 = vrot.slane %v1468, %v3495
  %v3497 = vlaneseq
  %v3498 = vshrl.u32 %v3497, 7
  %v3499 = vsub.s32 3, %v3498
  %v3500 = vrot.slane %v1468, %v3499
  %v3501 = vlaneseq
  %v3502 = vshrl.u32 %v3501, 7
  %v3503 = vsub.s32 4, %v3502
  %v3504 = vrot.slane %v1468, %v3503
  %v3505 = vlaneseq
  %v3506 = vshrl.u32 %v3505, 7
  %v3507 = vsub.s32 5, %v3506
  %v3508 = vrot.slane %v1468, %v3507
  %v3509 = vlaneseq
  %v3510 = vshrl.u32 %v3509, 7
  %v3511 = vsub.s32 6, %v3510
  %v3512 = vrot.slane %v1468, %v3511
  %v3513 = vlaneseq
  %v3514 = vshrl.u32 %v3513, 7
  %v3515 = vsub.s32 7, %v3514
  %v3516 = vrot.slane %v1468, %v3515
  %v3517 = vlaneseq
  %v3518 = vshrl.u32 %v3517, 7
  %v3519 = vsub.s32 0, %v3518
  %v3520 = vrot.slane %v1483, %v3519
  %v3521 = vlaneseq
  %v3522 = vshrl.u32 %v3521, 7
  %v3523 = vsub.s32 1, %v3522
  %v3524 = vrot.slane %v1483, %v3523
  %v3525 = vlaneseq
  %v3526 = vshrl.u32 %v3525, 7
  %v3527 = vsub.s32 2, %v3526
  %v3528 = vrot.slane %v1483, %v3527
  %v3529 = vlaneseq
  %v3530 = vshrl.u32 %v3529, 7
  %v3531 = vsub.s32 3, %v3530
  %v3532 = vrot.slane %v1483, %v3531
  %v3533 = vlaneseq
  %v3534 = vshrl.u32 %v3533, 7
  %v3535 = vsub.s32 4, %v3534
  %v3536 = vrot.slane %v1483, %v3535
  %v3537 = vlaneseq
  %v3538 = vshrl.u32 %v3537, 7
  %v3539 = vsub.s32 5, %v3538
  %v3540 = vrot.slane %v1483, %v3539
  %v3541 = vlaneseq
  %v3542 = vshrl.u32 %v3541, 7
  %v3543 = vsub.s32 6, %v3542
  %v3544 = vrot.slane %v1483, %v3543
  %v3545 = vlaneseq
  %v3546 = vshrl.u32 %v3545, 7
  %v3547 = vsub.s32 7, %v3546
  %v3548 = vrot.slane %v1483, %v3547
  %v3549 = vlaneseq
  %v3550 = vshrl.u32 %v3549, 7
  %v3551 = vsub.s32 0, %v3550
  %v3552 = vrot.slane %v1498, %v3551
  %v3553 = vlaneseq
  %v3554 = vshrl.u32 %v3553, 7
  %v3555 = vsub.s32 1, %v3554
  %v3556 = vrot.slane %v1498, %v3555
  %v3557 = vlaneseq
  %v3558 = vshrl.u32 %v3557, 7
  %v3559 = vsub.s32 2, %v3558
  %v3560 = vrot.slane %v1498, %v3559
  %v3561 = vlaneseq
  %v3562 = vshrl.u32 %v3561, 7
  %v3563 = vsub.s32 3, %v3562
  %v3564 = vrot.slane %v1498, %v3563
  %v3565 = vlaneseq
  %v3566 = vshrl.u32 %v3565, 7
  %v3567 = vsub.s32 4, %v3566
  %v3568 = vrot.slane %v1498, %v3567
  %v3569 = vlaneseq
  %v3570 = vshrl.u32 %v3569, 7
  %v3571 = vsub.s32 5, %v3570
  %v3572 = vrot.slane %v1498, %v3571
  %v3573 = vlaneseq
  %v3574 = vshrl.u32 %v3573, 7
  %v3575 = vsub.s32 6, %v3574
  %v3576 = vrot.slane %v1498, %v3575
  %v3577 = vlaneseq
  %v3578 = vshrl.u32 %v3577, 7
  %v3579 = vsub.s32 7, %v3578
  %v3580 = vrot.slane %v1498, %v3579
  %v3581 = vlaneseq
  %v3582 = vshrl.u32 %v3581, 7
  %v3583 = vsub.s32 0, %v3582
  %v3584 = vrot.slane %v1513, %v3583
  %v3585 = vlaneseq
  %v3586 = vshrl.u32 %v3585, 7
  %v3587 = vsub.s32 1, %v3586
  %v3588 = vrot.slane %v1513, %v3587
  %v3589 = vlaneseq
  %v3590 = vshrl.u32 %v3589, 7
  %v3591 = vsub.s32 2, %v3590
  %v3592 = vrot.slane %v1513, %v3591
  %v3593 = vlaneseq
  %v3594 = vshrl.u32 %v3593, 7
  %v3595 = vsub.s32 3, %v3594
  %v3596 = vrot.slane %v1513, %v3595
  %v3597 = vlaneseq
  %v3598 = vshrl.u32 %v3597, 7
  %v3599 = vsub.s32 4, %v3598
  %v3600 = vrot.slane %v1513, %v3599
  %v3601 = vlaneseq
  %v3602 = vshrl.u32 %v3601, 7
  %v3603 = vsub.s32 5, %v3602
  %v3604 = vrot.slane %v1513, %v3603
  %v3605 = vlaneseq
  %v3606 = vshrl.u32 %v3605, 7
  %v3607 = vsub.s32 6, %v3606
  %v3608 = vrot.slane %v1513, %v3607
  %v3609 = vlaneseq
  %v3610 = vshrl.u32 %v3609, 7
  %v3611 = vsub.s32 7, %v3610
  %v3612 = vrot.slane %v1513, %v3611
  %v3613 = vlaneseq
  %v3614 = vshrl.u32 %v3613, 7
  %v3615 = vsub.s32 0, %v3614
  %v3616 = vrot.slane %v1528, %v3615
  %v3617 = vlaneseq
  %v3618 = vshrl.u32 %v3617, 7
  %v3619 = vsub.s32 1, %v3618
  %v3620 = vrot.slane %v1528, %v3619
  %v3621 = vlaneseq
  %v3622 = vshrl.u32 %v3621, 7
  %v3623 = vsub.s32 2, %v3622
  %v3624 = vrot.slane %v1528, %v3623
  %v3625 = vlaneseq
  %v3626 = vshrl.u32 %v3625, 7
  %v3627 = vsub.s32 3, %v3626
  %v3628 = vrot.slane %v1528, %v3627
  %v3629 = vlaneseq
  %v3630 = vshrl.u32 %v3629, 7
  %v3631 = vsub.s32 4, %v3630
  %v3632 = vrot.slane %v1528, %v3631
  %v3633 = vlaneseq
  %v3634 = vshrl.u32 %v3633, 7
  %v3635 = vsub.s32 5, %v3634
  %v3636 = vrot.slane %v1528, %v3635
  %v3637 = vlaneseq
  %v3638 = vshrl.u32 %v3637, 7
  %v3639 = vsub.s32 6, %v3638
  %v3640 = vrot.slane %v1528, %v3639
  %v3641 = vlaneseq
  %v3642 = vshrl.u32 %v3641, 7
  %v3643 = vsub.s32 7, %v3642
  %v3644 = vrot.slane %v1528, %v3643
  %v3645 = vlaneseq
  %v3646 = vshrl.u32 %v3645, 7
  %v3647 = vsub.s32 0, %v3646
  %v3648 = vrot.slane %v1543, %v3647
  %v3649 = vlaneseq
  %v3650 = vshrl.u32 %v3649, 7
  %v3651 = vsub.s32 1, %v3650
  %v3652 = vrot.slane %v1543, %v3651
  %v3653 = vlaneseq
  %v3654 = vshrl.u32 %v3653, 7
  %v3655 = vsub.s32 2, %v3654
  %v3656 = vrot.slane %v1543, %v3655
  %v3657 = vlaneseq
  %v3658 = vshrl.u32 %v3657, 7
  %v3659 = vsub.s32 3, %v3658
  %v3660 = vrot.slane %v1543, %v3659
  %v3661 = vlaneseq
  %v3662 = vshrl.u32 %v3661, 7
  %v3663 = vsub.s32 4, %v3662
  %v3664 = vrot.slane %v1543, %v3663
  %v3665 = vlaneseq
  %v3666 = vshrl.u32 %v3665, 7
  %v3667 = vsub.s32 5, %v3666
  %v3668 = vrot.slane %v1543, %v3667
  %v3669 = vlaneseq
  %v3670 = vshrl.u32 %v3669, 7
  %v3671 = vsub.s32 6, %v3670
  %v3672 = vrot.slane %v1543, %v3671
  %v3673 = vlaneseq
  %v3674 = vshrl.u32 %v3673, 7
  %v3675 = vsub.s32 7, %v3674
  %v3676 = vrot.slane %v1543, %v3675
  %v3677 = vlaneseq
  %v3678 = vshrl.u32 %v3677, 7
  %v3679 = vsub.s32 0, %v3678
  %v3680 = vrot.slane %v1558, %v3679
  %v3681 = vlaneseq
  %v3682 = vshrl.u32 %v3681, 7
  %v3683 = vsub.s32 1, %v3682
  %v3684 = vrot.slane %v1558, %v3683
  %v3685 = vlaneseq
  %v3686 = vshrl.u32 %v3685, 7
  %v3687 = vsub.s32 2, %v3686
  %v3688 = vrot.slane %v1558, %v3687
  %v3689 = vlaneseq
  %v3690 = vshrl.u32 %v3689, 7
  %v3691 = vsub.s32 3, %v3690
  %v3692 = vrot.slane %v1558, %v3691
  %v3693 = vlaneseq
  %v3694 = vshrl.u32 %v3693, 7
  %v3695 = vsub.s32 4, %v3694
  %v3696 = vrot.slane %v1558, %v3695
  %v3697 = vlaneseq
  %v3698 = vshrl.u32 %v3697, 7
  %v3699 = vsub.s32 5, %v3698
  %v3700 = vrot.slane %v1558, %v3699
  %v3701 = vlaneseq
  %v3702 = vshrl.u32 %v3701, 7
  %v3703 = vsub.s32 6, %v3702
  %v3704 = vrot.slane %v1558, %v3703
  %v3705 = vlaneseq
  %v3706 = vshrl.u32 %v3705, 7
  %v3707 = vsub.s32 7, %v3706
  %v3708 = vrot.slane %v1558, %v3707
  %v3709 = vlaneseq
  %v3710 = vshrl.u32 %v3709, 7
  %v3711 = vsub.s32 0, %v3710
  %v3712 = vrot.slane %v1573, %v3711
  %v3713 = vlaneseq
  %v3714 = vshrl.u32 %v3713, 7
  %v3715 = vsub.s32 1, %v3714
  %v3716 = vrot.slane %v1573, %v3715
  %v3717 = vlaneseq
  %v3718 = vshrl.u32 %v3717, 7
  %v3719 = vsub.s32 2, %v3718
  %v3720 = vrot.slane %v1573, %v3719
  %v3721 = vlaneseq
  %v3722 = vshrl.u32 %v3721, 7
  %v3723 = vsub.s32 3, %v3722
  %v3724 = vrot.slane %v1573, %v3723
  %v3725 = vlaneseq
  %v3726 = vshrl.u32 %v3725, 7
  %v3727 = vsub.s32 4, %v3726
  %v3728 = vrot.slane %v1573, %v3727
  %v3729 = vlaneseq
  %v3730 = vshrl.u32 %v3729, 7
  %v3731 = vsub.s32 5, %v3730
  %v3732 = vrot.slane %v1573, %v3731
  %v3733 = vlaneseq
  %v3734 = vshrl.u32 %v3733, 7
  %v3735 = vsub.s32 6, %v3734
  %v3736 = vrot.slane %v1573, %v3735
  %v3737 = vlaneseq
  %v3738 = vshrl.u32 %v3737, 7
  %v3739 = vsub.s32 7, %v3738
  %v3740 = vrot.slane %v1573, %v3739
  %v3741 = vlaneseq
  %v3742 = vshrl.u32 %v3741, 7
  %v3743 = vsub.s32 0, %v3742
  %v3744 = vrot.slane %v1588, %v3743
  %v3745 = vlaneseq
  %v3746 = vshrl.u32 %v3745, 7
  %v3747 = vsub.s32 1, %v3746
  %v3748 = vrot.slane %v1588, %v3747
  %v3749 = vlaneseq
  %v3750 = vshrl.u32 %v3749, 7
  %v3751 = vsub.s32 2, %v3750
  %v3752 = vrot.slane %v1588, %v3751
  %v3753 = vlaneseq
  %v3754 = vshrl.u32 %v3753, 7
  %v3755 = vsub.s32 3, %v3754
  %v3756 = vrot.slane %v1588, %v3755
  %v3757 = vlaneseq
  %v3758 = vshrl.u32 %v3757, 7
  %v3759 = vsub.s32 4, %v3758
  %v3760 = vrot.slane %v1588, %v3759
  %v3761 = vlaneseq
  %v3762 = vshrl.u32 %v3761, 7
  %v3763 = vsub.s32 5, %v3762
  %v3764 = vrot.slane %v1588, %v3763
  %v3765 = vlaneseq
  %v3766 = vshrl.u32 %v3765, 7
  %v3767 = vsub.s32 6, %v3766
  %v3768 = vrot.slane %v1588, %v3767
  %v3769 = vlaneseq
  %v3770 = vshrl.u32 %v3769, 7
  %v3771 = vsub.s32 7, %v3770
  %v3772 = vrot.slane %v1588, %v3771
  %v3773 = vlaneseq
  %v3774 = vshrl.u32 %v3773, 7
  %v3775 = vsub.s32 0, %v3774
  %v3776 = vrot.slane %v1603, %v3775
  %v3777 = vlaneseq
  %v3778 = vshrl.u32 %v3777, 7
  %v3779 = vsub.s32 1, %v3778
  %v3780 = vrot.slane %v1603, %v3779
  %v3781 = vlaneseq
  %v3782 = vshrl.u32 %v3781, 7
  %v3783 = vsub.s32 2, %v3782
  %v3784 = vrot.slane %v1603, %v3783
  %v3785 = vlaneseq
  %v3786 = vshrl.u32 %v3785, 7
  %v3787 = vsub.s32 3, %v3786
  %v3788 = vrot.slane %v1603, %v3787
  %v3789 = vlaneseq
  %v3790 = vshrl.u32 %v3789, 7
  %v3791 = vsub.s32 4, %v3790
  %v3792 = vrot.slane %v1603, %v3791
  %v3793 = vlaneseq
  %v3794 = vshrl.u32 %v3793, 7
  %v3795 = vsub.s32 5, %v3794
  %v3796 = vrot.slane %v1603, %v3795
  %v3797 = vlaneseq
  %v3798 = vshrl.u32 %v3797, 7
  %v3799 = vsub.s32 6, %v3798
  %v3800 = vrot.slane %v1603, %v3799
  %v3801 = vlaneseq
  %v3802 = vshrl.u32 %v3801, 7
  %v3803 = vsub.s32 7, %v3802
  %v3804 = vrot.slane %v1603, %v3803
  %v3805 = vlaneseq
  %v3806 = vshrl.u32 %v3805, 7
  %v3807 = vsub.s32 0, %v3806
  %v3808 = vrot.slane %v1618, %v3807
  %v3809 = vlaneseq
  %v3810 = vshrl.u32 %v3809, 7
  %v3811 = vsub.s32 1, %v3810
  %v3812 = vrot.slane %v1618, %v3811
  %v3813 = vlaneseq
  %v3814 = vshrl.u32 %v3813, 7
  %v3815 = vsub.s32 2, %v3814
  %v3816 = vrot.slane %v1618, %v3815
  %v3817 = vlaneseq
  %v3818 = vshrl.u32 %v3817, 7
  %v3819 = vsub.s32 3, %v3818
  %v3820 = vrot.slane %v1618, %v3819
  %v3821 = vlaneseq
  %v3822 = vshrl.u32 %v3821, 7
  %v3823 = vsub.s32 4, %v3822
  %v3824 = vrot.slane %v1618, %v3823
  %v3825 = vlaneseq
  %v3826 = vshrl.u32 %v3825, 7
  %v3827 = vsub.s32 5, %v3826
  %v3828 = vrot.slane %v1618, %v3827
  %v3829 = vlaneseq
  %v3830 = vshrl.u32 %v3829, 7
  %v3831 = vsub.s32 6, %v3830
  %v3832 = vrot.slane %v1618, %v3831
  %v3833 = vlaneseq
  %v3834 = vshrl.u32 %v3833, 7
  %v3835 = vsub.s32 7, %v3834
  %v3836 = vrot.slane %v1618, %v3835
  %v3837 = vlaneseq
  %v3838 = vshrl.u32 %v3837, 7
  %v3839 = vsub.s32 0, %v3838
  %v3840 = vrot.slane %v1633, %v3839
  %v3841 = vlaneseq
  %v3842 = vshrl.u32 %v3841, 7
  %v3843 = vsub.s32 1, %v3842
  %v3844 = vrot.slane %v1633, %v3843
  %v3845 = vlaneseq
  %v3846 = vshrl.u32 %v3845, 7
  %v3847 = vsub.s32 2, %v3846
  %v3848 = vrot.slane %v1633, %v3847
  %v3849 = vlaneseq
  %v3850 = vshrl.u32 %v3849, 7
  %v3851 = vsub.s32 3, %v3850
  %v3852 = vrot.slane %v1633, %v3851
  %v3853 = vlaneseq
  %v3854 = vshrl.u32 %v3853, 7
  %v3855 = vsub.s32 4, %v3854
  %v3856 = vrot.slane %v1633, %v3855
  %v3857 = vlaneseq
  %v3858 = vshrl.u32 %v3857, 7
  %v3859 = vsub.s32 5, %v3858
  %v3860 = vrot.slane %v1633, %v3859
  %v3861 = vlaneseq
  %v3862 = vshrl.u32 %v3861, 7
  %v3863 = vsub.s32 6, %v3862
  %v3864 = vrot.slane %v1633, %v3863
  %v3865 = vlaneseq
  %v3866 = vshrl.u32 %v3865, 7
  %v3867 = vsub.s32 7, %v3866
  %v3868 = vrot.slane %v1633, %v3867
  %v3869 = vlaneseq
  %v3870 = vshrl.u32 %v3869, 7
  %v3871 = vsub.s32 0, %v3870
  %v3872 = vrot.slane %v1648, %v3871
  %v3873 = vlaneseq
  %v3874 = vshrl.u32 %v3873, 7
  %v3875 = vsub.s32 1, %v3874
  %v3876 = vrot.slane %v1648, %v3875
  %v3877 = vlaneseq
  %v3878 = vshrl.u32 %v3877, 7
  %v3879 = vsub.s32 2, %v3878
  %v3880 = vrot.slane %v1648, %v3879
  %v3881 = vlaneseq
  %v3882 = vshrl.u32 %v3881, 7
  %v3883 = vsub.s32 3, %v3882
  %v3884 = vrot.slane %v1648, %v3883
  %v3885 = vlaneseq
  %v3886 = vshrl.u32 %v3885, 7
  %v3887 = vsub.s32 4, %v3886
  %v3888 = vrot.slane %v1648, %v3887
  %v3889 = vlaneseq
  %v3890 = vshrl.u32 %v3889, 7
  %v3891 = vsub.s32 5, %v3890
  %v3892 = vrot.slane %v1648, %v3891
  %v3893 = vlaneseq
  %v3894 = vshrl.u32 %v3893, 7
  %v3895 = vsub.s32 6, %v3894
  %v3896 = vrot.slane %v1648, %v3895
  %v3897 = vlaneseq
  %v3898 = vshrl.u32 %v3897, 7
  %v3899 = vsub.s32 7, %v3898
  %v3900 = vrot.slane %v1648, %v3899
  %v3901 = vlaneseq
  %v3902 = vshrl.u32 %v3901, 7
  %v3903 = vsub.s32 0, %v3902
  %v3904 = vrot.slane %v1663, %v3903
  %v3905 = vlaneseq
  %v3906 = vshrl.u32 %v3905, 7
  %v3907 = vsub.s32 1, %v3906
  %v3908 = vrot.slane %v1663, %v3907
  %v3909 = vlaneseq
  %v3910 = vshrl.u32 %v3909, 7
  %v3911 = vsub.s32 2, %v3910
  %v3912 = vrot.slane %v1663, %v3911
  %v3913 = vlaneseq
  %v3914 = vshrl.u32 %v3913, 7
  %v3915 = vsub.s32 3, %v3914
  %v3916 = vrot.slane %v1663, %v3915
  %v3917 = vlaneseq
  %v3918 = vshrl.u32 %v3917, 7
  %v3919 = vsub.s32 4, %v3918
  %v3920 = vrot.slane %v1663, %v3919
  %v3921 = vlaneseq
  %v3922 = vshrl.u32 %v3921, 7
  %v3923 = vsub.s32 5, %v3922
  %v3924 = vrot.slane %v1663, %v3923
  %v3925 = vlaneseq
  %v3926 = vshrl.u32 %v3925, 7
  %v3927 = vsub.s32 6, %v3926
  %v3928 = vrot.slane %v1663, %v3927
  %v3929 = vlaneseq
  %v3930 = vshrl.u32 %v3929, 7
  %v3931 = vsub.s32 7, %v3930
  %v3932 = vrot.slane %v1663, %v3931
  %v3933 = vlaneseq
  %v3934 = vshrl.u32 %v3933, 7
  %v3935 = vsub.s32 0, %v3934
  %v3936 = vrot.slane %v1678, %v3935
  %v3937 = vlaneseq
  %v3938 = vshrl.u32 %v3937, 7
  %v3939 = vsub.s32 1, %v3938
  %v3940 = vrot.slane %v1678, %v3939
  %v3941 = vlaneseq
  %v3942 = vshrl.u32 %v3941, 7
  %v3943 = vsub.s32 2, %v3942
  %v3944 = vrot.slane %v1678, %v3943
  %v3945 = vlaneseq
  %v3946 = vshrl.u32 %v3945, 7
  %v3947 = vsub.s32 3, %v3946
  %v3948 = vrot.slane %v1678, %v3947
  %v3949 = vlaneseq
  %v3950 = vshrl.u32 %v3949, 7
  %v3951 = vsub.s32 4, %v3950
  %v3952 = vrot.slane %v1678, %v3951
  %v3953 = vlaneseq
  %v3954 = vshrl.u32 %v3953, 7
  %v3955 = vsub.s32 5, %v3954
  %v3956 = vrot.slane %v1678, %v3955
  %v3957 = vlaneseq
  %v3958 = vshrl.u32 %v3957, 7
  %v3959 = vsub.s32 6, %v3958
  %v3960 = vrot.slane %v1678, %v3959
  %v3961 = vlaneseq
  %v3962 = vshrl.u32 %v3961, 7
  %v3963 = vsub.s32 7, %v3962
  %v3964 = vrot.slane %v1678, %v3963
  %v3965 = vlaneseq
  %v3966 = vshrl.u32 %v3965, 7
  %v3967 = vsub.s32 0, %v3966
  %v3968 = vrot.slane %v1693, %v3967
  %v3969 = vlaneseq
  %v3970 = vshrl.u32 %v3969, 7
  %v3971 = vsub.s32 1, %v3970
  %v3972 = vrot.slane %v1693, %v3971
  %v3973 = vlaneseq
  %v3974 = vshrl.u32 %v3973, 7
  %v3975 = vsub.s32 2, %v3974
  %v3976 = vrot.slane %v1693, %v3975
  %v3977 = vlaneseq
  %v3978 = vshrl.u32 %v3977, 7
  %v3979 = vsub.s32 3, %v3978
  %v3980 = vrot.slane %v1693, %v3979
  %v3981 = vlaneseq
  %v3982 = vshrl.u32 %v3981, 7
  %v3983 = vsub.s32 4, %v3982
  %v3984 = vrot.slane %v1693, %v3983
  %v3985 = vlaneseq
  %v3986 = vshrl.u32 %v3985, 7
  %v3987 = vsub.s32 5, %v3986
  %v3988 = vrot.slane %v1693, %v3987
  %v3989 = vlaneseq
  %v3990 = vshrl.u32 %v3989, 7
  %v3991 = vsub.s32 6, %v3990
  %v3992 = vrot.slane %v1693, %v3991
  %v3993 = vlaneseq
  %v3994 = vshrl.u32 %v3993, 7
  %v3995 = vsub.s32 7, %v3994
  %v3996 = vrot.slane %v1693, %v3995
  %v3997 = vlaneseq
  %v3998 = vshrl.u32 %v3997, 7
  %v3999 = vsub.s32 0, %v3998
  %v4000 = vrot.slane %v1708, %v3999
  %v4001 = vlaneseq
  %v4002 = vshrl.u32 %v4001, 7
  %v4003 = vsub.s32 1, %v4002
  %v4004 = vrot.slane %v1708, %v4003
  %v4005 = vlaneseq
  %v4006 = vshrl.u32 %v4005, 7
  %v4007 = vsub.s32 2, %v4006
  %v4008 = vrot.slane %v1708, %v4007
  %v4009 = vlaneseq
  %v4010 = vshrl.u32 %v4009, 7
  %v4011 = vsub.s32 3, %v4010
  %v4012 = vrot.slane %v1708, %v4011
  %v4013 = vlaneseq
  %v4014 = vshrl.u32 %v4013, 7
  %v4015 = vsub.s32 4, %v4014
  %v4016 = vrot.slane %v1708, %v4015
  %v4017 = vlaneseq
  %v4018 = vshrl.u32 %v4017, 7
  %v4019 = vsub.s32 5, %v4018
  %v4020 = vrot.slane %v1708, %v4019
  %v4021 = vlaneseq
  %v4022 = vshrl.u32 %v4021, 7
  %v4023 = vsub.s32 6, %v4022
  %v4024 = vrot.slane %v1708, %v4023
  %v4025 = vlaneseq
  %v4026 = vshrl.u32 %v4025, 7
  %v4027 = vsub.s32 7, %v4026
  %v4028 = vrot.slane %v1708, %v4027
  %v4029 = vlaneseq
  %v4030 = vshrl.u32 %v4029, 7
  %v4031 = vsub.s32 0, %v4030
  %v4032 = vrot.slane %v1723, %v4031
  %v4033 = vlaneseq
  %v4034 = vshrl.u32 %v4033, 7
  %v4035 = vsub.s32 1, %v4034
  %v4036 = vrot.slane %v1723, %v4035
  %v4037 = vlaneseq
  %v4038 = vshrl.u32 %v4037, 7
  %v4039 = vsub.s32 2, %v4038
  %v4040 = vrot.slane %v1723, %v4039
  %v4041 = vlaneseq
  %v4042 = vshrl.u32 %v4041, 7
  %v4043 = vsub.s32 3, %v4042
  %v4044 = vrot.slane %v1723, %v4043
  %v4045 = vlaneseq
  %v4046 = vshrl.u32 %v4045, 7
  %v4047 = vsub.s32 4, %v4046
  %v4048 = vrot.slane %v1723, %v4047
  %v4049 = vlaneseq
  %v4050 = vshrl.u32 %v4049, 7
  %v4051 = vsub.s32 5, %v4050
  %v4052 = vrot.slane %v1723, %v4051
  %v4053 = vlaneseq
  %v4054 = vshrl.u32 %v4053, 7
  %v4055 = vsub.s32 6, %v4054
  %v4056 = vrot.slane %v1723, %v4055
  %v4057 = vlaneseq
  %v4058 = vshrl.u32 %v4057, 7
  %v4059 = vsub.s32 7, %v4058
  %v4060 = vrot.slane %v1723, %v4059
  %v4061 = vlaneseq
  %v4062 = vshrl.u32 %v4061, 7
  %v4063 = vsub.s32 0, %v4062
  %v4064 = vrot.slane %v1738, %v4063
  %v4065 = vlaneseq
  %v4066 = vshrl.u32 %v4065, 7
  %v4067 = vsub.s32 1, %v4066
  %v4068 = vrot.slane %v1738, %v4067
  %v4069 = vlaneseq
  %v4070 = vshrl.u32 %v4069, 7
  %v4071 = vsub.s32 2, %v4070
  %v4072 = vrot.slane %v1738, %v4071
  %v4073 = vlaneseq
  %v4074 = vshrl.u32 %v4073, 7
  %v4075 = vsub.s32 3, %v4074
  %v4076 = vrot.slane %v1738, %v4075
  %v4077 = vlaneseq
  %v4078 = vshrl.u32 %v4077, 7
  %v4079 = vsub.s32 4, %v4078
  %v4080 = vrot.slane %v1738, %v4079
  %v4081 = vlaneseq
  %v4082 = vshrl.u32 %v4081, 7
  %v4083 = vsub.s32 5, %v4082
  %v4084 = vrot.slane %v1738, %v4083
  %v4085 = vlaneseq
  %v4086 = vshrl.u32 %v4085, 7
  %v4087 = vsub.s32 6, %v4086
  %v4088 = vrot.slane %v1738, %v4087
  %v4089 = vlaneseq
  %v4090 = vshrl.u32 %v4089, 7
  %v4091 = vsub.s32 7, %v4090
  %v4092 = vrot.slane %v1738, %v4091
  %v4093 = vlaneseq
  %v4094 = vshrl.u32 %v4093, 7
  %v4095 = vsub.s32 0, %v4094
  %v4096 = vrot.slane %v1753, %v4095
  %v4097 = vlaneseq
  %v4098 = vshrl.u32 %v4097, 7
  %v4099 = vsub.s32 1, %v4098
  %v4100 = vrot.slane %v1753, %v4099
  %v4101 = vlaneseq
  %v4102 = vshrl.u32 %v4101, 7
  %v4103 = vsub.s32 2, %v4102
  %v4104 = vrot.slane %v1753, %v4103
  %v4105 = vlaneseq
  %v4106 = vshrl.u32 %v4105, 7
  %v4107 = vsub.s32 3, %v4106
  %v4108 = vrot.slane %v1753, %v4107
  %v4109 = vlaneseq
  %v4110 = vshrl.u32 %v4109, 7
  %v4111 = vsub.s32 4, %v4110
  %v4112 = vrot.slane %v1753, %v4111
  %v4113 = vlaneseq
  %v4114 = vshrl.u32 %v4113, 7
  %v4115 = vsub.s32 5, %v4114
  %v4116 = vrot.slane %v1753, %v4115
  %v4117 = vlaneseq
  %v4118 = vshrl.u32 %v4117, 7
  %v4119 = vsub.s32 6, %v4118
  %v4120 = vrot.slane %v1753, %v4119
  %v4121 = vlaneseq
  %v4122 = vshrl.u32 %v4121, 7
  %v4123 = vsub.s32 7, %v4122
  %v4124 = vrot.slane %v1753, %v4123
  %v4125 = vlaneseq
  %v4126 = vshrl.u32 %v4125, 7
  %v4127 = vsub.s32 0, %v4126
  %v4128 = vrot.slane %v1768, %v4127
  %v4129 = vlaneseq
  %v4130 = vshrl.u32 %v4129, 7
  %v4131 = vsub.s32 1, %v4130
  %v4132 = vrot.slane %v1768, %v4131
  %v4133 = vlaneseq
  %v4134 = vshrl.u32 %v4133, 7
  %v4135 = vsub.s32 2, %v4134
  %v4136 = vrot.slane %v1768, %v4135
  %v4137 = vlaneseq
  %v4138 = vshrl.u32 %v4137, 7
  %v4139 = vsub.s32 3, %v4138
  %v4140 = vrot.slane %v1768, %v4139
  %v4141 = vlaneseq
  %v4142 = vshrl.u32 %v4141, 7
  %v4143 = vsub.s32 4, %v4142
  %v4144 = vrot.slane %v1768, %v4143
  %v4145 = vlaneseq
  %v4146 = vshrl.u32 %v4145, 7
  %v4147 = vsub.s32 5, %v4146
  %v4148 = vrot.slane %v1768, %v4147
  %v4149 = vlaneseq
  %v4150 = vshrl.u32 %v4149, 7
  %v4151 = vsub.s32 6, %v4150
  %v4152 = vrot.slane %v1768, %v4151
  %v4153 = vlaneseq
  %v4154 = vshrl.u32 %v4153, 7
  %v4155 = vsub.s32 7, %v4154
  %v4156 = vrot.slane %v1768, %v4155
  %v4157 = vlaneseq
  %v4158 = vshrl.u32 %v4157, 7
  %v4159 = vsub.s32 0, %v4158
  %v4160 = vrot.slane %v1783, %v4159
  %v4161 = vlaneseq
  %v4162 = vshrl.u32 %v4161, 7
  %v4163 = vsub.s32 1, %v4162
  %v4164 = vrot.slane %v1783, %v4163
  %v4165 = vlaneseq
  %v4166 = vshrl.u32 %v4165, 7
  %v4167 = vsub.s32 2, %v4166
  %v4168 = vrot.slane %v1783, %v4167
  %v4169 = vlaneseq
  %v4170 = vshrl.u32 %v4169, 7
  %v4171 = vsub.s32 3, %v4170
  %v4172 = vrot.slane %v1783, %v4171
  %v4173 = vlaneseq
  %v4174 = vshrl.u32 %v4173, 7
  %v4175 = vsub.s32 4, %v4174
  %v4176 = vrot.slane %v1783, %v4175
  %v4177 = vlaneseq
  %v4178 = vshrl.u32 %v4177, 7
  %v4179 = vsub.s32 5, %v4178
  %v4180 = vrot.slane %v1783, %v4179
  %v4181 = vlaneseq
  %v4182 = vshrl.u32 %v4181, 7
  %v4183 = vsub.s32 6, %v4182
  %v4184 = vrot.slane %v1783, %v4183
  %v4185 = vlaneseq
  %v4186 = vshrl.u32 %v4185, 7
  %v4187 = vsub.s32 7, %v4186
  %v4188 = vrot.slane %v1783, %v4187
  %v4189 = vlaneseq
  %v4190 = vshrl.u32 %v4189, 7
  %v4191 = vsub.s32 0, %v4190
  %v4192 = vrot.slane %v1798, %v4191
  %v4193 = vlaneseq
  %v4194 = vshrl.u32 %v4193, 7
  %v4195 = vsub.s32 1, %v4194
  %v4196 = vrot.slane %v1798, %v4195
  %v4197 = vlaneseq
  %v4198 = vshrl.u32 %v4197, 7
  %v4199 = vsub.s32 2, %v4198
  %v4200 = vrot.slane %v1798, %v4199
  %v4201 = vlaneseq
  %v4202 = vshrl.u32 %v4201, 7
  %v4203 = vsub.s32 3, %v4202
  %v4204 = vrot.slane %v1798, %v4203
  %v4205 = vlaneseq
  %v4206 = vshrl.u32 %v4205, 7
  %v4207 = vsub.s32 4, %v4206
  %v4208 = vrot.slane %v1798, %v4207
  %v4209 = vlaneseq
  %v4210 = vshrl.u32 %v4209, 7
  %v4211 = vsub.s32 5, %v4210
  %v4212 = vrot.slane %v1798, %v4211
  %v4213 = vlaneseq
  %v4214 = vshrl.u32 %v4213, 7
  %v4215 = vsub.s32 6, %v4214
  %v4216 = vrot.slane %v1798, %v4215
  %v4217 = vlaneseq
  %v4218 = vshrl.u32 %v4217, 7
  %v4219 = vsub.s32 7, %v4218
  %v4220 = vrot.slane %v1798, %v4219
  %v4221 = vlaneseq
  %v4222 = vshrl.u32 %v4221, 7
  %v4223 = vsub.s32 0, %v4222
  %v4224 = vrot.slane %v1813, %v4223
  %v4225 = vlaneseq
  %v4226 = vshrl.u32 %v4225, 7
  %v4227 = vsub.s32 1, %v4226
  %v4228 = vrot.slane %v1813, %v4227
  %v4229 = vlaneseq
  %v4230 = vshrl.u32 %v4229, 7
  %v4231 = vsub.s32 2, %v4230
  %v4232 = vrot.slane %v1813, %v4231
  %v4233 = vlaneseq
  %v4234 = vshrl.u32 %v4233, 7
  %v4235 = vsub.s32 3, %v4234
  %v4236 = vrot.slane %v1813, %v4235
  %v4237 = vlaneseq
  %v4238 = vshrl.u32 %v4237, 7
  %v4239 = vsub.s32 4, %v4238
  %v4240 = vrot.slane %v1813, %v4239
  %v4241 = vlaneseq
  %v4242 = vshrl.u32 %v4241, 7
  %v4243 = vsub.s32 5, %v4242
  %v4244 = vrot.slane %v1813, %v4243
  %v4245 = vlaneseq
  %v4246 = vshrl.u32 %v4245, 7
  %v4247 = vsub.s32 6, %v4246
  %v4248 = vrot.slane %v1813, %v4247
  %v4249 = vlaneseq
  %v4250 = vshrl.u32 %v4249, 7
  %v4251 = vsub.s32 7, %v4250
  %v4252 = vrot.slane %v1813, %v4251
  %v4253 = vlaneseq
  %v4254 = vshrl.u32 %v4253, 7
  %v4255 = vsub.s32 0, %v4254
  %v4256 = vrot.slane %v1828, %v4255
  %v4257 = vlaneseq
  %v4258 = vshrl.u32 %v4257, 7
  %v4259 = vsub.s32 1, %v4258
  %v4260 = vrot.slane %v1828, %v4259
  %v4261 = vlaneseq
  %v4262 = vshrl.u32 %v4261, 7
  %v4263 = vsub.s32 2, %v4262
  %v4264 = vrot.slane %v1828, %v4263
  %v4265 = vlaneseq
  %v4266 = vshrl.u32 %v4265, 7
  %v4267 = vsub.s32 3, %v4266
  %v4268 = vrot.slane %v1828, %v4267
  %v4269 = vlaneseq
  %v4270 = vshrl.u32 %v4269, 7
  %v4271 = vsub.s32 4, %v4270
  %v4272 = vrot.slane %v1828, %v4271
  %v4273 = vlaneseq
  %v4274 = vshrl.u32 %v4273, 7
  %v4275 = vsub.s32 5, %v4274
  %v4276 = vrot.slane %v1828, %v4275
  %v4277 = vlaneseq
  %v4278 = vshrl.u32 %v4277, 7
  %v4279 = vsub.s32 6, %v4278
  %v4280 = vrot.slane %v1828, %v4279
  %v4281 = vlaneseq
  %v4282 = vshrl.u32 %v4281, 7
  %v4283 = vsub.s32 7, %v4282
  %v4284 = vrot.slane %v1828, %v4283
  %v4285 = vlaneseq
  %v4286 = vshrl.u32 %v4285, 7
  %v4287 = vsub.s32 0, %v4286
  %v4288 = vrot.slane %v1843, %v4287
  %v4289 = vlaneseq
  %v4290 = vshrl.u32 %v4289, 7
  %v4291 = vsub.s32 1, %v4290
  %v4292 = vrot.slane %v1843, %v4291
  %v4293 = vlaneseq
  %v4294 = vshrl.u32 %v4293, 7
  %v4295 = vsub.s32 2, %v4294
  %v4296 = vrot.slane %v1843, %v4295
  %v4297 = vlaneseq
  %v4298 = vshrl.u32 %v4297, 7
  %v4299 = vsub.s32 3, %v4298
  %v4300 = vrot.slane %v1843, %v4299
  %v4301 = vlaneseq
  %v4302 = vshrl.u32 %v4301, 7
  %v4303 = vsub.s32 4, %v4302
  %v4304 = vrot.slane %v1843, %v4303
  %v4305 = vlaneseq
  %v4306 = vshrl.u32 %v4305, 7
  %v4307 = vsub.s32 5, %v4306
  %v4308 = vrot.slane %v1843, %v4307
  %v4309 = vlaneseq
  %v4310 = vshrl.u32 %v4309, 7
  %v4311 = vsub.s32 6, %v4310
  %v4312 = vrot.slane %v1843, %v4311
  %v4313 = vlaneseq
  %v4314 = vshrl.u32 %v4313, 7
  %v4315 = vsub.s32 7, %v4314
  %v4316 = vrot.slane %v1843, %v4315
  %v4317 = vlaneseq
  %v4318 = vshrl.u32 %v4317, 7
  %v4319 = vsub.s32 0, %v4318
  %v4320 = vrot.slane %v1858, %v4319
  %v4321 = vlaneseq
  %v4322 = vshrl.u32 %v4321, 7
  %v4323 = vsub.s32 1, %v4322
  %v4324 = vrot.slane %v1858, %v4323
  %v4325 = vlaneseq
  %v4326 = vshrl.u32 %v4325, 7
  %v4327 = vsub.s32 2, %v4326
  %v4328 = vrot.slane %v1858, %v4327
  %v4329 = vlaneseq
  %v4330 = vshrl.u32 %v4329, 7
  %v4331 = vsub.s32 3, %v4330
  %v4332 = vrot.slane %v1858, %v4331
  %v4333 = vlaneseq
  %v4334 = vshrl.u32 %v4333, 7
  %v4335 = vsub.s32 4, %v4334
  %v4336 = vrot.slane %v1858, %v4335
  %v4337 = vlaneseq
  %v4338 = vshrl.u32 %v4337, 7
  %v4339 = vsub.s32 5, %v4338
  %v4340 = vrot.slane %v1858, %v4339
  %v4341 = vlaneseq
  %v4342 = vshrl.u32 %v4341, 7
  %v4343 = vsub.s32 6, %v4342
  %v4344 = vrot.slane %v1858, %v4343
  %v4345 = vlaneseq
  %v4346 = vshrl.u32 %v4345, 7
  %v4347 = vsub.s32 7, %v4346
  %v4348 = vrot.slane %v1858, %v4347
  %v4349 = vlaneseq
  %v4350 = vshrl.u32 %v4349, 7
  %v4351 = vsub.s32 0, %v4350
  %v4352 = vrot.slane %v1873, %v4351
  %v4353 = vlaneseq
  %v4354 = vshrl.u32 %v4353, 7
  %v4355 = vsub.s32 1, %v4354
  %v4356 = vrot.slane %v1873, %v4355
  %v4357 = vlaneseq
  %v4358 = vshrl.u32 %v4357, 7
  %v4359 = vsub.s32 2, %v4358
  %v4360 = vrot.slane %v1873, %v4359
  %v4361 = vlaneseq
  %v4362 = vshrl.u32 %v4361, 7
  %v4363 = vsub.s32 3, %v4362
  %v4364 = vrot.slane %v1873, %v4363
  %v4365 = vlaneseq
  %v4366 = vshrl.u32 %v4365, 7
  %v4367 = vsub.s32 4, %v4366
  %v4368 = vrot.slane %v1873, %v4367
  %v4369 = vlaneseq
  %v4370 = vshrl.u32 %v4369, 7
  %v4371 = vsub.s32 5, %v4370
  %v4372 = vrot.slane %v1873, %v4371
  %v4373 = vlaneseq
  %v4374 = vshrl.u32 %v4373, 7
  %v4375 = vsub.s32 6, %v4374
  %v4376 = vrot.slane %v1873, %v4375
  %v4377 = vlaneseq
  %v4378 = vshrl.u32 %v4377, 7
  %v4379 = vsub.s32 7, %v4378
  %v4380 = vrot.slane %v1873, %v4379
  %v4381 = vlaneseq
  %v4382 = vshrl.u32 %v4381, 7
  %v4383 = vsub.s32 0, %v4382
  %v4384 = vrot.slane %v1888, %v4383
  %v4385 = vlaneseq
  %v4386 = vshrl.u32 %v4385, 7
  %v4387 = vsub.s32 1, %v4386
  %v4388 = vrot.slane %v1888, %v4387
  %v4389 = vlaneseq
  %v4390 = vshrl.u32 %v4389, 7
  %v4391 = vsub.s32 2, %v4390
  %v4392 = vrot.slane %v1888, %v4391
  %v4393 = vlaneseq
  %v4394 = vshrl.u32 %v4393, 7
  %v4395 = vsub.s32 3, %v4394
  %v4396 = vrot.slane %v1888, %v4395
  %v4397 = vlaneseq
  %v4398 = vshrl.u32 %v4397, 7
  %v4399 = vsub.s32 4, %v4398
  %v4400 = vrot.slane %v1888, %v4399
  %v4401 = vlaneseq
  %v4402 = vshrl.u32 %v4401, 7
  %v4403 = vsub.s32 5, %v4402
  %v4404 = vrot.slane %v1888, %v4403
  %v4405 = vlaneseq
  %v4406 = vshrl.u32 %v4405, 7
  %v4407 = vsub.s32 6, %v4406
  %v4408 = vrot.slane %v1888, %v4407
  %v4409 = vlaneseq
  %v4410 = vshrl.u32 %v4409, 7
  %v4411 = vsub.s32 7, %v4410
  %v4412 = vrot.slane %v1888, %v4411
  %v4413 = vlaneseq
  %v4414 = vshrl.u32 %v4413, 7
  %v4415 = vsub.s32 0, %v4414
  %v4416 = vrot.slane %v1903, %v4415
  %v4417 = vlaneseq
  %v4418 = vshrl.u32 %v4417, 7
  %v4419 = vsub.s32 1, %v4418
  %v4420 = vrot.slane %v1903, %v4419
  %v4421 = vlaneseq
  %v4422 = vshrl.u32 %v4421, 7
  %v4423 = vsub.s32 2, %v4422
  %v4424 = vrot.slane %v1903, %v4423
  %v4425 = vlaneseq
  %v4426 = vshrl.u32 %v4425, 7
  %v4427 = vsub.s32 3, %v4426
  %v4428 = vrot.slane %v1903, %v4427
  %v4429 = vlaneseq
  %v4430 = vshrl.u32 %v4429, 7
  %v4431 = vsub.s32 4, %v4430
  %v4432 = vrot.slane %v1903, %v4431
  %v4433 = vlaneseq
  %v4434 = vshrl.u32 %v4433, 7
  %v4435 = vsub.s32 5, %v4434
  %v4436 = vrot.slane %v1903, %v4435
  %v4437 = vlaneseq
  %v4438 = vshrl.u32 %v4437, 7
  %v4439 = vsub.s32 6, %v4438
  %v4440 = vrot.slane %v1903, %v4439
  %v4441 = vlaneseq
  %v4442 = vshrl.u32 %v4441, 7
  %v4443 = vsub.s32 7, %v4442
  %v4444 = vrot.slane %v1903, %v4443
  %v4445 = vlaneseq
  %v4446 = vshrl.u32 %v4445, 7
  %v4447 = vsub.s32 0, %v4446
  %v4448 = vrot.slane %v1918, %v4447
  %v4449 = vlaneseq
  %v4450 = vshrl.u32 %v4449, 7
  %v4451 = vsub.s32 1, %v4450
  %v4452 = vrot.slane %v1918, %v4451
  %v4453 = vlaneseq
  %v4454 = vshrl.u32 %v4453, 7
  %v4455 = vsub.s32 2, %v4454
  %v4456 = vrot.slane %v1918, %v4455
  %v4457 = vlaneseq
  %v4458 = vshrl.u32 %v4457, 7
  %v4459 = vsub.s32 3, %v4458
  %v4460 = vrot.slane %v1918, %v4459
  %v4461 = vlaneseq
  %v4462 = vshrl.u32 %v4461, 7
  %v4463 = vsub.s32 4, %v4462
  %v4464 = vrot.slane %v1918, %v4463
  %v4465 = vlaneseq
  %v4466 = vshrl.u32 %v4465, 7
  %v4467 = vsub.s32 5, %v4466
  %v4468 = vrot.slane %v1918, %v4467
  %v4469 = vlaneseq
  %v4470 = vshrl.u32 %v4469, 7
  %v4471 = vsub.s32 6, %v4470
  %v4472 = vrot.slane %v1918, %v4471
  %v4473 = vlaneseq
  %v4474 = vshrl.u32 %v4473, 7
  %v4475 = vsub.s32 7, %v4474
  %v4476 = vrot.slane %v1918, %v4475
  %v4477 = vlaneseq
  %v4478 = vshrl.u32 %v4477, 7
  %v4479 = vsub.s32 0, %v4478
  %v4480 = vrot.slane %v1933, %v4479
  %v4481 = vlaneseq
  %v4482 = vshrl.u32 %v4481, 7
  %v4483 = vsub.s32 1, %v4482
  %v4484 = vrot.slane %v1933, %v4483
  %v4485 = vlaneseq
  %v4486 = vshrl.u32 %v4485, 7
  %v4487 = vsub.s32 2, %v4486
  %v4488 = vrot.slane %v1933, %v4487
  %v4489 = vlaneseq
  %v4490 = vshrl.u32 %v4489, 7
  %v4491 = vsub.s32 3, %v4490
  %v4492 = vrot.slane %v1933, %v4491
  %v4493 = vlaneseq
  %v4494 = vshrl.u32 %v4493, 7
  %v4495 = vsub.s32 4, %v4494
  %v4496 = vrot.slane %v1933, %v4495
  %v4497 = vlaneseq
  %v4498 = vshrl.u32 %v4497, 7
  %v4499 = vsub.s32 5, %v4498
  %v4500 = vrot.slane %v1933, %v4499
  %v4501 = vlaneseq
  %v4502 = vshrl.u32 %v4501, 7
  %v4503 = vsub.s32 6, %v4502
  %v4504 = vrot.slane %v1933, %v4503
  %v4505 = vlaneseq
  %v4506 = vshrl.u32 %v4505, 7
  %v4507 = vsub.s32 7, %v4506
  %v4508 = vrot.slane %v1933, %v4507
  %v4509 = vlaneseq
  %v4510 = vshrl.u32 %v4509, 7
  %v4511 = vsub.s32 0, %v4510
  %v4512 = vrot.slane %v1948, %v4511
  %v4513 = vlaneseq
  %v4514 = vshrl.u32 %v4513, 7
  %v4515 = vsub.s32 1, %v4514
  %v4516 = vrot.slane %v1948, %v4515
  %v4517 = vlaneseq
  %v4518 = vshrl.u32 %v4517, 7
  %v4519 = vsub.s32 2, %v4518
  %v4520 = vrot.slane %v1948, %v4519
  %v4521 = vlaneseq
  %v4522 = vshrl.u32 %v4521, 7
  %v4523 = vsub.s32 3, %v4522
  %v4524 = vrot.slane %v1948, %v4523
  %v4525 = vlaneseq
  %v4526 = vshrl.u32 %v4525, 7
  %v4527 = vsub.s32 4, %v4526
  %v4528 = vrot.slane %v1948, %v4527
  %v4529 = vlaneseq
  %v4530 = vshrl.u32 %v4529, 7
  %v4531 = vsub.s32 5, %v4530
  %v4532 = vrot.slane %v1948, %v4531
  %v4533 = vlaneseq
  %v4534 = vshrl.u32 %v4533, 7
  %v4535 = vsub.s32 6, %v4534
  %v4536 = vrot.slane %v1948, %v4535
  %v4537 = vlaneseq
  %v4538 = vshrl.u32 %v4537, 7
  %v4539 = vsub.s32 7, %v4538
  %v4540 = vrot.slane %v1948, %v4539
  %v4541 = vlaneseq
  %v4542 = vshrl.u32 %v4541, 7
  %v4543 = vsub.s32 0, %v4542
  %v4544 = vrot.slane %v1963, %v4543
  %v4545 = vlaneseq
  %v4546 = vshrl.u32 %v4545, 7
  %v4547 = vsub.s32 1, %v4546
  %v4548 = vrot.slane %v1963, %v4547
  %v4549 = vlaneseq
  %v4550 = vshrl.u32 %v4549, 7
  %v4551 = vsub.s32 2, %v4550
  %v4552 = vrot.slane %v1963, %v4551
  %v4553 = vlaneseq
  %v4554 = vshrl.u32 %v4553, 7
  %v4555 = vsub.s32 3, %v4554
  %v4556 = vrot.slane %v1963, %v4555
  %v4557 = vlaneseq
  %v4558 = vshrl.u32 %v4557, 7
  %v4559 = vsub.s32 4, %v4558
  %v4560 = vrot.slane %v1963, %v4559
  %v4561 = vlaneseq
  %v4562 = vshrl.u32 %v4561, 7
  %v4563 = vsub.s32 5, %v4562
  %v4564 = vrot.slane %v1963, %v4563
  %v4565 = vlaneseq
  %v4566 = vshrl.u32 %v4565, 7
  %v4567 = vsub.s32 6, %v4566
  %v4568 = vrot.slane %v1963, %v4567
  %v4569 = vlaneseq
  %v4570 = vshrl.u32 %v4569, 7
  %v4571 = vsub.s32 7, %v4570
  %v4572 = vrot.slane %v1963, %v4571
  %v4573 = vlaneseq
  %v4574 = vshrl.u32 %v4573, 7
  %v4575 = vsub.s32 0, %v4574
  %v4576 = vrot.slane %v1978, %v4575
  %v4577 = vlaneseq
  %v4578 = vshrl.u32 %v4577, 7
  %v4579 = vsub.s32 1, %v4578
  %v4580 = vrot.slane %v1978, %v4579
  %v4581 = vlaneseq
  %v4582 = vshrl.u32 %v4581, 7
  %v4583 = vsub.s32 2, %v4582
  %v4584 = vrot.slane %v1978, %v4583
  %v4585 = vlaneseq
  %v4586 = vshrl.u32 %v4585, 7
  %v4587 = vsub.s32 3, %v4586
  %v4588 = vrot.slane %v1978, %v4587
  %v4589 = vlaneseq
  %v4590 = vshrl.u32 %v4589, 7
  %v4591 = vsub.s32 4, %v4590
  %v4592 = vrot.slane %v1978, %v4591
  %v4593 = vlaneseq
  %v4594 = vshrl.u32 %v4593, 7
  %v4595 = vsub.s32 5, %v4594
  %v4596 = vrot.slane %v1978, %v4595
  %v4597 = vlaneseq
  %v4598 = vshrl.u32 %v4597, 7
  %v4599 = vsub.s32 6, %v4598
  %v4600 = vrot.slane %v1978, %v4599
  %v4601 = vlaneseq
  %v4602 = vshrl.u32 %v4601, 7
  %v4603 = vsub.s32 7, %v4602
  %v4604 = vrot.slane %v1978, %v4603
  %v4605 = vlaneseq
  %v4606 = vshrl.u32 %v4605, 7
  %v4607 = vsub.s32 0, %v4606
  %v4608 = vrot.slane %v1993, %v4607
  %v4609 = vlaneseq
  %v4610 = vshrl.u32 %v4609, 7
  %v4611 = vsub.s32 1, %v4610
  %v4612 = vrot.slane %v1993, %v4611
  %v4613 = vlaneseq
  %v4614 = vshrl.u32 %v4613, 7
  %v4615 = vsub.s32 2, %v4614
  %v4616 = vrot.slane %v1993, %v4615
  %v4617 = vlaneseq
  %v4618 = vshrl.u32 %v4617, 7
  %v4619 = vsub.s32 3, %v4618
  %v4620 = vrot.slane %v1993, %v4619
  %v4621 = vlaneseq
  %v4622 = vshrl.u32 %v4621, 7
  %v4623 = vsub.s32 4, %v4622
  %v4624 = vrot.slane %v1993, %v4623
  %v4625 = vlaneseq
  %v4626 = vshrl.u32 %v4625, 7
  %v4627 = vsub.s32 5, %v4626
  %v4628 = vrot.slane %v1993, %v4627
  %v4629 = vlaneseq
  %v4630 = vshrl.u32 %v4629, 7
  %v4631 = vsub.s32 6, %v4630
  %v4632 = vrot.slane %v1993, %v4631
  %v4633 = vlaneseq
  %v4634 = vshrl.u32 %v4633, 7
  %v4635 = vsub.s32 7, %v4634
  %v4636 = vrot.slane %v1993, %v4635
  %v4637 = vlaneseq
  %v4638 = vshrl.u32 %v4637, 7
  %v4639 = vsub.s32 0, %v4638
  %v4640 = vrot.slane %v2008, %v4639
  %v4641 = vlaneseq
  %v4642 = vshrl.u32 %v4641, 7
  %v4643 = vsub.s32 1, %v4642
  %v4644 = vrot.slane %v2008, %v4643
  %v4645 = vlaneseq
  %v4646 = vshrl.u32 %v4645, 7
  %v4647 = vsub.s32 2, %v4646
  %v4648 = vrot.slane %v2008, %v4647
  %v4649 = vlaneseq
  %v4650 = vshrl.u32 %v4649, 7
  %v4651 = vsub.s32 3, %v4650
  %v4652 = vrot.slane %v2008, %v4651
  %v4653 = vlaneseq
  %v4654 = vshrl.u32 %v4653, 7
  %v4655 = vsub.s32 4, %v4654
  %v4656 = vrot.slane %v2008, %v4655
  %v4657 = vlaneseq
  %v4658 = vshrl.u32 %v4657, 7
  %v4659 = vsub.s32 5, %v4658
  %v4660 = vrot.slane %v2008, %v4659
  %v4661 = vlaneseq
  %v4662 = vshrl.u32 %v4661, 7
  %v4663 = vsub.s32 6, %v4662
  %v4664 = vrot.slane %v2008, %v4663
  %v4665 = vlaneseq
  %v4666 = vshrl.u32 %v4665, 7
  %v4667 = vsub.s32 7, %v4666
  %v4668 = vrot.slane %v2008, %v4667
  %v4669 = vlaneseq
  %v4670 = vshrl.u32 %v4669, 7
  %v4671 = vsub.s32 0, %v4670
  %v4672 = vrot.slane %v2023, %v4671
  %v4673 = vlaneseq
  %v4674 = vshrl.u32 %v4673, 7
  %v4675 = vsub.s32 1, %v4674
  %v4676 = vrot.slane %v2023, %v4675
  %v4677 = vlaneseq
  %v4678 = vshrl.u32 %v4677, 7
  %v4679 = vsub.s32 2, %v4678
  %v4680 = vrot.slane %v2023, %v4679
  %v4681 = vlaneseq
  %v4682 = vshrl.u32 %v4681, 7
  %v4683 = vsub.s32 3, %v4682
  %v4684 = vrot.slane %v2023, %v4683
  %v4685 = vlaneseq
  %v4686 = vshrl.u32 %v4685, 7
  %v4687 = vsub.s32 4, %v4686
  %v4688 = vrot.slane %v2023, %v4687
  %v4689 = vlaneseq
  %v4690 = vshrl.u32 %v4689, 7
  %v4691 = vsub.s32 5, %v4690
  %v4692 = vrot.slane %v2023, %v4691
  %v4693 = vlaneseq
  %v4694 = vshrl.u32 %v4693, 7
  %v4695 = vsub.s32 6, %v4694
  %v4696 = vrot.slane %v2023, %v4695
  %v4697 = vlaneseq
  %v4698 = vshrl.u32 %v4697, 7
  %v4699 = vsub.s32 7, %v4698
  %v4700 = vrot.slane %v2023, %v4699
  %v4701 = vlaneseq
  %v4702 = vshrl.u32 %v4701, 7
  %v4703 = vsub.s32 0, %v4702
  %v4704 = vrot.slane %v2038, %v4703
  %v4705 = vlaneseq
  %v4706 = vshrl.u32 %v4705, 7
  %v4707 = vsub.s32 1, %v4706
  %v4708 = vrot.slane %v2038, %v4707
  %v4709 = vlaneseq
  %v4710 = vshrl.u32 %v4709, 7
  %v4711 = vsub.s32 2, %v4710
  %v4712 = vrot.slane %v2038, %v4711
  %v4713 = vlaneseq
  %v4714 = vshrl.u32 %v4713, 7
  %v4715 = vsub.s32 3, %v4714
  %v4716 = vrot.slane %v2038, %v4715
  %v4717 = vlaneseq
  %v4718 = vshrl.u32 %v4717, 7
  %v4719 = vsub.s32 4, %v4718
  %v4720 = vrot.slane %v2038, %v4719
  %v4721 = vlaneseq
  %v4722 = vshrl.u32 %v4721, 7
  %v4723 = vsub.s32 5, %v4722
  %v4724 = vrot.slane %v2038, %v4723
  %v4725 = vlaneseq
  %v4726 = vshrl.u32 %v4725, 7
  %v4727 = vsub.s32 6, %v4726
  %v4728 = vrot.slane %v2038, %v4727
  %v4729 = vlaneseq
  %v4730 = vshrl.u32 %v4729, 7
  %v4731 = vsub.s32 7, %v4730
  %v4732 = vrot.slane %v2038, %v4731
  %v4733 = vlaneseq
  %v4734 = vshrl.u32 %v4733, 7
  %v4735 = vsub.s32 0, %v4734
  %v4736 = vrot.slane %v2053, %v4735
  %v4737 = vlaneseq
  %v4738 = vshrl.u32 %v4737, 7
  %v4739 = vsub.s32 1, %v4738
  %v4740 = vrot.slane %v2053, %v4739
  %v4741 = vlaneseq
  %v4742 = vshrl.u32 %v4741, 7
  %v4743 = vsub.s32 2, %v4742
  %v4744 = vrot.slane %v2053, %v4743
  %v4745 = vlaneseq
  %v4746 = vshrl.u32 %v4745, 7
  %v4747 = vsub.s32 3, %v4746
  %v4748 = vrot.slane %v2053, %v4747
  %v4749 = vlaneseq
  %v4750 = vshrl.u32 %v4749, 7
  %v4751 = vsub.s32 4, %v4750
  %v4752 = vrot.slane %v2053, %v4751
  %v4753 = vlaneseq
  %v4754 = vshrl.u32 %v4753, 7
  %v4755 = vsub.s32 5, %v4754
  %v4756 = vrot.slane %v2053, %v4755
  %v4757 = vlaneseq
  %v4758 = vshrl.u32 %v4757, 7
  %v4759 = vsub.s32 6, %v4758
  %v4760 = vrot.slane %v2053, %v4759
  %v4761 = vlaneseq
  %v4762 = vshrl.u32 %v4761, 7
  %v4763 = vsub.s32 7, %v4762
  %v4764 = vrot.slane %v2053, %v4763
  %v4765 = vlaneseq
  %v4766 = vshrl.u32 %v4765, 7
  %v4767 = vsub.s32 0, %v4766
  %v4768 = vrot.slane %v2068, %v4767
  %v4769 = vlaneseq
  %v4770 = vshrl.u32 %v4769, 7
  %v4771 = vsub.s32 1, %v4770
  %v4772 = vrot.slane %v2068, %v4771
  %v4773 = vlaneseq
  %v4774 = vshrl.u32 %v4773, 7
  %v4775 = vsub.s32 2, %v4774
  %v4776 = vrot.slane %v2068, %v4775
  %v4777 = vlaneseq
  %v4778 = vshrl.u32 %v4777, 7
  %v4779 = vsub.s32 3, %v4778
  %v4780 = vrot.slane %v2068, %v4779
  %v4781 = vlaneseq
  %v4782 = vshrl.u32 %v4781, 7
  %v4783 = vsub.s32 4, %v4782
  %v4784 = vrot.slane %v2068, %v4783
  %v4785 = vlaneseq
  %v4786 = vshrl.u32 %v4785, 7
  %v4787 = vsub.s32 5, %v4786
  %v4788 = vrot.slane %v2068, %v4787
  %v4789 = vlaneseq
  %v4790 = vshrl.u32 %v4789, 7
  %v4791 = vsub.s32 6, %v4790
  %v4792 = vrot.slane %v2068, %v4791
  %v4793 = vlaneseq
  %v4794 = vshrl.u32 %v4793, 7
  %v4795 = vsub.s32 7, %v4794
  %v4796 = vrot.slane %v2068, %v4795
  %v4797 = vlaneseq
  %v4798 = vshrl.u32 %v4797, 7
  %v4799 = vsub.s32 0, %v4798
  %v4800 = vrot.slane %v2083, %v4799
  %v4801 = vlaneseq
  %v4802 = vshrl.u32 %v4801, 7
  %v4803 = vsub.s32 1, %v4802
  %v4804 = vrot.slane %v2083, %v4803
  %v4805 = vlaneseq
  %v4806 = vshrl.u32 %v4805, 7
  %v4807 = vsub.s32 2, %v4806
  %v4808 = vrot.slane %v2083, %v4807
  %v4809 = vlaneseq
  %v4810 = vshrl.u32 %v4809, 7
  %v4811 = vsub.s32 3, %v4810
  %v4812 = vrot.slane %v2083, %v4811
  %v4813 = vlaneseq
  %v4814 = vshrl.u32 %v4813, 7
  %v4815 = vsub.s32 4, %v4814
  %v4816 = vrot.slane %v2083, %v4815
  %v4817 = vlaneseq
  %v4818 = vshrl.u32 %v4817, 7
  %v4819 = vsub.s32 5, %v4818
  %v4820 = vrot.slane %v2083, %v4819
  %v4821 = vlaneseq
  %v4822 = vshrl.u32 %v4821, 7
  %v4823 = vsub.s32 6, %v4822
  %v4824 = vrot.slane %v2083, %v4823
  %v4825 = vlaneseq
  %v4826 = vshrl.u32 %v4825, 7
  %v4827 = vsub.s32 7, %v4826
  %v4828 = vrot.slane %v2083, %v4827
  %v4829 = vlaneseq
  %v4830 = vshrl.u32 %v4829, 7
  %v4831 = vsub.s32 0, %v4830
  %v4832 = vrot.slane %v2098, %v4831
  %v4833 = vlaneseq
  %v4834 = vshrl.u32 %v4833, 7
  %v4835 = vsub.s32 1, %v4834
  %v4836 = vrot.slane %v2098, %v4835
  %v4837 = vlaneseq
  %v4838 = vshrl.u32 %v4837, 7
  %v4839 = vsub.s32 2, %v4838
  %v4840 = vrot.slane %v2098, %v4839
  %v4841 = vlaneseq
  %v4842 = vshrl.u32 %v4841, 7
  %v4843 = vsub.s32 3, %v4842
  %v4844 = vrot.slane %v2098, %v4843
  %v4845 = vlaneseq
  %v4846 = vshrl.u32 %v4845, 7
  %v4847 = vsub.s32 4, %v4846
  %v4848 = vrot.slane %v2098, %v4847
  %v4849 = vlaneseq
  %v4850 = vshrl.u32 %v4849, 7
  %v4851 = vsub.s32 5, %v4850
  %v4852 = vrot.slane %v2098, %v4851
  %v4853 = vlaneseq
  %v4854 = vshrl.u32 %v4853, 7
  %v4855 = vsub.s32 6, %v4854
  %v4856 = vrot.slane %v2098, %v4855
  %v4857 = vlaneseq
  %v4858 = vshrl.u32 %v4857, 7
  %v4859 = vsub.s32 7, %v4858
  %v4860 = vrot.slane %v2098, %v4859
  %v4861 = vlaneseq
  %v4862 = vshrl.u32 %v4861, 7
  %v4863 = vsub.s32 0, %v4862
  %v4864 = vrot.slane %v2113, %v4863
  %v4865 = vlaneseq
  %v4866 = vshrl.u32 %v4865, 7
  %v4867 = vsub.s32 1, %v4866
  %v4868 = vrot.slane %v2113, %v4867
  %v4869 = vlaneseq
  %v4870 = vshrl.u32 %v4869, 7
  %v4871 = vsub.s32 2, %v4870
  %v4872 = vrot.slane %v2113, %v4871
  %v4873 = vlaneseq
  %v4874 = vshrl.u32 %v4873, 7
  %v4875 = vsub.s32 3, %v4874
  %v4876 = vrot.slane %v2113, %v4875
  %v4877 = vlaneseq
  %v4878 = vshrl.u32 %v4877, 7
  %v4879 = vsub.s32 4, %v4878
  %v4880 = vrot.slane %v2113, %v4879
  %v4881 = vlaneseq
  %v4882 = vshrl.u32 %v4881, 7
  %v4883 = vsub.s32 5, %v4882
  %v4884 = vrot.slane %v2113, %v4883
  %v4885 = vlaneseq
  %v4886 = vshrl.u32 %v4885, 7
  %v4887 = vsub.s32 6, %v4886
  %v4888 = vrot.slane %v2113, %v4887
  %v4889 = vlaneseq
  %v4890 = vshrl.u32 %v4889, 7
  %v4891 = vsub.s32 7, %v4890
  %v4892 = vrot.slane %v2113, %v4891
  %v4893 = vlaneseq
  %v4894 = vshrl.u32 %v4893, 7
  %v4895 = vsub.s32 0, %v4894
  %v4896 = vrot.slane %v2128, %v4895
  %v4897 = vlaneseq
  %v4898 = vshrl.u32 %v4897, 7
  %v4899 = vsub.s32 1, %v4898
  %v4900 = vrot.slane %v2128, %v4899
  %v4901 = vlaneseq
  %v4902 = vshrl.u32 %v4901, 7
  %v4903 = vsub.s32 2, %v4902
  %v4904 = vrot.slane %v2128, %v4903
  %v4905 = vlaneseq
  %v4906 = vshrl.u32 %v4905, 7
  %v4907 = vsub.s32 3, %v4906
  %v4908 = vrot.slane %v2128, %v4907
  %v4909 = vlaneseq
  %v4910 = vshrl.u32 %v4909, 7
  %v4911 = vsub.s32 4, %v4910
  %v4912 = vrot.slane %v2128, %v4911
  %v4913 = vlaneseq
  %v4914 = vshrl.u32 %v4913, 7
  %v4915 = vsub.s32 5, %v4914
  %v4916 = vrot.slane %v2128, %v4915
  %v4917 = vlaneseq
  %v4918 = vshrl.u32 %v4917, 7
  %v4919 = vsub.s32 6, %v4918
  %v4920 = vrot.slane %v2128, %v4919
  %v4921 = vlaneseq
  %v4922 = vshrl.u32 %v4921, 7
  %v4923 = vsub.s32 7, %v4922
  %v4924 = vrot.slane %v2128, %v4923
  %v4925 = vlaneseq
  %v4926 = vshrl.u32 %v4925, 7
  %v4927 = vsub.s32 0, %v4926
  %v4928 = vrot.slane %v2143, %v4927
  %v4929 = vlaneseq
  %v4930 = vshrl.u32 %v4929, 7
  %v4931 = vsub.s32 1, %v4930
  %v4932 = vrot.slane %v2143, %v4931
  %v4933 = vlaneseq
  %v4934 = vshrl.u32 %v4933, 7
  %v4935 = vsub.s32 2, %v4934
  %v4936 = vrot.slane %v2143, %v4935
  %v4937 = vlaneseq
  %v4938 = vshrl.u32 %v4937, 7
  %v4939 = vsub.s32 3, %v4938
  %v4940 = vrot.slane %v2143, %v4939
  %v4941 = vlaneseq
  %v4942 = vshrl.u32 %v4941, 7
  %v4943 = vsub.s32 4, %v4942
  %v4944 = vrot.slane %v2143, %v4943
  %v4945 = vlaneseq
  %v4946 = vshrl.u32 %v4945, 7
  %v4947 = vsub.s32 5, %v4946
  %v4948 = vrot.slane %v2143, %v4947
  %v4949 = vlaneseq
  %v4950 = vshrl.u32 %v4949, 7
  %v4951 = vsub.s32 6, %v4950
  %v4952 = vrot.slane %v2143, %v4951
  %v4953 = vlaneseq
  %v4954 = vshrl.u32 %v4953, 7
  %v4955 = vsub.s32 7, %v4954
  %v4956 = vrot.slane %v2143, %v4955
  %v4957 = vlaneseq
  %v4958 = vshrl.u32 %v4957, 7
  %v4959 = vsub.s32 0, %v4958
  %v4960 = vrot.slane %v2158, %v4959
  %v4961 = vlaneseq
  %v4962 = vshrl.u32 %v4961, 7
  %v4963 = vsub.s32 1, %v4962
  %v4964 = vrot.slane %v2158, %v4963
  %v4965 = vlaneseq
  %v4966 = vshrl.u32 %v4965, 7
  %v4967 = vsub.s32 2, %v4966
  %v4968 = vrot.slane %v2158, %v4967
  %v4969 = vlaneseq
  %v4970 = vshrl.u32 %v4969, 7
  %v4971 = vsub.s32 3, %v4970
  %v4972 = vrot.slane %v2158, %v4971
  %v4973 = vlaneseq
  %v4974 = vshrl.u32 %v4973, 7
  %v4975 = vsub.s32 4, %v4974
  %v4976 = vrot.slane %v2158, %v4975
  %v4977 = vlaneseq
  %v4978 = vshrl.u32 %v4977, 7
  %v4979 = vsub.s32 5, %v4978
  %v4980 = vrot.slane %v2158, %v4979
  %v4981 = vlaneseq
  %v4982 = vshrl.u32 %v4981, 7
  %v4983 = vsub.s32 6, %v4982
  %v4984 = vrot.slane %v2158, %v4983
  %v4985 = vlaneseq
  %v4986 = vshrl.u32 %v4985, 7
  %v4987 = vsub.s32 7, %v4986
  %v4988 = vrot.slane %v2158, %v4987
  %v4989 = vlaneseq
  %v4990 = vshrl.u32 %v4989, 7
  %v4991 = vsub.s32 0, %v4990
  %v4992 = vrot.slane %v2173, %v4991
  %v4993 = vlaneseq
  %v4994 = vshrl.u32 %v4993, 7
  %v4995 = vsub.s32 1, %v4994
  %v4996 = vrot.slane %v2173, %v4995
  %v4997 = vlaneseq
  %v4998 = vshrl.u32 %v4997, 7
  %v4999 = vsub.s32 2, %v4998
  %v5000 = vrot.slane %v2173, %v4999
  %v5001 = vlaneseq
  %v5002 = vshrl.u32 %v5001, 7
  %v5003 = vsub.s32 3, %v5002
  %v5004 = vrot.slane %v2173, %v5003
  %v5005 = vlaneseq
  %v5006 = vshrl.u32 %v5005, 7
  %v5007 = vsub.s32 4, %v5006
  %v5008 = vrot.slane %v2173, %v5007
  %v5009 = vlaneseq
  %v5010 = vshrl.u32 %v5009, 7
  %v5011 = vsub.s32 5, %v5010
  %v5012 = vrot.slane %v2173, %v5011
  %v5013 = vlaneseq
  %v5014 = vshrl.u32 %v5013, 7
  %v5015 = vsub.s32 6, %v5014
  %v5016 = vrot.slane %v2173, %v5015
  %v5017 = vlaneseq
  %v5018 = vshrl.u32 %v5017, 7
  %v5019 = vsub.s32 7, %v5018
  %v5020 = vrot.slane %v2173, %v5019
  %v5021 = vlaneseq
  %v5022 = vshrl.u32 %v5021, 7
  %v5023 = vsub.s32 0, %v5022
  %v5024 = vrot.slane %v2188, %v5023
  %v5025 = vlaneseq
  %v5026 = vshrl.u32 %v5025, 7
  %v5027 = vsub.s32 1, %v5026
  %v5028 = vrot.slane %v2188, %v5027
  %v5029 = vlaneseq
  %v5030 = vshrl.u32 %v5029, 7
  %v5031 = vsub.s32 2, %v5030
  %v5032 = vrot.slane %v2188, %v5031
  %v5033 = vlaneseq
  %v5034 = vshrl.u32 %v5033, 7
  %v5035 = vsub.s32 3, %v5034
  %v5036 = vrot.slane %v2188, %v5035
  %v5037 = vlaneseq
  %v5038 = vshrl.u32 %v5037, 7
  %v5039 = vsub.s32 4, %v5038
  %v5040 = vrot.slane %v2188, %v5039
  %v5041 = vlaneseq
  %v5042 = vshrl.u32 %v5041, 7
  %v5043 = vsub.s32 5, %v5042
  %v5044 = vrot.slane %v2188, %v5043
  %v5045 = vlaneseq
  %v5046 = vshrl.u32 %v5045, 7
  %v5047 = vsub.s32 6, %v5046
  %v5048 = vrot.slane %v2188, %v5047
  %v5049 = vlaneseq
  %v5050 = vshrl.u32 %v5049, 7
  %v5051 = vsub.s32 7, %v5050
  %v5052 = vrot.slane %v2188, %v5051
  %v5053 = vlaneseq
  %v5054 = vshrl.u32 %v5053, 7
  %v5055 = vsub.s32 0, %v5054
  %v5056 = vrot.slane %v2203, %v5055
  %v5057 = vlaneseq
  %v5058 = vshrl.u32 %v5057, 7
  %v5059 = vsub.s32 1, %v5058
  %v5060 = vrot.slane %v2203, %v5059
  %v5061 = vlaneseq
  %v5062 = vshrl.u32 %v5061, 7
  %v5063 = vsub.s32 2, %v5062
  %v5064 = vrot.slane %v2203, %v5063
  %v5065 = vlaneseq
  %v5066 = vshrl.u32 %v5065, 7
  %v5067 = vsub.s32 3, %v5066
  %v5068 = vrot.slane %v2203, %v5067
  %v5069 = vlaneseq
  %v5070 = vshrl.u32 %v5069, 7
  %v5071 = vsub.s32 4, %v5070
  %v5072 = vrot.slane %v2203, %v5071
  %v5073 = vlaneseq
  %v5074 = vshrl.u32 %v5073, 7
  %v5075 = vsub.s32 5, %v5074
  %v5076 = vrot.slane %v2203, %v5075
  %v5077 = vlaneseq
  %v5078 = vshrl.u32 %v5077, 7
  %v5079 = vsub.s32 6, %v5078
  %v5080 = vrot.slane %v2203, %v5079
  %v5081 = vlaneseq
  %v5082 = vshrl.u32 %v5081, 7
  %v5083 = vsub.s32 7, %v5082
  %v5084 = vrot.slane %v2203, %v5083
  %v5085 = vcombine.low %v3040, %v3044
  %v5086 = vcombine.low %v3048, %v3052
  %v5087 = vcombine.low %v3056, %v3060
  %v5088 = vcombine.low %v3064, %v3068
  %v5090 = vunpack.c.l.s4 1966171168
  %v5091 = vunpack.c.0.s8 %v5090
  %v5092 = vlaneseq
  %v5093 = vshrl.u32 %v5092, 7
  %v5094 = vsub.s32 %v5091, %v5093
  %v5095 = vrot.slane %v5085, %v5094
  %v5097 = vunpack.c.l.s4 1966171168
  %v5098 = vunpack.c.0.s8 %v5097
  %v5099 = vlaneseq
  %v5100 = vshrl.u32 %v5099, 7
  %v5101 = vsub.s32 %v5098, %v5100
  %v5102 = vrot.slane %v5086, %v5101
  %v5104 = vunpack.c.l.s4 1966171168
  %v5105 = vunpack.c.0.s8 %v5104
  %v5106 = vlaneseq
  %v5107 = vshrl.u32 %v5106, 7
  %v5108 = vsub.s32 %v5105, %v5107
  %v5109 = vrot.slane %v5087, %v5108
  %v5111 = vunpack.c.l.s4 1966171168
  %v5112 = vunpack.c.0.s8 %v5111
  %v5113 = vlaneseq
  %v5114 = vshrl.u32 %v5113, 7
  %v5115 = vsub.s32 %v5112, %v5114
  %v5116 = vrot.slane %v5088, %v5115
  %v5117 = vcombine.low %v5095, %v5102
  %v5118 = vcombine.low %v5109, %v5116
  %v5120 = vunpack.c.l.s4 1966171168
  %v5121 = vunpack.c.0.s8 %v5120
  %v5122 = vlaneseq
  %v5123 = vshrl.u32 %v5122, 7
  %v5124 = vsub.s32 %v5121, %v5123
  %v5125 = vrot.slane %v5117, %v5124
  %v5127 = vunpack.c.l.s4 1966171168
  %v5128 = vunpack.c.0.s8 %v5127
  %v5129 = vlaneseq
  %v5130 = vshrl.u32 %v5129, 7
  %v5131 = vsub.s32 %v5128, %v5130
  %v5132 = vrot.slane %v5118, %v5131
  %v5133 = vcombine.low %v5125, %v5132
  %v5134 = vcombine.low %v3072, %v3076
  %v5135 = vcombine.low %v3080, %v3084
  %v5136 = vcombine.low %v3088, %v3092
  %v5137 = vcombine.low %v3096, %v3100
  %v5139 = vunpack.c.l.s4 1966171168
  %v5140 = vunpack.c.0.s8 %v5139
  %v5141 = vlaneseq
  %v5142 = vshrl.u32 %v5141, 7
  %v5143 = vsub.s32 %v5140, %v5142
  %v5144 = vrot.slane %v5134, %v5143
  %v5146 = vunpack.c.l.s4 1966171168
  %v5147 = vunpack.c.0.s8 %v5146
  %v5148 = vlaneseq
  %v5149 = vshrl.u32 %v5148, 7
  %v5150 = vsub.s32 %v5147, %v5149
  %v5151 = vrot.slane %v5135, %v5150
  %v5153 = vunpack.c.l.s4 1966171168
  %v5154 = vunpack.c.0.s8 %v5153
  %v5155 = vlaneseq
  %v5156 = vshrl.u32 %v5155, 7
  %v5157 = vsub.s32 %v5154, %v5156
  %v5158 = vrot.slane %v5136, %v5157
  %v5160 = vunpack.c.l.s4 1966171168
  %v5161 = vunpack.c.0.s8 %v5160
  %v5162 = vlaneseq
  %v5163 = vshrl.u32 %v5162, 7
  %v5164 = vsub.s32 %v5161, %v5163
  %v5165 = vrot.slane %v5137, %v5164
  %v5166 = vcombine.low %v5144, %v5151
  %v5167 = vcombine.low %v5158, %v5165
  %v5169 = vunpack.c.l.s4 1966171168
  %v5170 = vunpack.c.0.s8 %v5169
  %v5171 = vlaneseq
  %v5172 = vshrl.u32 %v5171, 7
  %v5173 = vsub.s32 %v5170, %v5172
  %v5174 = vrot.slane %v5166, %v5173
  %v5176 = vunpack.c.l.s4 1966171168
  %v5177 = vunpack.c.0.s8 %v5176
  %v5178 = vlaneseq
  %v5179 = vshrl.u32 %v5178, 7
  %v5180 = vsub.s32 %v5177, %v5179
  %v5181 = vrot.slane %v5167, %v5180
  %v5182 = vcombine.low %v5174, %v5181
  %v5183 = vcombine.low %v3104, %v3108
  %v5184 = vcombine.low %v3112, %v3116
  %v5185 = vcombine.low %v3120, %v3124
  %v5186 = vcombine.low %v3128, %v3132
  %v5188 = vunpack.c.l.s4 1966171168
  %v5189 = vunpack.c.0.s8 %v5188
  %v5190 = vlaneseq
  %v5191 = vshrl.u32 %v5190, 7
  %v5192 = vsub.s32 %v5189, %v5191
  %v5193 = vrot.slane %v5183, %v5192
  %v5195 = vunpack.c.l.s4 1966171168
  %v5196 = vunpack.c.0.s8 %v5195
  %v5197 = vlaneseq
  %v5198 = vshrl.u32 %v5197, 7
  %v5199 = vsub.s32 %v5196, %v5198
  %v5200 = vrot.slane %v5184, %v5199
  %v5202 = vunpack.c.l.s4 1966171168
  %v5203 = vunpack.c.0.s8 %v5202
  %v5204 = vlaneseq
  %v5205 = vshrl.u32 %v5204, 7
  %v5206 = vsub.s32 %v5203, %v5205
  %v5207 = vrot.slane %v5185, %v5206
  %v5209 = vunpack.c.l.s4 1966171168
  %v5210 = vunpack.c.0.s8 %v5209
  %v5211 = vlaneseq
  %v5212 = vshrl.u32 %v5211, 7
  %v5213 = vsub.s32 %v5210, %v5212
  %v5214 = vrot.slane %v5186, %v5213
  %v5215 = vcombine.low %v5193, %v5200
  %v5216 = vcombine.low %v5207, %v5214
  %v5218 = vunpack.c.l.s4 1966171168
  %v5219 = vunpack.c.0.s8 %v5218
  %v5220 = vlaneseq
  %v5221 = vshrl.u32 %v5220, 7
  %v5222 = vsub.s32 %v5219, %v5221
  %v5223 = vrot.slane %v5215, %v5222
  %v5225 = vunpack.c.l.s4 1966171168
  %v5226 = vunpack.c.0.s8 %v5225
  %v5227 = vlaneseq
  %v5228 = vshrl.u32 %v5227, 7
  %v5229 = vsub.s32 %v5226, %v5228
  %v5230 = vrot.slane %v5216, %v5229
  %v5231 = vcombine.low %v5223, %v5230
  %v5232 = vcombine.low %v3136, %v3140
  %v5233 = vcombine.low %v3144, %v3148
  %v5234 = vcombine.low %v3152, %v3156
  %v5235 = vcombine.low %v3160, %v3164
  %v5237 = vunpack.c.l.s4 1966171168
  %v5238 = vunpack.c.0.s8 %v5237
  %v5239 = vlaneseq
  %v5240 = vshrl.u32 %v5239, 7
  %v5241 = vsub.s32 %v5238, %v5240
  %v5242 = vrot.slane %v5232, %v5241
  %v5244 = vunpack.c.l.s4 1966171168
  %v5245 = vunpack.c.0.s8 %v5244
  %v5246 = vlaneseq
  %v5247 = vshrl.u32 %v5246, 7
  %v5248 = vsub.s32 %v5245, %v5247
  %v5249 = vrot.slane %v5233, %v5248
  %v5251 = vunpack.c.l.s4 1966171168
  %v5252 = vunpack.c.0.s8 %v5251
  %v5253 = vlaneseq
  %v5254 = vshrl.u32 %v5253, 7
  %v5255 = vsub.s32 %v5252, %v5254
  %v5256 = vrot.slane %v5234, %v5255
  %v5258 = vunpack.c.l.s4 1966171168
  %v5259 = vunpack.c.0.s8 %v5258
  %v5260 = vlaneseq
  %v5261 = vshrl.u32 %v5260, 7
  %v5262 = vsub.s32 %v5259, %v5261
  %v5263 = vrot.slane %v5235, %v5262
  %v5264 = vcombine.low %v5242, %v5249
  %v5265 = vcombine.low %v5256, %v5263
  %v5267 = vunpack.c.l.s4 1966171168
  %v5268 = vunpack.c.0.s8 %v5267
  %v5269 = vlaneseq
  %v5270 = vshrl.u32 %v5269, 7
  %v5271 = vsub.s32 %v5268, %v5270
  %v5272 = vrot.slane %v5264, %v5271
  %v5274 = vunpack.c.l.s4 1966171168
  %v5275 = vunpack.c.0.s8 %v5274
  %v5276 = vlaneseq
  %v5277 = vshrl.u32 %v5276, 7
  %v5278 = vsub.s32 %v5275, %v5277
  %v5279 = vrot.slane %v5265, %v5278
  %v5280 = vcombine.low %v5272, %v5279
  %v5281 = vcombine.low %v3168, %v3172
  %v5282 = vcombine.low %v3176, %v3180
  %v5283 = vcombine.low %v3184, %v3188
  %v5284 = vcombine.low %v3192, %v3196
  %v5286 = vunpack.c.l.s4 1966171168
  %v5287 = vunpack.c.0.s8 %v5286
  %v5288 = vlaneseq
  %v5289 = vshrl.u32 %v5288, 7
  %v5290 = vsub.s32 %v5287, %v5289
  %v5291 = vrot.slane %v5281, %v5290
  %v5293 = vunpack.c.l.s4 1966171168
  %v5294 = vunpack.c.0.s8 %v5293
  %v5295 = vlaneseq
  %v5296 = vshrl.u32 %v5295, 7
  %v5297 = vsub.s32 %v5294, %v5296
  %v5298 = vrot.slane %v5282, %v5297
  %v5300 = vunpack.c.l.s4 1966171168
  %v5301 = vunpack.c.0.s8 %v5300
  %v5302 = vlaneseq
  %v5303 = vshrl.u32 %v5302, 7
  %v5304 = vsub.s32 %v5301, %v5303
  %v5305 = vrot.slane %v5283, %v5304
  %v5307 = vunpack.c.l.s4 1966171168
  %v5308 = vunpack.c.0.s8 %v5307
  %v5309 = vlaneseq
  %v5310 = vshrl.u32 %v5309, 7
  %v5311 = vsub.s32 %v5308, %v5310
  %v5312 = vrot.slane %v5284, %v5311
  %v5313 = vcombine.low %v5291, %v5298
  %v5314 = vcombine.low %v5305, %v5312
  %v5316 = vunpack.c.l.s4 1966171168
  %v5317 = vunpack.c.0.s8 %v5316
  %v5318 = vlaneseq
  %v5319 = vshrl.u32 %v5318, 7
  %v5320 = vsub.s32 %v5317, %v5319
  %v5321 = vrot.slane %v5313, %v5320
  %v5323 = vunpack.c.l.s4 1966171168
  %v5324 = vunpack.c.0.s8 %v5323
  %v5325 = vlaneseq
  %v5326 = vshrl.u32 %v5325, 7
  %v5327 = vsub.s32 %v5324, %v5326
  %v5328 = vrot.slane %v5314, %v5327
  %v5329 = vcombine.low %v5321, %v5328
  %v5330 = vcombine.low %v3200, %v3204
  %v5331 = vcombine.low %v3208, %v3212
  %v5332 = vcombine.low %v3216, %v3220
  %v5333 = vcombine.low %v3224, %v3228
  %v5335 = vunpack.c.l.s4 1966171168
  %v5336 = vunpack.c.0.s8 %v5335
  %v5337 = vlaneseq
  %v5338 = vshrl.u32 %v5337, 7
  %v5339 = vsub.s32 %v5336, %v5338
  %v5340 = vrot.slane %v5330, %v5339
  %v5342 = vunpack.c.l.s4 1966171168
  %v5343 = vunpack.c.0.s8 %v5342
  %v5344 = vlaneseq
  %v5345 = vshrl.u32 %v5344, 7
  %v5346 = vsub.s32 %v5343, %v5345
  %v5347 = vrot.slane %v5331, %v5346
  %v5349 = vunpack.c.l.s4 1966171168
  %v5350 = vunpack.c.0.s8 %v5349
  %v5351 = vlaneseq
  %v5352 = vshrl.u32 %v5351, 7
  %v5353 = vsub.s32 %v5350, %v5352
  %v5354 = vrot.slane %v5332, %v5353
  %v5356 = vunpack.c.l.s4 1966171168
  %v5357 = vunpack.c.0.s8 %v5356
  %v5358 = vlaneseq
  %v5359 = vshrl.u32 %v5358, 7
  %v5360 = vsub.s32 %v5357, %v5359
  %v5361 = vrot.slane %v5333, %v5360
  %v5362 = vcombine.low %v5340, %v5347
  %v5363 = vcombine.low %v5354, %v5361
  %v5365 = vunpack.c.l.s4 1966171168
  %v5366 = vunpack.c.0.s8 %v5365
  %v5367 = vlaneseq
  %v5368 = vshrl.u32 %v5367, 7
  %v5369 = vsub.s32 %v5366, %v5368
  %v5370 = vrot.slane %v5362, %v5369
  %v5372 = vunpack.c.l.s4 1966171168
  %v5373 = vunpack.c.0.s8 %v5372
  %v5374 = vlaneseq
  %v5375 = vshrl.u32 %v5374, 7
  %v5376 = vsub.s32 %v5373, %v5375
  %v5377 = vrot.slane %v5363, %v5376
  %v5378 = vcombine.low %v5370, %v5377
  %v5379 = vcombine.low %v3232, %v3236
  %v5380 = vcombine.low %v3240, %v3244
  %v5381 = vcombine.low %v3248, %v3252
  %v5382 = vcombine.low %v3256, %v3260
  %v5384 = vunpack.c.l.s4 1966171168
  %v5385 = vunpack.c.0.s8 %v5384
  %v5386 = vlaneseq
  %v5387 = vshrl.u32 %v5386, 7
  %v5388 = vsub.s32 %v5385, %v5387
  %v5389 = vrot.slane %v5379, %v5388
  %v5391 = vunpack.c.l.s4 1966171168
  %v5392 = vunpack.c.0.s8 %v5391
  %v5393 = vlaneseq
  %v5394 = vshrl.u32 %v5393, 7
  %v5395 = vsub.s32 %v5392, %v5394
  %v5396 = vrot.slane %v5380, %v5395
  %v5398 = vunpack.c.l.s4 1966171168
  %v5399 = vunpack.c.0.s8 %v5398
  %v5400 = vlaneseq
  %v5401 = vshrl.u32 %v5400, 7
  %v5402 = vsub.s32 %v5399, %v5401
  %v5403 = vrot.slane %v5381, %v5402
  %v5405 = vunpack.c.l.s4 1966171168
  %v5406 = vunpack.c.0.s8 %v5405
  %v5407 = vlaneseq
  %v5408 = vshrl.u32 %v5407, 7
  %v5409 = vsub.s32 %v5406, %v5408
  %v5410 = vrot.slane %v5382, %v5409
  %v5411 = vcombine.low %v5389, %v5396
  %v5412 = vcombine.low %v5403, %v5410
  %v5414 = vunpack.c.l.s4 1966171168
  %v5415 = vunpack.c.0.s8 %v5414
  %v5416 = vlaneseq
  %v5417 = vshrl.u32 %v5416, 7
  %v5418 = vsub.s32 %v5415, %v5417
  %v5419 = vrot.slane %v5411, %v5418
  %v5421 = vunpack.c.l.s4 1966171168
  %v5422 = vunpack.c.0.s8 %v5421
  %v5423 = vlaneseq
  %v5424 = vshrl.u32 %v5423, 7
  %v5425 = vsub.s32 %v5422, %v5424
  %v5426 = vrot.slane %v5412, %v5425
  %v5427 = vcombine.low %v5419, %v5426
  %v5428 = vcombine.low %v3264, %v3268
  %v5429 = vcombine.low %v3272, %v3276
  %v5430 = vcombine.low %v3280, %v3284
  %v5431 = vcombine.low %v3288, %v3292
  %v5433 = vunpack.c.l.s4 1966171168
  %v5434 = vunpack.c.0.s8 %v5433
  %v5435 = vlaneseq
  %v5436 = vshrl.u32 %v5435, 7
  %v5437 = vsub.s32 %v5434, %v5436
  %v5438 = vrot.slane %v5428, %v5437
  %v5440 = vunpack.c.l.s4 1966171168
  %v5441 = vunpack.c.0.s8 %v5440
  %v5442 = vlaneseq
  %v5443 = vshrl.u32 %v5442, 7
  %v5444 = vsub.s32 %v5441, %v5443
  %v5445 = vrot.slane %v5429, %v5444
  %v5447 = vunpack.c.l.s4 1966171168
  %v5448 = vunpack.c.0.s8 %v5447
  %v5449 = vlaneseq
  %v5450 = vshrl.u32 %v5449, 7
  %v5451 = vsub.s32 %v5448, %v5450
  %v5452 = vrot.slane %v5430, %v5451
  %v5454 = vunpack.c.l.s4 1966171168
  %v5455 = vunpack.c.0.s8 %v5454
  %v5456 = vlaneseq
  %v5457 = vshrl.u32 %v5456, 7
  %v5458 = vsub.s32 %v5455, %v5457
  %v5459 = vrot.slane %v5431, %v5458
  %v5460 = vcombine.low %v5438, %v5445
  %v5461 = vcombine.low %v5452, %v5459
  %v5463 = vunpack.c.l.s4 1966171168
  %v5464 = vunpack.c.0.s8 %v5463
  %v5465 = vlaneseq
  %v5466 = vshrl.u32 %v5465, 7
  %v5467 = vsub.s32 %v5464, %v5466
  %v5468 = vrot.slane %v5460, %v5467
  %v5470 = vunpack.c.l.s4 1966171168
  %v5471 = vunpack.c.0.s8 %v5470
  %v5472 = vlaneseq
  %v5473 = vshrl.u32 %v5472, 7
  %v5474 = vsub.s32 %v5471, %v5473
  %v5475 = vrot.slane %v5461, %v5474
  %v5476 = vcombine.low %v5468, %v5475
  %v5477 = vcombine.low %v3296, %v3300
  %v5478 = vcombine.low %v3304, %v3308
  %v5479 = vcombine.low %v3312, %v3316
  %v5480 = vcombine.low %v3320, %v3324
  %v5482 = vunpack.c.l.s4 1966171168
  %v5483 = vunpack.c.0.s8 %v5482
  %v5484 = vlaneseq
  %v5485 = vshrl.u32 %v5484, 7
  %v5486 = vsub.s32 %v5483, %v5485
  %v5487 = vrot.slane %v5477, %v5486
  %v5489 = vunpack.c.l.s4 1966171168
  %v5490 = vunpack.c.0.s8 %v5489
  %v5491 = vlaneseq
  %v5492 = vshrl.u32 %v5491, 7
  %v5493 = vsub.s32 %v5490, %v5492
  %v5494 = vrot.slane %v5478, %v5493
  %v5496 = vunpack.c.l.s4 1966171168
  %v5497 = vunpack.c.0.s8 %v5496
  %v5498 = vlaneseq
  %v5499 = vshrl.u32 %v5498, 7
  %v5500 = vsub.s32 %v5497, %v5499
  %v5501 = vrot.slane %v5479, %v5500
  %v5503 = vunpack.c.l.s4 1966171168
  %v5504 = vunpack.c.0.s8 %v5503
  %v5505 = vlaneseq
  %v5506 = vshrl.u32 %v5505, 7
  %v5507 = vsub.s32 %v5504, %v5506
  %v5508 = vrot.slane %v5480, %v5507
  %v5509 = vcombine.low %v5487, %v5494
  %v5510 = vcombine.low %v5501, %v5508
  %v5512 = vunpack.c.l.s4 1966171168
  %v5513 = vunpack.c.0.s8 %v5512
  %v5514 = vlaneseq
  %v5515 = vshrl.u32 %v5514, 7
  %v5516 = vsub.s32 %v5513, %v5515
  %v5517 = vrot.slane %v5509, %v5516
  %v5519 = vunpack.c.l.s4 1966171168
  %v5520 = vunpack.c.0.s8 %v5519
  %v5521 = vlaneseq
  %v5522 = vshrl.u32 %v5521, 7
  %v5523 = vsub.s32 %v5520, %v5522
  %v5524 = vrot.slane %v5510, %v5523
  %v5525 = vcombine.low %v5517, %v5524
  %v5526 = vcombine.low %v3328, %v3332
  %v5527 = vcombine.low %v3336, %v3340
  %v5528 = vcombine.low %v3344, %v3348
  %v5529 = vcombine.low %v3352, %v3356
  %v5531 = vunpack.c.l.s4 1966171168
  %v5532 = vunpack.c.0.s8 %v5531
  %v5533 = vlaneseq
  %v5534 = vshrl.u32 %v5533, 7
  %v5535 = vsub.s32 %v5532, %v5534
  %v5536 = vrot.slane %v5526, %v5535
  %v5538 = vunpack.c.l.s4 1966171168
  %v5539 = vunpack.c.0.s8 %v5538
  %v5540 = vlaneseq
  %v5541 = vshrl.u32 %v5540, 7
  %v5542 = vsub.s32 %v5539, %v5541
  %v5543 = vrot.slane %v5527, %v5542
  %v5545 = vunpack.c.l.s4 1966171168
  %v5546 = vunpack.c.0.s8 %v5545
  %v5547 = vlaneseq
  %v5548 = vshrl.u32 %v5547, 7
  %v5549 = vsub.s32 %v5546, %v5548
  %v5550 = vrot.slane %v5528, %v5549
  %v5552 = vunpack.c.l.s4 1966171168
  %v5553 = vunpack.c.0.s8 %v5552
  %v5554 = vlaneseq
  %v5555 = vshrl.u32 %v5554, 7
  %v5556 = vsub.s32 %v5553, %v5555
  %v5557 = vrot.slane %v5529, %v5556
  %v5558 = vcombine.low %v5536, %v5543
  %v5559 = vcombine.low %v5550, %v5557
  %v5561 = vunpack.c.l.s4 1966171168
  %v5562 = vunpack.c.0.s8 %v5561
  %v5563 = vlaneseq
  %v5564 = vshrl.u32 %v5563, 7
  %v5565 = vsub.s32 %v5562, %v5564
  %v5566 = vrot.slane %v5558, %v5565
  %v5568 = vunpack.c.l.s4 1966171168
  %v5569 = vunpack.c.0.s8 %v5568
  %v5570 = vlaneseq
  %v5571 = vshrl.u32 %v5570, 7
  %v5572 = vsub.s32 %v5569, %v5571
  %v5573 = vrot.slane %v5559, %v5572
  %v5574 = vcombine.low %v5566, %v5573
  %v5575 = vcombine.low %v3360, %v3364
  %v5576 = vcombine.low %v3368, %v3372
  %v5577 = vcombine.low %v3376, %v3380
  %v5578 = vcombine.low %v3384, %v3388
  %v5580 = vunpack.c.l.s4 1966171168
  %v5581 = vunpack.c.0.s8 %v5580
  %v5582 = vlaneseq
  %v5583 = vshrl.u32 %v5582, 7
  %v5584 = vsub.s32 %v5581, %v5583
  %v5585 = vrot.slane %v5575, %v5584
  %v5587 = vunpack.c.l.s4 1966171168
  %v5588 = vunpack.c.0.s8 %v5587
  %v5589 = vlaneseq
  %v5590 = vshrl.u32 %v5589, 7
  %v5591 = vsub.s32 %v5588, %v5590
  %v5592 = vrot.slane %v5576, %v5591
  %v5594 = vunpack.c.l.s4 1966171168
  %v5595 = vunpack.c.0.s8 %v5594
  %v5596 = vlaneseq
  %v5597 = vshrl.u32 %v5596, 7
  %v5598 = vsub.s32 %v5595, %v5597
  %v5599 = vrot.slane %v5577, %v5598
  %v5601 = vunpack.c.l.s4 1966171168
  %v5602 = vunpack.c.0.s8 %v5601
  %v5603 = vlaneseq
  %v5604 = vshrl.u32 %v5603, 7
  %v5605 = vsub.s32 %v5602, %v5604
  %v5606 = vrot.slane %v5578, %v5605
  %v5607 = vcombine.low %v5585, %v5592
  %v5608 = vcombine.low %v5599, %v5606
  %v5610 = vunpack.c.l.s4 1966171168
  %v5611 = vunpack.c.0.s8 %v5610
  %v5612 = vlaneseq
  %v5613 = vshrl.u32 %v5612, 7
  %v5614 = vsub.s32 %v5611, %v5613
  %v5615 = vrot.slane %v5607, %v5614
  %v5617 = vunpack.c.l.s4 1966171168
  %v5618 = vunpack.c.0.s8 %v5617
  %v5619 = vlaneseq
  %v5620 = vshrl.u32 %v5619, 7
  %v5621 = vsub.s32 %v5618, %v5620
  %v5622 = vrot.slane %v5608, %v5621
  %v5623 = vcombine.low %v5615, %v5622
  %v5624 = vcombine.low %v3392, %v3396
  %v5625 = vcombine.low %v3400, %v3404
  %v5626 = vcombine.low %v3408, %v3412
  %v5627 = vcombine.low %v3416, %v3420
  %v5629 = vunpack.c.l.s4 1966171168
  %v5630 = vunpack.c.0.s8 %v5629
  %v5631 = vlaneseq
  %v5632 = vshrl.u32 %v5631, 7
  %v5633 = vsub.s32 %v5630, %v5632
  %v5634 = vrot.slane %v5624, %v5633
  %v5636 = vunpack.c.l.s4 1966171168
  %v5637 = vunpack.c.0.s8 %v5636
  %v5638 = vlaneseq
  %v5639 = vshrl.u32 %v5638, 7
  %v5640 = vsub.s32 %v5637, %v5639
  %v5641 = vrot.slane %v5625, %v5640
  %v5643 = vunpack.c.l.s4 1966171168
  %v5644 = vunpack.c.0.s8 %v5643
  %v5645 = vlaneseq
  %v5646 = vshrl.u32 %v5645, 7
  %v5647 = vsub.s32 %v5644, %v5646
  %v5648 = vrot.slane %v5626, %v5647
  %v5650 = vunpack.c.l.s4 1966171168
  %v5651 = vunpack.c.0.s8 %v5650
  %v5652 = vlaneseq
  %v5653 = vshrl.u32 %v5652, 7
  %v5654 = vsub.s32 %v5651, %v5653
  %v5655 = vrot.slane %v5627, %v5654
  %v5656 = vcombine.low %v5634, %v5641
  %v5657 = vcombine.low %v5648, %v5655
  %v5659 = vunpack.c.l.s4 1966171168
  %v5660 = vunpack.c.0.s8 %v5659
  %v5661 = vlaneseq
  %v5662 = vshrl.u32 %v5661, 7
  %v5663 = vsub.s32 %v5660, %v5662
  %v5664 = vrot.slane %v5656, %v5663
  %v5666 = vunpack.c.l.s4 1966171168
  %v5667 = vunpack.c.0.s8 %v5666
  %v5668 = vlaneseq
  %v5669 = vshrl.u32 %v5668, 7
  %v5670 = vsub.s32 %v5667, %v5669
  %v5671 = vrot.slane %v5657, %v5670
  %v5672 = vcombine.low %v5664, %v5671
  %v5673 = vcombine.low %v3424, %v3428
  %v5674 = vcombine.low %v3432, %v3436
  %v5675 = vcombine.low %v3440, %v3444
  %v5676 = vcombine.low %v3448, %v3452
  %v5678 = vunpack.c.l.s4 1966171168
  %v5679 = vunpack.c.0.s8 %v5678
  %v5680 = vlaneseq
  %v5681 = vshrl.u32 %v5680, 7
  %v5682 = vsub.s32 %v5679, %v5681
  %v5683 = vrot.slane %v5673, %v5682
  %v5685 = vunpack.c.l.s4 1966171168
  %v5686 = vunpack.c.0.s8 %v5685
  %v5687 = vlaneseq
  %v5688 = vshrl.u32 %v5687, 7
  %v5689 = vsub.s32 %v5686, %v5688
  %v5690 = vrot.slane %v5674, %v5689
  %v5692 = vunpack.c.l.s4 1966171168
  %v5693 = vunpack.c.0.s8 %v5692
  %v5694 = vlaneseq
  %v5695 = vshrl.u32 %v5694, 7
  %v5696 = vsub.s32 %v5693, %v5695
  %v5697 = vrot.slane %v5675, %v5696
  %v5699 = vunpack.c.l.s4 1966171168
  %v5700 = vunpack.c.0.s8 %v5699
  %v5701 = vlaneseq
  %v5702 = vshrl.u32 %v5701, 7
  %v5703 = vsub.s32 %v5700, %v5702
  %v5704 = vrot.slane %v5676, %v5703
  %v5705 = vcombine.low %v5683, %v5690
  %v5706 = vcombine.low %v5697, %v5704
  %v5708 = vunpack.c.l.s4 1966171168
  %v5709 = vunpack.c.0.s8 %v5708
  %v5710 = vlaneseq
  %v5711 = vshrl.u32 %v5710, 7
  %v5712 = vsub.s32 %v5709, %v5711
  %v5713 = vrot.slane %v5705, %v5712
  %v5715 = vunpack.c.l.s4 1966171168
  %v5716 = vunpack.c.0.s8 %v5715
  %v5717 = vlaneseq
  %v5718 = vshrl.u32 %v5717, 7
  %v5719 = vsub.s32 %v5716, %v5718
  %v5720 = vrot.slane %v5706, %v5719
  %v5721 = vcombine.low %v5713, %v5720
  %v5722 = vcombine.low %v3456, %v3460
  %v5723 = vcombine.low %v3464, %v3468
  %v5724 = vcombine.low %v3472, %v3476
  %v5725 = vcombine.low %v3480, %v3484
  %v5727 = vunpack.c.l.s4 1966171168
  %v5728 = vunpack.c.0.s8 %v5727
  %v5729 = vlaneseq
  %v5730 = vshrl.u32 %v5729, 7
  %v5731 = vsub.s32 %v5728, %v5730
  %v5732 = vrot.slane %v5722, %v5731
  %v5734 = vunpack.c.l.s4 1966171168
  %v5735 = vunpack.c.0.s8 %v5734
  %v5736 = vlaneseq
  %v5737 = vshrl.u32 %v5736, 7
  %v5738 = vsub.s32 %v5735, %v5737
  %v5739 = vrot.slane %v5723, %v5738
  %v5741 = vunpack.c.l.s4 1966171168
  %v5742 = vunpack.c.0.s8 %v5741
  %v5743 = vlaneseq
  %v5744 = vshrl.u32 %v5743, 7
  %v5745 = vsub.s32 %v5742, %v5744
  %v5746 = vrot.slane %v5724, %v5745
  %v5748 = vunpack.c.l.s4 1966171168
  %v5749 = vunpack.c.0.s8 %v5748
  %v5750 = vlaneseq
  %v5751 = vshrl.u32 %v5750, 7
  %v5752 = vsub.s32 %v5749, %v5751
  %v5753 = vrot.slane %v5725, %v5752
  %v5754 = vcombine.low %v5732, %v5739
  %v5755 = vcombine.low %v5746, %v5753
  %v5757 = vunpack.c.l.s4 1966171168
  %v5758 = vunpack.c.0.s8 %v5757
  %v5759 = vlaneseq
  %v5760 = vshrl.u32 %v5759, 7
  %v5761 = vsub.s32 %v5758, %v5760
  %v5762 = vrot.slane %v5754, %v5761
  %v5764 = vunpack.c.l.s4 1966171168
  %v5765 = vunpack.c.0.s8 %v5764
  %v5766 = vlaneseq
  %v5767 = vshrl.u32 %v5766, 7
  %v5768 = vsub.s32 %v5765, %v5767
  %v5769 = vrot.slane %v5755, %v5768
  %v5770 = vcombine.low %v5762, %v5769
  %v5771 = vcombine.low %v3488, %v3492
  %v5772 = vcombine.low %v3496, %v3500
  %v5773 = vcombine.low %v3504, %v3508
  %v5774 = vcombine.low %v3512, %v3516
  %v5776 = vunpack.c.l.s4 1966171168
  %v5777 = vunpack.c.0.s8 %v5776
  %v5778 = vlaneseq
  %v5779 = vshrl.u32 %v5778, 7
  %v5780 = vsub.s32 %v5777, %v5779
  %v5781 = vrot.slane %v5771, %v5780
  %v5783 = vunpack.c.l.s4 1966171168
  %v5784 = vunpack.c.0.s8 %v5783
  %v5785 = vlaneseq
  %v5786 = vshrl.u32 %v5785, 7
  %v5787 = vsub.s32 %v5784, %v5786
  %v5788 = vrot.slane %v5772, %v5787
  %v5790 = vunpack.c.l.s4 1966171168
  %v5791 = vunpack.c.0.s8 %v5790
  %v5792 = vlaneseq
  %v5793 = vshrl.u32 %v5792, 7
  %v5794 = vsub.s32 %v5791, %v5793
  %v5795 = vrot.slane %v5773, %v5794
  %v5797 = vunpack.c.l.s4 1966171168
  %v5798 = vunpack.c.0.s8 %v5797
  %v5799 = vlaneseq
  %v5800 = vshrl.u32 %v5799, 7
  %v5801 = vsub.s32 %v5798, %v5800
  %v5802 = vrot.slane %v5774, %v5801
  %v5803 = vcombine.low %v5781, %v5788
  %v5804 = vcombine.low %v5795, %v5802
  %v5806 = vunpack.c.l.s4 1966171168
  %v5807 = vunpack.c.0.s8 %v5806
  %v5808 = vlaneseq
  %v5809 = vshrl.u32 %v5808, 7
  %v5810 = vsub.s32 %v5807, %v5809
  %v5811 = vrot.slane %v5803, %v5810
  %v5813 = vunpack.c.l.s4 1966171168
  %v5814 = vunpack.c.0.s8 %v5813
  %v5815 = vlaneseq
  %v5816 = vshrl.u32 %v5815, 7
  %v5817 = vsub.s32 %v5814, %v5816
  %v5818 = vrot.slane %v5804, %v5817
  %v5819 = vcombine.low %v5811, %v5818
  %v5820 = vcombine.low %v3520, %v3524
  %v5821 = vcombine.low %v3528, %v3532
  %v5822 = vcombine.low %v3536, %v3540
  %v5823 = vcombine.low %v3544, %v3548
  %v5825 = vunpack.c.l.s4 1966171168
  %v5826 = vunpack.c.0.s8 %v5825
  %v5827 = vlaneseq
  %v5828 = vshrl.u32 %v5827, 7
  %v5829 = vsub.s32 %v5826, %v5828
  %v5830 = vrot.slane %v5820, %v5829
  %v5832 = vunpack.c.l.s4 1966171168
  %v5833 = vunpack.c.0.s8 %v5832
  %v5834 = vlaneseq
  %v5835 = vshrl.u32 %v5834, 7
  %v5836 = vsub.s32 %v5833, %v5835
  %v5837 = vrot.slane %v5821, %v5836
  %v5839 = vunpack.c.l.s4 1966171168
  %v5840 = vunpack.c.0.s8 %v5839
  %v5841 = vlaneseq
  %v5842 = vshrl.u32 %v5841, 7
  %v5843 = vsub.s32 %v5840, %v5842
  %v5844 = vrot.slane %v5822, %v5843
  %v5846 = vunpack.c.l.s4 1966171168
  %v5847 = vunpack.c.0.s8 %v5846
  %v5848 = vlaneseq
  %v5849 = vshrl.u32 %v5848, 7
  %v5850 = vsub.s32 %v5847, %v5849
  %v5851 = vrot.slane %v5823, %v5850
  %v5852 = vcombine.low %v5830, %v5837
  %v5853 = vcombine.low %v5844, %v5851
  %v5855 = vunpack.c.l.s4 1966171168
  %v5856 = vunpack.c.0.s8 %v5855
  %v5857 = vlaneseq
  %v5858 = vshrl.u32 %v5857, 7
  %v5859 = vsub.s32 %v5856, %v5858
  %v5860 = vrot.slane %v5852, %v5859
  %v5862 = vunpack.c.l.s4 1966171168
  %v5863 = vunpack.c.0.s8 %v5862
  %v5864 = vlaneseq
  %v5865 = vshrl.u32 %v5864, 7
  %v5866 = vsub.s32 %v5863, %v5865
  %v5867 = vrot.slane %v5853, %v5866
  %v5868 = vcombine.low %v5860, %v5867
  %v5869 = vcombine.low %v3552, %v3556
  %v5870 = vcombine.low %v3560, %v3564
  %v5871 = vcombine.low %v3568, %v3572
  %v5872 = vcombine.low %v3576, %v3580
  %v5874 = vunpack.c.l.s4 1966171168
  %v5875 = vunpack.c.0.s8 %v5874
  %v5876 = vlaneseq
  %v5877 = vshrl.u32 %v5876, 7
  %v5878 = vsub.s32 %v5875, %v5877
  %v5879 = vrot.slane %v5869, %v5878
  %v5881 = vunpack.c.l.s4 1966171168
  %v5882 = vunpack.c.0.s8 %v5881
  %v5883 = vlaneseq
  %v5884 = vshrl.u32 %v5883, 7
  %v5885 = vsub.s32 %v5882, %v5884
  %v5886 = vrot.slane %v5870, %v5885
  %v5888 = vunpack.c.l.s4 1966171168
  %v5889 = vunpack.c.0.s8 %v5888
  %v5890 = vlaneseq
  %v5891 = vshrl.u32 %v5890, 7
  %v5892 = vsub.s32 %v5889, %v5891
  %v5893 = vrot.slane %v5871, %v5892
  %v5895 = vunpack.c.l.s4 1966171168
  %v5896 = vunpack.c.0.s8 %v5895
  %v5897 = vlaneseq
  %v5898 = vshrl.u32 %v5897, 7
  %v5899 = vsub.s32 %v5896, %v5898
  %v5900 = vrot.slane %v5872, %v5899
  %v5901 = vcombine.low %v5879, %v5886
  %v5902 = vcombine.low %v5893, %v5900
  %v5904 = vunpack.c.l.s4 1966171168
  %v5905 = vunpack.c.0.s8 %v5904
  %v5906 = vlaneseq
  %v5907 = vshrl.u32 %v5906, 7
  %v5908 = vsub.s32 %v5905, %v5907
  %v5909 = vrot.slane %v5901, %v5908
  %v5911 = vunpack.c.l.s4 1966171168
  %v5912 = vunpack.c.0.s8 %v5911
  %v5913 = vlaneseq
  %v5914 = vshrl.u32 %v5913, 7
  %v5915 = vsub.s32 %v5912, %v5914
  %v5916 = vrot.slane %v5902, %v5915
  %v5917 = vcombine.low %v5909, %v5916
  %v5918 = vcombine.low %v3584, %v3588
  %v5919 = vcombine.low %v3592, %v3596
  %v5920 = vcombine.low %v3600, %v3604
  %v5921 = vcombine.low %v3608, %v3612
  %v5923 = vunpack.c.l.s4 1966171168
  %v5924 = vunpack.c.0.s8 %v5923
  %v5925 = vlaneseq
  %v5926 = vshrl.u32 %v5925, 7
  %v5927 = vsub.s32 %v5924, %v5926
  %v5928 = vrot.slane %v5918, %v5927
  %v5930 = vunpack.c.l.s4 1966171168
  %v5931 = vunpack.c.0.s8 %v5930
  %v5932 = vlaneseq
  %v5933 = vshrl.u32 %v5932, 7
  %v5934 = vsub.s32 %v5931, %v5933
  %v5935 = vrot.slane %v5919, %v5934
  %v5937 = vunpack.c.l.s4 1966171168
  %v5938 = vunpack.c.0.s8 %v5937
  %v5939 = vlaneseq
  %v5940 = vshrl.u32 %v5939, 7
  %v5941 = vsub.s32 %v5938, %v5940
  %v5942 = vrot.slane %v5920, %v5941
  %v5944 = vunpack.c.l.s4 1966171168
  %v5945 = vunpack.c.0.s8 %v5944
  %v5946 = vlaneseq
  %v5947 = vshrl.u32 %v5946, 7
  %v5948 = vsub.s32 %v5945, %v5947
  %v5949 = vrot.slane %v5921, %v5948
  %v5950 = vcombine.low %v5928, %v5935
  %v5951 = vcombine.low %v5942, %v5949
  %v5953 = vunpack.c.l.s4 1966171168
  %v5954 = vunpack.c.0.s8 %v5953
  %v5955 = vlaneseq
  %v5956 = vshrl.u32 %v5955, 7
  %v5957 = vsub.s32 %v5954, %v5956
  %v5958 = vrot.slane %v5950, %v5957
  %v5960 = vunpack.c.l.s4 1966171168
  %v5961 = vunpack.c.0.s8 %v5960
  %v5962 = vlaneseq
  %v5963 = vshrl.u32 %v5962, 7
  %v5964 = vsub.s32 %v5961, %v5963
  %v5965 = vrot.slane %v5951, %v5964
  %v5966 = vcombine.low %v5958, %v5965
  %v5967 = vcombine.low %v3616, %v3620
  %v5968 = vcombine.low %v3624, %v3628
  %v5969 = vcombine.low %v3632, %v3636
  %v5970 = vcombine.low %v3640, %v3644
  %v5972 = vunpack.c.l.s4 1966171168
  %v5973 = vunpack.c.0.s8 %v5972
  %v5974 = vlaneseq
  %v5975 = vshrl.u32 %v5974, 7
  %v5976 = vsub.s32 %v5973, %v5975
  %v5977 = vrot.slane %v5967, %v5976
  %v5979 = vunpack.c.l.s4 1966171168
  %v5980 = vunpack.c.0.s8 %v5979
  %v5981 = vlaneseq
  %v5982 = vshrl.u32 %v5981, 7
  %v5983 = vsub.s32 %v5980, %v5982
  %v5984 = vrot.slane %v5968, %v5983
  %v5986 = vunpack.c.l.s4 1966171168
  %v5987 = vunpack.c.0.s8 %v5986
  %v5988 = vlaneseq
  %v5989 = vshrl.u32 %v5988, 7
  %v5990 = vsub.s32 %v5987, %v5989
  %v5991 = vrot.slane %v5969, %v5990
  %v5993 = vunpack.c.l.s4 1966171168
  %v5994 = vunpack.c.0.s8 %v5993
  %v5995 = vlaneseq
  %v5996 = vshrl.u32 %v5995, 7
  %v5997 = vsub.s32 %v5994, %v5996
  %v5998 = vrot.slane %v5970, %v5997
  %v5999 = vcombine.low %v5977, %v5984
  %v6000 = vcombine.low %v5991, %v5998
  %v6002 = vunpack.c.l.s4 1966171168
  %v6003 = vunpack.c.0.s8 %v6002
  %v6004 = vlaneseq
  %v6005 = vshrl.u32 %v6004, 7
  %v6006 = vsub.s32 %v6003, %v6005
  %v6007 = vrot.slane %v5999, %v6006
  %v6009 = vunpack.c.l.s4 1966171168
  %v6010 = vunpack.c.0.s8 %v6009
  %v6011 = vlaneseq
  %v6012 = vshrl.u32 %v6011, 7
  %v6013 = vsub.s32 %v6010, %v6012
  %v6014 = vrot.slane %v6000, %v6013
  %v6015 = vcombine.low %v6007, %v6014
  %v6016 = vcombine.low %v3648, %v3652
  %v6017 = vcombine.low %v3656, %v3660
  %v6018 = vcombine.low %v3664, %v3668
  %v6019 = vcombine.low %v3672, %v3676
  %v6021 = vunpack.c.l.s4 1966171168
  %v6022 = vunpack.c.0.s8 %v6021
  %v6023 = vlaneseq
  %v6024 = vshrl.u32 %v6023, 7
  %v6025 = vsub.s32 %v6022, %v6024
  %v6026 = vrot.slane %v6016, %v6025
  %v6028 = vunpack.c.l.s4 1966171168
  %v6029 = vunpack.c.0.s8 %v6028
  %v6030 = vlaneseq
  %v6031 = vshrl.u32 %v6030, 7
  %v6032 = vsub.s32 %v6029, %v6031
  %v6033 = vrot.slane %v6017, %v6032
  %v6035 = vunpack.c.l.s4 1966171168
  %v6036 = vunpack.c.0.s8 %v6035
  %v6037 = vlaneseq
  %v6038 = vshrl.u32 %v6037, 7
  %v6039 = vsub.s32 %v6036, %v6038
  %v6040 = vrot.slane %v6018, %v6039
  %v6042 = vunpack.c.l.s4 1966171168
  %v6043 = vunpack.c.0.s8 %v6042
  %v6044 = vlaneseq
  %v6045 = vshrl.u32 %v6044, 7
  %v6046 = vsub.s32 %v6043, %v6045
  %v6047 = vrot.slane %v6019, %v6046
  %v6048 = vcombine.low %v6026, %v6033
  %v6049 = vcombine.low %v6040, %v6047
  %v6051 = vunpack.c.l.s4 1966171168
  %v6052 = vunpack.c.0.s8 %v6051
  %v6053 = vlaneseq
  %v6054 = vshrl.u32 %v6053, 7
  %v6055 = vsub.s32 %v6052, %v6054
  %v6056 = vrot.slane %v6048, %v6055
  %v6058 = vunpack.c.l.s4 1966171168
  %v6059 = vunpack.c.0.s8 %v6058
  %v6060 = vlaneseq
  %v6061 = vshrl.u32 %v6060, 7
  %v6062 = vsub.s32 %v6059, %v6061
  %v6063 = vrot.slane %v6049, %v6062
  %v6064 = vcombine.low %v6056, %v6063
  %v6065 = vcombine.low %v3680, %v3684
  %v6066 = vcombine.low %v3688, %v3692
  %v6067 = vcombine.low %v3696, %v3700
  %v6068 = vcombine.low %v3704, %v3708
  %v6070 = vunpack.c.l.s4 1966171168
  %v6071 = vunpack.c.0.s8 %v6070
  %v6072 = vlaneseq
  %v6073 = vshrl.u32 %v6072, 7
  %v6074 = vsub.s32 %v6071, %v6073
  %v6075 = vrot.slane %v6065, %v6074
  %v6077 = vunpack.c.l.s4 1966171168
  %v6078 = vunpack.c.0.s8 %v6077
  %v6079 = vlaneseq
  %v6080 = vshrl.u32 %v6079, 7
  %v6081 = vsub.s32 %v6078, %v6080
  %v6082 = vrot.slane %v6066, %v6081
  %v6084 = vunpack.c.l.s4 1966171168
  %v6085 = vunpack.c.0.s8 %v6084
  %v6086 = vlaneseq
  %v6087 = vshrl.u32 %v6086, 7
  %v6088 = vsub.s32 %v6085, %v6087
  %v6089 = vrot.slane %v6067, %v6088
  %v6091 = vunpack.c.l.s4 1966171168
  %v6092 = vunpack.c.0.s8 %v6091
  %v6093 = vlaneseq
  %v6094 = vshrl.u32 %v6093, 7
  %v6095 = vsub.s32 %v6092, %v6094
  %v6096 = vrot.slane %v6068, %v6095
  %v6097 = vcombine.low %v6075, %v6082
  %v6098 = vcombine.low %v6089, %v6096
  %v6100 = vunpack.c.l.s4 1966171168
  %v6101 = vunpack.c.0.s8 %v6100
  %v6102 = vlaneseq
  %v6103 = vshrl.u32 %v6102, 7
  %v6104 = vsub.s32 %v6101, %v6103
  %v6105 = vrot.slane %v6097, %v6104
  %v6107 = vunpack.c.l.s4 1966171168
  %v6108 = vunpack.c.0.s8 %v6107
  %v6109 = vlaneseq
  %v6110 = vshrl.u32 %v6109, 7
  %v6111 = vsub.s32 %v6108, %v6110
  %v6112 = vrot.slane %v6098, %v6111
  %v6113 = vcombine.low %v6105, %v6112
  %v6114 = vcombine.low %v3712, %v3716
  %v6115 = vcombine.low %v3720, %v3724
  %v6116 = vcombine.low %v3728, %v3732
  %v6117 = vcombine.low %v3736, %v3740
  %v6119 = vunpack.c.l.s4 1966171168
  %v6120 = vunpack.c.0.s8 %v6119
  %v6121 = vlaneseq
  %v6122 = vshrl.u32 %v6121, 7
  %v6123 = vsub.s32 %v6120, %v6122
  %v6124 = vrot.slane %v6114, %v6123
  %v6126 = vunpack.c.l.s4 1966171168
  %v6127 = vunpack.c.0.s8 %v6126
  %v6128 = vlaneseq
  %v6129 = vshrl.u32 %v6128, 7
  %v6130 = vsub.s32 %v6127, %v6129
  %v6131 = vrot.slane %v6115, %v6130
  %v6133 = vunpack.c.l.s4 1966171168
  %v6134 = vunpack.c.0.s8 %v6133
  %v6135 = vlaneseq
  %v6136 = vshrl.u32 %v6135, 7
  %v6137 = vsub.s32 %v6134, %v6136
  %v6138 = vrot.slane %v6116, %v6137
  %v6140 = vunpack.c.l.s4 1966171168
  %v6141 = vunpack.c.0.s8 %v6140
  %v6142 = vlaneseq
  %v6143 = vshrl.u32 %v6142, 7
  %v6144 = vsub.s32 %v6141, %v6143
  %v6145 = vrot.slane %v6117, %v6144
  %v6146 = vcombine.low %v6124, %v6131
  %v6147 = vcombine.low %v6138, %v6145
  %v6149 = vunpack.c.l.s4 1966171168
  %v6150 = vunpack.c.0.s8 %v6149
  %v6151 = vlaneseq
  %v6152 = vshrl.u32 %v6151, 7
  %v6153 = vsub.s32 %v6150, %v6152
  %v6154 = vrot.slane %v6146, %v6153
  %v6156 = vunpack.c.l.s4 1966171168
  %v6157 = vunpack.c.0.s8 %v6156
  %v6158 = vlaneseq
  %v6159 = vshrl.u32 %v6158, 7
  %v6160 = vsub.s32 %v6157, %v6159
  %v6161 = vrot.slane %v6147, %v6160
  %v6162 = vcombine.low %v6154, %v6161
  %v6163 = vcombine.low %v3744, %v3748
  %v6164 = vcombine.low %v3752, %v3756
  %v6165 = vcombine.low %v3760, %v3764
  %v6166 = vcombine.low %v3768, %v3772
  %v6168 = vunpack.c.l.s4 1966171168
  %v6169 = vunpack.c.0.s8 %v6168
  %v6170 = vlaneseq
  %v6171 = vshrl.u32 %v6170, 7
  %v6172 = vsub.s32 %v6169, %v6171
  %v6173 = vrot.slane %v6163, %v6172
  %v6175 = vunpack.c.l.s4 1966171168
  %v6176 = vunpack.c.0.s8 %v6175
  %v6177 = vlaneseq
  %v6178 = vshrl.u32 %v6177, 7
  %v6179 = vsub.s32 %v6176, %v6178
  %v6180 = vrot.slane %v6164, %v6179
  %v6182 = vunpack.c.l.s4 1966171168
  %v6183 = vunpack.c.0.s8 %v6182
  %v6184 = vlaneseq
  %v6185 = vshrl.u32 %v6184, 7
  %v6186 = vsub.s32 %v6183, %v6185
  %v6187 = vrot.slane %v6165, %v6186
  %v6189 = vunpack.c.l.s4 1966171168
  %v6190 = vunpack.c.0.s8 %v6189
  %v6191 = vlaneseq
  %v6192 = vshrl.u32 %v6191, 7
  %v6193 = vsub.s32 %v6190, %v6192
  %v6194 = vrot.slane %v6166, %v6193
  %v6195 = vcombine.low %v6173, %v6180
  %v6196 = vcombine.low %v6187, %v6194
  %v6198 = vunpack.c.l.s4 1966171168
  %v6199 = vunpack.c.0.s8 %v6198
  %v6200 = vlaneseq
  %v6201 = vshrl.u32 %v6200, 7
  %v6202 = vsub.s32 %v6199, %v6201
  %v6203 = vrot.slane %v6195, %v6202
  %v6205 = vunpack.c.l.s4 1966171168
  %v6206 = vunpack.c.0.s8 %v6205
  %v6207 = vlaneseq
  %v6208 = vshrl.u32 %v6207, 7
  %v6209 = vsub.s32 %v6206, %v6208
  %v6210 = vrot.slane %v6196, %v6209
  %v6211 = vcombine.low %v6203, %v6210
  %v6212 = vcombine.low %v3776, %v3780
  %v6213 = vcombine.low %v3784, %v3788
  %v6214 = vcombine.low %v3792, %v3796
  %v6215 = vcombine.low %v3800, %v3804
  %v6217 = vunpack.c.l.s4 1966171168
  %v6218 = vunpack.c.0.s8 %v6217
  %v6219 = vlaneseq
  %v6220 = vshrl.u32 %v6219, 7
  %v6221 = vsub.s32 %v6218, %v6220
  %v6222 = vrot.slane %v6212, %v6221
  %v6224 = vunpack.c.l.s4 1966171168
  %v6225 = vunpack.c.0.s8 %v6224
  %v6226 = vlaneseq
  %v6227 = vshrl.u32 %v6226, 7
  %v6228 = vsub.s32 %v6225, %v6227
  %v6229 = vrot.slane %v6213, %v6228
  %v6231 = vunpack.c.l.s4 1966171168
  %v6232 = vunpack.c.0.s8 %v6231
  %v6233 = vlaneseq
  %v6234 = vshrl.u32 %v6233, 7
  %v6235 = vsub.s32 %v6232, %v6234
  %v6236 = vrot.slane %v6214, %v6235
  %v6238 = vunpack.c.l.s4 1966171168
  %v6239 = vunpack.c.0.s8 %v6238
  %v6240 = vlaneseq
  %v6241 = vshrl.u32 %v6240, 7
  %v6242 = vsub.s32 %v6239, %v6241
  %v6243 = vrot.slane %v6215, %v6242
  %v6244 = vcombine.low %v6222, %v6229
  %v6245 = vcombine.low %v6236, %v6243
  %v6247 = vunpack.c.l.s4 1966171168
  %v6248 = vunpack.c.0.s8 %v6247
  %v6249 = vlaneseq
  %v6250 = vshrl.u32 %v6249, 7
  %v6251 = vsub.s32 %v6248, %v6250
  %v6252 = vrot.slane %v6244, %v6251
  %v6254 = vunpack.c.l.s4 1966171168
  %v6255 = vunpack.c.0.s8 %v6254
  %v6256 = vlaneseq
  %v6257 = vshrl.u32 %v6256, 7
  %v6258 = vsub.s32 %v6255, %v6257
  %v6259 = vrot.slane %v6245, %v6258
  %v6260 = vcombine.low %v6252, %v6259
  %v6261 = vcombine.low %v3808, %v3812
  %v6262 = vcombine.low %v3816, %v3820
  %v6263 = vcombine.low %v3824, %v3828
  %v6264 = vcombine.low %v3832, %v3836
  %v6266 = vunpack.c.l.s4 1966171168
  %v6267 = vunpack.c.0.s8 %v6266
  %v6268 = vlaneseq
  %v6269 = vshrl.u32 %v6268, 7
  %v6270 = vsub.s32 %v6267, %v6269
  %v6271 = vrot.slane %v6261, %v6270
  %v6273 = vunpack.c.l.s4 1966171168
  %v6274 = vunpack.c.0.s8 %v6273
  %v6275 = vlaneseq
  %v6276 = vshrl.u32 %v6275, 7
  %v6277 = vsub.s32 %v6274, %v6276
  %v6278 = vrot.slane %v6262, %v6277
  %v6280 = vunpack.c.l.s4 1966171168
  %v6281 = vunpack.c.0.s8 %v6280
  %v6282 = vlaneseq
  %v6283 = vshrl.u32 %v6282, 7
  %v6284 = vsub.s32 %v6281, %v6283
  %v6285 = vrot.slane %v6263, %v6284
  %v6287 = vunpack.c.l.s4 1966171168
  %v6288 = vunpack.c.0.s8 %v6287
  %v6289 = vlaneseq
  %v6290 = vshrl.u32 %v6289, 7
  %v6291 = vsub.s32 %v6288, %v6290
  %v6292 = vrot.slane %v6264, %v6291
  %v6293 = vcombine.low %v6271, %v6278
  %v6294 = vcombine.low %v6285, %v6292
  %v6296 = vunpack.c.l.s4 1966171168
  %v6297 = vunpack.c.0.s8 %v6296
  %v6298 = vlaneseq
  %v6299 = vshrl.u32 %v6298, 7
  %v6300 = vsub.s32 %v6297, %v6299
  %v6301 = vrot.slane %v6293, %v6300
  %v6303 = vunpack.c.l.s4 1966171168
  %v6304 = vunpack.c.0.s8 %v6303
  %v6305 = vlaneseq
  %v6306 = vshrl.u32 %v6305, 7
  %v6307 = vsub.s32 %v6304, %v6306
  %v6308 = vrot.slane %v6294, %v6307
  %v6309 = vcombine.low %v6301, %v6308
  %v6310 = vcombine.low %v3840, %v3844
  %v6311 = vcombine.low %v3848, %v3852
  %v6312 = vcombine.low %v3856, %v3860
  %v6313 = vcombine.low %v3864, %v3868
  %v6315 = vunpack.c.l.s4 1966171168
  %v6316 = vunpack.c.0.s8 %v6315
  %v6317 = vlaneseq
  %v6318 = vshrl.u32 %v6317, 7
  %v6319 = vsub.s32 %v6316, %v6318
  %v6320 = vrot.slane %v6310, %v6319
  %v6322 = vunpack.c.l.s4 1966171168
  %v6323 = vunpack.c.0.s8 %v6322
  %v6324 = vlaneseq
  %v6325 = vshrl.u32 %v6324, 7
  %v6326 = vsub.s32 %v6323, %v6325
  %v6327 = vrot.slane %v6311, %v6326
  %v6329 = vunpack.c.l.s4 1966171168
  %v6330 = vunpack.c.0.s8 %v6329
  %v6331 = vlaneseq
  %v6332 = vshrl.u32 %v6331, 7
  %v6333 = vsub.s32 %v6330, %v6332
  %v6334 = vrot.slane %v6312, %v6333
  %v6336 = vunpack.c.l.s4 1966171168
  %v6337 = vunpack.c.0.s8 %v6336
  %v6338 = vlaneseq
  %v6339 = vshrl.u32 %v6338, 7
  %v6340 = vsub.s32 %v6337, %v6339
  %v6341 = vrot.slane %v6313, %v6340
  %v6342 = vcombine.low %v6320, %v6327
  %v6343 = vcombine.low %v6334, %v6341
  %v6345 = vunpack.c.l.s4 1966171168
  %v6346 = vunpack.c.0.s8 %v6345
  %v6347 = vlaneseq
  %v6348 = vshrl.u32 %v6347, 7
  %v6349 = vsub.s32 %v6346, %v6348
  %v6350 = vrot.slane %v6342, %v6349
  %v6352 = vunpack.c.l.s4 1966171168
  %v6353 = vunpack.c.0.s8 %v6352
  %v6354 = vlaneseq
  %v6355 = vshrl.u32 %v6354, 7
  %v6356 = vsub.s32 %v6353, %v6355
  %v6357 = vrot.slane %v6343, %v6356
  %v6358 = vcombine.low %v6350, %v6357
  %v6359 = vcombine.low %v3872, %v3876
  %v6360 = vcombine.low %v3880, %v3884
  %v6361 = vcombine.low %v3888, %v3892
  %v6362 = vcombine.low %v3896, %v3900
  %v6364 = vunpack.c.l.s4 1966171168
  %v6365 = vunpack.c.0.s8 %v6364
  %v6366 = vlaneseq
  %v6367 = vshrl.u32 %v6366, 7
  %v6368 = vsub.s32 %v6365, %v6367
  %v6369 = vrot.slane %v6359, %v6368
  %v6371 = vunpack.c.l.s4 1966171168
  %v6372 = vunpack.c.0.s8 %v6371
  %v6373 = vlaneseq
  %v6374 = vshrl.u32 %v6373, 7
  %v6375 = vsub.s32 %v6372, %v6374
  %v6376 = vrot.slane %v6360, %v6375
  %v6378 = vunpack.c.l.s4 1966171168
  %v6379 = vunpack.c.0.s8 %v6378
  %v6380 = vlaneseq
  %v6381 = vshrl.u32 %v6380, 7
  %v6382 = vsub.s32 %v6379, %v6381
  %v6383 = vrot.slane %v6361, %v6382
  %v6385 = vunpack.c.l.s4 1966171168
  %v6386 = vunpack.c.0.s8 %v6385
  %v6387 = vlaneseq
  %v6388 = vshrl.u32 %v6387, 7
  %v6389 = vsub.s32 %v6386, %v6388
  %v6390 = vrot.slane %v6362, %v6389
  %v6391 = vcombine.low %v6369, %v6376
  %v6392 = vcombine.low %v6383, %v6390
  %v6394 = vunpack.c.l.s4 1966171168
  %v6395 = vunpack.c.0.s8 %v6394
  %v6396 = vlaneseq
  %v6397 = vshrl.u32 %v6396, 7
  %v6398 = vsub.s32 %v6395, %v6397
  %v6399 = vrot.slane %v6391, %v6398
  %v6401 = vunpack.c.l.s4 1966171168
  %v6402 = vunpack.c.0.s8 %v6401
  %v6403 = vlaneseq
  %v6404 = vshrl.u32 %v6403, 7
  %v6405 = vsub.s32 %v6402, %v6404
  %v6406 = vrot.slane %v6392, %v6405
  %v6407 = vcombine.low %v6399, %v6406
  %v6408 = vcombine.low %v3904, %v3908
  %v6409 = vcombine.low %v3912, %v3916
  %v6410 = vcombine.low %v3920, %v3924
  %v6411 = vcombine.low %v3928, %v3932
  %v6413 = vunpack.c.l.s4 1966171168
  %v6414 = vunpack.c.0.s8 %v6413
  %v6415 = vlaneseq
  %v6416 = vshrl.u32 %v6415, 7
  %v6417 = vsub.s32 %v6414, %v6416
  %v6418 = vrot.slane %v6408, %v6417
  %v6420 = vunpack.c.l.s4 1966171168
  %v6421 = vunpack.c.0.s8 %v6420
  %v6422 = vlaneseq
  %v6423 = vshrl.u32 %v6422, 7
  %v6424 = vsub.s32 %v6421, %v6423
  %v6425 = vrot.slane %v6409, %v6424
  %v6427 = vunpack.c.l.s4 1966171168
  %v6428 = vunpack.c.0.s8 %v6427
  %v6429 = vlaneseq
  %v6430 = vshrl.u32 %v6429, 7
  %v6431 = vsub.s32 %v6428, %v6430
  %v6432 = vrot.slane %v6410, %v6431
  %v6434 = vunpack.c.l.s4 1966171168
  %v6435 = vunpack.c.0.s8 %v6434
  %v6436 = vlaneseq
  %v6437 = vshrl.u32 %v6436, 7
  %v6438 = vsub.s32 %v6435, %v6437
  %v6439 = vrot.slane %v6411, %v6438
  %v6440 = vcombine.low %v6418, %v6425
  %v6441 = vcombine.low %v6432, %v6439
  %v6443 = vunpack.c.l.s4 1966171168
  %v6444 = vunpack.c.0.s8 %v6443
  %v6445 = vlaneseq
  %v6446 = vshrl.u32 %v6445, 7
  %v6447 = vsub.s32 %v6444, %v6446
  %v6448 = vrot.slane %v6440, %v6447
  %v6450 = vunpack.c.l.s4 1966171168
  %v6451 = vunpack.c.0.s8 %v6450
  %v6452 = vlaneseq
  %v6453 = vshrl.u32 %v6452, 7
  %v6454 = vsub.s32 %v6451, %v6453
  %v6455 = vrot.slane %v6441, %v6454
  %v6456 = vcombine.low %v6448, %v6455
  %v6457 = vcombine.low %v3936, %v3940
  %v6458 = vcombine.low %v3944, %v3948
  %v6459 = vcombine.low %v3952, %v3956
  %v6460 = vcombine.low %v3960, %v3964
  %v6462 = vunpack.c.l.s4 1966171168
  %v6463 = vunpack.c.0.s8 %v6462
  %v6464 = vlaneseq
  %v6465 = vshrl.u32 %v6464, 7
  %v6466 = vsub.s32 %v6463, %v6465
  %v6467 = vrot.slane %v6457, %v6466
  %v6469 = vunpack.c.l.s4 1966171168
  %v6470 = vunpack.c.0.s8 %v6469
  %v6471 = vlaneseq
  %v6472 = vshrl.u32 %v6471, 7
  %v6473 = vsub.s32 %v6470, %v6472
  %v6474 = vrot.slane %v6458, %v6473
  %v6476 = vunpack.c.l.s4 1966171168
  %v6477 = vunpack.c.0.s8 %v6476
  %v6478 = vlaneseq
  %v6479 = vshrl.u32 %v6478, 7
  %v6480 = vsub.s32 %v6477, %v6479
  %v6481 = vrot.slane %v6459, %v6480
  %v6483 = vunpack.c.l.s4 1966171168
  %v6484 = vunpack.c.0.s8 %v6483
  %v6485 = vlaneseq
  %v6486 = vshrl.u32 %v6485, 7
  %v6487 = vsub.s32 %v6484, %v6486
  %v6488 = vrot.slane %v6460, %v6487
  %v6489 = vcombine.low %v6467, %v6474
  %v6490 = vcombine.low %v6481, %v6488
  %v6492 = vunpack.c.l.s4 1966171168
  %v6493 = vunpack.c.0.s8 %v6492
  %v6494 = vlaneseq
  %v6495 = vshrl.u32 %v6494, 7
  %v6496 = vsub.s32 %v6493, %v6495
  %v6497 = vrot.slane %v6489, %v6496
  %v6499 = vunpack.c.l.s4 1966171168
  %v6500 = vunpack.c.0.s8 %v6499
  %v6501 = vlaneseq
  %v6502 = vshrl.u32 %v6501, 7
  %v6503 = vsub.s32 %v6500, %v6502
  %v6504 = vrot.slane %v6490, %v6503
  %v6505 = vcombine.low %v6497, %v6504
  %v6506 = vcombine.low %v3968, %v3972
  %v6507 = vcombine.low %v3976, %v3980
  %v6508 = vcombine.low %v3984, %v3988
  %v6509 = vcombine.low %v3992, %v3996
  %v6511 = vunpack.c.l.s4 1966171168
  %v6512 = vunpack.c.0.s8 %v6511
  %v6513 = vlaneseq
  %v6514 = vshrl.u32 %v6513, 7
  %v6515 = vsub.s32 %v6512, %v6514
  %v6516 = vrot.slane %v6506, %v6515
  %v6518 = vunpack.c.l.s4 1966171168
  %v6519 = vunpack.c.0.s8 %v6518
  %v6520 = vlaneseq
  %v6521 = vshrl.u32 %v6520, 7
  %v6522 = vsub.s32 %v6519, %v6521
  %v6523 = vrot.slane %v6507, %v6522
  %v6525 = vunpack.c.l.s4 1966171168
  %v6526 = vunpack.c.0.s8 %v6525
  %v6527 = vlaneseq
  %v6528 = vshrl.u32 %v6527, 7
  %v6529 = vsub.s32 %v6526, %v6528
  %v6530 = vrot.slane %v6508, %v6529
  %v6532 = vunpack.c.l.s4 1966171168
  %v6533 = vunpack.c.0.s8 %v6532
  %v6534 = vlaneseq
  %v6535 = vshrl.u32 %v6534, 7
  %v6536 = vsub.s32 %v6533, %v6535
  %v6537 = vrot.slane %v6509, %v6536
  %v6538 = vcombine.low %v6516, %v6523
  %v6539 = vcombine.low %v6530, %v6537
  %v6541 = vunpack.c.l.s4 1966171168
  %v6542 = vunpack.c.0.s8 %v6541
  %v6543 = vlaneseq
  %v6544 = vshrl.u32 %v6543, 7
  %v6545 = vsub.s32 %v6542, %v6544
  %v6546 = vrot.slane %v6538, %v6545
  %v6548 = vunpack.c.l.s4 1966171168
  %v6549 = vunpack.c.0.s8 %v6548
  %v6550 = vlaneseq
  %v6551 = vshrl.u32 %v6550, 7
  %v6552 = vsub.s32 %v6549, %v6551
  %v6553 = vrot.slane %v6539, %v6552
  %v6554 = vcombine.low %v6546, %v6553
  %v6555 = vcombine.low %v4000, %v4004
  %v6556 = vcombine.low %v4008, %v4012
  %v6557 = vcombine.low %v4016, %v4020
  %v6558 = vcombine.low %v4024, %v4028
  %v6560 = vunpack.c.l.s4 1966171168
  %v6561 = vunpack.c.0.s8 %v6560
  %v6562 = vlaneseq
  %v6563 = vshrl.u32 %v6562, 7
  %v6564 = vsub.s32 %v6561, %v6563
  %v6565 = vrot.slane %v6555, %v6564
  %v6567 = vunpack.c.l.s4 1966171168
  %v6568 = vunpack.c.0.s8 %v6567
  %v6569 = vlaneseq
  %v6570 = vshrl.u32 %v6569, 7
  %v6571 = vsub.s32 %v6568, %v6570
  %v6572 = vrot.slane %v6556, %v6571
  %v6574 = vunpack.c.l.s4 1966171168
  %v6575 = vunpack.c.0.s8 %v6574
  %v6576 = vlaneseq
  %v6577 = vshrl.u32 %v6576, 7
  %v6578 = vsub.s32 %v6575, %v6577
  %v6579 = vrot.slane %v6557, %v6578
  %v6581 = vunpack.c.l.s4 1966171168
  %v6582 = vunpack.c.0.s8 %v6581
  %v6583 = vlaneseq
  %v6584 = vshrl.u32 %v6583, 7
  %v6585 = vsub.s32 %v6582, %v6584
  %v6586 = vrot.slane %v6558, %v6585
  %v6587 = vcombine.low %v6565, %v6572
  %v6588 = vcombine.low %v6579, %v6586
  %v6590 = vunpack.c.l.s4 1966171168
  %v6591 = vunpack.c.0.s8 %v6590
  %v6592 = vlaneseq
  %v6593 = vshrl.u32 %v6592, 7
  %v6594 = vsub.s32 %v6591, %v6593
  %v6595 = vrot.slane %v6587, %v6594
  %v6597 = vunpack.c.l.s4 1966171168
  %v6598 = vunpack.c.0.s8 %v6597
  %v6599 = vlaneseq
  %v6600 = vshrl.u32 %v6599, 7
  %v6601 = vsub.s32 %v6598, %v6600
  %v6602 = vrot.slane %v6588, %v6601
  %v6603 = vcombine.low %v6595, %v6602
  %v6604 = vcombine.low %v4032, %v4036
  %v6605 = vcombine.low %v4040, %v4044
  %v6606 = vcombine.low %v4048, %v4052
  %v6607 = vcombine.low %v4056, %v4060
  %v6609 = vunpack.c.l.s4 1966171168
  %v6610 = vunpack.c.0.s8 %v6609
  %v6611 = vlaneseq
  %v6612 = vshrl.u32 %v6611, 7
  %v6613 = vsub.s32 %v6610, %v6612
  %v6614 = vrot.slane %v6604, %v6613
  %v6616 = vunpack.c.l.s4 1966171168
  %v6617 = vunpack.c.0.s8 %v6616
  %v6618 = vlaneseq
  %v6619 = vshrl.u32 %v6618, 7
  %v6620 = vsub.s32 %v6617, %v6619
  %v6621 = vrot.slane %v6605, %v6620
  %v6623 = vunpack.c.l.s4 1966171168
  %v6624 = vunpack.c.0.s8 %v6623
  %v6625 = vlaneseq
  %v6626 = vshrl.u32 %v6625, 7
  %v6627 = vsub.s32 %v6624, %v6626
  %v6628 = vrot.slane %v6606, %v6627
  %v6630 = vunpack.c.l.s4 1966171168
  %v6631 = vunpack.c.0.s8 %v6630
  %v6632 = vlaneseq
  %v6633 = vshrl.u32 %v6632, 7
  %v6634 = vsub.s32 %v6631, %v6633
  %v6635 = vrot.slane %v6607, %v6634
  %v6636 = vcombine.low %v6614, %v6621
  %v6637 = vcombine.low %v6628, %v6635
  %v6639 = vunpack.c.l.s4 1966171168
  %v6640 = vunpack.c.0.s8 %v6639
  %v6641 = vlaneseq
  %v6642 = vshrl.u32 %v6641, 7
  %v6643 = vsub.s32 %v6640, %v6642
  %v6644 = vrot.slane %v6636, %v6643
  %v6646 = vunpack.c.l.s4 1966171168
  %v6647 = vunpack.c.0.s8 %v6646
  %v6648 = vlaneseq
  %v6649 = vshrl.u32 %v6648, 7
  %v6650 = vsub.s32 %v6647, %v6649
  %v6651 = vrot.slane %v6637, %v6650
  %v6652 = vcombine.low %v6644, %v6651
  %v6653 = vcombine.low %v4064, %v4068
  %v6654 = vcombine.low %v4072, %v4076
  %v6655 = vcombine.low %v4080, %v4084
  %v6656 = vcombine.low %v4088, %v4092
  %v6658 = vunpack.c.l.s4 1966171168
  %v6659 = vunpack.c.0.s8 %v6658
  %v6660 = vlaneseq
  %v6661 = vshrl.u32 %v6660, 7
  %v6662 = vsub.s32 %v6659, %v6661
  %v6663 = vrot.slane %v6653, %v6662
  %v6665 = vunpack.c.l.s4 1966171168
  %v6666 = vunpack.c.0.s8 %v6665
  %v6667 = vlaneseq
  %v6668 = vshrl.u32 %v6667, 7
  %v6669 = vsub.s32 %v6666, %v6668
  %v6670 = vrot.slane %v6654, %v6669
  %v6672 = vunpack.c.l.s4 1966171168
  %v6673 = vunpack.c.0.s8 %v6672
  %v6674 = vlaneseq
  %v6675 = vshrl.u32 %v6674, 7
  %v6676 = vsub.s32 %v6673, %v6675
  %v6677 = vrot.slane %v6655, %v6676
  %v6679 = vunpack.c.l.s4 1966171168
  %v6680 = vunpack.c.0.s8 %v6679
  %v6681 = vlaneseq
  %v6682 = vshrl.u32 %v6681, 7
  %v6683 = vsub.s32 %v6680, %v6682
  %v6684 = vrot.slane %v6656, %v6683
  %v6685 = vcombine.low %v6663, %v6670
  %v6686 = vcombine.low %v6677, %v6684
  %v6688 = vunpack.c.l.s4 1966171168
  %v6689 = vunpack.c.0.s8 %v6688
  %v6690 = vlaneseq
  %v6691 = vshrl.u32 %v6690, 7
  %v6692 = vsub.s32 %v6689, %v6691
  %v6693 = vrot.slane %v6685, %v6692
  %v6695 = vunpack.c.l.s4 1966171168
  %v6696 = vunpack.c.0.s8 %v6695
  %v6697 = vlaneseq
  %v6698 = vshrl.u32 %v6697, 7
  %v6699 = vsub.s32 %v6696, %v6698
  %v6700 = vrot.slane %v6686, %v6699
  %v6701 = vcombine.low %v6693, %v6700
  %v6702 = vcombine.low %v4096, %v4100
  %v6703 = vcombine.low %v4104, %v4108
  %v6704 = vcombine.low %v4112, %v4116
  %v6705 = vcombine.low %v4120, %v4124
  %v6707 = vunpack.c.l.s4 1966171168
  %v6708 = vunpack.c.0.s8 %v6707
  %v6709 = vlaneseq
  %v6710 = vshrl.u32 %v6709, 7
  %v6711 = vsub.s32 %v6708, %v6710
  %v6712 = vrot.slane %v6702, %v6711
  %v6714 = vunpack.c.l.s4 1966171168
  %v6715 = vunpack.c.0.s8 %v6714
  %v6716 = vlaneseq
  %v6717 = vshrl.u32 %v6716, 7
  %v6718 = vsub.s32 %v6715, %v6717
  %v6719 = vrot.slane %v6703, %v6718
  %v6721 = vunpack.c.l.s4 1966171168
  %v6722 = vunpack.c.0.s8 %v6721
  %v6723 = vlaneseq
  %v6724 = vshrl.u32 %v6723, 7
  %v6725 = vsub.s32 %v6722, %v6724
  %v6726 = vrot.slane %v6704, %v6725
  %v6728 = vunpack.c.l.s4 1966171168
  %v6729 = vunpack.c.0.s8 %v6728
  %v6730 = vlaneseq
  %v6731 = vshrl.u32 %v6730, 7
  %v6732 = vsub.s32 %v6729, %v6731
  %v6733 = vrot.slane %v6705, %v6732
  %v6734 = vcombine.low %v6712, %v6719
  %v6735 = vcombine.low %v6726, %v6733
  %v6737 = vunpack.c.l.s4 1966171168
  %v6738 = vunpack.c.0.s8 %v6737
  %v6739 = vlaneseq
  %v6740 = vshrl.u32 %v6739, 7
  %v6741 = vsub.s32 %v6738, %v6740
  %v6742 = vrot.slane %v6734, %v6741
  %v6744 = vunpack.c.l.s4 1966171168
  %v6745 = vunpack.c.0.s8 %v6744
  %v6746 = vlaneseq
  %v6747 = vshrl.u32 %v6746, 7
  %v6748 = vsub.s32 %v6745, %v6747
  %v6749 = vrot.slane %v6735, %v6748
  %v6750 = vcombine.low %v6742, %v6749
  %v6751 = vcombine.low %v4128, %v4132
  %v6752 = vcombine.low %v4136, %v4140
  %v6753 = vcombine.low %v4144, %v4148
  %v6754 = vcombine.low %v4152, %v4156
  %v6756 = vunpack.c.l.s4 1966171168
  %v6757 = vunpack.c.0.s8 %v6756
  %v6758 = vlaneseq
  %v6759 = vshrl.u32 %v6758, 7
  %v6760 = vsub.s32 %v6757, %v6759
  %v6761 = vrot.slane %v6751, %v6760
  %v6763 = vunpack.c.l.s4 1966171168
  %v6764 = vunpack.c.0.s8 %v6763
  %v6765 = vlaneseq
  %v6766 = vshrl.u32 %v6765, 7
  %v6767 = vsub.s32 %v6764, %v6766
  %v6768 = vrot.slane %v6752, %v6767
  %v6770 = vunpack.c.l.s4 1966171168
  %v6771 = vunpack.c.0.s8 %v6770
  %v6772 = vlaneseq
  %v6773 = vshrl.u32 %v6772, 7
  %v6774 = vsub.s32 %v6771, %v6773
  %v6775 = vrot.slane %v6753, %v6774
  %v6777 = vunpack.c.l.s4 1966171168
  %v6778 = vunpack.c.0.s8 %v6777
  %v6779 = vlaneseq
  %v6780 = vshrl.u32 %v6779, 7
  %v6781 = vsub.s32 %v6778, %v6780
  %v6782 = vrot.slane %v6754, %v6781
  %v6783 = vcombine.low %v6761, %v6768
  %v6784 = vcombine.low %v6775, %v6782
  %v6786 = vunpack.c.l.s4 1966171168
  %v6787 = vunpack.c.0.s8 %v6786
  %v6788 = vlaneseq
  %v6789 = vshrl.u32 %v6788, 7
  %v6790 = vsub.s32 %v6787, %v6789
  %v6791 = vrot.slane %v6783, %v6790
  %v6793 = vunpack.c.l.s4 1966171168
  %v6794 = vunpack.c.0.s8 %v6793
  %v6795 = vlaneseq
  %v6796 = vshrl.u32 %v6795, 7
  %v6797 = vsub.s32 %v6794, %v6796
  %v6798 = vrot.slane %v6784, %v6797
  %v6799 = vcombine.low %v6791, %v6798
  %v6800 = vcombine.low %v4160, %v4164
  %v6801 = vcombine.low %v4168, %v4172
  %v6802 = vcombine.low %v4176, %v4180
  %v6803 = vcombine.low %v4184, %v4188
  %v6805 = vunpack.c.l.s4 1966171168
  %v6806 = vunpack.c.0.s8 %v6805
  %v6807 = vlaneseq
  %v6808 = vshrl.u32 %v6807, 7
  %v6809 = vsub.s32 %v6806, %v6808
  %v6810 = vrot.slane %v6800, %v6809
  %v6812 = vunpack.c.l.s4 1966171168
  %v6813 = vunpack.c.0.s8 %v6812
  %v6814 = vlaneseq
  %v6815 = vshrl.u32 %v6814, 7
  %v6816 = vsub.s32 %v6813, %v6815
  %v6817 = vrot.slane %v6801, %v6816
  %v6819 = vunpack.c.l.s4 1966171168
  %v6820 = vunpack.c.0.s8 %v6819
  %v6821 = vlaneseq
  %v6822 = vshrl.u32 %v6821, 7
  %v6823 = vsub.s32 %v6820, %v6822
  %v6824 = vrot.slane %v6802, %v6823
  %v6826 = vunpack.c.l.s4 1966171168
  %v6827 = vunpack.c.0.s8 %v6826
  %v6828 = vlaneseq
  %v6829 = vshrl.u32 %v6828, 7
  %v6830 = vsub.s32 %v6827, %v6829
  %v6831 = vrot.slane %v6803, %v6830
  %v6832 = vcombine.low %v6810, %v6817
  %v6833 = vcombine.low %v6824, %v6831
  %v6835 = vunpack.c.l.s4 1966171168
  %v6836 = vunpack.c.0.s8 %v6835
  %v6837 = vlaneseq
  %v6838 = vshrl.u32 %v6837, 7
  %v6839 = vsub.s32 %v6836, %v6838
  %v6840 = vrot.slane %v6832, %v6839
  %v6842 = vunpack.c.l.s4 1966171168
  %v6843 = vunpack.c.0.s8 %v6842
  %v6844 = vlaneseq
  %v6845 = vshrl.u32 %v6844, 7
  %v6846 = vsub.s32 %v6843, %v6845
  %v6847 = vrot.slane %v6833, %v6846
  %v6848 = vcombine.low %v6840, %v6847
  %v6849 = vcombine.low %v4192, %v4196
  %v6850 = vcombine.low %v4200, %v4204
  %v6851 = vcombine.low %v4208, %v4212
  %v6852 = vcombine.low %v4216, %v4220
  %v6854 = vunpack.c.l.s4 1966171168
  %v6855 = vunpack.c.0.s8 %v6854
  %v6856 = vlaneseq
  %v6857 = vshrl.u32 %v6856, 7
  %v6858 = vsub.s32 %v6855, %v6857
  %v6859 = vrot.slane %v6849, %v6858
  %v6861 = vunpack.c.l.s4 1966171168
  %v6862 = vunpack.c.0.s8 %v6861
  %v6863 = vlaneseq
  %v6864 = vshrl.u32 %v6863, 7
  %v6865 = vsub.s32 %v6862, %v6864
  %v6866 = vrot.slane %v6850, %v6865
  %v6868 = vunpack.c.l.s4 1966171168
  %v6869 = vunpack.c.0.s8 %v6868
  %v6870 = vlaneseq
  %v6871 = vshrl.u32 %v6870, 7
  %v6872 = vsub.s32 %v6869, %v6871
  %v6873 = vrot.slane %v6851, %v6872
  %v6875 = vunpack.c.l.s4 1966171168
  %v6876 = vunpack.c.0.s8 %v6875
  %v6877 = vlaneseq
  %v6878 = vshrl.u32 %v6877, 7
  %v6879 = vsub.s32 %v6876, %v6878
  %v6880 = vrot.slane %v6852, %v6879
  %v6881 = vcombine.low %v6859, %v6866
  %v6882 = vcombine.low %v6873, %v6880
  %v6884 = vunpack.c.l.s4 1966171168
  %v6885 = vunpack.c.0.s8 %v6884
  %v6886 = vlaneseq
  %v6887 = vshrl.u32 %v6886, 7
  %v6888 = vsub.s32 %v6885, %v6887
  %v6889 = vrot.slane %v6881, %v6888
  %v6891 = vunpack.c.l.s4 1966171168
  %v6892 = vunpack.c.0.s8 %v6891
  %v6893 = vlaneseq
  %v6894 = vshrl.u32 %v6893, 7
  %v6895 = vsub.s32 %v6892, %v6894
  %v6896 = vrot.slane %v6882, %v6895
  %v6897 = vcombine.low %v6889, %v6896
  %v6898 = vcombine.low %v4224, %v4228
  %v6899 = vcombine.low %v4232, %v4236
  %v6900 = vcombine.low %v4240, %v4244
  %v6901 = vcombine.low %v4248, %v4252
  %v6903 = vunpack.c.l.s4 1966171168
  %v6904 = vunpack.c.0.s8 %v6903
  %v6905 = vlaneseq
  %v6906 = vshrl.u32 %v6905, 7
  %v6907 = vsub.s32 %v6904, %v6906
  %v6908 = vrot.slane %v6898, %v6907
  %v6910 = vunpack.c.l.s4 1966171168
  %v6911 = vunpack.c.0.s8 %v6910
  %v6912 = vlaneseq
  %v6913 = vshrl.u32 %v6912, 7
  %v6914 = vsub.s32 %v6911, %v6913
  %v6915 = vrot.slane %v6899, %v6914
  %v6917 = vunpack.c.l.s4 1966171168
  %v6918 = vunpack.c.0.s8 %v6917
  %v6919 = vlaneseq
  %v6920 = vshrl.u32 %v6919, 7
  %v6921 = vsub.s32 %v6918, %v6920
  %v6922 = vrot.slane %v6900, %v6921
  %v6924 = vunpack.c.l.s4 1966171168
  %v6925 = vunpack.c.0.s8 %v6924
  %v6926 = vlaneseq
  %v6927 = vshrl.u32 %v6926, 7
  %v6928 = vsub.s32 %v6925, %v6927
  %v6929 = vrot.slane %v6901, %v6928
  %v6930 = vcombine.low %v6908, %v6915
  %v6931 = vcombine.low %v6922, %v6929
  %v6933 = vunpack.c.l.s4 1966171168
  %v6934 = vunpack.c.0.s8 %v6933
  %v6935 = vlaneseq
  %v6936 = vshrl.u32 %v6935, 7
  %v6937 = vsub.s32 %v6934, %v6936
  %v6938 = vrot.slane %v6930, %v6937
  %v6940 = vunpack.c.l.s4 1966171168
  %v6941 = vunpack.c.0.s8 %v6940
  %v6942 = vlaneseq
  %v6943 = vshrl.u32 %v6942, 7
  %v6944 = vsub.s32 %v6941, %v6943
  %v6945 = vrot.slane %v6931, %v6944
  %v6946 = vcombine.low %v6938, %v6945
  %v6947 = vcombine.low %v4256, %v4260
  %v6948 = vcombine.low %v4264, %v4268
  %v6949 = vcombine.low %v4272, %v4276
  %v6950 = vcombine.low %v4280, %v4284
  %v6952 = vunpack.c.l.s4 1966171168
  %v6953 = vunpack.c.0.s8 %v6952
  %v6954 = vlaneseq
  %v6955 = vshrl.u32 %v6954, 7
  %v6956 = vsub.s32 %v6953, %v6955
  %v6957 = vrot.slane %v6947, %v6956
  %v6959 = vunpack.c.l.s4 1966171168
  %v6960 = vunpack.c.0.s8 %v6959
  %v6961 = vlaneseq
  %v6962 = vshrl.u32 %v6961, 7
  %v6963 = vsub.s32 %v6960, %v6962
  %v6964 = vrot.slane %v6948, %v6963
  %v6966 = vunpack.c.l.s4 1966171168
  %v6967 = vunpack.c.0.s8 %v6966
  %v6968 = vlaneseq
  %v6969 = vshrl.u32 %v6968, 7
  %v6970 = vsub.s32 %v6967, %v6969
  %v6971 = vrot.slane %v6949, %v6970
  %v6973 = vunpack.c.l.s4 1966171168
  %v6974 = vunpack.c.0.s8 %v6973
  %v6975 = vlaneseq
  %v6976 = vshrl.u32 %v6975, 7
  %v6977 = vsub.s32 %v6974, %v6976
  %v6978 = vrot.slane %v6950, %v6977
  %v6979 = vcombine.low %v6957, %v6964
  %v6980 = vcombine.low %v6971, %v6978
  %v6982 = vunpack.c.l.s4 1966171168
  %v6983 = vunpack.c.0.s8 %v6982
  %v6984 = vlaneseq
  %v6985 = vshrl.u32 %v6984, 7
  %v6986 = vsub.s32 %v6983, %v6985
  %v6987 = vrot.slane %v6979, %v6986
  %v6989 = vunpack.c.l.s4 1966171168
  %v6990 = vunpack.c.0.s8 %v6989
  %v6991 = vlaneseq
  %v6992 = vshrl.u32 %v6991, 7
  %v6993 = vsub.s32 %v6990, %v6992
  %v6994 = vrot.slane %v6980, %v6993
  %v6995 = vcombine.low %v6987, %v6994
  %v6996 = vcombine.low %v4288, %v4292
  %v6997 = vcombine.low %v4296, %v4300
  %v6998 = vcombine.low %v4304, %v4308
  %v6999 = vcombine.low %v4312, %v4316
  %v7001 = vunpack.c.l.s4 1966171168
  %v7002 = vunpack.c.0.s8 %v7001
  %v7003 = vlaneseq
  %v7004 = vshrl.u32 %v7003, 7
  %v7005 = vsub.s32 %v7002, %v7004
  %v7006 = vrot.slane %v6996, %v7005
  %v7008 = vunpack.c.l.s4 1966171168
  %v7009 = vunpack.c.0.s8 %v7008
  %v7010 = vlaneseq
  %v7011 = vshrl.u32 %v7010, 7
  %v7012 = vsub.s32 %v7009, %v7011
  %v7013 = vrot.slane %v6997, %v7012
  %v7015 = vunpack.c.l.s4 1966171168
  %v7016 = vunpack.c.0.s8 %v7015
  %v7017 = vlaneseq
  %v7018 = vshrl.u32 %v7017, 7
  %v7019 = vsub.s32 %v7016, %v7018
  %v7020 = vrot.slane %v6998, %v7019
  %v7022 = vunpack.c.l.s4 1966171168
  %v7023 = vunpack.c.0.s8 %v7022
  %v7024 = vlaneseq
  %v7025 = vshrl.u32 %v7024, 7
  %v7026 = vsub.s32 %v7023, %v7025
  %v7027 = vrot.slane %v6999, %v7026
  %v7028 = vcombine.low %v7006, %v7013
  %v7029 = vcombine.low %v7020, %v7027
  %v7031 = vunpack.c.l.s4 1966171168
  %v7032 = vunpack.c.0.s8 %v7031
  %v7033 = vlaneseq
  %v7034 = vshrl.u32 %v7033, 7
  %v7035 = vsub.s32 %v7032, %v7034
  %v7036 = vrot.slane %v7028, %v7035
  %v7038 = vunpack.c.l.s4 1966171168
  %v7039 = vunpack.c.0.s8 %v7038
  %v7040 = vlaneseq
  %v7041 = vshrl.u32 %v7040, 7
  %v7042 = vsub.s32 %v7039, %v7041
  %v7043 = vrot.slane %v7029, %v7042
  %v7044 = vcombine.low %v7036, %v7043
  %v7045 = vcombine.low %v4320, %v4324
  %v7046 = vcombine.low %v4328, %v4332
  %v7047 = vcombine.low %v4336, %v4340
  %v7048 = vcombine.low %v4344, %v4348
  %v7050 = vunpack.c.l.s4 1966171168
  %v7051 = vunpack.c.0.s8 %v7050
  %v7052 = vlaneseq
  %v7053 = vshrl.u32 %v7052, 7
  %v7054 = vsub.s32 %v7051, %v7053
  %v7055 = vrot.slane %v7045, %v7054
  %v7057 = vunpack.c.l.s4 1966171168
  %v7058 = vunpack.c.0.s8 %v7057
  %v7059 = vlaneseq
  %v7060 = vshrl.u32 %v7059, 7
  %v7061 = vsub.s32 %v7058, %v7060
  %v7062 = vrot.slane %v7046, %v7061
  %v7064 = vunpack.c.l.s4 1966171168
  %v7065 = vunpack.c.0.s8 %v7064
  %v7066 = vlaneseq
  %v7067 = vshrl.u32 %v7066, 7
  %v7068 = vsub.s32 %v7065, %v7067
  %v7069 = vrot.slane %v7047, %v7068
  %v7071 = vunpack.c.l.s4 1966171168
  %v7072 = vunpack.c.0.s8 %v7071
  %v7073 = vlaneseq
  %v7074 = vshrl.u32 %v7073, 7
  %v7075 = vsub.s32 %v7072, %v7074
  %v7076 = vrot.slane %v7048, %v7075
  %v7077 = vcombine.low %v7055, %v7062
  %v7078 = vcombine.low %v7069, %v7076
  %v7080 = vunpack.c.l.s4 1966171168
  %v7081 = vunpack.c.0.s8 %v7080
  %v7082 = vlaneseq
  %v7083 = vshrl.u32 %v7082, 7
  %v7084 = vsub.s32 %v7081, %v7083
  %v7085 = vrot.slane %v7077, %v7084
  %v7087 = vunpack.c.l.s4 1966171168
  %v7088 = vunpack.c.0.s8 %v7087
  %v7089 = vlaneseq
  %v7090 = vshrl.u32 %v7089, 7
  %v7091 = vsub.s32 %v7088, %v7090
  %v7092 = vrot.slane %v7078, %v7091
  %v7093 = vcombine.low %v7085, %v7092
  %v7094 = vcombine.low %v4352, %v4356
  %v7095 = vcombine.low %v4360, %v4364
  %v7096 = vcombine.low %v4368, %v4372
  %v7097 = vcombine.low %v4376, %v4380
  %v7099 = vunpack.c.l.s4 1966171168
  %v7100 = vunpack.c.0.s8 %v7099
  %v7101 = vlaneseq
  %v7102 = vshrl.u32 %v7101, 7
  %v7103 = vsub.s32 %v7100, %v7102
  %v7104 = vrot.slane %v7094, %v7103
  %v7106 = vunpack.c.l.s4 1966171168
  %v7107 = vunpack.c.0.s8 %v7106
  %v7108 = vlaneseq
  %v7109 = vshrl.u32 %v7108, 7
  %v7110 = vsub.s32 %v7107, %v7109
  %v7111 = vrot.slane %v7095, %v7110
  %v7113 = vunpack.c.l.s4 1966171168
  %v7114 = vunpack.c.0.s8 %v7113
  %v7115 = vlaneseq
  %v7116 = vshrl.u32 %v7115, 7
  %v7117 = vsub.s32 %v7114, %v7116
  %v7118 = vrot.slane %v7096, %v7117
  %v7120 = vunpack.c.l.s4 1966171168
  %v7121 = vunpack.c.0.s8 %v7120
  %v7122 = vlaneseq
  %v7123 = vshrl.u32 %v7122, 7
  %v7124 = vsub.s32 %v7121, %v7123
  %v7125 = vrot.slane %v7097, %v7124
  %v7126 = vcombine.low %v7104, %v7111
  %v7127 = vcombine.low %v7118, %v7125
  %v7129 = vunpack.c.l.s4 1966171168
  %v7130 = vunpack.c.0.s8 %v7129
  %v7131 = vlaneseq
  %v7132 = vshrl.u32 %v7131, 7
  %v7133 = vsub.s32 %v7130, %v7132
  %v7134 = vrot.slane %v7126, %v7133
  %v7136 = vunpack.c.l.s4 1966171168
  %v7137 = vunpack.c.0.s8 %v7136
  %v7138 = vlaneseq
  %v7139 = vshrl.u32 %v7138, 7
  %v7140 = vsub.s32 %v7137, %v7139
  %v7141 = vrot.slane %v7127, %v7140
  %v7142 = vcombine.low %v7134, %v7141
  %v7143 = vcombine.low %v4384, %v4388
  %v7144 = vcombine.low %v4392, %v4396
  %v7145 = vcombine.low %v4400, %v4404
  %v7146 = vcombine.low %v4408, %v4412
  %v7148 = vunpack.c.l.s4 1966171168
  %v7149 = vunpack.c.0.s8 %v7148
  %v7150 = vlaneseq
  %v7151 = vshrl.u32 %v7150, 7
  %v7152 = vsub.s32 %v7149, %v7151
  %v7153 = vrot.slane %v7143, %v7152
  %v7155 = vunpack.c.l.s4 1966171168
  %v7156 = vunpack.c.0.s8 %v7155
  %v7157 = vlaneseq
  %v7158 = vshrl.u32 %v7157, 7
  %v7159 = vsub.s32 %v7156, %v7158
  %v7160 = vrot.slane %v7144, %v7159
  %v7162 = vunpack.c.l.s4 1966171168
  %v7163 = vunpack.c.0.s8 %v7162
  %v7164 = vlaneseq
  %v7165 = vshrl.u32 %v7164, 7
  %v7166 = vsub.s32 %v7163, %v7165
  %v7167 = vrot.slane %v7145, %v7166
  %v7169 = vunpack.c.l.s4 1966171168
  %v7170 = vunpack.c.0.s8 %v7169
  %v7171 = vlaneseq
  %v7172 = vshrl.u32 %v7171, 7
  %v7173 = vsub.s32 %v7170, %v7172
  %v7174 = vrot.slane %v7146, %v7173
  %v7175 = vcombine.low %v7153, %v7160
  %v7176 = vcombine.low %v7167, %v7174
  %v7178 = vunpack.c.l.s4 1966171168
  %v7179 = vunpack.c.0.s8 %v7178
  %v7180 = vlaneseq
  %v7181 = vshrl.u32 %v7180, 7
  %v7182 = vsub.s32 %v7179, %v7181
  %v7183 = vrot.slane %v7175, %v7182
  %v7185 = vunpack.c.l.s4 1966171168
  %v7186 = vunpack.c.0.s8 %v7185
  %v7187 = vlaneseq
  %v7188 = vshrl.u32 %v7187, 7
  %v7189 = vsub.s32 %v7186, %v7188
  %v7190 = vrot.slane %v7176, %v7189
  %v7191 = vcombine.low %v7183, %v7190
  %v7192 = vcombine.low %v4416, %v4420
  %v7193 = vcombine.low %v4424, %v4428
  %v7194 = vcombine.low %v4432, %v4436
  %v7195 = vcombine.low %v4440, %v4444
  %v7197 = vunpack.c.l.s4 1966171168
  %v7198 = vunpack.c.0.s8 %v7197
  %v7199 = vlaneseq
  %v7200 = vshrl.u32 %v7199, 7
  %v7201 = vsub.s32 %v7198, %v7200
  %v7202 = vrot.slane %v7192, %v7201
  %v7204 = vunpack.c.l.s4 1966171168
  %v7205 = vunpack.c.0.s8 %v7204
  %v7206 = vlaneseq
  %v7207 = vshrl.u32 %v7206, 7
  %v7208 = vsub.s32 %v7205, %v7207
  %v7209 = vrot.slane %v7193, %v7208
  %v7211 = vunpack.c.l.s4 1966171168
  %v7212 = vunpack.c.0.s8 %v7211
  %v7213 = vlaneseq
  %v7214 = vshrl.u32 %v7213, 7
  %v7215 = vsub.s32 %v7212, %v7214
  %v7216 = vrot.slane %v7194, %v7215
  %v7218 = vunpack.c.l.s4 1966171168
  %v7219 = vunpack.c.0.s8 %v7218
  %v7220 = vlaneseq
  %v7221 = vshrl.u32 %v7220, 7
  %v7222 = vsub.s32 %v7219, %v7221
  %v7223 = vrot.slane %v7195, %v7222
  %v7224 = vcombine.low %v7202, %v7209
  %v7225 = vcombine.low %v7216, %v7223
  %v7227 = vunpack.c.l.s4 1966171168
  %v7228 = vunpack.c.0.s8 %v7227
  %v7229 = vlaneseq
  %v7230 = vshrl.u32 %v7229, 7
  %v7231 = vsub.s32 %v7228, %v7230
  %v7232 = vrot.slane %v7224, %v7231
  %v7234 = vunpack.c.l.s4 1966171168
  %v7235 = vunpack.c.0.s8 %v7234
  %v7236 = vlaneseq
  %v7237 = vshrl.u32 %v7236, 7
  %v7238 = vsub.s32 %v7235, %v7237
  %v7239 = vrot.slane %v7225, %v7238
  %v7240 = vcombine.low %v7232, %v7239
  %v7241 = vcombine.low %v4448, %v4452
  %v7242 = vcombine.low %v4456, %v4460
  %v7243 = vcombine.low %v4464, %v4468
  %v7244 = vcombine.low %v4472, %v4476
  %v7246 = vunpack.c.l.s4 1966171168
  %v7247 = vunpack.c.0.s8 %v7246
  %v7248 = vlaneseq
  %v7249 = vshrl.u32 %v7248, 7
  %v7250 = vsub.s32 %v7247, %v7249
  %v7251 = vrot.slane %v7241, %v7250
  %v7253 = vunpack.c.l.s4 1966171168
  %v7254 = vunpack.c.0.s8 %v7253
  %v7255 = vlaneseq
  %v7256 = vshrl.u32 %v7255, 7
  %v7257 = vsub.s32 %v7254, %v7256
  %v7258 = vrot.slane %v7242, %v7257
  %v7260 = vunpack.c.l.s4 1966171168
  %v7261 = vunpack.c.0.s8 %v7260
  %v7262 = vlaneseq
  %v7263 = vshrl.u32 %v7262, 7
  %v7264 = vsub.s32 %v7261, %v7263
  %v7265 = vrot.slane %v7243, %v7264
  %v7267 = vunpack.c.l.s4 1966171168
  %v7268 = vunpack.c.0.s8 %v7267
  %v7269 = vlaneseq
  %v7270 = vshrl.u32 %v7269, 7
  %v7271 = vsub.s32 %v7268, %v7270
  %v7272 = vrot.slane %v7244, %v7271
  %v7273 = vcombine.low %v7251, %v7258
  %v7274 = vcombine.low %v7265, %v7272
  %v7276 = vunpack.c.l.s4 1966171168
  %v7277 = vunpack.c.0.s8 %v7276
  %v7278 = vlaneseq
  %v7279 = vshrl.u32 %v7278, 7
  %v7280 = vsub.s32 %v7277, %v7279
  %v7281 = vrot.slane %v7273, %v7280
  %v7283 = vunpack.c.l.s4 1966171168
  %v7284 = vunpack.c.0.s8 %v7283
  %v7285 = vlaneseq
  %v7286 = vshrl.u32 %v7285, 7
  %v7287 = vsub.s32 %v7284, %v7286
  %v7288 = vrot.slane %v7274, %v7287
  %v7289 = vcombine.low %v7281, %v7288
  %v7290 = vcombine.low %v4480, %v4484
  %v7291 = vcombine.low %v4488, %v4492
  %v7292 = vcombine.low %v4496, %v4500
  %v7293 = vcombine.low %v4504, %v4508
  %v7295 = vunpack.c.l.s4 1966171168
  %v7296 = vunpack.c.0.s8 %v7295
  %v7297 = vlaneseq
  %v7298 = vshrl.u32 %v7297, 7
  %v7299 = vsub.s32 %v7296, %v7298
  %v7300 = vrot.slane %v7290, %v7299
  %v7302 = vunpack.c.l.s4 1966171168
  %v7303 = vunpack.c.0.s8 %v7302
  %v7304 = vlaneseq
  %v7305 = vshrl.u32 %v7304, 7
  %v7306 = vsub.s32 %v7303, %v7305
  %v7307 = vrot.slane %v7291, %v7306
  %v7309 = vunpack.c.l.s4 1966171168
  %v7310 = vunpack.c.0.s8 %v7309
  %v7311 = vlaneseq
  %v7312 = vshrl.u32 %v7311, 7
  %v7313 = vsub.s32 %v7310, %v7312
  %v7314 = vrot.slane %v7292, %v7313
  %v7316 = vunpack.c.l.s4 1966171168
  %v7317 = vunpack.c.0.s8 %v7316
  %v7318 = vlaneseq
  %v7319 = vshrl.u32 %v7318, 7
  %v7320 = vsub.s32 %v7317, %v7319
  %v7321 = vrot.slane %v7293, %v7320
  %v7322 = vcombine.low %v7300, %v7307
  %v7323 = vcombine.low %v7314, %v7321
  %v7325 = vunpack.c.l.s4 1966171168
  %v7326 = vunpack.c.0.s8 %v7325
  %v7327 = vlaneseq
  %v7328 = vshrl.u32 %v7327, 7
  %v7329 = vsub.s32 %v7326, %v7328
  %v7330 = vrot.slane %v7322, %v7329
  %v7332 = vunpack.c.l.s4 1966171168
  %v7333 = vunpack.c.0.s8 %v7332
  %v7334 = vlaneseq
  %v7335 = vshrl.u32 %v7334, 7
  %v7336 = vsub.s32 %v7333, %v7335
  %v7337 = vrot.slane %v7323, %v7336
  %v7338 = vcombine.low %v7330, %v7337
  %v7339 = vcombine.low %v4512, %v4516
  %v7340 = vcombine.low %v4520, %v4524
  %v7341 = vcombine.low %v4528, %v4532
  %v7342 = vcombine.low %v4536, %v4540
  %v7344 = vunpack.c.l.s4 1966171168
  %v7345 = vunpack.c.0.s8 %v7344
  %v7346 = vlaneseq
  %v7347 = vshrl.u32 %v7346, 7
  %v7348 = vsub.s32 %v7345, %v7347
  %v7349 = vrot.slane %v7339, %v7348
  %v7351 = vunpack.c.l.s4 1966171168
  %v7352 = vunpack.c.0.s8 %v7351
  %v7353 = vlaneseq
  %v7354 = vshrl.u32 %v7353, 7
  %v7355 = vsub.s32 %v7352, %v7354
  %v7356 = vrot.slane %v7340, %v7355
  %v7358 = vunpack.c.l.s4 1966171168
  %v7359 = vunpack.c.0.s8 %v7358
  %v7360 = vlaneseq
  %v7361 = vshrl.u32 %v7360, 7
  %v7362 = vsub.s32 %v7359, %v7361
  %v7363 = vrot.slane %v7341, %v7362
  %v7365 = vunpack.c.l.s4 1966171168
  %v7366 = vunpack.c.0.s8 %v7365
  %v7367 = vlaneseq
  %v7368 = vshrl.u32 %v7367, 7
  %v7369 = vsub.s32 %v7366, %v7368
  %v7370 = vrot.slane %v7342, %v7369
  %v7371 = vcombine.low %v7349, %v7356
  %v7372 = vcombine.low %v7363, %v7370
  %v7374 = vunpack.c.l.s4 1966171168
  %v7375 = vunpack.c.0.s8 %v7374
  %v7376 = vlaneseq
  %v7377 = vshrl.u32 %v7376, 7
  %v7378 = vsub.s32 %v7375, %v7377
  %v7379 = vrot.slane %v7371, %v7378
  %v7381 = vunpack.c.l.s4 1966171168
  %v7382 = vunpack.c.0.s8 %v7381
  %v7383 = vlaneseq
  %v7384 = vshrl.u32 %v7383, 7
  %v7385 = vsub.s32 %v7382, %v7384
  %v7386 = vrot.slane %v7372, %v7385
  %v7387 = vcombine.low %v7379, %v7386
  %v7388 = vcombine.low %v4544, %v4548
  %v7389 = vcombine.low %v4552, %v4556
  %v7390 = vcombine.low %v4560, %v4564
  %v7391 = vcombine.low %v4568, %v4572
  %v7393 = vunpack.c.l.s4 1966171168
  %v7394 = vunpack.c.0.s8 %v7393
  %v7395 = vlaneseq
  %v7396 = vshrl.u32 %v7395, 7
  %v7397 = vsub.s32 %v7394, %v7396
  %v7398 = vrot.slane %v7388, %v7397
  %v7400 = vunpack.c.l.s4 1966171168
  %v7401 = vunpack.c.0.s8 %v7400
  %v7402 = vlaneseq
  %v7403 = vshrl.u32 %v7402, 7
  %v7404 = vsub.s32 %v7401, %v7403
  %v7405 = vrot.slane %v7389, %v7404
  %v7407 = vunpack.c.l.s4 1966171168
  %v7408 = vunpack.c.0.s8 %v7407
  %v7409 = vlaneseq
  %v7410 = vshrl.u32 %v7409, 7
  %v7411 = vsub.s32 %v7408, %v7410
  %v7412 = vrot.slane %v7390, %v7411
  %v7414 = vunpack.c.l.s4 1966171168
  %v7415 = vunpack.c.0.s8 %v7414
  %v7416 = vlaneseq
  %v7417 = vshrl.u32 %v7416, 7
  %v7418 = vsub.s32 %v7415, %v7417
  %v7419 = vrot.slane %v7391, %v7418
  %v7420 = vcombine.low %v7398, %v7405
  %v7421 = vcombine.low %v7412, %v7419
  %v7423 = vunpack.c.l.s4 1966171168
  %v7424 = vunpack.c.0.s8 %v7423
  %v7425 = vlaneseq
  %v7426 = vshrl.u32 %v7425, 7
  %v7427 = vsub.s32 %v7424, %v7426
  %v7428 = vrot.slane %v7420, %v7427
  %v7430 = vunpack.c.l.s4 1966171168
  %v7431 = vunpack.c.0.s8 %v7430
  %v7432 = vlaneseq
  %v7433 = vshrl.u32 %v7432, 7
  %v7434 = vsub.s32 %v7431, %v7433
  %v7435 = vrot.slane %v7421, %v7434
  %v7436 = vcombine.low %v7428, %v7435
  %v7437 = vcombine.low %v4576, %v4580
  %v7438 = vcombine.low %v4584, %v4588
  %v7439 = vcombine.low %v4592, %v4596
  %v7440 = vcombine.low %v4600, %v4604
  %v7442 = vunpack.c.l.s4 1966171168
  %v7443 = vunpack.c.0.s8 %v7442
  %v7444 = vlaneseq
  %v7445 = vshrl.u32 %v7444, 7
  %v7446 = vsub.s32 %v7443, %v7445
  %v7447 = vrot.slane %v7437, %v7446
  %v7449 = vunpack.c.l.s4 1966171168
  %v7450 = vunpack.c.0.s8 %v7449
  %v7451 = vlaneseq
  %v7452 = vshrl.u32 %v7451, 7
  %v7453 = vsub.s32 %v7450, %v7452
  %v7454 = vrot.slane %v7438, %v7453
  %v7456 = vunpack.c.l.s4 1966171168
  %v7457 = vunpack.c.0.s8 %v7456
  %v7458 = vlaneseq
  %v7459 = vshrl.u32 %v7458, 7
  %v7460 = vsub.s32 %v7457, %v7459
  %v7461 = vrot.slane %v7439, %v7460
  %v7463 = vunpack.c.l.s4 1966171168
  %v7464 = vunpack.c.0.s8 %v7463
  %v7465 = vlaneseq
  %v7466 = vshrl.u32 %v7465, 7
  %v7467 = vsub.s32 %v7464, %v7466
  %v7468 = vrot.slane %v7440, %v7467
  %v7469 = vcombine.low %v7447, %v7454
  %v7470 = vcombine.low %v7461, %v7468
  %v7472 = vunpack.c.l.s4 1966171168
  %v7473 = vunpack.c.0.s8 %v7472
  %v7474 = vlaneseq
  %v7475 = vshrl.u32 %v7474, 7
  %v7476 = vsub.s32 %v7473, %v7475
  %v7477 = vrot.slane %v7469, %v7476
  %v7479 = vunpack.c.l.s4 1966171168
  %v7480 = vunpack.c.0.s8 %v7479
  %v7481 = vlaneseq
  %v7482 = vshrl.u32 %v7481, 7
  %v7483 = vsub.s32 %v7480, %v7482
  %v7484 = vrot.slane %v7470, %v7483
  %v7485 = vcombine.low %v7477, %v7484
  %v7486 = vcombine.low %v4608, %v4612
  %v7487 = vcombine.low %v4616, %v4620
  %v7488 = vcombine.low %v4624, %v4628
  %v7489 = vcombine.low %v4632, %v4636
  %v7491 = vunpack.c.l.s4 1966171168
  %v7492 = vunpack.c.0.s8 %v7491
  %v7493 = vlaneseq
  %v7494 = vshrl.u32 %v7493, 7
  %v7495 = vsub.s32 %v7492, %v7494
  %v7496 = vrot.slane %v7486, %v7495
  %v7498 = vunpack.c.l.s4 1966171168
  %v7499 = vunpack.c.0.s8 %v7498
  %v7500 = vlaneseq
  %v7501 = vshrl.u32 %v7500, 7
  %v7502 = vsub.s32 %v7499, %v7501
  %v7503 = vrot.slane %v7487, %v7502
  %v7505 = vunpack.c.l.s4 1966171168
  %v7506 = vunpack.c.0.s8 %v7505
  %v7507 = vlaneseq
  %v7508 = vshrl.u32 %v7507, 7
  %v7509 = vsub.s32 %v7506, %v7508
  %v7510 = vrot.slane %v7488, %v7509
  %v7512 = vunpack.c.l.s4 1966171168
  %v7513 = vunpack.c.0.s8 %v7512
  %v7514 = vlaneseq
  %v7515 = vshrl.u32 %v7514, 7
  %v7516 = vsub.s32 %v7513, %v7515
  %v7517 = vrot.slane %v7489, %v7516
  %v7518 = vcombine.low %v7496, %v7503
  %v7519 = vcombine.low %v7510, %v7517
  %v7521 = vunpack.c.l.s4 1966171168
  %v7522 = vunpack.c.0.s8 %v7521
  %v7523 = vlaneseq
  %v7524 = vshrl.u32 %v7523, 7
  %v7525 = vsub.s32 %v7522, %v7524
  %v7526 = vrot.slane %v7518, %v7525
  %v7528 = vunpack.c.l.s4 1966171168
  %v7529 = vunpack.c.0.s8 %v7528
  %v7530 = vlaneseq
  %v7531 = vshrl.u32 %v7530, 7
  %v7532 = vsub.s32 %v7529, %v7531
  %v7533 = vrot.slane %v7519, %v7532
  %v7534 = vcombine.low %v7526, %v7533
  %v7535 = vcombine.low %v4640, %v4644
  %v7536 = vcombine.low %v4648, %v4652
  %v7537 = vcombine.low %v4656, %v4660
  %v7538 = vcombine.low %v4664, %v4668
  %v7540 = vunpack.c.l.s4 1966171168
  %v7541 = vunpack.c.0.s8 %v7540
  %v7542 = vlaneseq
  %v7543 = vshrl.u32 %v7542, 7
  %v7544 = vsub.s32 %v7541, %v7543
  %v7545 = vrot.slane %v7535, %v7544
  %v7547 = vunpack.c.l.s4 1966171168
  %v7548 = vunpack.c.0.s8 %v7547
  %v7549 = vlaneseq
  %v7550 = vshrl.u32 %v7549, 7
  %v7551 = vsub.s32 %v7548, %v7550
  %v7552 = vrot.slane %v7536, %v7551
  %v7554 = vunpack.c.l.s4 1966171168
  %v7555 = vunpack.c.0.s8 %v7554
  %v7556 = vlaneseq
  %v7557 = vshrl.u32 %v7556, 7
  %v7558 = vsub.s32 %v7555, %v7557
  %v7559 = vrot.slane %v7537, %v7558
  %v7561 = vunpack.c.l.s4 1966171168
  %v7562 = vunpack.c.0.s8 %v7561
  %v7563 = vlaneseq
  %v7564 = vshrl.u32 %v7563, 7
  %v7565 = vsub.s32 %v7562, %v7564
  %v7566 = vrot.slane %v7538, %v7565
  %v7567 = vcombine.low %v7545, %v7552
  %v7568 = vcombine.low %v7559, %v7566
  %v7570 = vunpack.c.l.s4 1966171168
  %v7571 = vunpack.c.0.s8 %v7570
  %v7572 = vlaneseq
  %v7573 = vshrl.u32 %v7572, 7
  %v7574 = vsub.s32 %v7571, %v7573
  %v7575 = vrot.slane %v7567, %v7574
  %v7577 = vunpack.c.l.s4 1966171168
  %v7578 = vunpack.c.0.s8 %v7577
  %v7579 = vlaneseq
  %v7580 = vshrl.u32 %v7579, 7
  %v7581 = vsub.s32 %v7578, %v7580
  %v7582 = vrot.slane %v7568, %v7581
  %v7583 = vcombine.low %v7575, %v7582
  %v7584 = vcombine.low %v4672, %v4676
  %v7585 = vcombine.low %v4680, %v4684
  %v7586 = vcombine.low %v4688, %v4692
  %v7587 = vcombine.low %v4696, %v4700
  %v7589 = vunpack.c.l.s4 1966171168
  %v7590 = vunpack.c.0.s8 %v7589
  %v7591 = vlaneseq
  %v7592 = vshrl.u32 %v7591, 7
  %v7593 = vsub.s32 %v7590, %v7592
  %v7594 = vrot.slane %v7584, %v7593
  %v7596 = vunpack.c.l.s4 1966171168
  %v7597 = vunpack.c.0.s8 %v7596
  %v7598 = vlaneseq
  %v7599 = vshrl.u32 %v7598, 7
  %v7600 = vsub.s32 %v7597, %v7599
  %v7601 = vrot.slane %v7585, %v7600
  %v7603 = vunpack.c.l.s4 1966171168
  %v7604 = vunpack.c.0.s8 %v7603
  %v7605 = vlaneseq
  %v7606 = vshrl.u32 %v7605, 7
  %v7607 = vsub.s32 %v7604, %v7606
  %v7608 = vrot.slane %v7586, %v7607
  %v7610 = vunpack.c.l.s4 1966171168
  %v7611 = vunpack.c.0.s8 %v7610
  %v7612 = vlaneseq
  %v7613 = vshrl.u32 %v7612, 7
  %v7614 = vsub.s32 %v7611, %v7613
  %v7615 = vrot.slane %v7587, %v7614
  %v7616 = vcombine.low %v7594, %v7601
  %v7617 = vcombine.low %v7608, %v7615
  %v7619 = vunpack.c.l.s4 1966171168
  %v7620 = vunpack.c.0.s8 %v7619
  %v7621 = vlaneseq
  %v7622 = vshrl.u32 %v7621, 7
  %v7623 = vsub.s32 %v7620, %v7622
  %v7624 = vrot.slane %v7616, %v7623
  %v7626 = vunpack.c.l.s4 1966171168
  %v7627 = vunpack.c.0.s8 %v7626
  %v7628 = vlaneseq
  %v7629 = vshrl.u32 %v7628, 7
  %v7630 = vsub.s32 %v7627, %v7629
  %v7631 = vrot.slane %v7617, %v7630
  %v7632 = vcombine.low %v7624, %v7631
  %v7633 = vcombine.low %v4704, %v4708
  %v7634 = vcombine.low %v4712, %v4716
  %v7635 = vcombine.low %v4720, %v4724
  %v7636 = vcombine.low %v4728, %v4732
  %v7638 = vunpack.c.l.s4 1966171168
  %v7639 = vunpack.c.0.s8 %v7638
  %v7640 = vlaneseq
  %v7641 = vshrl.u32 %v7640, 7
  %v7642 = vsub.s32 %v7639, %v7641
  %v7643 = vrot.slane %v7633, %v7642
  %v7645 = vunpack.c.l.s4 1966171168
  %v7646 = vunpack.c.0.s8 %v7645
  %v7647 = vlaneseq
  %v7648 = vshrl.u32 %v7647, 7
  %v7649 = vsub.s32 %v7646, %v7648
  %v7650 = vrot.slane %v7634, %v7649
  %v7652 = vunpack.c.l.s4 1966171168
  %v7653 = vunpack.c.0.s8 %v7652
  %v7654 = vlaneseq
  %v7655 = vshrl.u32 %v7654, 7
  %v7656 = vsub.s32 %v7653, %v7655
  %v7657 = vrot.slane %v7635, %v7656
  %v7659 = vunpack.c.l.s4 1966171168
  %v7660 = vunpack.c.0.s8 %v7659
  %v7661 = vlaneseq
  %v7662 = vshrl.u32 %v7661, 7
  %v7663 = vsub.s32 %v7660, %v7662
  %v7664 = vrot.slane %v7636, %v7663
  %v7665 = vcombine.low %v7643, %v7650
  %v7666 = vcombine.low %v7657, %v7664
  %v7668 = vunpack.c.l.s4 1966171168
  %v7669 = vunpack.c.0.s8 %v7668
  %v7670 = vlaneseq
  %v7671 = vshrl.u32 %v7670, 7
  %v7672 = vsub.s32 %v7669, %v7671
  %v7673 = vrot.slane %v7665, %v7672
  %v7675 = vunpack.c.l.s4 1966171168
  %v7676 = vunpack.c.0.s8 %v7675
  %v7677 = vlaneseq
  %v7678 = vshrl.u32 %v7677, 7
  %v7679 = vsub.s32 %v7676, %v7678
  %v7680 = vrot.slane %v7666, %v7679
  %v7681 = vcombine.low %v7673, %v7680
  %v7682 = vcombine.low %v4736, %v4740
  %v7683 = vcombine.low %v4744, %v4748
  %v7684 = vcombine.low %v4752, %v4756
  %v7685 = vcombine.low %v4760, %v4764
  %v7687 = vunpack.c.l.s4 1966171168
  %v7688 = vunpack.c.0.s8 %v7687
  %v7689 = vlaneseq
  %v7690 = vshrl.u32 %v7689, 7
  %v7691 = vsub.s32 %v7688, %v7690
  %v7692 = vrot.slane %v7682, %v7691
  %v7694 = vunpack.c.l.s4 1966171168
  %v7695 = vunpack.c.0.s8 %v7694
  %v7696 = vlaneseq
  %v7697 = vshrl.u32 %v7696, 7
  %v7698 = vsub.s32 %v7695, %v7697
  %v7699 = vrot.slane %v7683, %v7698
  %v7701 = vunpack.c.l.s4 1966171168
  %v7702 = vunpack.c.0.s8 %v7701
  %v7703 = vlaneseq
  %v7704 = vshrl.u32 %v7703, 7
  %v7705 = vsub.s32 %v7702, %v7704
  %v7706 = vrot.slane %v7684, %v7705
  %v7708 = vunpack.c.l.s4 1966171168
  %v7709 = vunpack.c.0.s8 %v7708
  %v7710 = vlaneseq
  %v7711 = vshrl.u32 %v7710, 7
  %v7712 = vsub.s32 %v7709, %v7711
  %v7713 = vrot.slane %v7685, %v7712
  %v7714 = vcombine.low %v7692, %v7699
  %v7715 = vcombine.low %v7706, %v7713
  %v7717 = vunpack.c.l.s4 1966171168
  %v7718 = vunpack.c.0.s8 %v7717
  %v7719 = vlaneseq
  %v7720 = vshrl.u32 %v7719, 7
  %v7721 = vsub.s32 %v7718, %v7720
  %v7722 = vrot.slane %v7714, %v7721
  %v7724 = vunpack.c.l.s4 1966171168
  %v7725 = vunpack.c.0.s8 %v7724
  %v7726 = vlaneseq
  %v7727 = vshrl.u32 %v7726, 7
  %v7728 = vsub.s32 %v7725, %v7727
  %v7729 = vrot.slane %v7715, %v7728
  %v7730 = vcombine.low %v7722, %v7729
  %v7731 = vcombine.low %v4768, %v4772
  %v7732 = vcombine.low %v4776, %v4780
  %v7733 = vcombine.low %v4784, %v4788
  %v7734 = vcombine.low %v4792, %v4796
  %v7736 = vunpack.c.l.s4 1966171168
  %v7737 = vunpack.c.0.s8 %v7736
  %v7738 = vlaneseq
  %v7739 = vshrl.u32 %v7738, 7
  %v7740 = vsub.s32 %v7737, %v7739
  %v7741 = vrot.slane %v7731, %v7740
  %v7743 = vunpack.c.l.s4 1966171168
  %v7744 = vunpack.c.0.s8 %v7743
  %v7745 = vlaneseq
  %v7746 = vshrl.u32 %v7745, 7
  %v7747 = vsub.s32 %v7744, %v7746
  %v7748 = vrot.slane %v7732, %v7747
  %v7750 = vunpack.c.l.s4 1966171168
  %v7751 = vunpack.c.0.s8 %v7750
  %v7752 = vlaneseq
  %v7753 = vshrl.u32 %v7752, 7
  %v7754 = vsub.s32 %v7751, %v7753
  %v7755 = vrot.slane %v7733, %v7754
  %v7757 = vunpack.c.l.s4 1966171168
  %v7758 = vunpack.c.0.s8 %v7757
  %v7759 = vlaneseq
  %v7760 = vshrl.u32 %v7759, 7
  %v7761 = vsub.s32 %v7758, %v7760
  %v7762 = vrot.slane %v7734, %v7761
  %v7763 = vcombine.low %v7741, %v7748
  %v7764 = vcombine.low %v7755, %v7762
  %v7766 = vunpack.c.l.s4 1966171168
  %v7767 = vunpack.c.0.s8 %v7766
  %v7768 = vlaneseq
  %v7769 = vshrl.u32 %v7768, 7
  %v7770 = vsub.s32 %v7767, %v7769
  %v7771 = vrot.slane %v7763, %v7770
  %v7773 = vunpack.c.l.s4 1966171168
  %v7774 = vunpack.c.0.s8 %v7773
  %v7775 = vlaneseq
  %v7776 = vshrl.u32 %v7775, 7
  %v7777 = vsub.s32 %v7774, %v7776
  %v7778 = vrot.slane %v7764, %v7777
  %v7779 = vcombine.low %v7771, %v7778
  %v7780 = vcombine.low %v4800, %v4804
  %v7781 = vcombine.low %v4808, %v4812
  %v7782 = vcombine.low %v4816, %v4820
  %v7783 = vcombine.low %v4824, %v4828
  %v7785 = vunpack.c.l.s4 1966171168
  %v7786 = vunpack.c.0.s8 %v7785
  %v7787 = vlaneseq
  %v7788 = vshrl.u32 %v7787, 7
  %v7789 = vsub.s32 %v7786, %v7788
  %v7790 = vrot.slane %v7780, %v7789
  %v7792 = vunpack.c.l.s4 1966171168
  %v7793 = vunpack.c.0.s8 %v7792
  %v7794 = vlaneseq
  %v7795 = vshrl.u32 %v7794, 7
  %v7796 = vsub.s32 %v7793, %v7795
  %v7797 = vrot.slane %v7781, %v7796
  %v7799 = vunpack.c.l.s4 1966171168
  %v7800 = vunpack.c.0.s8 %v7799
  %v7801 = vlaneseq
  %v7802 = vshrl.u32 %v7801, 7
  %v7803 = vsub.s32 %v7800, %v7802
  %v7804 = vrot.slane %v7782, %v7803
  %v7806 = vunpack.c.l.s4 1966171168
  %v7807 = vunpack.c.0.s8 %v7806
  %v7808 = vlaneseq
  %v7809 = vshrl.u32 %v7808, 7
  %v7810 = vsub.s32 %v7807, %v7809
  %v7811 = vrot.slane %v7783, %v7810
  %v7812 = vcombine.low %v7790, %v7797
  %v7813 = vcombine.low %v7804, %v7811
  %v7815 = vunpack.c.l.s4 1966171168
  %v7816 = vunpack.c.0.s8 %v7815
  %v7817 = vlaneseq
  %v7818 = vshrl.u32 %v7817, 7
  %v7819 = vsub.s32 %v7816, %v7818
  %v7820 = vrot.slane %v7812, %v7819
  %v7822 = vunpack.c.l.s4 1966171168
  %v7823 = vunpack.c.0.s8 %v7822
  %v7824 = vlaneseq
  %v7825 = vshrl.u32 %v7824, 7
  %v7826 = vsub.s32 %v7823, %v7825
  %v7827 = vrot.slane %v7813, %v7826
  %v7828 = vcombine.low %v7820, %v7827
  %v7829 = vcombine.low %v4832, %v4836
  %v7830 = vcombine.low %v4840, %v4844
  %v7831 = vcombine.low %v4848, %v4852
  %v7832 = vcombine.low %v4856, %v4860
  %v7834 = vunpack.c.l.s4 1966171168
  %v7835 = vunpack.c.0.s8 %v7834
  %v7836 = vlaneseq
  %v7837 = vshrl.u32 %v7836, 7
  %v7838 = vsub.s32 %v7835, %v7837
  %v7839 = vrot.slane %v7829, %v7838
  %v7841 = vunpack.c.l.s4 1966171168
  %v7842 = vunpack.c.0.s8 %v7841
  %v7843 = vlaneseq
  %v7844 = vshrl.u32 %v7843, 7
  %v7845 = vsub.s32 %v7842, %v7844
  %v7846 = vrot.slane %v7830, %v7845
  %v7848 = vunpack.c.l.s4 1966171168
  %v7849 = vunpack.c.0.s8 %v7848
  %v7850 = vlaneseq
  %v7851 = vshrl.u32 %v7850, 7
  %v7852 = vsub.s32 %v7849, %v7851
  %v7853 = vrot.slane %v7831, %v7852
  %v7855 = vunpack.c.l.s4 1966171168
  %v7856 = vunpack.c.0.s8 %v7855
  %v7857 = vlaneseq
  %v7858 = vshrl.u32 %v7857, 7
  %v7859 = vsub.s32 %v7856, %v7858
  %v7860 = vrot.slane %v7832, %v7859
  %v7861 = vcombine.low %v7839, %v7846
  %v7862 = vcombine.low %v7853, %v7860
  %v7864 = vunpack.c.l.s4 1966171168
  %v7865 = vunpack.c.0.s8 %v7864
  %v7866 = vlaneseq
  %v7867 = vshrl.u32 %v7866, 7
  %v7868 = vsub.s32 %v7865, %v7867
  %v7869 = vrot.slane %v7861, %v7868
  %v7871 = vunpack.c.l.s4 1966171168
  %v7872 = vunpack.c.0.s8 %v7871
  %v7873 = vlaneseq
  %v7874 = vshrl.u32 %v7873, 7
  %v7875 = vsub.s32 %v7872, %v7874
  %v7876 = vrot.slane %v7862, %v7875
  %v7877 = vcombine.low %v7869, %v7876
  %v7878 = vcombine.low %v4864, %v4868
  %v7879 = vcombine.low %v4872, %v4876
  %v7880 = vcombine.low %v4880, %v4884
  %v7881 = vcombine.low %v4888, %v4892
  %v7883 = vunpack.c.l.s4 1966171168
  %v7884 = vunpack.c.0.s8 %v7883
  %v7885 = vlaneseq
  %v7886 = vshrl.u32 %v7885, 7
  %v7887 = vsub.s32 %v7884, %v7886
  %v7888 = vrot.slane %v7878, %v7887
  %v7890 = vunpack.c.l.s4 1966171168
  %v7891 = vunpack.c.0.s8 %v7890
  %v7892 = vlaneseq
  %v7893 = vshrl.u32 %v7892, 7
  %v7894 = vsub.s32 %v7891, %v7893
  %v7895 = vrot.slane %v7879, %v7894
  %v7897 = vunpack.c.l.s4 1966171168
  %v7898 = vunpack.c.0.s8 %v7897
  %v7899 = vlaneseq
  %v7900 = vshrl.u32 %v7899, 7
  %v7901 = vsub.s32 %v7898, %v7900
  %v7902 = vrot.slane %v7880, %v7901
  %v7904 = vunpack.c.l.s4 1966171168
  %v7905 = vunpack.c.0.s8 %v7904
  %v7906 = vlaneseq
  %v7907 = vshrl.u32 %v7906, 7
  %v7908 = vsub.s32 %v7905, %v7907
  %v7909 = vrot.slane %v7881, %v7908
  %v7910 = vcombine.low %v7888, %v7895
  %v7911 = vcombine.low %v7902, %v7909
  %v7913 = vunpack.c.l.s4 1966171168
  %v7914 = vunpack.c.0.s8 %v7913
  %v7915 = vlaneseq
  %v7916 = vshrl.u32 %v7915, 7
  %v7917 = vsub.s32 %v7914, %v7916
  %v7918 = vrot.slane %v7910, %v7917
  %v7920 = vunpack.c.l.s4 1966171168
  %v7921 = vunpack.c.0.s8 %v7920
  %v7922 = vlaneseq
  %v7923 = vshrl.u32 %v7922, 7
  %v7924 = vsub.s32 %v7921, %v7923
  %v7925 = vrot.slane %v7911, %v7924
  %v7926 = vcombine.low %v7918, %v7925
  %v7927 = vcombine.low %v4896, %v4900
  %v7928 = vcombine.low %v4904, %v4908
  %v7929 = vcombine.low %v4912, %v4916
  %v7930 = vcombine.low %v4920, %v4924
  %v7932 = vunpack.c.l.s4 1966171168
  %v7933 = vunpack.c.0.s8 %v7932
  %v7934 = vlaneseq
  %v7935 = vshrl.u32 %v7934, 7
  %v7936 = vsub.s32 %v7933, %v7935
  %v7937 = vrot.slane %v7927, %v7936
  %v7939 = vunpack.c.l.s4 1966171168
  %v7940 = vunpack.c.0.s8 %v7939
  %v7941 = vlaneseq
  %v7942 = vshrl.u32 %v7941, 7
  %v7943 = vsub.s32 %v7940, %v7942
  %v7944 = vrot.slane %v7928, %v7943
  %v7946 = vunpack.c.l.s4 1966171168
  %v7947 = vunpack.c.0.s8 %v7946
  %v7948 = vlaneseq
  %v7949 = vshrl.u32 %v7948, 7
  %v7950 = vsub.s32 %v7947, %v7949
  %v7951 = vrot.slane %v7929, %v7950
  %v7953 = vunpack.c.l.s4 1966171168
  %v7954 = vunpack.c.0.s8 %v7953
  %v7955 = vlaneseq
  %v7956 = vshrl.u32 %v7955, 7
  %v7957 = vsub.s32 %v7954, %v7956
  %v7958 = vrot.slane %v7930, %v7957
  %v7959 = vcombine.low %v7937, %v7944
  %v7960 = vcombine.low %v7951, %v7958
  %v7962 = vunpack.c.l.s4 1966171168
  %v7963 = vunpack.c.0.s8 %v7962
  %v7964 = vlaneseq
  %v7965 = vshrl.u32 %v7964, 7
  %v7966 = vsub.s32 %v7963, %v7965
  %v7967 = vrot.slane %v7959, %v7966
  %v7969 = vunpack.c.l.s4 1966171168
  %v7970 = vunpack.c.0.s8 %v7969
  %v7971 = vlaneseq
  %v7972 = vshrl.u32 %v7971, 7
  %v7973 = vsub.s32 %v7970, %v7972
  %v7974 = vrot.slane %v7960, %v7973
  %v7975 = vcombine.low %v7967, %v7974
  %v7976 = vcombine.low %v4928, %v4932
  %v7977 = vcombine.low %v4936, %v4940
  %v7978 = vcombine.low %v4944, %v4948
  %v7979 = vcombine.low %v4952, %v4956
  %v7981 = vunpack.c.l.s4 1966171168
  %v7982 = vunpack.c.0.s8 %v7981
  %v7983 = vlaneseq
  %v7984 = vshrl.u32 %v7983, 7
  %v7985 = vsub.s32 %v7982, %v7984
  %v7986 = vrot.slane %v7976, %v7985
  %v7988 = vunpack.c.l.s4 1966171168
  %v7989 = vunpack.c.0.s8 %v7988
  %v7990 = vlaneseq
  %v7991 = vshrl.u32 %v7990, 7
  %v7992 = vsub.s32 %v7989, %v7991
  %v7993 = vrot.slane %v7977, %v7992
  %v7995 = vunpack.c.l.s4 1966171168
  %v7996 = vunpack.c.0.s8 %v7995
  %v7997 = vlaneseq
  %v7998 = vshrl.u32 %v7997, 7
  %v7999 = vsub.s32 %v7996, %v7998
  %v8000 = vrot.slane %v7978, %v7999
  %v8002 = vunpack.c.l.s4 1966171168
  %v8003 = vunpack.c.0.s8 %v8002
  %v8004 = vlaneseq
  %v8005 = vshrl.u32 %v8004, 7
  %v8006 = vsub.s32 %v8003, %v8005
  %v8007 = vrot.slane %v7979, %v8006
  %v8008 = vcombine.low %v7986, %v7993
  %v8009 = vcombine.low %v8000, %v8007
  %v8011 = vunpack.c.l.s4 1966171168
  %v8012 = vunpack.c.0.s8 %v8011
  %v8013 = vlaneseq
  %v8014 = vshrl.u32 %v8013, 7
  %v8015 = vsub.s32 %v8012, %v8014
  %v8016 = vrot.slane %v8008, %v8015
  %v8018 = vunpack.c.l.s4 1966171168
  %v8019 = vunpack.c.0.s8 %v8018
  %v8020 = vlaneseq
  %v8021 = vshrl.u32 %v8020, 7
  %v8022 = vsub.s32 %v8019, %v8021
  %v8023 = vrot.slane %v8009, %v8022
  %v8024 = vcombine.low %v8016, %v8023
  %v8025 = vcombine.low %v4960, %v4964
  %v8026 = vcombine.low %v4968, %v4972
  %v8027 = vcombine.low %v4976, %v4980
  %v8028 = vcombine.low %v4984, %v4988
  %v8030 = vunpack.c.l.s4 1966171168
  %v8031 = vunpack.c.0.s8 %v8030
  %v8032 = vlaneseq
  %v8033 = vshrl.u32 %v8032, 7
  %v8034 = vsub.s32 %v8031, %v8033
  %v8035 = vrot.slane %v8025, %v8034
  %v8037 = vunpack.c.l.s4 1966171168
  %v8038 = vunpack.c.0.s8 %v8037
  %v8039 = vlaneseq
  %v8040 = vshrl.u32 %v8039, 7
  %v8041 = vsub.s32 %v8038, %v8040
  %v8042 = vrot.slane %v8026, %v8041
  %v8044 = vunpack.c.l.s4 1966171168
  %v8045 = vunpack.c.0.s8 %v8044
  %v8046 = vlaneseq
  %v8047 = vshrl.u32 %v8046, 7
  %v8048 = vsub.s32 %v8045, %v8047
  %v8049 = vrot.slane %v8027, %v8048
  %v8051 = vunpack.c.l.s4 1966171168
  %v8052 = vunpack.c.0.s8 %v8051
  %v8053 = vlaneseq
  %v8054 = vshrl.u32 %v8053, 7
  %v8055 = vsub.s32 %v8052, %v8054
  %v8056 = vrot.slane %v8028, %v8055
  %v8057 = vcombine.low %v8035, %v8042
  %v8058 = vcombine.low %v8049, %v8056
  %v8060 = vunpack.c.l.s4 1966171168
  %v8061 = vunpack.c.0.s8 %v8060
  %v8062 = vlaneseq
  %v8063 = vshrl.u32 %v8062, 7
  %v8064 = vsub.s32 %v8061, %v8063
  %v8065 = vrot.slane %v8057, %v8064
  %v8067 = vunpack.c.l.s4 1966171168
  %v8068 = vunpack.c.0.s8 %v8067
  %v8069 = vlaneseq
  %v8070 = vshrl.u32 %v8069, 7
  %v8071 = vsub.s32 %v8068, %v8070
  %v8072 = vrot.slane %v8058, %v8071
  %v8073 = vcombine.low %v8065, %v8072
  %v8074 = vcombine.low %v4992, %v4996
  %v8075 = vcombine.low %v5000, %v5004
  %v8076 = vcombine.low %v5008, %v5012
  %v8077 = vcombine.low %v5016, %v5020
  %v8079 = vunpack.c.l.s4 1966171168
  %v8080 = vunpack.c.0.s8 %v8079
  %v8081 = vlaneseq
  %v8082 = vshrl.u32 %v8081, 7
  %v8083 = vsub.s32 %v8080, %v8082
  %v8084 = vrot.slane %v8074, %v8083
  %v8086 = vunpack.c.l.s4 1966171168
  %v8087 = vunpack.c.0.s8 %v8086
  %v8088 = vlaneseq
  %v8089 = vshrl.u32 %v8088, 7
  %v8090 = vsub.s32 %v8087, %v8089
  %v8091 = vrot.slane %v8075, %v8090
  %v8093 = vunpack.c.l.s4 1966171168
  %v8094 = vunpack.c.0.s8 %v8093
  %v8095 = vlaneseq
  %v8096 = vshrl.u32 %v8095, 7
  %v8097 = vsub.s32 %v8094, %v8096
  %v8098 = vrot.slane %v8076, %v8097
  %v8100 = vunpack.c.l.s4 1966171168
  %v8101 = vunpack.c.0.s8 %v8100
  %v8102 = vlaneseq
  %v8103 = vshrl.u32 %v8102, 7
  %v8104 = vsub.s32 %v8101, %v8103
  %v8105 = vrot.slane %v8077, %v8104
  %v8106 = vcombine.low %v8084, %v8091
  %v8107 = vcombine.low %v8098, %v8105
  %v8109 = vunpack.c.l.s4 1966171168
  %v8110 = vunpack.c.0.s8 %v8109
  %v8111 = vlaneseq
  %v8112 = vshrl.u32 %v8111, 7
  %v8113 = vsub.s32 %v8110, %v8112
  %v8114 = vrot.slane %v8106, %v8113
  %v8116 = vunpack.c.l.s4 1966171168
  %v8117 = vunpack.c.0.s8 %v8116
  %v8118 = vlaneseq
  %v8119 = vshrl.u32 %v8118, 7
  %v8120 = vsub.s32 %v8117, %v8119
  %v8121 = vrot.slane %v8107, %v8120
  %v8122 = vcombine.low %v8114, %v8121
  %v8123 = vcombine.low %v5024, %v5028
  %v8124 = vcombine.low %v5032, %v5036
  %v8125 = vcombine.low %v5040, %v5044
  %v8126 = vcombine.low %v5048, %v5052
  %v8128 = vunpack.c.l.s4 1966171168
  %v8129 = vunpack.c.0.s8 %v8128
  %v8130 = vlaneseq
  %v8131 = vshrl.u32 %v8130, 7
  %v8132 = vsub.s32 %v8129, %v8131
  %v8133 = vrot.slane %v8123, %v8132
  %v8135 = vunpack.c.l.s4 1966171168
  %v8136 = vunpack.c.0.s8 %v8135
  %v8137 = vlaneseq
  %v8138 = vshrl.u32 %v8137, 7
  %v8139 = vsub.s32 %v8136, %v8138
  %v8140 = vrot.slane %v8124, %v8139
  %v8142 = vunpack.c.l.s4 1966171168
  %v8143 = vunpack.c.0.s8 %v8142
  %v8144 = vlaneseq
  %v8145 = vshrl.u32 %v8144, 7
  %v8146 = vsub.s32 %v8143, %v8145
  %v8147 = vrot.slane %v8125, %v8146
  %v8149 = vunpack.c.l.s4 1966171168
  %v8150 = vunpack.c.0.s8 %v8149
  %v8151 = vlaneseq
  %v8152 = vshrl.u32 %v8151, 7
  %v8153 = vsub.s32 %v8150, %v8152
  %v8154 = vrot.slane %v8126, %v8153
  %v8155 = vcombine.low %v8133, %v8140
  %v8156 = vcombine.low %v8147, %v8154
  %v8158 = vunpack.c.l.s4 1966171168
  %v8159 = vunpack.c.0.s8 %v8158
  %v8160 = vlaneseq
  %v8161 = vshrl.u32 %v8160, 7
  %v8162 = vsub.s32 %v8159, %v8161
  %v8163 = vrot.slane %v8155, %v8162
  %v8165 = vunpack.c.l.s4 1966171168
  %v8166 = vunpack.c.0.s8 %v8165
  %v8167 = vlaneseq
  %v8168 = vshrl.u32 %v8167, 7
  %v8169 = vsub.s32 %v8166, %v8168
  %v8170 = vrot.slane %v8156, %v8169
  %v8171 = vcombine.low %v8163, %v8170
  %v8172 = vcombine.low %v5056, %v5060
  %v8173 = vcombine.low %v5064, %v5068
  %v8174 = vcombine.low %v5072, %v5076
  %v8175 = vcombine.low %v5080, %v5084
  %v8177 = vunpack.c.l.s4 1966171168
  %v8178 = vunpack.c.0.s8 %v8177
  %v8179 = vlaneseq
  %v8180 = vshrl.u32 %v8179, 7
  %v8181 = vsub.s32 %v8178, %v8180
  %v8182 = vrot.slane %v8172, %v8181
  %v8184 = vunpack.c.l.s4 1966171168
  %v8185 = vunpack.c.0.s8 %v8184
  %v8186 = vlaneseq
  %v8187 = vshrl.u32 %v8186, 7
  %v8188 = vsub.s32 %v8185, %v8187
  %v8189 = vrot.slane %v8173, %v8188
  %v8191 = vunpack.c.l.s4 1966171168
  %v8192 = vunpack.c.0.s8 %v8191
  %v8193 = vlaneseq
  %v8194 = vshrl.u32 %v8193, 7
  %v8195 = vsub.s32 %v8192, %v8194
  %v8196 = vrot.slane %v8174, %v8195
  %v8198 = vunpack.c.l.s4 1966171168
  %v8199 = vunpack.c.0.s8 %v8198
  %v8200 = vlaneseq
  %v8201 = vshrl.u32 %v8200, 7
  %v8202 = vsub.s32 %v8199, %v8201
  %v8203 = vrot.slane %v8175, %v8202
  %v8204 = vcombine.low %v8182, %v8189
  %v8205 = vcombine.low %v8196, %v8203
  %v8207 = vunpack.c.l.s4 1966171168
  %v8208 = vunpack.c.0.s8 %v8207
  %v8209 = vlaneseq
  %v8210 = vshrl.u32 %v8209, 7
  %v8211 = vsub.s32 %v8208, %v8210
  %v8212 = vrot.slane %v8204, %v8211
  %v8214 = vunpack.c.l.s4 1966171168
  %v8215 = vunpack.c.0.s8 %v8214
  %v8216 = vlaneseq
  %v8217 = vshrl.u32 %v8216, 7
  %v8218 = vsub.s32 %v8215, %v8217
  %v8219 = vrot.slane %v8205, %v8218
  %v8220 = vcombine.low %v8212, %v8219
  %8221 = vset.pattern.permute.xlu0 0
  %8222 = vperm.xlu0 %8221, %v5133
  %v8223 = vpop.permute.xlu0 %8222
  %8224 = vset.pattern.permute.xlu0 0
  %8225 = vperm.xlu0 %8224, %v5182
  %v8226 = vpop.permute.xlu0 %8225
  %8227 = vset.pattern.permute.xlu0 0
  %8228 = vperm.xlu0 %8227, %v5231
  %v8229 = vpop.permute.xlu0 %8228
  %8230 = vset.pattern.permute.xlu0 0
  %8231 = vperm.xlu0 %8230, %v5280
  %v8232 = vpop.permute.xlu0 %8231
  %8233 = vset.pattern.permute.xlu0 0
  %8234 = vperm.xlu0 %8233, %v5329
  %v8235 = vpop.permute.xlu0 %8234
  %8236 = vset.pattern.permute.xlu0 0
  %8237 = vperm.xlu0 %8236, %v5378
  %v8238 = vpop.permute.xlu0 %8237
  %8239 = vset.pattern.permute.xlu0 0
  %8240 = vperm.xlu0 %8239, %v5427
  %v8241 = vpop.permute.xlu0 %8240
  %8242 = vset.pattern.permute.xlu0 0
  %8243 = vperm.xlu0 %8242, %v5476
  %v8244 = vpop.permute.xlu0 %8243
  %8245 = vset.pattern.permute.xlu0 0
  %8246 = vperm.xlu0 %8245, %v5525
  %v8247 = vpop.permute.xlu0 %8246
  %8248 = vset.pattern.permute.xlu0 0
  %8249 = vperm.xlu0 %8248, %v5574
  %v8250 = vpop.permute.xlu0 %8249
  %8251 = vset.pattern.permute.xlu0 0
  %8252 = vperm.xlu0 %8251, %v5623
  %v8253 = vpop.permute.xlu0 %8252
  %8254 = vset.pattern.permute.xlu0 0
  %8255 = vperm.xlu0 %8254, %v5672
  %v8256 = vpop.permute.xlu0 %8255
  %8257 = vset.pattern.permute.xlu0 0
  %8258 = vperm.xlu0 %8257, %v5721
  %v8259 = vpop.permute.xlu0 %8258
  %8260 = vset.pattern.permute.xlu0 0
  %8261 = vperm.xlu0 %8260, %v5770
  %v8262 = vpop.permute.xlu0 %8261
  %8263 = vset.pattern.permute.xlu0 0
  %8264 = vperm.xlu0 %8263, %v5819
  %v8265 = vpop.permute.xlu0 %8264
  %8266 = vset.pattern.permute.xlu0 0
  %8267 = vperm.xlu0 %8266, %v5868
  %v8268 = vpop.permute.xlu0 %8267
  %8269 = vset.pattern.permute.xlu0 0
  %8270 = vperm.xlu0 %8269, %v5917
  %v8271 = vpop.permute.xlu0 %8270
  %8272 = vset.pattern.permute.xlu0 0
  %8273 = vperm.xlu0 %8272, %v5966
  %v8274 = vpop.permute.xlu0 %8273
  %8275 = vset.pattern.permute.xlu0 0
  %8276 = vperm.xlu0 %8275, %v6015
  %v8277 = vpop.permute.xlu0 %8276
  %8278 = vset.pattern.permute.xlu0 0
  %8279 = vperm.xlu0 %8278, %v6064
  %v8280 = vpop.permute.xlu0 %8279
  %8281 = vset.pattern.permute.xlu0 0
  %8282 = vperm.xlu0 %8281, %v6113
  %v8283 = vpop.permute.xlu0 %8282
  %8284 = vset.pattern.permute.xlu0 0
  %8285 = vperm.xlu0 %8284, %v6162
  %v8286 = vpop.permute.xlu0 %8285
  %8287 = vset.pattern.permute.xlu0 0
  %8288 = vperm.xlu0 %8287, %v6211
  %v8289 = vpop.permute.xlu0 %8288
  %8290 = vset.pattern.permute.xlu0 0
  %8291 = vperm.xlu0 %8290, %v6260
  %v8292 = vpop.permute.xlu0 %8291
  %8293 = vset.pattern.permute.xlu0 0
  %8294 = vperm.xlu0 %8293, %v6309
  %v8295 = vpop.permute.xlu0 %8294
  %8296 = vset.pattern.permute.xlu0 0
  %8297 = vperm.xlu0 %8296, %v6358
  %v8298 = vpop.permute.xlu0 %8297
  %8299 = vset.pattern.permute.xlu0 0
  %8300 = vperm.xlu0 %8299, %v6407
  %v8301 = vpop.permute.xlu0 %8300
  %8302 = vset.pattern.permute.xlu0 0
  %8303 = vperm.xlu0 %8302, %v6456
  %v8304 = vpop.permute.xlu0 %8303
  %8305 = vset.pattern.permute.xlu0 0
  %8306 = vperm.xlu0 %8305, %v6505
  %v8307 = vpop.permute.xlu0 %8306
  %8308 = vset.pattern.permute.xlu0 0
  %8309 = vperm.xlu0 %8308, %v6554
  %v8310 = vpop.permute.xlu0 %8309
  %8311 = vset.pattern.permute.xlu0 0
  %8312 = vperm.xlu0 %8311, %v6603
  %v8313 = vpop.permute.xlu0 %8312
  %8314 = vset.pattern.permute.xlu0 0
  %8315 = vperm.xlu0 %8314, %v6652
  %v8316 = vpop.permute.xlu0 %8315
  %8317 = vset.pattern.permute.xlu0 0
  %8318 = vperm.xlu0 %8317, %v6701
  %v8319 = vpop.permute.xlu0 %8318
  %8320 = vset.pattern.permute.xlu0 0
  %8321 = vperm.xlu0 %8320, %v6750
  %v8322 = vpop.permute.xlu0 %8321
  %8323 = vset.pattern.permute.xlu0 0
  %8324 = vperm.xlu0 %8323, %v6799
  %v8325 = vpop.permute.xlu0 %8324
  %8326 = vset.pattern.permute.xlu0 0
  %8327 = vperm.xlu0 %8326, %v6848
  %v8328 = vpop.permute.xlu0 %8327
  %8329 = vset.pattern.permute.xlu0 0
  %8330 = vperm.xlu0 %8329, %v6897
  %v8331 = vpop.permute.xlu0 %8330
  %8332 = vset.pattern.permute.xlu0 0
  %8333 = vperm.xlu0 %8332, %v6946
  %v8334 = vpop.permute.xlu0 %8333
  %8335 = vset.pattern.permute.xlu0 0
  %8336 = vperm.xlu0 %8335, %v6995
  %v8337 = vpop.permute.xlu0 %8336
  %8338 = vset.pattern.permute.xlu0 0
  %8339 = vperm.xlu0 %8338, %v7044
  %v8340 = vpop.permute.xlu0 %8339
  %8341 = vset.pattern.permute.xlu0 0
  %8342 = vperm.xlu0 %8341, %v7093
  %v8343 = vpop.permute.xlu0 %8342
  %8344 = vset.pattern.permute.xlu0 0
  %8345 = vperm.xlu0 %8344, %v7142
  %v8346 = vpop.permute.xlu0 %8345
  %8347 = vset.pattern.permute.xlu0 0
  %8348 = vperm.xlu0 %8347, %v7191
  %v8349 = vpop.permute.xlu0 %8348
  %8350 = vset.pattern.permute.xlu0 0
  %8351 = vperm.xlu0 %8350, %v7240
  %v8352 = vpop.permute.xlu0 %8351
  %8353 = vset.pattern.permute.xlu0 0
  %8354 = vperm.xlu0 %8353, %v7289
  %v8355 = vpop.permute.xlu0 %8354
  %8356 = vset.pattern.permute.xlu0 0
  %8357 = vperm.xlu0 %8356, %v7338
  %v8358 = vpop.permute.xlu0 %8357
  %8359 = vset.pattern.permute.xlu0 0
  %8360 = vperm.xlu0 %8359, %v7387
  %v8361 = vpop.permute.xlu0 %8360
  %8362 = vset.pattern.permute.xlu0 0
  %8363 = vperm.xlu0 %8362, %v7436
  %v8364 = vpop.permute.xlu0 %8363
  %8365 = vset.pattern.permute.xlu0 0
  %8366 = vperm.xlu0 %8365, %v7485
  %v8367 = vpop.permute.xlu0 %8366
  %8368 = vset.pattern.permute.xlu0 0
  %8369 = vperm.xlu0 %8368, %v7534
  %v8370 = vpop.permute.xlu0 %8369
  %8371 = vset.pattern.permute.xlu0 0
  %8372 = vperm.xlu0 %8371, %v7583
  %v8373 = vpop.permute.xlu0 %8372
  %8374 = vset.pattern.permute.xlu0 0
  %8375 = vperm.xlu0 %8374, %v7632
  %v8376 = vpop.permute.xlu0 %8375
  %8377 = vset.pattern.permute.xlu0 0
  %8378 = vperm.xlu0 %8377, %v7681
  %v8379 = vpop.permute.xlu0 %8378
  %8380 = vset.pattern.permute.xlu0 0
  %8381 = vperm.xlu0 %8380, %v7730
  %v8382 = vpop.permute.xlu0 %8381
  %8383 = vset.pattern.permute.xlu0 0
  %8384 = vperm.xlu0 %8383, %v7779
  %v8385 = vpop.permute.xlu0 %8384
  %8386 = vset.pattern.permute.xlu0 0
  %8387 = vperm.xlu0 %8386, %v7828
  %v8388 = vpop.permute.xlu0 %8387
  %8389 = vset.pattern.permute.xlu0 0
  %8390 = vperm.xlu0 %8389, %v7877
  %v8391 = vpop.permute.xlu0 %8390
  %8392 = vset.pattern.permute.xlu0 0
  %8393 = vperm.xlu0 %8392, %v7926
  %v8394 = vpop.permute.xlu0 %8393
  %8395 = vset.pattern.permute.xlu0 0
  %8396 = vperm.xlu0 %8395, %v7975
  %v8397 = vpop.permute.xlu0 %8396
  %8398 = vset.pattern.permute.xlu0 0
  %8399 = vperm.xlu0 %8398, %v8024
  %v8400 = vpop.permute.xlu0 %8399
  %8401 = vset.pattern.permute.xlu0 0
  %8402 = vperm.xlu0 %8401, %v8073
  %v8403 = vpop.permute.xlu0 %8402
  %8404 = vset.pattern.permute.xlu0 0
  %8405 = vperm.xlu0 %8404, %v8122
  %v8406 = vpop.permute.xlu0 %8405
  %8407 = vset.pattern.permute.xlu0 0
  %8408 = vperm.xlu0 %8407, %v8171
  %v8409 = vpop.permute.xlu0 %8408
  %8410 = vset.pattern.permute.xlu0 0
  %8411 = vperm.xlu0 %8410, %v8220
  %v8412 = vpop.permute.xlu0 %8411
  %v8413 = vlaneseq
  %v8414 = vshrl.u32 %v8413, 7
  %v8415 = vsub.s32 %v1115, %v8414
  %v8416 = vrot.slane %v8223, %v8415
  %v8417 = vadd.s32 %v1115, 4294967288
  %v8418 = vlaneseq
  %v8419 = vshrl.u32 %v8418, 7
  %v8420 = vsub.s32 %v8417, %v8419
  %v8421 = vrot.slane %v8226, %v8420
  %vm8422 = vcmask 130112
  %v8423 = vsel %vm8422, %v8421, %v8416
  %v8424 = vadd.s32 %v1115, 4294967280
  %v8425 = vlaneseq
  %v8426 = vshrl.u32 %v8425, 7
  %v8427 = vsub.s32 %v8424, %v8426
  %v8428 = vrot.slane %v8229, %v8427
  %vm8429 = vcmask 195712
  %v8430 = vsel %vm8429, %v8428, %v8423
  %v8431 = vadd.s32 %v1115, 4294967272
  %v8432 = vlaneseq
  %v8433 = vshrl.u32 %v8432, 7
  %v8434 = vsub.s32 %v8431, %v8433
  %v8435 = vrot.slane %v8232, %v8434
  %vm8436 = vcmask 261312
  %v8437 = vsel %vm8436, %v8435, %v8430
  %v8438 = vadd.s32 %v1115, 4294967264
  %v8439 = vlaneseq
  %v8440 = vshrl.u32 %v8439, 7
  %v8441 = vsub.s32 %v8438, %v8440
  %v8442 = vrot.slane %v8235, %v8441
  %vm8443 = vcmask 326912
  %v8444 = vsel %vm8443, %v8442, %v8437
  %v8445 = vadd.s32 %v1115, 4294967256
  %v8446 = vlaneseq
  %v8447 = vshrl.u32 %v8446, 7
  %v8448 = vsub.s32 %v8445, %v8447
  %v8449 = vrot.slane %v8238, %v8448
  %vm8450 = vcmask 392512
  %v8451 = vsel %vm8450, %v8449, %v8444
  %v8452 = vadd.s32 %v1115, 4294967248
  %v8453 = vlaneseq
  %v8454 = vshrl.u32 %v8453, 7
  %v8455 = vsub.s32 %v8452, %v8454
  %v8456 = vrot.slane %v8241, %v8455
  %vm8457 = vcmask 458112
  %v8458 = vsel %vm8457, %v8456, %v8451
  %v8459 = vadd.s32 %v1115, 4294967240
  %v8460 = vlaneseq
  %v8461 = vshrl.u32 %v8460, 7
  %v8462 = vsub.s32 %v8459, %v8461
  %v8463 = vrot.slane %v8244, %v8462
  %vm8464 = vcmask 523712
  %v8465 = vsel %vm8464, %v8463, %v8458
  %v8466 = vadd.s32 %v1115, 4294967232
  %v8467 = vlaneseq
  %v8468 = vshrl.u32 %v8467, 7
  %v8469 = vsub.s32 %v8466, %v8468
  %v8470 = vrot.slane %v8247, %v8469
  %vm8471 = vcmask 589312
  %v8472 = vsel %vm8471, %v8470, %v8465
  %v8473 = vadd.s32 %v1115, 4294967224
  %v8474 = vlaneseq
  %v8475 = vshrl.u32 %v8474, 7
  %v8476 = vsub.s32 %v8473, %v8475
  %v8477 = vrot.slane %v8250, %v8476
  %vm8478 = vcmask 654912
  %v8479 = vsel %vm8478, %v8477, %v8472
  %v8480 = vadd.s32 %v1115, 4294967216
  %v8481 = vlaneseq
  %v8482 = vshrl.u32 %v8481, 7
  %v8483 = vsub.s32 %v8480, %v8482
  %v8484 = vrot.slane %v8253, %v8483
  %vm8485 = vcmask 720512
  %v8486 = vsel %vm8485, %v8484, %v8479
  %v8487 = vadd.s32 %v1115, 4294967208
  %v8488 = vlaneseq
  %v8489 = vshrl.u32 %v8488, 7
  %v8490 = vsub.s32 %v8487, %v8489
  %v8491 = vrot.slane %v8256, %v8490
  %vm8492 = vcmask 786112
  %v8493 = vsel %vm8492, %v8491, %v8486
  %v8494 = vadd.s32 %v1115, 4294967200
  %v8495 = vlaneseq
  %v8496 = vshrl.u32 %v8495, 7
  %v8497 = vsub.s32 %v8494, %v8496
  %v8498 = vrot.slane %v8259, %v8497
  %vm8499 = vcmask 851712
  %v8500 = vsel %vm8499, %v8498, %v8493
  %v8501 = vadd.s32 %v1115, 4294967192
  %v8502 = vlaneseq
  %v8503 = vshrl.u32 %v8502, 7
  %v8504 = vsub.s32 %v8501, %v8503
  %v8505 = vrot.slane %v8262, %v8504
  %vm8506 = vcmask 917312
  %v8507 = vsel %vm8506, %v8505, %v8500
  %v8508 = vadd.s32 %v1115, 4294967184
  %v8509 = vlaneseq
  %v8510 = vshrl.u32 %v8509, 7
  %v8511 = vsub.s32 %v8508, %v8510
  %v8512 = vrot.slane %v8265, %v8511
  %vm8513 = vcmask 982912
  %v8514 = vsel %vm8513, %v8512, %v8507
  %v8515 = vadd.s32 %v1115, 4294967176
  %v8516 = vlaneseq
  %v8517 = vshrl.u32 %v8516, 7
  %v8518 = vsub.s32 %v8515, %v8517
  %v8519 = vrot.slane %v8268, %v8518
  %vm8520 = vcmask 1048512
  %v8521 = vsel %vm8520, %v8519, %v8514
  %v8522 = vlaneseq
  %v8523 = vshrl.u32 %v8522, 7
  %v8524 = vsub.s32 %v1115, %v8523
  %v8525 = vrot.slane %v8271, %v8524
  %v8526 = vlaneseq
  %v8527 = vshrl.u32 %v8526, 7
  %v8528 = vsub.s32 %v8417, %v8527
  %v8529 = vrot.slane %v8274, %v8528
  %v8530 = vsel %vm8422, %v8529, %v8525
  %v8531 = vlaneseq
  %v8532 = vshrl.u32 %v8531, 7
  %v8533 = vsub.s32 %v8424, %v8532
  %v8534 = vrot.slane %v8277, %v8533
  %v8535 = vsel %vm8429, %v8534, %v8530
  %v8536 = vlaneseq
  %v8537 = vshrl.u32 %v8536, 7
  %v8538 = vsub.s32 %v8431, %v8537
  %v8539 = vrot.slane %v8280, %v8538
  %v8540 = vsel %vm8436, %v8539, %v8535
  %v8541 = vlaneseq
  %v8542 = vshrl.u32 %v8541, 7
  %v8543 = vsub.s32 %v8438, %v8542
  %v8544 = vrot.slane %v8283, %v8543
  %v8545 = vsel %vm8443, %v8544, %v8540
  %v8546 = vlaneseq
  %v8547 = vshrl.u32 %v8546, 7
  %v8548 = vsub.s32 %v8445, %v8547
  %v8549 = vrot.slane %v8286, %v8548
  %v8550 = vsel %vm8450, %v8549, %v8545
  %v8551 = vlaneseq
  %v8552 = vshrl.u32 %v8551, 7
  %v8553 = vsub.s32 %v8452, %v8552
  %v8554 = vrot.slane %v8289, %v8553
  %v8555 = vsel %vm8457, %v8554, %v8550
  %v8556 = vlaneseq
  %v8557 = vshrl.u32 %v8556, 7
  %v8558 = vsub.s32 %v8459, %v8557
  %v8559 = vrot.slane %v8292, %v8558
  %v8560 = vsel %vm8464, %v8559, %v8555
  %v8561 = vlaneseq
  %v8562 = vshrl.u32 %v8561, 7
  %v8563 = vsub.s32 %v8466, %v8562
  %v8564 = vrot.slane %v8295, %v8563
  %v8565 = vsel %vm8471, %v8564, %v8560
  %v8566 = vlaneseq
  %v8567 = vshrl.u32 %v8566, 7
  %v8568 = vsub.s32 %v8473, %v8567
  %v8569 = vrot.slane %v8298, %v8568
  %v8570 = vsel %vm8478, %v8569, %v8565
  %v8571 = vlaneseq
  %v8572 = vshrl.u32 %v8571, 7
  %v8573 = vsub.s32 %v8480, %v8572
  %v8574 = vrot.slane %v8301, %v8573
  %v8575 = vsel %vm8485, %v8574, %v8570
  %v8576 = vlaneseq
  %v8577 = vshrl.u32 %v8576, 7
  %v8578 = vsub.s32 %v8487, %v8577
  %v8579 = vrot.slane %v8304, %v8578
  %v8580 = vsel %vm8492, %v8579, %v8575
  %v8581 = vlaneseq
  %v8582 = vshrl.u32 %v8581, 7
  %v8583 = vsub.s32 %v8494, %v8582
  %v8584 = vrot.slane %v8307, %v8583
  %v8585 = vsel %vm8499, %v8584, %v8580
  %v8586 = vlaneseq
  %v8587 = vshrl.u32 %v8586, 7
  %v8588 = vsub.s32 %v8501, %v8587
  %v8589 = vrot.slane %v8310, %v8588
  %v8590 = vsel %vm8506, %v8589, %v8585
  %v8591 = vlaneseq
  %v8592 = vshrl.u32 %v8591, 7
  %v8593 = vsub.s32 %v8508, %v8592
  %v8594 = vrot.slane %v8313, %v8593
  %v8595 = vsel %vm8513, %v8594, %v8590
  %v8596 = vlaneseq
  %v8597 = vshrl.u32 %v8596, 7
  %v8598 = vsub.s32 %v8515, %v8597
  %v8599 = vrot.slane %v8316, %v8598
  %v8600 = vsel %vm8520, %v8599, %v8595
  %v8601 = vlaneseq
  %v8602 = vshrl.u32 %v8601, 7
  %v8603 = vsub.s32 %v1115, %v8602
  %v8604 = vrot.slane %v8319, %v8603
  %v8605 = vlaneseq
  %v8606 = vshrl.u32 %v8605, 7
  %v8607 = vsub.s32 %v8417, %v8606
  %v8608 = vrot.slane %v8322, %v8607
  %v8609 = vsel %vm8422, %v8608, %v8604
  %v8610 = vlaneseq
  %v8611 = vshrl.u32 %v8610, 7
  %v8612 = vsub.s32 %v8424, %v8611
  %v8613 = vrot.slane %v8325, %v8612
  %v8614 = vsel %vm8429, %v8613, %v8609
  %v8615 = vlaneseq
  %v8616 = vshrl.u32 %v8615, 7
  %v8617 = vsub.s32 %v8431, %v8616
  %v8618 = vrot.slane %v8328, %v8617
  %v8619 = vsel %vm8436, %v8618, %v8614
  %v8620 = vlaneseq
  %v8621 = vshrl.u32 %v8620, 7
  %v8622 = vsub.s32 %v8438, %v8621
  %v8623 = vrot.slane %v8331, %v8622
  %v8624 = vsel %vm8443, %v8623, %v8619
  %v8625 = vlaneseq
  %v8626 = vshrl.u32 %v8625, 7
  %v8627 = vsub.s32 %v8445, %v8626
  %v8628 = vrot.slane %v8334, %v8627
  %v8629 = vsel %vm8450, %v8628, %v8624
  %v8630 = vlaneseq
  %v8631 = vshrl.u32 %v8630, 7
  %v8632 = vsub.s32 %v8452, %v8631
  %v8633 = vrot.slane %v8337, %v8632
  %v8634 = vsel %vm8457, %v8633, %v8629
  %v8635 = vlaneseq
  %v8636 = vshrl.u32 %v8635, 7
  %v8637 = vsub.s32 %v8459, %v8636
  %v8638 = vrot.slane %v8340, %v8637
  %v8639 = vsel %vm8464, %v8638, %v8634
  %v8640 = vlaneseq
  %v8641 = vshrl.u32 %v8640, 7
  %v8642 = vsub.s32 %v8466, %v8641
  %v8643 = vrot.slane %v8343, %v8642
  %v8644 = vsel %vm8471, %v8643, %v8639
  %v8645 = vlaneseq
  %v8646 = vshrl.u32 %v8645, 7
  %v8647 = vsub.s32 %v8473, %v8646
  %v8648 = vrot.slane %v8346, %v8647
  %v8649 = vsel %vm8478, %v8648, %v8644
  %v8650 = vlaneseq
  %v8651 = vshrl.u32 %v8650, 7
  %v8652 = vsub.s32 %v8480, %v8651
  %v8653 = vrot.slane %v8349, %v8652
  %v8654 = vsel %vm8485, %v8653, %v8649
  %v8655 = vlaneseq
  %v8656 = vshrl.u32 %v8655, 7
  %v8657 = vsub.s32 %v8487, %v8656
  %v8658 = vrot.slane %v8352, %v8657
  %v8659 = vsel %vm8492, %v8658, %v8654
  %v8660 = vlaneseq
  %v8661 = vshrl.u32 %v8660, 7
  %v8662 = vsub.s32 %v8494, %v8661
  %v8663 = vrot.slane %v8355, %v8662
  %v8664 = vsel %vm8499, %v8663, %v8659
  %v8665 = vlaneseq
  %v8666 = vshrl.u32 %v8665, 7
  %v8667 = vsub.s32 %v8501, %v8666
  %v8668 = vrot.slane %v8358, %v8667
  %v8669 = vsel %vm8506, %v8668, %v8664
  %v8670 = vlaneseq
  %v8671 = vshrl.u32 %v8670, 7
  %v8672 = vsub.s32 %v8508, %v8671
  %v8673 = vrot.slane %v8361, %v8672
  %v8674 = vsel %vm8513, %v8673, %v8669
  %v8675 = vlaneseq
  %v8676 = vshrl.u32 %v8675, 7
  %v8677 = vsub.s32 %v8515, %v8676
  %v8678 = vrot.slane %v8364, %v8677
  %v8679 = vsel %vm8520, %v8678, %v8674
  %v8680 = vlaneseq
  %v8681 = vshrl.u32 %v8680, 7
  %v8682 = vsub.s32 %v1115, %v8681
  %v8683 = vrot.slane %v8367, %v8682
  %v8684 = vlaneseq
  %v8685 = vshrl.u32 %v8684, 7
  %v8686 = vsub.s32 %v8417, %v8685
  %v8687 = vrot.slane %v8370, %v8686
  %v8688 = vsel %vm8422, %v8687, %v8683
  %v8689 = vlaneseq
  %v8690 = vshrl.u32 %v8689, 7
  %v8691 = vsub.s32 %v8424, %v8690
  %v8692 = vrot.slane %v8373, %v8691
  %v8693 = vsel %vm8429, %v8692, %v8688
  %v8694 = vlaneseq
  %v8695 = vshrl.u32 %v8694, 7
  %v8696 = vsub.s32 %v8431, %v8695
  %v8697 = vrot.slane %v8376, %v8696
  %v8698 = vsel %vm8436, %v8697, %v8693
  %v8699 = vlaneseq
  %v8700 = vshrl.u32 %v8699, 7
  %v8701 = vsub.s32 %v8438, %v8700
  %v8702 = vrot.slane %v8379, %v8701
  %v8703 = vsel %vm8443, %v8702, %v8698
  %v8704 = vlaneseq
  %v8705 = vshrl.u32 %v8704, 7
  %v8706 = vsub.s32 %v8445, %v8705
  %v8707 = vrot.slane %v8382, %v8706
  %v8708 = vsel %vm8450, %v8707, %v8703
  %v8709 = vlaneseq
  %v8710 = vshrl.u32 %v8709, 7
  %v8711 = vsub.s32 %v8452, %v8710
  %v8712 = vrot.slane %v8385, %v8711
  %v8713 = vsel %vm8457, %v8712, %v8708
  %v8714 = vlaneseq
  %v8715 = vshrl.u32 %v8714, 7
  %v8716 = vsub.s32 %v8459, %v8715
  %v8717 = vrot.slane %v8388, %v8716
  %v8718 = vsel %vm8464, %v8717, %v8713
  %v8719 = vlaneseq
  %v8720 = vshrl.u32 %v8719, 7
  %v8721 = vsub.s32 %v8466, %v8720
  %v8722 = vrot.slane %v8391, %v8721
  %v8723 = vsel %vm8471, %v8722, %v8718
  %v8724 = vlaneseq
  %v8725 = vshrl.u32 %v8724, 7
  %v8726 = vsub.s32 %v8473, %v8725
  %v8727 = vrot.slane %v8394, %v8726
  %v8728 = vsel %vm8478, %v8727, %v8723
  %v8729 = vlaneseq
  %v8730 = vshrl.u32 %v8729, 7
  %v8731 = vsub.s32 %v8480, %v8730
  %v8732 = vrot.slane %v8397, %v8731
  %v8733 = vsel %vm8485, %v8732, %v8728
  %v8734 = vlaneseq
  %v8735 = vshrl.u32 %v8734, 7
  %v8736 = vsub.s32 %v8487, %v8735
  %v8737 = vrot.slane %v8400, %v8736
  %v8738 = vsel %vm8492, %v8737, %v8733
  %v8739 = vlaneseq
  %v8740 = vshrl.u32 %v8739, 7
  %v8741 = vsub.s32 %v8494, %v8740
  %v8742 = vrot.slane %v8403, %v8741
  %v8743 = vsel %vm8499, %v8742, %v8738
  %v8744 = vlaneseq
  %v8745 = vshrl.u32 %v8744, 7
  %v8746 = vsub.s32 %v8501, %v8745
  %v8747 = vrot.slane %v8406, %v8746
  %v8748 = vsel %vm8506, %v8747, %v8743
  %v8749 = vlaneseq
  %v8750 = vshrl.u32 %v8749, 7
  %v8751 = vsub.s32 %v8508, %v8750
  %v8752 = vrot.slane %v8409, %v8751
  %v8753 = vsel %vm8513, %v8752, %v8748
  %v8754 = vlaneseq
  %v8755 = vshrl.u32 %v8754, 7
  %v8756 = vsub.s32 %v8515, %v8755
  %v8757 = vrot.slane %v8412, %v8756
  %v8758 = vsel %vm8520, %v8757, %v8753
  %v8759 = vcombine.low %v8521, %v8600
  %v8760 = vcombine.low %v8679, %v8758
  %v8762 = vunpack.c.l.s4 1966171168
  %v8763 = vunpack.c.0.s8 %v8762
  %v8764 = vlaneseq
  %v8765 = vshrl.u32 %v8764, 7
  %v8766 = vsub.s32 %v8763, %v8765
  %v8767 = vrot.slane %v8759, %v8766
  %v8769 = vunpack.c.l.s4 1966171168
  %v8770 = vunpack.c.0.s8 %v8769
  %v8771 = vlaneseq
  %v8772 = vshrl.u32 %v8771, 7
  %v8773 = vsub.s32 %v8770, %v8772
  %v8774 = vrot.slane %v8760, %v8773
  %v8775 = vcombine.low %v8767, %v8774
  %v8777 = vunpack.c.l.s4 1966171168
  %v8778 = vunpack.c.0.s8 %v8777
  %v8779 = vlaneseq
  %v8780 = vshrl.u32 %v8779, 7
  %v8781 = vsub.s32 %v8778, %v8780
  %v8782 = vrot.slane %v8775, %v8781
  %v8783 = vlaneseq
  %vm8784 = vcmp.ge.s32.totalorder %v8783, 0
  %vm8785 = vcmp.lt.s32.totalorder %v8783, 512
  %vm8786 = vmand %vm8784, %vm8785
  %8787 = vst.msk [vmem:[%s66] sm:$0xf] %vm8786, %v8782
  %v8788 = vsub.f32 %v2655, %v192
  %v8789 = vsub.f32 %v2660, %v193
  %v8790 = vsub.f32 %v2665, %v194
  %v8791 = vsub.f32 %v2670, %v195
  %v8792 = vsub.f32 %v2675, %v196
  %v8793 = vsub.f32 %v2680, %v197
  %v8794 = vsub.f32 %v2685, %v198
  %v8795 = vsub.f32 %v2690, %v199
  %v8796 = vsub.f32 %v2695, %v200
  %v8797 = vsub.f32 %v2700, %v201
  %v8798 = vsub.f32 %v2705, %v202
  %v8799 = vsub.f32 %v2710, %v203
  %v8800 = vsub.f32 %v2715, %v204
  %v8801 = vsub.f32 %v2720, %v205
  %v8802 = vsub.f32 %v2725, %v206
  %v8803 = vsub.f32 %v2730, %v207
  %v8804 = vsub.f32 %v2735, %v208
  %v8805 = vsub.f32 %v2740, %v209
  %v8806 = vsub.f32 %v2745, %v210
  %v8807 = vsub.f32 %v2750, %v211
  %v8808 = vsub.f32 %v2755, %v212
  %v8809 = vsub.f32 %v2760, %v213
  %v8810 = vsub.f32 %v2765, %v214
  %v8811 = vsub.f32 %v2770, %v215
  %v8812 = vsub.f32 %v2775, %v216
  %v8813 = vsub.f32 %v2780, %v217
  %v8814 = vsub.f32 %v2785, %v218
  %v8815 = vsub.f32 %v2790, %v219
  %v8816 = vsub.f32 %v2795, %v220
  %v8817 = vsub.f32 %v2800, %v221
  %v8818 = vsub.f32 %v2805, %v222
  %v8819 = vsub.f32 %v2810, %v223
  %v8820 = vsub.f32 %v2815, %v224
  %v8821 = vsub.f32 %v2820, %v225
  %v8822 = vsub.f32 %v2825, %v226
  %v8823 = vsub.f32 %v2830, %v227
  %v8824 = vsub.f32 %v2835, %v228
  %v8825 = vsub.f32 %v2840, %v229
  %v8826 = vsub.f32 %v2845, %v230
  %v8827 = vsub.f32 %v2850, %v231
  %v8828 = vsub.f32 %v2855, %v232
  %v8829 = vsub.f32 %v2860, %v233
  %v8830 = vsub.f32 %v2865, %v234
  %v8831 = vsub.f32 %v2870, %v235
  %v8832 = vsub.f32 %v2875, %v236
  %v8833 = vsub.f32 %v2880, %v237
  %v8834 = vsub.f32 %v2885, %v238
  %v8835 = vsub.f32 %v2890, %v239
  %v8836 = vsub.f32 %v2895, %v240
  %v8837 = vsub.f32 %v2900, %v241
  %v8838 = vsub.f32 %v2905, %v242
  %v8839 = vsub.f32 %v2910, %v243
  %v8840 = vsub.f32 %v2915, %v244
  %v8841 = vsub.f32 %v2920, %v245
  %v8842 = vsub.f32 %v2925, %v246
  %v8843 = vsub.f32 %v2930, %v247
  %v8844 = vsub.f32 %v2935, %v248
  %v8845 = vsub.f32 %v2940, %v249
  %v8846 = vsub.f32 %v2945, %v250
  %v8847 = vsub.f32 %v2950, %v251
  %v8848 = vsub.f32 %v2955, %v252
  %v8849 = vsub.f32 %v2960, %v253
  %v8850 = vsub.f32 %v2965, %v254
  %v8851 = vsub.f32 %v2970, %v255
  %v8852 = vsel %vm921, %v2332, 0.0
  %v8853 = vsel %vm921, %v2333, 0.0
  %v8854 = vadd.f32 %v8852, %v8853
  %v8855 = vsel %vm921, %v2334, 0.0
  %v8856 = vadd.f32 %v8854, %v8855
  %v8857 = vsel %vm921, %v2335, 0.0
  %v8858 = vadd.f32 %v8856, %v8857
  %v8859 = vsel %vm921, %v2336, 0.0
  %v8860 = vadd.f32 %v8858, %v8859
  %v8861 = vsel %vm921, %v2337, 0.0
  %v8862 = vadd.f32 %v8860, %v8861
  %v8863 = vsel %vm921, %v2338, 0.0
  %v8864 = vadd.f32 %v8862, %v8863
  %v8865 = vsel %vm921, %v2339, 0.0
  %v8866 = vadd.f32 %v8864, %v8865
  %v8867 = vsel %vm921, %v2340, 0.0
  %v8868 = vadd.f32 %v8866, %v8867
  %v8869 = vsel %vm921, %v2341, 0.0
  %v8870 = vadd.f32 %v8868, %v8869
  %v8871 = vsel %vm921, %v2342, 0.0
  %v8872 = vadd.f32 %v8870, %v8871
  %v8873 = vsel %vm921, %v2343, 0.0
  %v8874 = vadd.f32 %v8872, %v8873
  %v8875 = vsel %vm921, %v2344, 0.0
  %v8876 = vadd.f32 %v8874, %v8875
  %v8877 = vsel %vm921, %v2345, 0.0
  %v8878 = vadd.f32 %v8876, %v8877
  %v8879 = vsel %vm921, %v2346, 0.0
  %v8880 = vadd.f32 %v8878, %v8879
  %v8881 = vsel %vm921, %v2347, 0.0
  %v8882 = vadd.f32 %v8880, %v8881
  %v8883 = vsel %vm921, %v2348, 0.0
  %v8884 = vadd.f32 %v8882, %v8883
  %v8885 = vsel %vm921, %v2349, 0.0
  %v8886 = vadd.f32 %v8884, %v8885
  %v8887 = vsel %vm921, %v2350, 0.0
  %v8888 = vadd.f32 %v8886, %v8887
  %v8889 = vsel %vm921, %v2351, 0.0
  %v8890 = vadd.f32 %v8888, %v8889
  %v8891 = vsel %vm921, %v2352, 0.0
  %v8892 = vadd.f32 %v8890, %v8891
  %v8893 = vsel %vm921, %v2353, 0.0
  %v8894 = vadd.f32 %v8892, %v8893
  %v8895 = vsel %vm921, %v2354, 0.0
  %v8896 = vadd.f32 %v8894, %v8895
  %v8897 = vsel %vm921, %v2355, 0.0
  %v8898 = vadd.f32 %v8896, %v8897
  %v8899 = vsel %vm921, %v2356, 0.0
  %v8900 = vadd.f32 %v8898, %v8899
  %v8901 = vsel %vm921, %v2357, 0.0
  %v8902 = vadd.f32 %v8900, %v8901
  %v8903 = vsel %vm921, %v2358, 0.0
  %v8904 = vadd.f32 %v8902, %v8903
  %v8905 = vsel %vm921, %v2359, 0.0
  %v8906 = vadd.f32 %v8904, %v8905
  %v8907 = vsel %vm921, %v2360, 0.0
  %v8908 = vadd.f32 %v8906, %v8907
  %v8909 = vsel %vm921, %v2361, 0.0
  %v8910 = vadd.f32 %v8908, %v8909
  %v8911 = vsel %vm921, %v2362, 0.0
  %v8912 = vadd.f32 %v8910, %v8911
  %v8913 = vsel %vm921, %v2363, 0.0
  %v8914 = vadd.f32 %v8912, %v8913
  %v8915 = vsel %vm921, %v2364, 0.0
  %v8916 = vadd.f32 %v8914, %v8915
  %v8917 = vsel %vm921, %v2365, 0.0
  %v8918 = vadd.f32 %v8916, %v8917
  %v8919 = vsel %vm921, %v2366, 0.0
  %v8920 = vadd.f32 %v8918, %v8919
  %v8921 = vsel %vm921, %v2367, 0.0
  %v8922 = vadd.f32 %v8920, %v8921
  %v8923 = vsel %vm921, %v2368, 0.0
  %v8924 = vadd.f32 %v8922, %v8923
  %v8925 = vsel %vm921, %v2369, 0.0
  %v8926 = vadd.f32 %v8924, %v8925
  %v8927 = vsel %vm921, %v2370, 0.0
  %v8928 = vadd.f32 %v8926, %v8927
  %v8929 = vsel %vm921, %v2371, 0.0
  %v8930 = vadd.f32 %v8928, %v8929
  %v8931 = vsel %vm921, %v2372, 0.0
  %v8932 = vadd.f32 %v8930, %v8931
  %v8933 = vsel %vm921, %v2373, 0.0
  %v8934 = vadd.f32 %v8932, %v8933
  %v8935 = vsel %vm921, %v2374, 0.0
  %v8936 = vadd.f32 %v8934, %v8935
  %v8937 = vsel %vm921, %v2375, 0.0
  %v8938 = vadd.f32 %v8936, %v8937
  %v8939 = vsel %vm921, %v2376, 0.0
  %v8940 = vadd.f32 %v8938, %v8939
  %v8941 = vsel %vm921, %v2377, 0.0
  %v8942 = vadd.f32 %v8940, %v8941
  %v8943 = vsel %vm921, %v2378, 0.0
  %v8944 = vadd.f32 %v8942, %v8943
  %v8945 = vsel %vm921, %v2379, 0.0
  %v8946 = vadd.f32 %v8944, %v8945
  %v8947 = vsel %vm921, %v2380, 0.0
  %v8948 = vadd.f32 %v8946, %v8947
  %v8949 = vsel %vm921, %v2381, 0.0
  %v8950 = vadd.f32 %v8948, %v8949
  %v8951 = vsel %vm921, %v2382, 0.0
  %v8952 = vadd.f32 %v8950, %v8951
  %v8953 = vsel %vm921, %v2383, 0.0
  %v8954 = vadd.f32 %v8952, %v8953
  %v8955 = vsel %vm921, %v2384, 0.0
  %v8956 = vadd.f32 %v8954, %v8955
  %v8957 = vsel %vm921, %v2385, 0.0
  %v8958 = vadd.f32 %v8956, %v8957
  %v8959 = vsel %vm921, %v2386, 0.0
  %v8960 = vadd.f32 %v8958, %v8959
  %v8961 = vsel %vm921, %v2387, 0.0
  %v8962 = vadd.f32 %v8960, %v8961
  %v8963 = vsel %vm921, %v2388, 0.0
  %v8964 = vadd.f32 %v8962, %v8963
  %v8965 = vsel %vm921, %v2389, 0.0
  %v8966 = vadd.f32 %v8964, %v8965
  %v8967 = vsel %vm921, %v2390, 0.0
  %v8968 = vadd.f32 %v8966, %v8967
  %v8969 = vsel %vm921, %v2391, 0.0
  %v8970 = vadd.f32 %v8968, %v8969
  %v8971 = vsel %vm921, %v2392, 0.0
  %v8972 = vadd.f32 %v8970, %v8971
  %v8973 = vsel %vm921, %v2393, 0.0
  %v8974 = vadd.f32 %v8972, %v8973
  %v8975 = vsel %vm921, %v2394, 0.0
  %v8976 = vadd.f32 %v8974, %v8975
  %v8977 = vsel %vm921, %v2395, 0.0
  %v8978 = vadd.f32 %v8976, %v8977
  %v8979 = vrot.slane %v8978, 4
  %v8980 = vadd.f32 %v8978, %v8979
  %v8981 = vrot.slane %v8980, 2
  %v8982 = vadd.f32 %v8980, %v8981
  %v8983 = vrot.slane %v8982, 1
  %v8984 = vadd.f32 %v8982, %v8983
  %vm8985 = vcmask 253952
  %8986 = vst.msk [vmem:[%s71] sm:$0x1] %vm8985, %v8984
  %v8987 = vmul.f32 %v8788, %v8788
  %v8988 = vmul.f32 %v8789, %v8789
  %v8989 = vmul.f32 %v8790, %v8790
  %v8990 = vmul.f32 %v8791, %v8791
  %v8991 = vmul.f32 %v8792, %v8792
  %v8992 = vmul.f32 %v8793, %v8793
  %v8993 = vmul.f32 %v8794, %v8794
  %v8994 = vmul.f32 %v8795, %v8795
  %v8995 = vmul.f32 %v8796, %v8796
  %v8996 = vmul.f32 %v8797, %v8797
  %v8997 = vmul.f32 %v8798, %v8798
  %v8998 = vmul.f32 %v8799, %v8799
  %v8999 = vmul.f32 %v8800, %v8800
  %v9000 = vmul.f32 %v8801, %v8801
  %v9001 = vmul.f32 %v8802, %v8802
  %v9002 = vmul.f32 %v8803, %v8803
  %v9003 = vmul.f32 %v8804, %v8804
  %v9004 = vmul.f32 %v8805, %v8805
  %v9005 = vmul.f32 %v8806, %v8806
  %v9006 = vmul.f32 %v8807, %v8807
  %v9007 = vmul.f32 %v8808, %v8808
  %v9008 = vmul.f32 %v8809, %v8809
  %v9009 = vmul.f32 %v8810, %v8810
  %v9010 = vmul.f32 %v8811, %v8811
  %v9011 = vmul.f32 %v8812, %v8812
  %v9012 = vmul.f32 %v8813, %v8813
  %v9013 = vmul.f32 %v8814, %v8814
  %v9014 = vmul.f32 %v8815, %v8815
  %v9015 = vmul.f32 %v8816, %v8816
  %v9016 = vmul.f32 %v8817, %v8817
  %v9017 = vmul.f32 %v8818, %v8818
  %v9018 = vmul.f32 %v8819, %v8819
  %v9019 = vmul.f32 %v8820, %v8820
  %v9020 = vmul.f32 %v8821, %v8821
  %v9021 = vmul.f32 %v8822, %v8822
  %v9022 = vmul.f32 %v8823, %v8823
  %v9023 = vmul.f32 %v8824, %v8824
  %v9024 = vmul.f32 %v8825, %v8825
  %v9025 = vmul.f32 %v8826, %v8826
  %v9026 = vmul.f32 %v8827, %v8827
  %v9027 = vmul.f32 %v8828, %v8828
  %v9028 = vmul.f32 %v8829, %v8829
  %v9029 = vmul.f32 %v8830, %v8830
  %v9030 = vmul.f32 %v8831, %v8831
  %v9031 = vmul.f32 %v8832, %v8832
  %v9032 = vmul.f32 %v8833, %v8833
  %v9033 = vmul.f32 %v8834, %v8834
  %v9034 = vmul.f32 %v8835, %v8835
  %v9035 = vmul.f32 %v8836, %v8836
  %v9036 = vmul.f32 %v8837, %v8837
  %v9037 = vmul.f32 %v8838, %v8838
  %v9038 = vmul.f32 %v8839, %v8839
  %v9039 = vmul.f32 %v8840, %v8840
  %v9040 = vmul.f32 %v8841, %v8841
  %v9041 = vmul.f32 %v8842, %v8842
  %v9042 = vmul.f32 %v8843, %v8843
  %v9043 = vmul.f32 %v8844, %v8844
  %v9044 = vmul.f32 %v8845, %v8845
  %v9045 = vmul.f32 %v8846, %v8846
  %v9046 = vmul.f32 %v8847, %v8847
  %v9047 = vmul.f32 %v8848, %v8848
  %v9048 = vmul.f32 %v8849, %v8849
  %v9049 = vmul.f32 %v8850, %v8850
  %v9050 = vmul.f32 %v8851, %v8851
  %v9051 = vsel %vm260, %v8987, 0.0
  %v9052 = vsel %vm260, %v8988, 0.0
  %v9053 = vadd.f32 %v9051, %v9052
  %v9054 = vsel %vm260, %v8989, 0.0
  %v9055 = vadd.f32 %v9053, %v9054
  %v9056 = vsel %vm260, %v8990, 0.0
  %v9057 = vadd.f32 %v9055, %v9056
  %v9058 = vsel %vm260, %v8991, 0.0
  %v9059 = vadd.f32 %v9057, %v9058
  %v9060 = vsel %vm260, %v8992, 0.0
  %v9061 = vadd.f32 %v9059, %v9060
  %v9062 = vsel %vm260, %v8993, 0.0
  %v9063 = vadd.f32 %v9061, %v9062
  %v9064 = vsel %vm260, %v8994, 0.0
  %v9065 = vadd.f32 %v9063, %v9064
  %v9066 = vsel %vm260, %v8995, 0.0
  %v9067 = vadd.f32 %v9065, %v9066
  %v9068 = vsel %vm260, %v8996, 0.0
  %v9069 = vadd.f32 %v9067, %v9068
  %v9070 = vsel %vm260, %v8997, 0.0
  %v9071 = vadd.f32 %v9069, %v9070
  %v9072 = vsel %vm260, %v8998, 0.0
  %v9073 = vadd.f32 %v9071, %v9072
  %v9074 = vsel %vm260, %v8999, 0.0
  %v9075 = vadd.f32 %v9073, %v9074
  %v9076 = vsel %vm260, %v9000, 0.0
  %v9077 = vadd.f32 %v9075, %v9076
  %v9078 = vsel %vm260, %v9001, 0.0
  %v9079 = vadd.f32 %v9077, %v9078
  %v9080 = vsel %vm260, %v9002, 0.0
  %v9081 = vadd.f32 %v9079, %v9080
  %v9082 = vsel %vm260, %v9003, 0.0
  %v9083 = vadd.f32 %v9081, %v9082
  %v9084 = vsel %vm260, %v9004, 0.0
  %v9085 = vadd.f32 %v9083, %v9084
  %v9086 = vsel %vm260, %v9005, 0.0
  %v9087 = vadd.f32 %v9085, %v9086
  %v9088 = vsel %vm260, %v9006, 0.0
  %v9089 = vadd.f32 %v9087, %v9088
  %v9090 = vsel %vm260, %v9007, 0.0
  %v9091 = vadd.f32 %v9089, %v9090
  %v9092 = vsel %vm260, %v9008, 0.0
  %v9093 = vadd.f32 %v9091, %v9092
  %v9094 = vsel %vm260, %v9009, 0.0
  %v9095 = vadd.f32 %v9093, %v9094
  %v9096 = vsel %vm260, %v9010, 0.0
  %v9097 = vadd.f32 %v9095, %v9096
  %v9098 = vsel %vm260, %v9011, 0.0
  %v9099 = vadd.f32 %v9097, %v9098
  %v9100 = vsel %vm260, %v9012, 0.0
  %v9101 = vadd.f32 %v9099, %v9100
  %v9102 = vsel %vm260, %v9013, 0.0
  %v9103 = vadd.f32 %v9101, %v9102
  %v9104 = vsel %vm260, %v9014, 0.0
  %v9105 = vadd.f32 %v9103, %v9104
  %v9106 = vsel %vm260, %v9015, 0.0
  %v9107 = vadd.f32 %v9105, %v9106
  %v9108 = vsel %vm260, %v9016, 0.0
  %v9109 = vadd.f32 %v9107, %v9108
  %v9110 = vsel %vm260, %v9017, 0.0
  %v9111 = vadd.f32 %v9109, %v9110
  %v9112 = vsel %vm260, %v9018, 0.0
  %v9113 = vadd.f32 %v9111, %v9112
  %v9114 = vsel %vm260, %v9019, 0.0
  %v9115 = vadd.f32 %v9113, %v9114
  %v9116 = vsel %vm260, %v9020, 0.0
  %v9117 = vadd.f32 %v9115, %v9116
  %v9118 = vsel %vm260, %v9021, 0.0
  %v9119 = vadd.f32 %v9117, %v9118
  %v9120 = vsel %vm260, %v9022, 0.0
  %v9121 = vadd.f32 %v9119, %v9120
  %v9122 = vsel %vm260, %v9023, 0.0
  %v9123 = vadd.f32 %v9121, %v9122
  %v9124 = vsel %vm260, %v9024, 0.0
  %v9125 = vadd.f32 %v9123, %v9124
  %v9126 = vsel %vm260, %v9025, 0.0
  %v9127 = vadd.f32 %v9125, %v9126
  %v9128 = vsel %vm260, %v9026, 0.0
  %v9129 = vadd.f32 %v9127, %v9128
  %v9130 = vsel %vm260, %v9027, 0.0
  %v9131 = vadd.f32 %v9129, %v9130
  %v9132 = vsel %vm260, %v9028, 0.0
  %v9133 = vadd.f32 %v9131, %v9132
  %v9134 = vsel %vm260, %v9029, 0.0
  %v9135 = vadd.f32 %v9133, %v9134
  %v9136 = vsel %vm260, %v9030, 0.0
  %v9137 = vadd.f32 %v9135, %v9136
  %v9138 = vsel %vm260, %v9031, 0.0
  %v9139 = vadd.f32 %v9137, %v9138
  %v9140 = vsel %vm260, %v9032, 0.0
  %v9141 = vadd.f32 %v9139, %v9140
  %v9142 = vsel %vm260, %v9033, 0.0
  %v9143 = vadd.f32 %v9141, %v9142
  %v9144 = vsel %vm260, %v9034, 0.0
  %v9145 = vadd.f32 %v9143, %v9144
  %v9146 = vsel %vm260, %v9035, 0.0
  %v9147 = vadd.f32 %v9145, %v9146
  %v9148 = vsel %vm260, %v9036, 0.0
  %v9149 = vadd.f32 %v9147, %v9148
  %v9150 = vsel %vm260, %v9037, 0.0
  %v9151 = vadd.f32 %v9149, %v9150
  %v9152 = vsel %vm260, %v9038, 0.0
  %v9153 = vadd.f32 %v9151, %v9152
  %v9154 = vsel %vm260, %v9039, 0.0
  %v9155 = vadd.f32 %v9153, %v9154
  %v9156 = vsel %vm260, %v9040, 0.0
  %v9157 = vadd.f32 %v9155, %v9156
  %v9158 = vsel %vm260, %v9041, 0.0
  %v9159 = vadd.f32 %v9157, %v9158
  %v9160 = vsel %vm260, %v9042, 0.0
  %v9161 = vadd.f32 %v9159, %v9160
  %v9162 = vsel %vm260, %v9043, 0.0
  %v9163 = vadd.f32 %v9161, %v9162
  %v9164 = vsel %vm260, %v9044, 0.0
  %v9165 = vadd.f32 %v9163, %v9164
  %v9166 = vsel %vm260, %v9045, 0.0
  %v9167 = vadd.f32 %v9165, %v9166
  %v9168 = vsel %vm260, %v9046, 0.0
  %v9169 = vadd.f32 %v9167, %v9168
  %v9170 = vsel %vm260, %v9047, 0.0
  %v9171 = vadd.f32 %v9169, %v9170
  %v9172 = vsel %vm260, %v9048, 0.0
  %v9173 = vadd.f32 %v9171, %v9172
  %v9174 = vsel %vm260, %v9049, 0.0
  %v9175 = vadd.f32 %v9173, %v9174
  %v9176 = vsel %vm260, %v9050, 0.0
  %v9177 = vadd.f32 %v9175, %v9176
  %v9178 = vrot.slane %v9177, 4
  %v9179 = vadd.f32 %v9177, %v9178
  %v9180 = vrot.slane %v9179, 2
  %v9181 = vadd.f32 %v9179, %v9180
  %v9182 = vrot.slane %v9181, 1
  %v9183 = vadd.f32 %v9181, %v9182
  %vm9184 = vcmask 122880
  %9185 = vst.msk [vmem:[%s76] sm:$0x1] %vm9184, %v9183
  %s9186 = sadd.s32 0, 0
  %s9187 = smul.u32 64, %s9186
  %p9188 = scmp.lt.s32.totalorder %s9187, 63
  %s9189 = scalar_select %p9188, %s9187, 63
  %s9190 = smul.addr %s9189, 8
  %s9191 = scalar_lea.vmem %s2, %s9190
  %s9192 = sadd.s32 0, 0
  %p9193 = scmp.lt.s32.totalorder %s9192, 0
  %s9194 = scalar_select %p9193, %s9192, 0
  %s9195 = smul.addr %s9194, 4
  %s9196 = scalar_lea.vmem %s3, %s9195
  %s9197 = sadd.s32 0, 0
  %p9198 = scmp.lt.s32.totalorder %s9197, 0
  %s9199 = scalar_select %p9198, %s9197, 0
  %s9200 = scalar_lea.vmem %s4, %s9199
  %s9201 = sadd.s32 0, 0
  %p9202 = scmp.lt.s32.totalorder %s9201, 0
  %s9203 = scalar_select %p9202, %s9201, 0
  %s9204 = scalar_lea.vmem %s5, %s9203
  // Predicated region
  $region44: #{vector_quantizer_forward.1} parent=0 // pred_check
    _
  $region45: #{vector_quantizer_forward.1} parent=0 // pred_check_branch
    %9206 = sbr.rel (0) target = $region47
  $region46: #{vector_quantizer_forward.1} parent=0 // pred_region
    %s9207 = sadd.s32 0, 0
    %s9208 = smul.u32 64, %s9207
  $region47: #{vector_quantizer_forward.1} parent=0 // pred_fallthru
    _
  // Predicated region
  $region48: #{vector_quantizer_forward.1} parent=0 // pred_check
    _
  $region49: #{vector_quantizer_forward.1} parent=0 // pred_check_branch
    %9210 = sbr.rel (0) target = $region51
  $region50: #{vector_quantizer_forward.1} parent=0 // pred_region
    %s9211 = sadd.s32 0, 0
  $region51: #{vector_quantizer_forward.1} parent=0 // pred_fallthru
    _
  // Predicated region
  $region52: #{vector_quantizer_forward.1} parent=0 // pred_check
    _
  $region53: #{vector_quantizer_forward.1} parent=0 // pred_check_branch
    %9213 = sbr.rel (0) target = $region55
  $region54: #{vector_quantizer_forward.1} parent=0 // pred_region
    %s9214 = sadd.s32 0, 0
  $region55: #{vector_quantizer_forward.1} parent=0 // pred_fallthru
    _
  // Predicated region
  $region56: #{vector_quantizer_forward.1} parent=0 // pred_check
    _
  $region57: #{vector_quantizer_forward.1} parent=0 // pred_check_branch
    %9216 = sbr.rel (0) target = $region59
  $region58: #{vector_quantizer_forward.1} parent=0 // pred_region
    %s9217 = sadd.s32 0, 0
  $region59: #{vector_quantizer_forward.1} parent=0 // pred_fallthru
    _
  // Predicated region
  $region60: #{vector_quantizer_forward.1} parent=0 // pred_check
    _
  $region61: #{vector_quantizer_forward.1} parent=0 // pred_check_branch
    %9219 = sbr.rel (0) target = $region63
  $region62: #{vector_quantizer_forward.1} parent=0 // pred_region
    %s9220 = sadd.s32 0, 0
    %s9221 = smul.u32 64, %s9220
    %p9222 = scmp.lt.s32.totalorder %s9221, 63
    %s9223 = scalar_select %p9222, %s9221, 63
    %s9224 = smul.addr %s9223, 8
    %s9225 = scalar_lea.vmem %s2, %s9224
  $region63: #{vector_quantizer_forward.1} parent=0 // pred_fallthru
    _
  // Predicated region
  $region64: #{vector_quantizer_forward.1} parent=0 // pred_check
    _
  $region65: #{vector_quantizer_forward.1} parent=0 // pred_check_branch
    %9227 = sbr.rel (0) target = $region67
  $region66: #{vector_quantizer_forward.1} parent=0 // pred_region
    %s9228 = sadd.s32 0, 0
    %p9229 = scmp.lt.s32.totalorder %s9228, 0
    %s9230 = scalar_select %p9229, %s9228, 0
    %s9231 = smul.addr %s9230, 4
    %s9232 = scalar_lea.vmem %s3, %s9231
  $region67: #{vector_quantizer_forward.1} parent=0 // pred_fallthru
    _
  // Predicated region
  $region68: #{vector_quantizer_forward.1} parent=0 // pred_check
    _
  $region69: #{vector_quantizer_forward.1} parent=0 // pred_check_branch
    %9234 = sbr.rel (0) target = $region71
  $region70: #{vector_quantizer_forward.1} parent=0 // pred_region
    %s9235 = sadd.s32 0, 0
    %p9236 = scmp.lt.s32.totalorder %s9235, 0
    %s9237 = scalar_select %p9236, %s9235, 0
    %s9238 = scalar_lea.vmem %s4, %s9237
  $region71: #{vector_quantizer_forward.1} parent=0 // pred_fallthru
    _
  // Predicated region
  $region72: #{vector_quantizer_forward.1} parent=0 // pred_check
    _
  $region73: #{vector_quantizer_forward.1} parent=0 // pred_check_branch
    %9240 = sbr.rel (0) target = $region75
  $region74: #{vector_quantizer_forward.1} parent=0 // pred_region
    %s9241 = sadd.s32 0, 0
    %p9242 = scmp.lt.s32.totalorder %s9241, 0
    %s9243 = scalar_select %p9242, %s9241, 0
    %s9244 = scalar_lea.vmem %s5, %s9243
  $region75: #{vector_quantizer_forward.1} parent=0 // pred_fallthru
    _
  %9245 = vsyncmov [#allocation4]
  %s9246 = vpop.sfrf %9245
  %p9247 = scmp.eq.s32.totalorder %s9246, 0
  %p9248 = pneg %p9247
  %9250 = shalt.err (%p9248)

</llo_original>
